<compile_context>
chip_gen: v7x
topology: tpu7x:2x2x1
jax: 0.10.0
libtpu: 0.0.40
codegen_flags: <defaults>
</compile_context>

<pallas_src>
import functools

import jax
import jax.numpy as jnp
from jax.experimental import pallas as pl
from jax.experimental.pallas import tpu as pltpu


def _round_up(x, m):
    return (x + m - 1) // m * m


def _ceil_div(a, b):
    return -(-a // b)


def _split_rows(n, max_tile):
    """Row tile (multiple of 8) covering n rows with minimal padding."""
    nblocks = _ceil_div(n, max_tile)
    tile = _round_up(_ceil_div(n, nblocks), 8)
    return tile, tile * nblocks


# ---------------------------------------------------------------------------
# Pallas kernel 1: MXU matmul with optional fused activation
# ---------------------------------------------------------------------------
def _mm_single_k_kernel(a_ref, b_ref, o_ref, *, act):
    # K fits in one block: no accumulator scratch, no pl.when phases.
    y = jnp.dot(a_ref[...], b_ref[...], preferred_element_type=jnp.float32)
    if act == "tanh":
        y = jnp.tanh(y)
    o_ref[...] = y


def _mm_multi_k_kernel(a_ref, b_ref, o_ref, acc_ref, *, act):
    @pl.when(pl.program_id(2) == 0)
    def _():
        acc_ref[...] = jnp.zeros_like(acc_ref)

    acc_ref[...] += jnp.dot(a_ref[...], b_ref[...],
                            preferred_element_type=jnp.float32)

    @pl.when(pl.program_id(2) == pl.num_programs(2) - 1)
    def _():
        y = acc_ref[...]
        if act == "tanh":
            y = jnp.tanh(y)
        o_ref[...] = y


def pallas_matmul(a, b, act=None, max_tm=512, max_tk=512):
    """out = act(a @ b), f32 accumulation on the MXU."""
    M, K = a.shape
    K2, N = b.shape
    assert K == K2
    Kp = _round_up(K, 128)
    Np = _round_up(N, 128)
    tm, Mp = _split_rows(M, max_tm)
    tn = Np if Np <= 512 else (256 if Np % 256 == 0 else 128)

    a_p = a if (Mp, Kp) == (M, K) else jnp.pad(a, ((0, Mp - M), (0, Kp - K)))
    b_p = b if (Kp, Np) == (K, N) else jnp.pad(b, ((0, Kp - K), (0, Np - N)))

    if Kp <= max_tk:
        out = pl.pallas_call(
            functools.partial(_mm_single_k_kernel, act=act),
            out_shape=jax.ShapeDtypeStruct((Mp, Np), jnp.float32),
            grid_spec=pltpu.PrefetchScalarGridSpec(
                num_scalar_prefetch=0,
                grid=(Mp // tm, Np // tn),
                in_specs=[pl.BlockSpec((tm, Kp), lambda i, j: (i, 0)),
                          pl.BlockSpec((Kp, tn), lambda i, j: (0, j))],
                out_specs=pl.BlockSpec((tm, tn), lambda i, j: (i, j))),
            compiler_params=pltpu.CompilerParams(
                dimension_semantics=("parallel", "parallel")),
        )(a_p, b_p)
    else:
        tk = 512 if Kp % 512 == 0 else (256 if Kp % 256 == 0 else 128)
        out = pl.pallas_call(
            functools.partial(_mm_multi_k_kernel, act=act),
            out_shape=jax.ShapeDtypeStruct((Mp, Np), jnp.float32),
            grid_spec=pltpu.PrefetchScalarGridSpec(
                num_scalar_prefetch=0,
                grid=(Mp // tm, Np // tn, Kp // tk),
                in_specs=[pl.BlockSpec((tm, tk), lambda i, j, k: (i, k)),
                          pl.BlockSpec((tk, tn), lambda i, j, k: (k, j))],
                out_specs=pl.BlockSpec((tm, tn), lambda i, j, k: (i, j)),
                scratch_shapes=[pltpu.VMEM((tm, tn), jnp.float32)]),
            compiler_params=pltpu.CompilerParams(
                dimension_semantics=("parallel", "parallel", "arbitrary")),
        )(a_p, b_p)
    return out[:M, :N] if (Mp, Np) != (M, N) else out


# ---------------------------------------------------------------------------
# Pallas kernel 2: per-lane sum / sum-of-squares (BatchNorm statistics)
# ---------------------------------------------------------------------------
def _colsum_kernel(x_ref, s_ref, sq_ref):
    @pl.when(pl.program_id(0) == 0)
    def _():
        s_ref[...] = jnp.zeros_like(s_ref)
        sq_ref[...] = jnp.zeros_like(sq_ref)

    x = x_ref[...]
    s_ref[...] += jnp.sum(x, axis=0, keepdims=True)
    sq_ref[...] += jnp.sum(x * x, axis=0, keepdims=True)


def pallas_col_sums(x2d, max_tr=512):
    R, L = x2d.shape
    tr, Rp = _split_rows(R, max_tr)
    x_p = x2d if Rp == R else jnp.pad(x2d, ((0, Rp - R), (0, 0)))
    s, sq = pl.pallas_call(
        _colsum_kernel,
        out_shape=(jax.ShapeDtypeStruct((1, L), jnp.float32),
                   jax.ShapeDtypeStruct((1, L), jnp.float32)),
        grid_spec=pltpu.PrefetchScalarGridSpec(
            num_scalar_prefetch=0,
            grid=(Rp // tr,),
            in_specs=[pl.BlockSpec((tr, L), lambda i: (i, 0))],
            out_specs=[pl.BlockSpec((1, L), lambda i: (0, 0)),
                       pl.BlockSpec((1, L), lambda i: (0, 0))]),
        compiler_params=pltpu.CompilerParams(
            dimension_semantics=("arbitrary",)),
    )(x_p)
    return s[0], sq[0]


# ---------------------------------------------------------------------------
# Pallas kernel 3: elementwise scale*x + shift, then ReLU / Tanh
# ---------------------------------------------------------------------------
def _affine_act_kernel(x_ref, scale_ref, shift_ref, o_ref, *, act):
    y = x_ref[...] * scale_ref[...] + shift_ref[...]
    if act == "relu":
        y = jnp.maximum(y, 0.0)
    elif act == "tanh":
        y = jnp.tanh(y)
    o_ref[...] = y


def pallas_affine_act(x2d, scale_row, shift_row, act, max_tr=512):
    R, L = x2d.shape
    tr, Rp = _split_rows(R, max_tr)
    x_p = x2d if Rp == R else jnp.pad(x2d, ((0, Rp - R), (0, 0)))
    out = pl.pallas_call(
        functools.partial(_affine_act_kernel, act=act),
        out_shape=jax.ShapeDtypeStruct((Rp, L), jnp.float32),
        grid_spec=pltpu.PrefetchScalarGridSpec(
            num_scalar_prefetch=0,
            grid=(Rp // tr,),
            in_specs=[pl.BlockSpec((tr, L), lambda i: (i, 0)),
                      pl.BlockSpec((1, L), lambda i: (0, 0)),
                      pl.BlockSpec((1, L), lambda i: (0, 0))],
            out_specs=pl.BlockSpec((tr, L), lambda i: (i, 0))),
        compiler_params=pltpu.CompilerParams(
            dimension_semantics=("parallel",)),
    )(x_p, scale_row.reshape(1, L), shift_row.reshape(1, L))
    return out[:R] if Rp != R else out


# ---------------------------------------------------------------------------
# BatchNorm (batch stats) + ReLU on a lane-dense (rows, reps*C) layout
# ---------------------------------------------------------------------------
def batchnorm_relu_lanes(x2d, C, gamma, beta, eps=1e-5):
    R, L = x2d.shape
    reps = L // C                         # lane index = rep*C + channel
    count = R * reps                      # true sample count (pad rows are zero)
    s, sq = pallas_col_sums(x2d)
    ssum = s.reshape(reps, C).sum(axis=0)
    ssq = sq.reshape(reps, C).sum(axis=0)
    mean = ssum / count
    var = jnp.maximum(ssq / count - mean * mean, 0.0)    # clamp (cancellation)
    scale = gamma * jax.lax.rsqrt(var + eps)
    shift = beta - mean * scale
    return pallas_affine_act(x2d, jnp.tile(scale, reps), jnp.tile(shift, reps),
                             act="relu")


def bn_relu_nhwc(h, gamma, beta):
    B, H, W, C = h.shape
    y = batchnorm_relu_lanes(h.reshape(B * H, W * C), C, gamma, beta)
    return y.reshape(B, H, W, C)


# ---------------------------------------------------------------------------
# ConvTranspose2d building blocks (glue + Pallas matmul)
# ---------------------------------------------------------------------------
def conv_transpose_s1_dilated(x, w, padding, dilation):
    """ConvTranspose2d with stride=1 = dilated conv with the flipped kernel."""
    B, H, W, Cin = x.shape
    k = w.shape[2]
    P = dilation * (k - 1) - padding
    z = jnp.pad(x, ((0, 0), (P, P), (P, P), (0, 0)))
    Ho = z.shape[1] - dilation * (k - 1)
    Wo = z.shape[2] - dilation * (k - 1)
    cols = [z[:, i * dilation:i * dilation + Ho, j * dilation:j * dilation + Wo, :]
            for i in range(k) for j in range(k)]
    patches = jnp.concatenate(cols, axis=-1).reshape(B * Ho * Wo, k * k * Cin)
    wf = jnp.flip(w, axis=(2, 3)).transpose(2, 3, 0, 1).reshape(k * k * Cin, -1)
    out = pallas_matmul(patches, wf)
    return out.reshape(B, Ho, Wo, -1)


def conv_transpose_s2(x, w, act=None):
    """ConvTranspose2d(kernel=4, stride=2, padding=1) via sub-pixel decomposition.

    Each output-pixel parity class (r, c) in {0,1}^2 is a stride-1 conv of the
    original (non-upsampled) input with a 2x2 sub-kernel; the 4 parity weights
    are concatenated along N so a single matmul produces all classes, which are
    then interleaved into the 2x-upsampled output.  No structural zeros.
    """
    B, H, W, Cin = x.shape
    Cout = w.shape[1]
    xp = jnp.pad(x, ((0, 0), (1, 1), (1, 1), (0, 0)))
    cols = [xp[:, u:u + H + 1, v:v + W + 1, :] for u in range(2) for v in range(2)]
    patches = jnp.concatenate(cols, axis=-1)                      # (B,H+1,W+1,4Cin)
    patches = patches.reshape(B * (H + 1) * (W + 1), 4 * Cin)
    w_parts = []
    for r in range(2):
        for c in range(2):
            taps = [w[:, :, 3 - 2 * u - r, 3 - 2 * v - c]
                    for u in range(2) for v in range(2)]          # match patch K-order
            w_parts.append(jnp.concatenate(taps, axis=0))         # (4Cin, Cout)
    w_all = jnp.concatenate(w_parts, axis=1)                      # (4Cin, 4Cout)
    y = pallas_matmul(patches, w_all, act=act)                    # act fused (tanh)
    y = y.reshape(B, H + 1, W + 1, 2, 2, Cout)
    out = jnp.zeros((B, 2 * H, 2 * W, Cout), jnp.float32)
    for r in range(2):
        for c in range(2):
            out = out.at[:, r::2, c::2, :].set(y[:, r:r + H, c:c + W, r, c, :])
    return out


# ---------------------------------------------------------------------------
# Parameters (deterministic init; shapes follow the PyTorch __init__)
# ---------------------------------------------------------------------------
def init_generator_params(key, D):
    ks = jax.random.split(key, 8)

    def u(k, shape, fan_in):
        bound = 1.0 / jnp.sqrt(jnp.float32(fan_in))
        return jax.random.uniform(k, shape, jnp.float32, -bound, bound)

    return {
        "w1": u(ks[0], (100, 64 * D), 100),
        "b1": u(ks[1], (64 * D,), 100),
        "bn1_g": jnp.ones((64 * D,), jnp.float32),
        "bn1_b": jnp.zeros((64 * D,), jnp.float32),
        "w2": u(ks[2], (D, 8 * D, 4, 4), D * 16),
        "bn2_g": jnp.ones((8 * D,), jnp.float32),
        "bn2_b": jnp.zeros((8 * D,), jnp.float32),
        "w3": u(ks[3], (8 * D, 4 * D, 4, 4), 8 * D * 16),
        "bn3_g": jnp.ones((4 * D,), jnp.float32),
        "bn3_b": jnp.zeros((4 * D,), jnp.float32),
        "w4": u(ks[4], (4 * D, 2 * D, 4, 4), 4 * D * 16),
        "bn4_g": jnp.ones((2 * D,), jnp.float32),
        "bn4_b": jnp.zeros((2 * D,), jnp.float32),
        "w5": u(ks[5], (2 * D, D, 4, 4), 2 * D * 16),
        "bn5_g": jnp.ones((D,), jnp.float32),
        "bn5_b": jnp.zeros((D,), jnp.float32),
        "w6": u(ks[6], (D, 3, 4, 4), D * 16),
    }


# ---------------------------------------------------------------------------
# Forward pass (matches PyTorch Generator.forward, training-mode BatchNorm)
# ---------------------------------------------------------------------------
def generator_forward(params, x, D):
    B = x.shape[0]
    # layer1: Linear + BN1d + ReLU.  The Linear bias is dropped: a per-channel
    # constant right before batch-stat BatchNorm is an exact no-op.
    h = pallas_matmul(x, params["w1"])                             # (B, 64D)
    h = batchnorm_relu_lanes(h, 64 * D, params["bn1_g"], params["bn1_b"])
    h = h.reshape(B, D, 8, 8).transpose(0, 2, 3, 1)                # NHWC (B,8,8,D)
    # layer2: ConvT(s=1, p=3, dil=2) + BN + ReLU -> (B,8,8,8D)
    h = conv_transpose_s1_dilated(h, params["w2"], padding=3, dilation=2)
    h = bn_relu_nhwc(h, params["bn2_g"], params["bn2_b"])
    # layer3 -> (B,16,16,4D)
    h = conv_transpose_s2(h, params["w3"])
    h = bn_relu_nhwc(h, params["bn3_g"], params["bn3_b"])
    # layer4 -> (B,32,32,2D)
    h = conv_transpose_s2(h, params["w4"])
    h = bn_relu_nhwc(h, params["bn4_g"], params["bn4_b"])
    # layer5 -> (B,64,64,D)
    h = conv_transpose_s2(h, params["w5"])
    h = bn_relu_nhwc(h, params["bn5_g"], params["bn5_b"])
    # output layer -> (B,128,128,3); tanh fused into the matmul epilogue
    h = conv_transpose_s2(h, params["w6"], act="tanh")
    return h.transpose(0, 3, 1, 2)                                 # NCHW


# ---------------------------------------------------------------------------
# Pure-JAX reference (zero-insertion conv-transpose) for self-verification
# ---------------------------------------------------------------------------
def _ref_conv_transpose(x, w, stride, padding, dilation=1):
    B, H, W, Cin = x.shape
    k = w.shape[2]
    Hu, Wu = (H - 1) * stride + 1, (W - 1) * stride + 1
    z = jnp.zeros((B, Hu, Wu, Cin), x.dtype).at[:, ::stride, ::stride, :].set(x)
    P = dilation * (k - 1) - padding
    z = jnp.pad(z, ((0, 0), (P, P), (P, P), (0, 0)))
    Ho = z.shape[1] - dilation * (k - 1)
    Wo = z.shape[2] - dilation * (k - 1)
    cols = [z[:, i * dilation:i * dilation + Ho, j * dilation:j * dilation + Wo, :]
            for i in range(k) for j in range(k)]
    patches = jnp.concatenate(cols, axis=-1)
    wf = jnp.flip(w, axis=(2, 3)).transpose(2, 3, 0, 1).reshape(k * k * Cin, -1)
    return jnp.einsum("bhwk,kc->bhwc", patches, wf,
                      precision=jax.lax.Precision.HIGHEST)


def _ref_bn_relu(x, gamma, beta, eps=1e-5):
    axes = tuple(range(x.ndim - 1))
    mean = jnp.mean(x, axis=axes)
    var = jnp.mean(jnp.square(x - mean), axis=axes)
    y = (x - mean) * jax.lax.rsqrt(var + eps) * gamma + beta
    return jnp.maximum(y, 0.0)


def reference_forward(params, x, D):
    B = x.shape[0]
    h = jnp.dot(x, params["w1"], precision=jax.lax.Precision.HIGHEST) + params["b1"]
    h = _ref_bn_relu(h, params["bn1_g"], params["bn1_b"])
    h = h.reshape(B, D, 8, 8).transpose(0, 2, 3, 1)
    h = _ref_bn_relu(_ref_conv_transpose(h, params["w2"], 1, 3, 2),
                     params["bn2_g"], params["bn2_b"])
    h = _ref_bn_relu(_ref_conv_transpose(h, params["w3"], 2, 1),
                     params["bn3_g"], params["bn3_b"])
    h = _ref_bn_relu(_ref_conv_transpose(h, params["w4"], 2, 1),
                     params["bn4_g"], params["bn4_b"])
    h = _ref_bn_relu(_ref_conv_transpose(h, params["w5"], 2, 1),
                     params["bn5_g"], params["bn5_b"])
    h = jnp.tanh(_ref_conv_transpose(h, params["w6"], 2, 1))
    return h.transpose(0, 3, 1, 2)


if __name__ == "__main__":
    D = 4      # generator_depth
    B = 2      # batch (>1 required for training-mode BatchNorm semantics)
    key = jax.random.PRNGKey(0)
    pkey, xkey = jax.random.split(key)
    params = init_generator_params(pkey, D)
    x = jax.random.normal(xkey, (B, 100), jnp.float32)

    fwd = jax.jit(functools.partial(generator_forward, D=D))
    out = jax.block_until_ready(fwd(params, x))

    assert out.shape == (B, 3, 128, 128), out.shape
    assert out.dtype == jnp.float32
    assert bool(jnp.all(jnp.isfinite(out)))
    assert bool(jnp.all(jnp.abs(out) <= 1.0 + 1e-6))   # tanh range

    # Self-check against a pure-JAX zero-insertion reference (loose thresholds
    # to allow for MXU matmul rounding; structural bugs give O(1) errors).
    ref = jax.block_until_ready(
        jax.jit(functools.partial(reference_forward, D=D))(params, x))
    max_err = float(jnp.max(jnp.abs(out - ref)))
    mean_err = float(jnp.mean(jnp.abs(out - ref)))
    assert max_err < 0.3 and mean_err < 0.02, (max_err, mean_err)

    print("KERNEL_OK")
</pallas_src>

<mosaic_0001>
module attributes {stable_mosaic.version = 11 : i64} {
  func.func @_mm_single_k_kernel(%arg0: i32, %arg1: i32, %arg2: memref<8x128xf32, #tpu.memory_space<vmem>>, %arg3: memref<128x256xf32, #tpu.memory_space<vmem>>, %arg4: memref<8x256xf32, #tpu.memory_space<vmem>>) attributes {dimension_semantics = [#tpu.dimension_semantics<parallel>, #tpu.dimension_semantics<parallel>], iteration_bounds = array<i64: 1, 1>, scalar_prefetch = 0 : i64, scratch_operands = 0 : i64, tpu.core_type = #tpu.core_type<tc>, window_params = [{transform_indices = @transform_0, window_bounds = array<i64: 8, 128>}, {transform_indices = @transform_1, window_bounds = array<i64: 128, 256>}, {transform_indices = @transform_2, window_bounds = array<i64: 8, 256>}]} {
    %c0 = arith.constant 0 : index
    %c0_0 = arith.constant 0 : index
    %0 = vector.load %arg2[%c0, %c0_0] : memref<8x128xf32, #tpu.memory_space<vmem>>, vector<8x128xf32>
    %c0_1 = arith.constant 0 : index
    %c0_2 = arith.constant 0 : index
    %1 = vector.load %arg3[%c0_1, %c0_2] : memref<128x256xf32, #tpu.memory_space<vmem>>, vector<128x256xf32>
    %cst = arith.constant dense<0.000000e+00> : vector<8x256xf32>
    %2 = tpu.matmul %0, %1, %cst {dimension_numbers = #tpu.dot_dimension_numbers<[1], [0], [0], [1], [0, 0, 1, 1], [], []>} : vector<8x128xf32>, vector<128x256xf32>, vector<8x256xf32> -> vector<8x256xf32>
    %c0_3 = arith.constant 0 : index
    %c0_4 = arith.constant 0 : index
    %3 = vector.load %arg4[%c0_3, %c0_4] : memref<8x256xf32, #tpu.memory_space<vmem>>, vector<8x256xf32>
    tpu.vector_store %arg4[%c0_3, %c0_4], %2 {strides = array<i32>} : memref<8x256xf32, #tpu.memory_space<vmem>>, vector<8x256xf32>,
    return
  }
  func.func @transform_0(%arg0: i32, %arg1: i32) -> (i32, i32) {
    %c0_i32 = arith.constant 0 : i32
    %c0_i32_0 = arith.constant 0 : i32
    return %arg0, %c0_i32 : i32, i32
  }
  func.func @transform_1(%arg0: i32, %arg1: i32) -> (i32, i32) {
    %c0_i32 = arith.constant 0 : i32
    %c0_i32_0 = arith.constant 0 : i32
    return %c0_i32, %arg1 : i32, i32
  }
  func.func @transform_2(%arg0: i32, %arg1: i32) -> (i32, i32) {
    %c0_i32 = arith.constant 0 : i32
    return %arg0, %arg1 : i32, i32
  }
}

module attributes {stable_mosaic.version = 11 : i64} {
  func.func @_colsum_kernel(%arg0: i32, %arg1: memref<8x256xf32, #tpu.memory_space<vmem>>, %arg2: memref<1x256xf32, #tpu.memory_space<vmem>>, %arg3: memref<1x256xf32, #tpu.memory_space<vmem>>) attributes {dimension_semantics = [#tpu.dimension_semantics<arbitrary>], iteration_bounds = array<i64: 1>, scalar_prefetch = 0 : i64, scratch_operands = 0 : i64, tpu.core_type = #tpu.core_type<tc>, window_params = [{transform_indices = @transform_0, window_bounds = array<i64: 8, 256>}, {pipeline_mode = #tpu.pipeline_mode<synchronous>, transform_indices = @transform_1, window_bounds = array<i64: 1, 256>}, {pipeline_mode = #tpu.pipeline_mode<synchronous>, transform_indices = @transform_2, window_bounds = array<i64: 1, 256>}]} {
    %c0_i32 = arith.constant 0 : i32
    %0 = arith.cmpi eq, %arg0, %c0_i32 : i32
    %1 = arith.extui %0 : i1 to i32
    %c0_i32_0 = arith.constant 0 : i32
    %2 = arith.cmpi ne, %1, %c0_i32_0 : i32
    scf.if %2 {
      %cst_11 = arith.constant 0.000000e+00 : f32
      %15 = vector.broadcast %cst_11 : f32 to vector<1x256xf32>
      %c0_12 = arith.constant 0 : index
      %c0_13 = arith.constant 0 : index
      %16 = vector.load %arg2[%c0_12, %c0_13] : memref<1x256xf32, #tpu.memory_space<vmem>>, vector<1x256xf32>
      tpu.vector_store %arg2[%c0_12, %c0_13], %15 {strides = array<i32>} : memref<1x256xf32, #tpu.memory_space<vmem>>, vector<1x256xf32>,
      %cst_14 = arith.constant 0.000000e+00 : f32
      %17 = vector.broadcast %cst_14 : f32 to vector<1x256xf32>
      %c0_15 = arith.constant 0 : index
      %c0_16 = arith.constant 0 : index
      %18 = vector.load %arg3[%c0_15, %c0_16] : memref<1x256xf32, #tpu.memory_space<vmem>>, vector<1x256xf32>
      tpu.vector_store %arg3[%c0_15, %c0_16], %17 {strides = array<i32>} : memref<1x256xf32, #tpu.memory_space<vmem>>, vector<1x256xf32>,
    } else {
    }
    %c0 = arith.constant 0 : index
    %c0_1 = arith.constant 0 : index
    %3 = vector.load %arg1[%c0, %c0_1] : memref<8x256xf32, #tpu.memory_space<vmem>>, vector<8x256xf32>
    %c0_2 = arith.constant 0 : index
    %c0_3 = arith.constant 0 : index
    %4 = vector.load %arg2[%c0_2, %c0_3] : memref<1x256xf32, #tpu.memory_space<vmem>>, vector<1x256xf32>
    %cst = arith.constant dense<0.000000e+00> : vector<256xf32>
    %5 = vector.multi_reduction <add>, %3, %cst [0] : vector<8x256xf32> to vector<256xf32>
    %6 = vector.shape_cast %5 : vector<256xf32> to vector<1x256xf32>
    %7 = arith.addf %4, %6 : vector<1x256xf32>
    %c0_4 = arith.constant 0 : index
    %c0_5 = arith.constant 0 : index
    %8 = vector.load %arg2[%c0_4, %c0_5] : memref<1x256xf32, #tpu.memory_space<vmem>>, vector<1x256xf32>
    tpu.vector_store %arg2[%c0_4, %c0_5], %7 {strides = array<i32>} : memref<1x256xf32, #tpu.memory_space<vmem>>, vector<1x256xf32>,
    %c0_6 = arith.constant 0 : index
    %c0_7 = arith.constant 0 : index
    %9 = vector.load %arg3[%c0_6, %c0_7] : memref<1x256xf32, #tpu.memory_space<vmem>>, vector<1x256xf32>
    %10 = arith.mulf %3, %3 : vector<8x256xf32>
    %cst_8 = arith.constant dense<0.000000e+00> : vector<256xf32>
    %11 = vector.multi_reduction <add>, %10, %cst_8 [0] : vector<8x256xf32> to vector<256xf32>
    %12 = vector.shape_cast %11 : vector<256xf32> to vector<1x256xf32>
    %13 = arith.addf %9, %12 : vector<1x256xf32>
    %c0_9 = arith.constant 0 : index
    %c0_10 = arith.constant 0 : index
    %14 = vector.load %arg3[%c0_9, %c0_10] : memref<1x256xf32, #tpu.memory_space<vmem>>, vector<1x256xf32>
    tpu.vector_store %arg3[%c0_9, %c0_10], %13 {strides = array<i32>} : memref<1x256xf32, #tpu.memory_space<vmem>>, vector<1x256xf32>,
    return
  }
  func.func @transform_0(%arg0: i32) -> (i32, i32) {
    %c0_i32 = arith.constant 0 : i32
    %c0_i32_0 = arith.constant 0 : i32
    return %arg0, %c0_i32 : i32, i32
  }
  func.func @transform_1(%arg0: i32) -> (i32, i32) {
    %c0_i32 = arith.constant 0 : i32
    %c0_i32_0 = arith.constant 0 : i32
    %c0_i32_1 = arith.constant 0 : i32
    return %c0_i32, %c0_i32_0 : i32, i32
  }
  func.func @transform_2(%arg0: i32) -> (i32, i32) {
    %c0_i32 = arith.constant 0 : i32
    %c0_i32_0 = arith.constant 0 : i32
    %c0_i32_1 = arith.constant 0 : i32
    return %c0_i32, %c0_i32_0 : i32, i32
  }
}

module attributes {stable_mosaic.version = 11 : i64} {
  func.func @_affine_act_kernel(%arg0: i32, %arg1: memref<8x256xf32, #tpu.memory_space<vmem>>, %arg2: memref<1x256xf32, #tpu.memory_space<vmem>>, %arg3: memref<1x256xf32, #tpu.memory_space<vmem>>, %arg4: memref<8x256xf32, #tpu.memory_space<vmem>>) attributes {dimension_semantics = [#tpu.dimension_semantics<parallel>], iteration_bounds = array<i64: 1>, scalar_prefetch = 0 : i64, scratch_operands = 0 : i64, tpu.core_type = #tpu.core_type<tc>, window_params = [{transform_indices = @transform_0, window_bounds = array<i64: 8, 256>}, {pipeline_mode = #tpu.pipeline_mode<synchronous>, transform_indices = @transform_1, window_bounds = array<i64: 1, 256>}, {pipeline_mode = #tpu.pipeline_mode<synchronous>, transform_indices = @transform_2, window_bounds = array<i64: 1, 256>}, {transform_indices = @transform_3, window_bounds = array<i64: 8, 256>}]} {
    %c0 = arith.constant 0 : index
    %c0_0 = arith.constant 0 : index
    %0 = vector.load %arg1[%c0, %c0_0] : memref<8x256xf32, #tpu.memory_space<vmem>>, vector<8x256xf32>
    %c0_1 = arith.constant 0 : index
    %c0_2 = arith.constant 0 : index
    %1 = vector.load %arg2[%c0_1, %c0_2] : memref<1x256xf32, #tpu.memory_space<vmem>>, vector<1x256xf32>
    %2 = vector.broadcast %1 : vector<1x256xf32> to vector<8x256xf32>
    %3 = arith.mulf %0, %2 : vector<8x256xf32>
    %c0_3 = arith.constant 0 : index
    %c0_4 = arith.constant 0 : index
    %4 = vector.load %arg3[%c0_3, %c0_4] : memref<1x256xf32, #tpu.memory_space<vmem>>, vector<1x256xf32>
    %5 = vector.broadcast %4 : vector<1x256xf32> to vector<8x256xf32>
    %6 = arith.addf %3, %5 : vector<8x256xf32>
    %cst = arith.constant 0.000000e+00 : f32
    %7 = vector.broadcast %cst : f32 to vector<8x256xf32>
    %8 = arith.maximumf %6, %7 : vector<8x256xf32>
    %c0_5 = arith.constant 0 : index
    %c0_6 = arith.constant 0 : index
    %9 = vector.load %arg4[%c0_5, %c0_6] : memref<8x256xf32, #tpu.memory_space<vmem>>, vector<8x256xf32>
    tpu.vector_store %arg4[%c0_5, %c0_6], %8 {strides = array<i32>} : memref<8x256xf32, #tpu.memory_space<vmem>>, vector<8x256xf32>,
    return
  }
  func.func @transform_0(%arg0: i32) -> (i32, i32) {
    %c0_i32 = arith.constant 0 : i32
    %c0_i32_0 = arith.constant 0 : i32
    return %arg0, %c0_i32 : i32, i32
  }
  func.func @transform_1(%arg0: i32) -> (i32, i32) {
    %c0_i32 = arith.constant 0 : i32
    %c0_i32_0 = arith.constant 0 : i32
    %c0_i32_1 = arith.constant 0 : i32
    return %c0_i32, %c0_i32_0 : i32, i32
  }
  func.func @transform_2(%arg0: i32) -> (i32, i32) {
    %c0_i32 = arith.constant 0 : i32
    %c0_i32_0 = arith.constant 0 : i32
    %c0_i32_1 = arith.constant 0 : i32
    return %c0_i32, %c0_i32_0 : i32, i32
  }
  func.func @transform_3(%arg0: i32) -> (i32, i32) {
    %c0_i32 = arith.constant 0 : i32
    %c0_i32_0 = arith.constant 0 : i32
    return %arg0, %c0_i32 : i32, i32
  }
}

module attributes {stable_mosaic.version = 11 : i64} {
  func.func @_mm_single_k_kernel(%arg0: i32, %arg1: i32, %arg2: memref<128x128xf32, #tpu.memory_space<vmem>>, %arg3: memref<128x128xf32, #tpu.memory_space<vmem>>, %arg4: memref<128x128xf32, #tpu.memory_space<vmem>>) attributes {dimension_semantics = [#tpu.dimension_semantics<parallel>, #tpu.dimension_semantics<parallel>], iteration_bounds = array<i64: 1, 1>, scalar_prefetch = 0 : i64, scratch_operands = 0 : i64, tpu.core_type = #tpu.core_type<tc>, window_params = [{transform_indices = @transform_0, window_bounds = array<i64: 128, 128>}, {transform_indices = @transform_1, window_bounds = array<i64: 128, 128>}, {transform_indices = @transform_2, window_bounds = array<i64: 128, 128>}]} {
    %c0 = arith.constant 0 : index
    %c0_0 = arith.constant 0 : index
    %0 = vector.load %arg2[%c0, %c0_0] : memref<128x128xf32, #tpu.memory_space<vmem>>, vector<128x128xf32>
    %c0_1 = arith.constant 0 : index
    %c0_2 = arith.constant 0 : index
    %1 = vector.load %arg3[%c0_1, %c0_2] : memref<128x128xf32, #tpu.memory_space<vmem>>, vector<128x128xf32>
    %cst = arith.constant dense<0.000000e+00> : vector<128x128xf32>
    %2 = tpu.matmul %0, %1, %cst {dimension_numbers = #tpu.dot_dimension_numbers<[1], [0], [0], [1], [0, 0, 1, 1], [], []>} : vector<128x128xf32>, vector<128x128xf32>, vector<128x128xf32> -> vector<128x128xf32>
    %c0_3 = arith.constant 0 : index
    %c0_4 = arith.constant 0 : index
    %3 = vector.load %arg4[%c0_3, %c0_4] : memref<128x128xf32, #tpu.memory_space<vmem>>, vector<128x128xf32>
    tpu.vector_store %arg4[%c0_3, %c0_4], %2 {strides = array<i32>} : memref<128x128xf32, #tpu.memory_space<vmem>>, vector<128x128xf32>,
    return
  }
  func.func @transform_0(%arg0: i32, %arg1: i32) -> (i32, i32) {
    %c0_i32 = arith.constant 0 : i32
    %c0_i32_0 = arith.constant 0 : i32
    return %arg0, %c0_i32 : i32, i32
  }
  func.func @transform_1(%arg0: i32, %arg1: i32) -> (i32, i32) {
    %c0_i32 = arith.constant 0 : i32
    %c0_i32_0 = arith.constant 0 : i32
    return %c0_i32, %arg1 : i32, i32
  }
  func.func @transform_2(%arg0: i32, %arg1: i32) -> (i32, i32) {
    %c0_i32 = arith.constant 0 : i32
    return %arg0, %arg1 : i32, i32
  }
}

module attributes {stable_mosaic.version = 11 : i64} {
  func.func @_colsum_kernel(%arg0: i32, %arg1: memref<16x256xf32, #tpu.memory_space<vmem>>, %arg2: memref<1x256xf32, #tpu.memory_space<vmem>>, %arg3: memref<1x256xf32, #tpu.memory_space<vmem>>) attributes {dimension_semantics = [#tpu.dimension_semantics<arbitrary>], iteration_bounds = array<i64: 1>, scalar_prefetch = 0 : i64, scratch_operands = 0 : i64, tpu.core_type = #tpu.core_type<tc>, window_params = [{transform_indices = @transform_0, window_bounds = array<i64: 16, 256>}, {pipeline_mode = #tpu.pipeline_mode<synchronous>, transform_indices = @transform_1, window_bounds = array<i64: 1, 256>}, {pipeline_mode = #tpu.pipeline_mode<synchronous>, transform_indices = @transform_2, window_bounds = array<i64: 1, 256>}]} {
    %c0_i32 = arith.constant 0 : i32
    %0 = arith.cmpi eq, %arg0, %c0_i32 : i32
    %1 = arith.extui %0 : i1 to i32
    %c0_i32_0 = arith.constant 0 : i32
    %2 = arith.cmpi ne, %1, %c0_i32_0 : i32
    scf.if %2 {
      %cst_11 = arith.constant 0.000000e+00 : f32
      %15 = vector.broadcast %cst_11 : f32 to vector<1x256xf32>
      %c0_12 = arith.constant 0 : index
      %c0_13 = arith.constant 0 : index
      %16 = vector.load %arg2[%c0_12, %c0_13] : memref<1x256xf32, #tpu.memory_space<vmem>>, vector<1x256xf32>
      tpu.vector_store %arg2[%c0_12, %c0_13], %15 {strides = array<i32>} : memref<1x256xf32, #tpu.memory_space<vmem>>, vector<1x256xf32>,
      %cst_14 = arith.constant 0.000000e+00 : f32
      %17 = vector.broadcast %cst_14 : f32 to vector<1x256xf32>
      %c0_15 = arith.constant 0 : index
      %c0_16 = arith.constant 0 : index
      %18 = vector.load %arg3[%c0_15, %c0_16] : memref<1x256xf32, #tpu.memory_space<vmem>>, vector<1x256xf32>
      tpu.vector_store %arg3[%c0_15, %c0_16], %17 {strides = array<i32>} : memref<1x256xf32, #tpu.memory_space<vmem>>, vector<1x256xf32>,
    } else {
    }
    %c0 = arith.constant 0 : index
    %c0_1 = arith.constant 0 : index
    %3 = vector.load %arg1[%c0, %c0_1] : memref<16x256xf32, #tpu.memory_space<vmem>>, vector<16x256xf32>
    %c0_2 = arith.constant 0 : index
    %c0_3 = arith.constant 0 : index
    %4 = vector.load %arg2[%c0_2, %c0_3] : memref<1x256xf32, #tpu.memory_space<vmem>>, vector<1x256xf32>
    %cst = arith.constant dense<0.000000e+00> : vector<256xf32>
    %5 = vector.multi_reduction <add>, %3, %cst [0] : vector<16x256xf32> to vector<256xf32>
    %6 = vector.shape_cast %5 : vector<256xf32> to vector<1x256xf32>
    %7 = arith.addf %4, %6 : vector<1x256xf32>
    %c0_4 = arith.constant 0 : index
    %c0_5 = arith.constant 0 : index
    %8 = vector.load %arg2[%c0_4, %c0_5] : memref<1x256xf32, #tpu.memory_space<vmem>>, vector<1x256xf32>
    tpu.vector_store %arg2[%c0_4, %c0_5], %7 {strides = array<i32>} : memref<1x256xf32, #tpu.memory_space<vmem>>, vector<1x256xf32>,
    %c0_6 = arith.constant 0 : index
    %c0_7 = arith.constant 0 : index
    %9 = vector.load %arg3[%c0_6, %c0_7] : memref<1x256xf32, #tpu.memory_space<vmem>>, vector<1x256xf32>
    %10 = arith.mulf %3, %3 : vector<16x256xf32>
    %cst_8 = arith.constant dense<0.000000e+00> : vector<256xf32>
    %11 = vector.multi_reduction <add>, %10, %cst_8 [0] : vector<16x256xf32> to vector<256xf32>
    %12 = vector.shape_cast %11 : vector<256xf32> to vector<1x256xf32>
    %13 = arith.addf %9, %12 : vector<1x256xf32>
    %c0_9 = arith.constant 0 : index
    %c0_10 = arith.constant 0 : index
    %14 = vector.load %arg3[%c0_9, %c0_10] : memref<1x256xf32, #tpu.memory_space<vmem>>, vector<1x256xf32>
    tpu.vector_store %arg3[%c0_9, %c0_10], %13 {strides = array<i32>} : memref<1x256xf32, #tpu.memory_space<vmem>>, vector<1x256xf32>,
    return
  }
  func.func @transform_0(%arg0: i32) -> (i32, i32) {
    %c0_i32 = arith.constant 0 : i32
    %c0_i32_0 = arith.constant 0 : i32
    return %arg0, %c0_i32 : i32, i32
  }
  func.func @transform_1(%arg0: i32) -> (i32, i32) {
    %c0_i32 = arith.constant 0 : i32
    %c0_i32_0 = arith.constant 0 : i32
    %c0_i32_1 = arith.constant 0 : i32
    return %c0_i32, %c0_i32_0 : i32, i32
  }
  func.func @transform_2(%arg0: i32) -> (i32, i32) {
    %c0_i32 = arith.constant 0 : i32
    %c0_i32_0 = arith.constant 0 : i32
    %c0_i32_1 = arith.constant 0 : i32
    return %c0_i32, %c0_i32_0 : i32, i32
  }
}

module attributes {stable_mosaic.version = 11 : i64} {
  func.func @_affine_act_kernel(%arg0: i32, %arg1: memref<16x256xf32, #tpu.memory_space<vmem>>, %arg2: memref<1x256xf32, #tpu.memory_space<vmem>>, %arg3: memref<1x256xf32, #tpu.memory_space<vmem>>, %arg4: memref<16x256xf32, #tpu.memory_space<vmem>>) attributes {dimension_semantics = [#tpu.dimension_semantics<parallel>], iteration_bounds = array<i64: 1>, scalar_prefetch = 0 : i64, scratch_operands = 0 : i64, tpu.core_type = #tpu.core_type<tc>, window_params = [{transform_indices = @transform_0, window_bounds = array<i64: 16, 256>}, {pipeline_mode = #tpu.pipeline_mode<synchronous>, transform_indices = @transform_1, window_bounds = array<i64: 1, 256>}, {pipeline_mode = #tpu.pipeline_mode<synchronous>, transform_indices = @transform_2, window_bounds = array<i64: 1, 256>}, {transform_indices = @transform_3, window_bounds = array<i64: 16, 256>}]} {
    %c0 = arith.constant 0 : index
    %c0_0 = arith.constant 0 : index
    %0 = vector.load %arg1[%c0, %c0_0] : memref<16x256xf32, #tpu.memory_space<vmem>>, vector<16x256xf32>
    %c0_1 = arith.constant 0 : index
    %c0_2 = arith.constant 0 : index
    %1 = vector.load %arg2[%c0_1, %c0_2] : memref<1x256xf32, #tpu.memory_space<vmem>>, vector<1x256xf32>
    %2 = vector.broadcast %1 : vector<1x256xf32> to vector<16x256xf32>
    %3 = arith.mulf %0, %2 : vector<16x256xf32>
    %c0_3 = arith.constant 0 : index
    %c0_4 = arith.constant 0 : index
    %4 = vector.load %arg3[%c0_3, %c0_4] : memref<1x256xf32, #tpu.memory_space<vmem>>, vector<1x256xf32>
    %5 = vector.broadcast %4 : vector<1x256xf32> to vector<16x256xf32>
    %6 = arith.addf %3, %5 : vector<16x256xf32>
    %cst = arith.constant 0.000000e+00 : f32
    %7 = vector.broadcast %cst : f32 to vector<16x256xf32>
    %8 = arith.maximumf %6, %7 : vector<16x256xf32>
    %c0_5 = arith.constant 0 : index
    %c0_6 = arith.constant 0 : index
    %9 = vector.load %arg4[%c0_5, %c0_6] : memref<16x256xf32, #tpu.memory_space<vmem>>, vector<16x256xf32>
    tpu.vector_store %arg4[%c0_5, %c0_6], %8 {strides = array<i32>} : memref<16x256xf32, #tpu.memory_space<vmem>>, vector<16x256xf32>,
    return
  }
  func.func @transform_0(%arg0: i32) -> (i32, i32) {
    %c0_i32 = arith.constant 0 : i32
    %c0_i32_0 = arith.constant 0 : i32
    return %arg0, %c0_i32 : i32, i32
  }
  func.func @transform_1(%arg0: i32) -> (i32, i32) {
    %c0_i32 = arith.constant 0 : i32
    %c0_i32_0 = arith.constant 0 : i32
    %c0_i32_1 = arith.constant 0 : i32
    return %c0_i32, %c0_i32_0 : i32, i32
  }
  func.func @transform_2(%arg0: i32) -> (i32, i32) {
    %c0_i32 = arith.constant 0 : i32
    %c0_i32_0 = arith.constant 0 : i32
    %c0_i32_1 = arith.constant 0 : i32
    return %c0_i32, %c0_i32_0 : i32, i32
  }
  func.func @transform_3(%arg0: i32) -> (i32, i32) {
    %c0_i32 = arith.constant 0 : i32
    %c0_i32_0 = arith.constant 0 : i32
    return %arg0, %c0_i32 : i32, i32
  }
}

module attributes {stable_mosaic.version = 11 : i64} {
  func.func @_mm_single_k_kernel(%arg0: i32, %arg1: i32, %arg2: memref<168x128xf32, #tpu.memory_space<vmem>>, %arg3: memref<128x128xf32, #tpu.memory_space<vmem>>, %arg4: memref<168x128xf32, #tpu.memory_space<vmem>>) attributes {dimension_semantics = [#tpu.dimension_semantics<parallel>, #tpu.dimension_semantics<parallel>], iteration_bounds = array<i64: 1, 1>, scalar_prefetch = 0 : i64, scratch_operands = 0 : i64, tpu.core_type = #tpu.core_type<tc>, window_params = [{transform_indices = @transform_0, window_bounds = array<i64: 168, 128>}, {transform_indices = @transform_1, window_bounds = array<i64: 128, 128>}, {transform_indices = @transform_2, window_bounds = array<i64: 168, 128>}]} {
    %c0 = arith.constant 0 : index
    %c0_0 = arith.constant 0 : index
    %0 = vector.load %arg2[%c0, %c0_0] : memref<168x128xf32, #tpu.memory_space<vmem>>, vector<168x128xf32>
    %c0_1 = arith.constant 0 : index
    %c0_2 = arith.constant 0 : index
    %1 = vector.load %arg3[%c0_1, %c0_2] : memref<128x128xf32, #tpu.memory_space<vmem>>, vector<128x128xf32>
    %cst = arith.constant dense<0.000000e+00> : vector<168x128xf32>
    %2 = tpu.matmul %0, %1, %cst {dimension_numbers = #tpu.dot_dimension_numbers<[1], [0], [0], [1], [0, 0, 1, 1], [], []>} : vector<168x128xf32>, vector<128x128xf32>, vector<168x128xf32> -> vector<168x128xf32>
    %c0_3 = arith.constant 0 : index
    %c0_4 = arith.constant 0 : index
    %3 = vector.load %arg4[%c0_3, %c0_4] : memref<168x128xf32, #tpu.memory_space<vmem>>, vector<168x128xf32>
    tpu.vector_store %arg4[%c0_3, %c0_4], %2 {strides = array<i32>} : memref<168x128xf32, #tpu.memory_space<vmem>>, vector<168x128xf32>,
    return
  }
  func.func @transform_0(%arg0: i32, %arg1: i32) -> (i32, i32) {
    %c0_i32 = arith.constant 0 : i32
    %c0_i32_0 = arith.constant 0 : i32
    return %arg0, %c0_i32 : i32, i32
  }
  func.func @transform_1(%arg0: i32, %arg1: i32) -> (i32, i32) {
    %c0_i32 = arith.constant 0 : i32
    %c0_i32_0 = arith.constant 0 : i32
    return %c0_i32, %arg1 : i32, i32
  }
  func.func @transform_2(%arg0: i32, %arg1: i32) -> (i32, i32) {
    %c0_i32 = arith.constant 0 : i32
    return %arg0, %arg1 : i32, i32
  }
}

module attributes {stable_mosaic.version = 11 : i64} {
  func.func @_colsum_kernel(%arg0: i32, %arg1: memref<32x256xf32, #tpu.memory_space<vmem>>, %arg2: memref<1x256xf32, #tpu.memory_space<vmem>>, %arg3: memref<1x256xf32, #tpu.memory_space<vmem>>) attributes {dimension_semantics = [#tpu.dimension_semantics<arbitrary>], iteration_bounds = array<i64: 1>, scalar_prefetch = 0 : i64, scratch_operands = 0 : i64, tpu.core_type = #tpu.core_type<tc>, window_params = [{transform_indices = @transform_0, window_bounds = array<i64: 32, 256>}, {pipeline_mode = #tpu.pipeline_mode<synchronous>, transform_indices = @transform_1, window_bounds = array<i64: 1, 256>}, {pipeline_mode = #tpu.pipeline_mode<synchronous>, transform_indices = @transform_2, window_bounds = array<i64: 1, 256>}]} {
    %c0_i32 = arith.constant 0 : i32
    %0 = arith.cmpi eq, %arg0, %c0_i32 : i32
    %1 = arith.extui %0 : i1 to i32
    %c0_i32_0 = arith.constant 0 : i32
    %2 = arith.cmpi ne, %1, %c0_i32_0 : i32
    scf.if %2 {
      %cst_11 = arith.constant 0.000000e+00 : f32
      %15 = vector.broadcast %cst_11 : f32 to vector<1x256xf32>
      %c0_12 = arith.constant 0 : index
      %c0_13 = arith.constant 0 : index
      %16 = vector.load %arg2[%c0_12, %c0_13] : memref<1x256xf32, #tpu.memory_space<vmem>>, vector<1x256xf32>
      tpu.vector_store %arg2[%c0_12, %c0_13], %15 {strides = array<i32>} : memref<1x256xf32, #tpu.memory_space<vmem>>, vector<1x256xf32>,
      %cst_14 = arith.constant 0.000000e+00 : f32
      %17 = vector.broadcast %cst_14 : f32 to vector<1x256xf32>
      %c0_15 = arith.constant 0 : index
      %c0_16 = arith.constant 0 : index
      %18 = vector.load %arg3[%c0_15, %c0_16] : memref<1x256xf32, #tpu.memory_space<vmem>>, vector<1x256xf32>
      tpu.vector_store %arg3[%c0_15, %c0_16], %17 {strides = array<i32>} : memref<1x256xf32, #tpu.memory_space<vmem>>, vector<1x256xf32>,
    } else {
    }
    %c0 = arith.constant 0 : index
    %c0_1 = arith.constant 0 : index
    %3 = vector.load %arg1[%c0, %c0_1] : memref<32x256xf32, #tpu.memory_space<vmem>>, vector<32x256xf32>
    %c0_2 = arith.constant 0 : index
    %c0_3 = arith.constant 0 : index
    %4 = vector.load %arg2[%c0_2, %c0_3] : memref<1x256xf32, #tpu.memory_space<vmem>>, vector<1x256xf32>
    %cst = arith.constant dense<0.000000e+00> : vector<256xf32>
    %5 = vector.multi_reduction <add>, %3, %cst [0] : vector<32x256xf32> to vector<256xf32>
    %6 = vector.shape_cast %5 : vector<256xf32> to vector<1x256xf32>
    %7 = arith.addf %4, %6 : vector<1x256xf32>
    %c0_4 = arith.constant 0 : index
    %c0_5 = arith.constant 0 : index
    %8 = vector.load %arg2[%c0_4, %c0_5] : memref<1x256xf32, #tpu.memory_space<vmem>>, vector<1x256xf32>
    tpu.vector_store %arg2[%c0_4, %c0_5], %7 {strides = array<i32>} : memref<1x256xf32, #tpu.memory_space<vmem>>, vector<1x256xf32>,
    %c0_6 = arith.constant 0 : index
    %c0_7 = arith.constant 0 : index
    %9 = vector.load %arg3[%c0_6, %c0_7] : memref<1x256xf32, #tpu.memory_space<vmem>>, vector<1x256xf32>
    %10 = arith.mulf %3, %3 : vector<32x256xf32>
    %cst_8 = arith.constant dense<0.000000e+00> : vector<256xf32>
    %11 = vector.multi_reduction <add>, %10, %cst_8 [0] : vector<32x256xf32> to vector<256xf32>
    %12 = vector.shape_cast %11 : vector<256xf32> to vector<1x256xf32>
    %13 = arith.addf %9, %12 : vector<1x256xf32>
    %c0_9 = arith.constant 0 : index
    %c0_10 = arith.constant 0 : index
    %14 = vector.load %arg3[%c0_9, %c0_10] : memref<1x256xf32, #tpu.memory_space<vmem>>, vector<1x256xf32>
    tpu.vector_store %arg3[%c0_9, %c0_10], %13 {strides = array<i32>} : memref<1x256xf32, #tpu.memory_space<vmem>>, vector<1x256xf32>,
    return
  }
  func.func @transform_0(%arg0: i32) -> (i32, i32) {
    %c0_i32 = arith.constant 0 : i32
    %c0_i32_0 = arith.constant 0 : i32
    return %arg0, %c0_i32 : i32, i32
  }
  func.func @transform_1(%arg0: i32) -> (i32, i32) {
    %c0_i32 = arith.constant 0 : i32
    %c0_i32_0 = arith.constant 0 : i32
    %c0_i32_1 = arith.constant 0 : i32
    return %c0_i32, %c0_i32_0 : i32, i32
  }
  func.func @transform_2(%arg0: i32) -> (i32, i32) {
    %c0_i32 = arith.constant 0 : i32
    %c0_i32_0 = arith.constant 0 : i32
    %c0_i32_1 = arith.constant 0 : i32
    return %c0_i32, %c0_i32_0 : i32, i32
  }
}

module attributes {stable_mosaic.version = 11 : i64} {
  func.func @_affine_act_kernel(%arg0: i32, %arg1: memref<32x256xf32, #tpu.memory_space<vmem>>, %arg2: memref<1x256xf32, #tpu.memory_space<vmem>>, %arg3: memref<1x256xf32, #tpu.memory_space<vmem>>, %arg4: memref<32x256xf32, #tpu.memory_space<vmem>>) attributes {dimension_semantics = [#tpu.dimension_semantics<parallel>], iteration_bounds = array<i64: 1>, scalar_prefetch = 0 : i64, scratch_operands = 0 : i64, tpu.core_type = #tpu.core_type<tc>, window_params = [{transform_indices = @transform_0, window_bounds = array<i64: 32, 256>}, {pipeline_mode = #tpu.pipeline_mode<synchronous>, transform_indices = @transform_1, window_bounds = array<i64: 1, 256>}, {pipeline_mode = #tpu.pipeline_mode<synchronous>, transform_indices = @transform_2, window_bounds = array<i64: 1, 256>}, {transform_indices = @transform_3, window_bounds = array<i64: 32, 256>}]} {
    %c0 = arith.constant 0 : index
    %c0_0 = arith.constant 0 : index
    %0 = vector.load %arg1[%c0, %c0_0] : memref<32x256xf32, #tpu.memory_space<vmem>>, vector<32x256xf32>
    %c0_1 = arith.constant 0 : index
    %c0_2 = arith.constant 0 : index
    %1 = vector.load %arg2[%c0_1, %c0_2] : memref<1x256xf32, #tpu.memory_space<vmem>>, vector<1x256xf32>
    %2 = vector.broadcast %1 : vector<1x256xf32> to vector<32x256xf32>
    %3 = arith.mulf %0, %2 : vector<32x256xf32>
    %c0_3 = arith.constant 0 : index
    %c0_4 = arith.constant 0 : index
    %4 = vector.load %arg3[%c0_3, %c0_4] : memref<1x256xf32, #tpu.memory_space<vmem>>, vector<1x256xf32>
    %5 = vector.broadcast %4 : vector<1x256xf32> to vector<32x256xf32>
    %6 = arith.addf %3, %5 : vector<32x256xf32>
    %cst = arith.constant 0.000000e+00 : f32
    %7 = vector.broadcast %cst : f32 to vector<32x256xf32>
    %8 = arith.maximumf %6, %7 : vector<32x256xf32>
    %c0_5 = arith.constant 0 : index
    %c0_6 = arith.constant 0 : index
    %9 = vector.load %arg4[%c0_5, %c0_6] : memref<32x256xf32, #tpu.memory_space<vmem>>, vector<32x256xf32>
    tpu.vector_store %arg4[%c0_5, %c0_6], %8 {strides = array<i32>} : memref<32x256xf32, #tpu.memory_space<vmem>>, vector<32x256xf32>,
    return
  }
  func.func @transform_0(%arg0: i32) -> (i32, i32) {
    %c0_i32 = arith.constant 0 : i32
    %c0_i32_0 = arith.constant 0 : i32
    return %arg0, %c0_i32 : i32, i32
  }
  func.func @transform_1(%arg0: i32) -> (i32, i32) {
    %c0_i32 = arith.constant 0 : i32
    %c0_i32_0 = arith.constant 0 : i32
    %c0_i32_1 = arith.constant 0 : i32
    return %c0_i32, %c0_i32_0 : i32, i32
  }
  func.func @transform_2(%arg0: i32) -> (i32, i32) {
    %c0_i32 = arith.constant 0 : i32
    %c0_i32_0 = arith.constant 0 : i32
    %c0_i32_1 = arith.constant 0 : i32
    return %c0_i32, %c0_i32_0 : i32, i32
  }
  func.func @transform_3(%arg0: i32) -> (i32, i32) {
    %c0_i32 = arith.constant 0 : i32
    %c0_i32_0 = arith.constant 0 : i32
    return %arg0, %c0_i32 : i32, i32
  }
}

module attributes {stable_mosaic.version = 11 : i64} {
  func.func @_mm_single_k_kernel(%arg0: i32, %arg1: i32, %arg2: memref<296x128xf32, #tpu.memory_space<vmem>>, %arg3: memref<128x128xf32, #tpu.memory_space<vmem>>, %arg4: memref<296x128xf32, #tpu.memory_space<vmem>>) attributes {dimension_semantics = [#tpu.dimension_semantics<parallel>, #tpu.dimension_semantics<parallel>], iteration_bounds = array<i64: 2, 1>, scalar_prefetch = 0 : i64, scratch_operands = 0 : i64, tpu.core_type = #tpu.core_type<tc>, window_params = [{transform_indices = @transform_0, window_bounds = array<i64: 296, 128>}, {transform_indices = @transform_1, window_bounds = array<i64: 128, 128>}, {transform_indices = @transform_2, window_bounds = array<i64: 296, 128>}]} {
    %c0 = arith.constant 0 : index
    %c0_0 = arith.constant 0 : index
    %0 = vector.load %arg2[%c0, %c0_0] : memref<296x128xf32, #tpu.memory_space<vmem>>, vector<296x128xf32>
    %c0_1 = arith.constant 0 : index
    %c0_2 = arith.constant 0 : index
    %1 = vector.load %arg3[%c0_1, %c0_2] : memref<128x128xf32, #tpu.memory_space<vmem>>, vector<128x128xf32>
    %cst = arith.constant dense<0.000000e+00> : vector<296x128xf32>
    %2 = tpu.matmul %0, %1, %cst {dimension_numbers = #tpu.dot_dimension_numbers<[1], [0], [0], [1], [0, 0, 1, 1], [], []>} : vector<296x128xf32>, vector<128x128xf32>, vector<296x128xf32> -> vector<296x128xf32>
    %c0_3 = arith.constant 0 : index
    %c0_4 = arith.constant 0 : index
    %3 = vector.load %arg4[%c0_3, %c0_4] : memref<296x128xf32, #tpu.memory_space<vmem>>, vector<296x128xf32>
    tpu.vector_store %arg4[%c0_3, %c0_4], %2 {strides = array<i32>} : memref<296x128xf32, #tpu.memory_space<vmem>>, vector<296x128xf32>,
    return
  }
  func.func @transform_0(%arg0: i32, %arg1: i32) -> (i32, i32) {
    %c0_i32 = arith.constant 0 : i32
    %c0_i32_0 = arith.constant 0 : i32
    return %arg0, %c0_i32 : i32, i32
  }
  func.func @transform_1(%arg0: i32, %arg1: i32) -> (i32, i32) {
    %c0_i32 = arith.constant 0 : i32
    %c0_i32_0 = arith.constant 0 : i32
    return %c0_i32, %arg1 : i32, i32
  }
  func.func @transform_2(%arg0: i32, %arg1: i32) -> (i32, i32) {
    %c0_i32 = arith.constant 0 : i32
    return %arg0, %arg1 : i32, i32
  }
}

module attributes {stable_mosaic.version = 11 : i64} {
  func.func @_colsum_kernel(%arg0: i32, %arg1: memref<64x256xf32, #tpu.memory_space<vmem>>, %arg2: memref<1x256xf32, #tpu.memory_space<vmem>>, %arg3: memref<1x256xf32, #tpu.memory_space<vmem>>) attributes {dimension_semantics = [#tpu.dimension_semantics<arbitrary>], iteration_bounds = array<i64: 1>, scalar_prefetch = 0 : i64, scratch_operands = 0 : i64, tpu.core_type = #tpu.core_type<tc>, window_params = [{transform_indices = @transform_0, window_bounds = array<i64: 64, 256>}, {pipeline_mode = #tpu.pipeline_mode<synchronous>, transform_indices = @transform_1, window_bounds = array<i64: 1, 256>}, {pipeline_mode = #tpu.pipeline_mode<synchronous>, transform_indices = @transform_2, window_bounds = array<i64: 1, 256>}]} {
    %c0_i32 = arith.constant 0 : i32
    %0 = arith.cmpi eq, %arg0, %c0_i32 : i32
    %1 = arith.extui %0 : i1 to i32
    %c0_i32_0 = arith.constant 0 : i32
    %2 = arith.cmpi ne, %1, %c0_i32_0 : i32
    scf.if %2 {
      %cst_11 = arith.constant 0.000000e+00 : f32
      %15 = vector.broadcast %cst_11 : f32 to vector<1x256xf32>
      %c0_12 = arith.constant 0 : index
      %c0_13 = arith.constant 0 : index
      %16 = vector.load %arg2[%c0_12, %c0_13] : memref<1x256xf32, #tpu.memory_space<vmem>>, vector<1x256xf32>
      tpu.vector_store %arg2[%c0_12, %c0_13], %15 {strides = array<i32>} : memref<1x256xf32, #tpu.memory_space<vmem>>, vector<1x256xf32>,
      %cst_14 = arith.constant 0.000000e+00 : f32
      %17 = vector.broadcast %cst_14 : f32 to vector<1x256xf32>
      %c0_15 = arith.constant 0 : index
      %c0_16 = arith.constant 0 : index
      %18 = vector.load %arg3[%c0_15, %c0_16] : memref<1x256xf32, #tpu.memory_space<vmem>>, vector<1x256xf32>
      tpu.vector_store %arg3[%c0_15, %c0_16], %17 {strides = array<i32>} : memref<1x256xf32, #tpu.memory_space<vmem>>, vector<1x256xf32>,
    } else {
    }
    %c0 = arith.constant 0 : index
    %c0_1 = arith.constant 0 : index
    %3 = vector.load %arg1[%c0, %c0_1] : memref<64x256xf32, #tpu.memory_space<vmem>>, vector<64x256xf32>
    %c0_2 = arith.constant 0 : index
    %c0_3 = arith.constant 0 : index
    %4 = vector.load %arg2[%c0_2, %c0_3] : memref<1x256xf32, #tpu.memory_space<vmem>>, vector<1x256xf32>
    %cst = arith.constant dense<0.000000e+00> : vector<256xf32>
    %5 = vector.multi_reduction <add>, %3, %cst [0] : vector<64x256xf32> to vector<256xf32>
    %6 = vector.shape_cast %5 : vector<256xf32> to vector<1x256xf32>
    %7 = arith.addf %4, %6 : vector<1x256xf32>
    %c0_4 = arith.constant 0 : index
    %c0_5 = arith.constant 0 : index
    %8 = vector.load %arg2[%c0_4, %c0_5] : memref<1x256xf32, #tpu.memory_space<vmem>>, vector<1x256xf32>
    tpu.vector_store %arg2[%c0_4, %c0_5], %7 {strides = array<i32>} : memref<1x256xf32, #tpu.memory_space<vmem>>, vector<1x256xf32>,
    %c0_6 = arith.constant 0 : index
    %c0_7 = arith.constant 0 : index
    %9 = vector.load %arg3[%c0_6, %c0_7] : memref<1x256xf32, #tpu.memory_space<vmem>>, vector<1x256xf32>
    %10 = arith.mulf %3, %3 : vector<64x256xf32>
    %cst_8 = arith.constant dense<0.000000e+00> : vector<256xf32>
    %11 = vector.multi_reduction <add>, %10, %cst_8 [0] : vector<64x256xf32> to vector<256xf32>
    %12 = vector.shape_cast %11 : vector<256xf32> to vector<1x256xf32>
    %13 = arith.addf %9, %12 : vector<1x256xf32>
    %c0_9 = arith.constant 0 : index
    %c0_10 = arith.constant 0 : index
    %14 = vector.load %arg3[%c0_9, %c0_10] : memref<1x256xf32, #tpu.memory_space<vmem>>, vector<1x256xf32>
    tpu.vector_store %arg3[%c0_9, %c0_10], %13 {strides = array<i32>} : memref<1x256xf32, #tpu.memory_space<vmem>>, vector<1x256xf32>,
    return
  }
  func.func @transform_0(%arg0: i32) -> (i32, i32) {
    %c0_i32 = arith.constant 0 : i32
    %c0_i32_0 = arith.constant 0 : i32
    return %arg0, %c0_i32 : i32, i32
  }
  func.func @transform_1(%arg0: i32) -> (i32, i32) {
    %c0_i32 = arith.constant 0 : i32
    %c0_i32_0 = arith.constant 0 : i32
    %c0_i32_1 = arith.constant 0 : i32
    return %c0_i32, %c0_i32_0 : i32, i32
  }
  func.func @transform_2(%arg0: i32) -> (i32, i32) {
    %c0_i32 = arith.constant 0 : i32
    %c0_i32_0 = arith.constant 0 : i32
    %c0_i32_1 = arith.constant 0 : i32
    return %c0_i32, %c0_i32_0 : i32, i32
  }
}

module attributes {stable_mosaic.version = 11 : i64} {
  func.func @_affine_act_kernel(%arg0: i32, %arg1: memref<64x256xf32, #tpu.memory_space<vmem>>, %arg2: memref<1x256xf32, #tpu.memory_space<vmem>>, %arg3: memref<1x256xf32, #tpu.memory_space<vmem>>, %arg4: memref<64x256xf32, #tpu.memory_space<vmem>>) attributes {dimension_semantics = [#tpu.dimension_semantics<parallel>], iteration_bounds = array<i64: 1>, scalar_prefetch = 0 : i64, scratch_operands = 0 : i64, tpu.core_type = #tpu.core_type<tc>, window_params = [{transform_indices = @transform_0, window_bounds = array<i64: 64, 256>}, {pipeline_mode = #tpu.pipeline_mode<synchronous>, transform_indices = @transform_1, window_bounds = array<i64: 1, 256>}, {pipeline_mode = #tpu.pipeline_mode<synchronous>, transform_indices = @transform_2, window_bounds = array<i64: 1, 256>}, {transform_indices = @transform_3, window_bounds = array<i64: 64, 256>}]} {
    %c0 = arith.constant 0 : index
    %c0_0 = arith.constant 0 : index
    %0 = vector.load %arg1[%c0, %c0_0] : memref<64x256xf32, #tpu.memory_space<vmem>>, vector<64x256xf32>
    %c0_1 = arith.constant 0 : index
    %c0_2 = arith.constant 0 : index
    %1 = vector.load %arg2[%c0_1, %c0_2] : memref<1x256xf32, #tpu.memory_space<vmem>>, vector<1x256xf32>
    %2 = vector.broadcast %1 : vector<1x256xf32> to vector<64x256xf32>
    %3 = arith.mulf %0, %2 : vector<64x256xf32>
    %c0_3 = arith.constant 0 : index
    %c0_4 = arith.constant 0 : index
    %4 = vector.load %arg3[%c0_3, %c0_4] : memref<1x256xf32, #tpu.memory_space<vmem>>, vector<1x256xf32>
    %5 = vector.broadcast %4 : vector<1x256xf32> to vector<64x256xf32>
    %6 = arith.addf %3, %5 : vector<64x256xf32>
    %cst = arith.constant 0.000000e+00 : f32
    %7 = vector.broadcast %cst : f32 to vector<64x256xf32>
    %8 = arith.maximumf %6, %7 : vector<64x256xf32>
    %c0_5 = arith.constant 0 : index
    %c0_6 = arith.constant 0 : index
    %9 = vector.load %arg4[%c0_5, %c0_6] : memref<64x256xf32, #tpu.memory_space<vmem>>, vector<64x256xf32>
    tpu.vector_store %arg4[%c0_5, %c0_6], %8 {strides = array<i32>} : memref<64x256xf32, #tpu.memory_space<vmem>>, vector<64x256xf32>,
    return
  }
  func.func @transform_0(%arg0: i32) -> (i32, i32) {
    %c0_i32 = arith.constant 0 : i32
    %c0_i32_0 = arith.constant 0 : i32
    return %arg0, %c0_i32 : i32, i32
  }
  func.func @transform_1(%arg0: i32) -> (i32, i32) {
    %c0_i32 = arith.constant 0 : i32
    %c0_i32_0 = arith.constant 0 : i32
    %c0_i32_1 = arith.constant 0 : i32
    return %c0_i32, %c0_i32_0 : i32, i32
  }
  func.func @transform_2(%arg0: i32) -> (i32, i32) {
    %c0_i32 = arith.constant 0 : i32
    %c0_i32_0 = arith.constant 0 : i32
    %c0_i32_1 = arith.constant 0 : i32
    return %c0_i32, %c0_i32_0 : i32, i32
  }
  func.func @transform_3(%arg0: i32) -> (i32, i32) {
    %c0_i32 = arith.constant 0 : i32
    %c0_i32_0 = arith.constant 0 : i32
    return %arg0, %c0_i32 : i32, i32
  }
}

module attributes {stable_mosaic.version = 11 : i64} {
  func.func @_mm_single_k_kernel(%arg0: i32, %arg1: i32, %arg2: memref<440x128xf32, #tpu.memory_space<vmem>>, %arg3: memref<128x128xf32, #tpu.memory_space<vmem>>, %arg4: memref<440x128xf32, #tpu.memory_space<vmem>>) attributes {dimension_semantics = [#tpu.dimension_semantics<parallel>, #tpu.dimension_semantics<parallel>], iteration_bounds = array<i64: 5, 1>, scalar_prefetch = 0 : i64, scratch_operands = 0 : i64, tpu.core_type = #tpu.core_type<tc>, window_params = [{transform_indices = @transform_0, window_bounds = array<i64: 440, 128>}, {transform_indices = @transform_1, window_bounds = array<i64: 128, 128>}, {transform_indices = @transform_2, window_bounds = array<i64: 440, 128>}]} {
    %c0 = arith.constant 0 : index
    %c0_0 = arith.constant 0 : index
    %0 = vector.load %arg2[%c0, %c0_0] : memref<440x128xf32, #tpu.memory_space<vmem>>, vector<440x128xf32>
    %c0_1 = arith.constant 0 : index
    %c0_2 = arith.constant 0 : index
    %1 = vector.load %arg3[%c0_1, %c0_2] : memref<128x128xf32, #tpu.memory_space<vmem>>, vector<128x128xf32>
    %cst = arith.constant dense<0.000000e+00> : vector<440x128xf32>
    %2 = tpu.matmul %0, %1, %cst {dimension_numbers = #tpu.dot_dimension_numbers<[1], [0], [0], [1], [0, 0, 1, 1], [], []>} : vector<440x128xf32>, vector<128x128xf32>, vector<440x128xf32> -> vector<440x128xf32>
    %c0_3 = arith.constant 0 : index
    %c0_4 = arith.constant 0 : index
    %3 = vector.load %arg4[%c0_3, %c0_4] : memref<440x128xf32, #tpu.memory_space<vmem>>, vector<440x128xf32>
    tpu.vector_store %arg4[%c0_3, %c0_4], %2 {strides = array<i32>} : memref<440x128xf32, #tpu.memory_space<vmem>>, vector<440x128xf32>,
    return
  }
  func.func @transform_0(%arg0: i32, %arg1: i32) -> (i32, i32) {
    %c0_i32 = arith.constant 0 : i32
    %c0_i32_0 = arith.constant 0 : i32
    return %arg0, %c0_i32 : i32, i32
  }
  func.func @transform_1(%arg0: i32, %arg1: i32) -> (i32, i32) {
    %c0_i32 = arith.constant 0 : i32
    %c0_i32_0 = arith.constant 0 : i32
    return %c0_i32, %arg1 : i32, i32
  }
  func.func @transform_2(%arg0: i32, %arg1: i32) -> (i32, i32) {
    %c0_i32 = arith.constant 0 : i32
    return %arg0, %arg1 : i32, i32
  }
}

module attributes {stable_mosaic.version = 11 : i64} {
  func.func @_colsum_kernel(%arg0: i32, %arg1: memref<128x256xf32, #tpu.memory_space<vmem>>, %arg2: memref<1x256xf32, #tpu.memory_space<vmem>>, %arg3: memref<1x256xf32, #tpu.memory_space<vmem>>) attributes {dimension_semantics = [#tpu.dimension_semantics<arbitrary>], iteration_bounds = array<i64: 1>, scalar_prefetch = 0 : i64, scratch_operands = 0 : i64, tpu.core_type = #tpu.core_type<tc>, window_params = [{transform_indices = @transform_0, window_bounds = array<i64: 128, 256>}, {pipeline_mode = #tpu.pipeline_mode<synchronous>, transform_indices = @transform_1, window_bounds = array<i64: 1, 256>}, {pipeline_mode = #tpu.pipeline_mode<synchronous>, transform_indices = @transform_2, window_bounds = array<i64: 1, 256>}]} {
    %c0_i32 = arith.constant 0 : i32
    %0 = arith.cmpi eq, %arg0, %c0_i32 : i32
    %1 = arith.extui %0 : i1 to i32
    %c0_i32_0 = arith.constant 0 : i32
    %2 = arith.cmpi ne, %1, %c0_i32_0 : i32
    scf.if %2 {
      %cst_11 = arith.constant 0.000000e+00 : f32
      %15 = vector.broadcast %cst_11 : f32 to vector<1x256xf32>
      %c0_12 = arith.constant 0 : index
      %c0_13 = arith.constant 0 : index
      %16 = vector.load %arg2[%c0_12, %c0_13] : memref<1x256xf32, #tpu.memory_space<vmem>>, vector<1x256xf32>
      tpu.vector_store %arg2[%c0_12, %c0_13], %15 {strides = array<i32>} : memref<1x256xf32, #tpu.memory_space<vmem>>, vector<1x256xf32>,
      %cst_14 = arith.constant 0.000000e+00 : f32
      %17 = vector.broadcast %cst_14 : f32 to vector<1x256xf32>
      %c0_15 = arith.constant 0 : index
      %c0_16 = arith.constant 0 : index
      %18 = vector.load %arg3[%c0_15, %c0_16] : memref<1x256xf32, #tpu.memory_space<vmem>>, vector<1x256xf32>
      tpu.vector_store %arg3[%c0_15, %c0_16], %17 {strides = array<i32>} : memref<1x256xf32, #tpu.memory_space<vmem>>, vector<1x256xf32>,
    } else {
    }
    %c0 = arith.constant 0 : index
    %c0_1 = arith.constant 0 : index
    %3 = vector.load %arg1[%c0, %c0_1] : memref<128x256xf32, #tpu.memory_space<vmem>>, vector<128x256xf32>
    %c0_2 = arith.constant 0 : index
    %c0_3 = arith.constant 0 : index
    %4 = vector.load %arg2[%c0_2, %c0_3] : memref<1x256xf32, #tpu.memory_space<vmem>>, vector<1x256xf32>
    %cst = arith.constant dense<0.000000e+00> : vector<256xf32>
    %5 = vector.multi_reduction <add>, %3, %cst [0] : vector<128x256xf32> to vector<256xf32>
    %6 = vector.shape_cast %5 : vector<256xf32> to vector<1x256xf32>
    %7 = arith.addf %4, %6 : vector<1x256xf32>
    %c0_4 = arith.constant 0 : index
    %c0_5 = arith.constant 0 : index
    %8 = vector.load %arg2[%c0_4, %c0_5] : memref<1x256xf32, #tpu.memory_space<vmem>>, vector<1x256xf32>
    tpu.vector_store %arg2[%c0_4, %c0_5], %7 {strides = array<i32>} : memref<1x256xf32, #tpu.memory_space<vmem>>, vector<1x256xf32>,
    %c0_6 = arith.constant 0 : index
    %c0_7 = arith.constant 0 : index
    %9 = vector.load %arg3[%c0_6, %c0_7] : memref<1x256xf32, #tpu.memory_space<vmem>>, vector<1x256xf32>
    %10 = arith.mulf %3, %3 : vector<128x256xf32>
    %cst_8 = arith.constant dense<0.000000e+00> : vector<256xf32>
    %11 = vector.multi_reduction <add>, %10, %cst_8 [0] : vector<128x256xf32> to vector<256xf32>
    %12 = vector.shape_cast %11 : vector<256xf32> to vector<1x256xf32>
    %13 = arith.addf %9, %12 : vector<1x256xf32>
    %c0_9 = arith.constant 0 : index
    %c0_10 = arith.constant 0 : index
    %14 = vector.load %arg3[%c0_9, %c0_10] : memref<1x256xf32, #tpu.memory_space<vmem>>, vector<1x256xf32>
    tpu.vector_store %arg3[%c0_9, %c0_10], %13 {strides = array<i32>} : memref<1x256xf32, #tpu.memory_space<vmem>>, vector<1x256xf32>,
    return
  }
  func.func @transform_0(%arg0: i32) -> (i32, i32) {
    %c0_i32 = arith.constant 0 : i32
    %c0_i32_0 = arith.constant 0 : i32
    return %arg0, %c0_i32 : i32, i32
  }
  func.func @transform_1(%arg0: i32) -> (i32, i32) {
    %c0_i32 = arith.constant 0 : i32
    %c0_i32_0 = arith.constant 0 : i32
    %c0_i32_1 = arith.constant 0 : i32
    return %c0_i32, %c0_i32_0 : i32, i32
  }
  func.func @transform_2(%arg0: i32) -> (i32, i32) {
    %c0_i32 = arith.constant 0 : i32
    %c0_i32_0 = arith.constant 0 : i32
    %c0_i32_1 = arith.constant 0 : i32
    return %c0_i32, %c0_i32_0 : i32, i32
  }
}

module attributes {stable_mosaic.version = 11 : i64} {
  func.func @_affine_act_kernel(%arg0: i32, %arg1: memref<128x256xf32, #tpu.memory_space<vmem>>, %arg2: memref<1x256xf32, #tpu.memory_space<vmem>>, %arg3: memref<1x256xf32, #tpu.memory_space<vmem>>, %arg4: memref<128x256xf32, #tpu.memory_space<vmem>>) attributes {dimension_semantics = [#tpu.dimension_semantics<parallel>], iteration_bounds = array<i64: 1>, scalar_prefetch = 0 : i64, scratch_operands = 0 : i64, tpu.core_type = #tpu.core_type<tc>, window_params = [{transform_indices = @transform_0, window_bounds = array<i64: 128, 256>}, {pipeline_mode = #tpu.pipeline_mode<synchronous>, transform_indices = @transform_1, window_bounds = array<i64: 1, 256>}, {pipeline_mode = #tpu.pipeline_mode<synchronous>, transform_indices = @transform_2, window_bounds = array<i64: 1, 256>}, {transform_indices = @transform_3, window_bounds = array<i64: 128, 256>}]} {
    %c0 = arith.constant 0 : index
    %c0_0 = arith.constant 0 : index
    %0 = vector.load %arg1[%c0, %c0_0] : memref<128x256xf32, #tpu.memory_space<vmem>>, vector<128x256xf32>
    %c0_1 = arith.constant 0 : index
    %c0_2 = arith.constant 0 : index
    %1 = vector.load %arg2[%c0_1, %c0_2] : memref<1x256xf32, #tpu.memory_space<vmem>>, vector<1x256xf32>
    %2 = vector.broadcast %1 : vector<1x256xf32> to vector<128x256xf32>
    %3 = arith.mulf %0, %2 : vector<128x256xf32>
    %c0_3 = arith.constant 0 : index
    %c0_4 = arith.constant 0 : index
    %4 = vector.load %arg3[%c0_3, %c0_4] : memref<1x256xf32, #tpu.memory_space<vmem>>, vector<1x256xf32>
    %5 = vector.broadcast %4 : vector<1x256xf32> to vector<128x256xf32>
    %6 = arith.addf %3, %5 : vector<128x256xf32>
    %cst = arith.constant 0.000000e+00 : f32
    %7 = vector.broadcast %cst : f32 to vector<128x256xf32>
    %8 = arith.maximumf %6, %7 : vector<128x256xf32>
    %c0_5 = arith.constant 0 : index
    %c0_6 = arith.constant 0 : index
    %9 = vector.load %arg4[%c0_5, %c0_6] : memref<128x256xf32, #tpu.memory_space<vmem>>, vector<128x256xf32>
    tpu.vector_store %arg4[%c0_5, %c0_6], %8 {strides = array<i32>} : memref<128x256xf32, #tpu.memory_space<vmem>>, vector<128x256xf32>,
    return
  }
  func.func @transform_0(%arg0: i32) -> (i32, i32) {
    %c0_i32 = arith.constant 0 : i32
    %c0_i32_0 = arith.constant 0 : i32
    return %arg0, %c0_i32 : i32, i32
  }
  func.func @transform_1(%arg0: i32) -> (i32, i32) {
    %c0_i32 = arith.constant 0 : i32
    %c0_i32_0 = arith.constant 0 : i32
    %c0_i32_1 = arith.constant 0 : i32
    return %c0_i32, %c0_i32_0 : i32, i32
  }
  func.func @transform_2(%arg0: i32) -> (i32, i32) {
    %c0_i32 = arith.constant 0 : i32
    %c0_i32_0 = arith.constant 0 : i32
    %c0_i32_1 = arith.constant 0 : i32
    return %c0_i32, %c0_i32_0 : i32, i32
  }
  func.func @transform_3(%arg0: i32) -> (i32, i32) {
    %c0_i32 = arith.constant 0 : i32
    %c0_i32_0 = arith.constant 0 : i32
    return %arg0, %c0_i32 : i32, i32
  }
}

module attributes {stable_mosaic.version = 11 : i64} {
  func.func @_mm_single_k_kernel(%arg0: i32, %arg1: i32, %arg2: memref<504x128xf32, #tpu.memory_space<vmem>>, %arg3: memref<128x128xf32, #tpu.memory_space<vmem>>, %arg4: memref<504x128xf32, #tpu.memory_space<vmem>>) attributes {dimension_semantics = [#tpu.dimension_semantics<parallel>, #tpu.dimension_semantics<parallel>], iteration_bounds = array<i64: 17, 1>, scalar_prefetch = 0 : i64, scratch_operands = 0 : i64, tpu.core_type = #tpu.core_type<tc>, window_params = [{transform_indices = @transform_0, window_bounds = array<i64: 504, 128>}, {transform_indices = @transform_1, window_bounds = array<i64: 128, 128>}, {transform_indices = @transform_2, window_bounds = array<i64: 504, 128>}]} {
    %c0 = arith.constant 0 : index
    %c0_0 = arith.constant 0 : index
    %0 = vector.load %arg2[%c0, %c0_0] : memref<504x128xf32, #tpu.memory_space<vmem>>, vector<504x128xf32>
    %c0_1 = arith.constant 0 : index
    %c0_2 = arith.constant 0 : index
    %1 = vector.load %arg3[%c0_1, %c0_2] : memref<128x128xf32, #tpu.memory_space<vmem>>, vector<128x128xf32>
    %cst = arith.constant dense<0.000000e+00> : vector<504x128xf32>
    %2 = tpu.matmul %0, %1, %cst {dimension_numbers = #tpu.dot_dimension_numbers<[1], [0], [0], [1], [0, 0, 1, 1], [], []>} : vector<504x128xf32>, vector<128x128xf32>, vector<504x128xf32> -> vector<504x128xf32>
    %3 = math.tanh %2 : vector<504x128xf32>
    %c0_3 = arith.constant 0 : index
    %c0_4 = arith.constant 0 : index
    %4 = vector.load %arg4[%c0_3, %c0_4] : memref<504x128xf32, #tpu.memory_space<vmem>>, vector<504x128xf32>
    tpu.vector_store %arg4[%c0_3, %c0_4], %3 {strides = array<i32>} : memref<504x128xf32, #tpu.memory_space<vmem>>, vector<504x128xf32>,
    return
  }
  func.func @transform_0(%arg0: i32, %arg1: i32) -> (i32, i32) {
    %c0_i32 = arith.constant 0 : i32
    %c0_i32_0 = arith.constant 0 : i32
    return %arg0, %c0_i32 : i32, i32
  }
  func.func @transform_1(%arg0: i32, %arg1: i32) -> (i32, i32) {
    %c0_i32 = arith.constant 0 : i32
    %c0_i32_0 = arith.constant 0 : i32
    return %c0_i32, %arg1 : i32, i32
  }
  func.func @transform_2(%arg0: i32, %arg1: i32) -> (i32, i32) {
    %c0_i32 = arith.constant 0 : i32
    return %arg0, %arg1 : i32, i32
  }
}

</mosaic_0001>

<llo_original>
// kernel: generator_forward.16
$region0: #{generator_forward.16}
  #allocation0 [shape = 'u32[]', space=smem, size = 0x4, offset = 0x4, fixed_abs, tag = 'smem constant byte address 0x4 - core index']
  #allocation1 [shape = 'u32[144,128]{1,0:T(1,128)}', space=vmem, size = 0x12000, scoped, tag = 'internal scratch']
  %s0 = inlined_call_operand.vmem [shape: f32[8,128], index: 0, kind: input, shape index: {}]
  %s1 = inlined_call_operand.vmem [shape: f32[128,256], index: 1, kind: input, shape index: {}]
  %s2 = inlined_call_operand.vmem [shape: f32[8,256], index: 2, kind: output, shape index: {}]
  %s3 = sld [smem:[#allocation0]]
  $region18: #{generator_forward.16} parent=0
    _
  %s5 = ssub.s32 1, %s3
  %s6 = scalar_select 0, %s5, %s3
  // Predicated region
  $region2: #{generator_forward.16} parent=0 // pred_check
    _
  $region3: #{generator_forward.16} parent=0 // pred_check_branch
    %8 = sbr.rel (0) target = $region5
  $region4: #{generator_forward.16} parent=0 // pred_region
    _
  $region5: #{generator_forward.16} parent=0 // pred_fallthru
    _
  // Predicated region
  $region6: #{generator_forward.16} parent=0 // pred_check
    _
  $region7: #{generator_forward.16} parent=0 // pred_check_branch
    %10 = sbr.rel (0) target = $region9
  $region8: #{generator_forward.16} parent=0 // pred_region
    _
  $region9: #{generator_forward.16} parent=0 // pred_fallthru
    _
  %v11 = vld [vmem:[%s0] sm:$0xff]
  %v12 = vld [vmem:[%s1] sm:$0xff]
  %v13 = vld [vmem:[%s1 + $0x8] sm:$0xff]
  %v14 = vld [vmem:[%s1 + $0x10] sm:$0xff]
  %v15 = vld [vmem:[%s1 + $0x18] sm:$0xff]
  %v16 = vld [vmem:[%s1 + $0x20] sm:$0xff]
  %v17 = vld [vmem:[%s1 + $0x28] sm:$0xff]
  %v18 = vld [vmem:[%s1 + $0x30] sm:$0xff]
  %v19 = vld [vmem:[%s1 + $0x38] sm:$0xff]
  %v20 = vld [vmem:[%s1 + $0x40] sm:$0xff]
  %v21 = vld [vmem:[%s1 + $0x48] sm:$0xff]
  %v22 = vld [vmem:[%s1 + $0x50] sm:$0xff]
  %v23 = vld [vmem:[%s1 + $0x58] sm:$0xff]
  %v24 = vld [vmem:[%s1 + $0x60] sm:$0xff]
  %v25 = vld [vmem:[%s1 + $0x68] sm:$0xff]
  %v26 = vld [vmem:[%s1 + $0x70] sm:$0xff]
  %v27 = vld [vmem:[%s1 + $0x78] sm:$0xff]
  %v28 = vld [vmem:[%s1 + $0x80] sm:$0xff]
  %v29 = vld [vmem:[%s1 + $0x88] sm:$0xff]
  %v30 = vld [vmem:[%s1 + $0x90] sm:$0xff]
  %v31 = vld [vmem:[%s1 + $0x98] sm:$0xff]
  %v32 = vld [vmem:[%s1 + $0xa0] sm:$0xff]
  %v33 = vld [vmem:[%s1 + $0xa8] sm:$0xff]
  %v34 = vld [vmem:[%s1 + $0xb0] sm:$0xff]
  %v35 = vld [vmem:[%s1 + $0xb8] sm:$0xff]
  %v36 = vld [vmem:[%s1 + $0xc0] sm:$0xff]
  %v37 = vld [vmem:[%s1 + $0xc8] sm:$0xff]
  %v38 = vld [vmem:[%s1 + $0xd0] sm:$0xff]
  %v39 = vld [vmem:[%s1 + $0xd8] sm:$0xff]
  %v40 = vld [vmem:[%s1 + $0xe0] sm:$0xff]
  %v41 = vld [vmem:[%s1 + $0xe8] sm:$0xff]
  %v42 = vld [vmem:[%s1 + $0xf0] sm:$0xff]
  %v43 = vld [vmem:[%s1 + $0xf8] sm:$0xff]
  %44 = vmatprep.subr.mxu0 %v13
  %45 = vmatpush1.msra.mxu0 %v12
  %46 = vmatprep.subr.mxu0 %v15
  %47 = vmatpush1.msra.mxu0 %v14
  %48 = vmatprep.subr.mxu0 %v17
  %49 = vmatpush1.msra.mxu0 %v16
  %50 = vmatprep.subr.mxu0 %v19
  %51 = vmatpush1.msra.mxu0 %v18
  %52 = vmatprep.subr.mxu0 %v21
  %53 = vmatpush1.msra.mxu0 %v20
  %54 = vmatprep.subr.mxu0 %v23
  %55 = vmatpush1.msra.mxu0 %v22
  %56 = vmatprep.subr.mxu0 %v25
  %57 = vmatpush1.msra.mxu0 %v24
  %58 = vmatprep.subr.mxu0 %v27
  %59 = vmatpush1.msra.mxu0 %v26
  %60 = vmatprep.subr.mxu0 %v29
  %61 = vmatpush1.msra.mxu0 %v28
  %62 = vmatprep.subr.mxu0 %v31
  %63 = vmatpush1.msra.mxu0 %v30
  %64 = vmatprep.subr.mxu0 %v33
  %65 = vmatpush1.msra.mxu0 %v32
  %66 = vmatprep.subr.mxu0 %v35
  %67 = vmatpush1.msra.mxu0 %v34
  %68 = vmatprep.subr.mxu0 %v37
  %69 = vmatpush1.msra.mxu0 %v36
  %70 = vmatprep.subr.mxu0 %v39
  %71 = vmatpush1.msra.mxu0 %v38
  %72 = vmatprep.subr.mxu0 %v41
  %73 = vmatpush1.msra.mxu0 %v40
  %74 = vmatprep.subr.mxu0 %v43
  %75 = vmatpush1.msra.mxu0 %v42
  %76 = vmatprep.subr.mxu0 0.0
  %77 = vmatpush1.msra.mxu0 0.0
  %78 = vmatprep.subr.mxu0 0.0
  %79 = vmatpush1.msra.mxu0 0.0
  %80 = vmatprep.subr.mxu0 0.0
  %81 = vmatpush1.msra.mxu0 0.0
  %82 = vmatprep.subr.mxu0 0.0
  %83 = vmatpush1.msra.mxu0 0.0
  %84 = vmatprep.subr.mxu0 0.0
  %85 = vmatpush1.msra.mxu0 0.0
  %86 = vmatprep.subr.mxu0 0.0
  %87 = vmatpush1.msra.mxu0 0.0
  %88 = vmatprep.subr.mxu0 0.0
  %89 = vmatpush1.msra.mxu0 0.0
  %90 = vmatprep.subr.mxu0 0.0
  %91 = vmatpush1.msra.mxu0 0.0
  %92 = vmatprep.subr.mxu0 0.0
  %93 = vmatpush1.msra.mxu0 0.0
  %94 = vmatprep.subr.mxu0 0.0
  %95 = vmatpush1.msra.mxu0 0.0
  %96 = vmatprep.subr.mxu0 0.0
  %97 = vmatpush1.msra.mxu0 0.0
  %98 = vmatprep.subr.mxu0 0.0
  %99 = vmatpush1.msra.mxu0 0.0
  %100 = vmatprep.subr.mxu0 0.0
  %101 = vmatpush1.msra.mxu0 0.0
  %102 = vmatprep.subr.mxu0 0.0
  %103 = vmatpush1.msra.mxu0 0.0
  %104 = vmatprep.subr.mxu0 0.0
  %105 = vmatpush1.msra.mxu0 0.0
  %106 = vmatprep.subr.mxu0 0.0
  %107 = vmatpush1.msra.mxu0 0.0
  %108 = vmatprep.mubr.f32.mxu0 0.0
  %109 = vmatmul.mubr.f32.gmra.mrb[0].mxu0 %v11
  %v110 = vpop.f32.mrb[0].mxu0
  %v111 = vadd.f32 0.0, %v110
  %v112 = vpop.f32.mrb[0].mxu0
  %v113 = vadd.f32 0.0, %v112
  %114 = vdwg.mxu0
  %115 = vst [vmem:[%s2] sm:$0xff] %v111
  %116 = vst [vmem:[%s2 + $0x8] sm:$0xff] %v113
  // Predicated region
  $region10: #{generator_forward.16} parent=0 // pred_check
    _
  $region11: #{generator_forward.16} parent=0 // pred_check_branch
    %118 = sbr.rel (0) target = $region13
  $region12: #{generator_forward.16} parent=0 // pred_region
    _
  $region13: #{generator_forward.16} parent=0 // pred_fallthru
    _
  // Predicated region
  $region14: #{generator_forward.16} parent=0 // pred_check
    _
  $region15: #{generator_forward.16} parent=0 // pred_check_branch
    %120 = sbr.rel (0) target = $region17
  $region16: #{generator_forward.16} parent=0 // pred_region
    _
  $region17: #{generator_forward.16} parent=0 // pred_fallthru
    _

// kernel: generator_forward.17
$region0: #{generator_forward.17}
  #allocation0 [shape = 'u32[]', space=smem, size = 0x4, offset = 0x4, fixed_abs, tag = 'smem constant byte address 0x4 - core index']
  #allocation1 [shape = 'u32[144,128]{1,0:T(1,128)}', space=vmem, size = 0x12000, scoped, tag = 'internal scratch']
  %s0 = inlined_call_operand.vmem [shape: f32[8,256], index: 0, kind: input, shape index: {}]
  %s1 = inlined_call_operand.vmem [shape: f32[1,256], index: 1, kind: output, shape index: {0}]
  %s2 = inlined_call_operand.vmem [shape: f32[1,256], index: 2, kind: output, shape index: {1}]
  %3 = xla_tuple %s1, %s2
  %s4 = sld [smem:[#allocation0]]
  $region26: #{generator_forward.17} parent=0
    _
  %s6 = ssub.s32 1, %s4
  %s7 = scalar_select 0, %s6, %s4
  // Predicated region
  $region2: #{generator_forward.17} parent=0 // pred_check
    _
  $region3: #{generator_forward.17} parent=0 // pred_check_branch
    %9 = sbr.rel (0) target = $region5
  $region4: #{generator_forward.17} parent=0 // pred_region
    _
  $region5: #{generator_forward.17} parent=0 // pred_fallthru
    _
  %p10 = scmp.eq.s32.totalorder 0, 0
  // Predicated region
  $region6: #{generator_forward.17} parent=0 // pred_check
    %p11 = pneg %p10
  $region7: #{generator_forward.17} parent=0 // pred_check_branch
    %13 = sbr.rel (%p11) target = $region9
  $region8: #{generator_forward.17} parent=0 // pred_region
    %v14 = vlaneseq
    %vm15 = vcmp.ge.s32.totalorder %v14, 0
    %vm16 = vcmp.lt.s32.totalorder %v14, 256
    %vm17 = vmand %vm15, %vm16
    %18 = vst.msk [vmem:[%s1] sm:$0x3] %vm17, 0.0
    %19 = vst.msk [vmem:[%s2] sm:$0x3] %vm17, 0.0
  $region9: #{generator_forward.17} parent=0 // pred_fallthru
    _
  %v20 = vld [vmem:[%s0] sm:$0xff]
  %v21 = vld [vmem:[%s0 + $0x8] sm:$0xff]
  %v22 = vld [vmem:[%s1] sm:$0x3]
  %v23 = vrot.slane %v20, 4
  %v24 = vadd.f32 %v20, %v23
  %v25 = vrot.slane %v24, 2
  %v26 = vadd.f32 %v24, %v25
  %v27 = vrot.slane %v26, 1
  %v28 = vadd.f32 %v26, %v27
  %v29 = vrot.slane %v21, 4
  %v30 = vadd.f32 %v21, %v29
  %v31 = vrot.slane %v30, 2
  %v32 = vadd.f32 %v30, %v31
  %v33 = vrot.slane %v32, 1
  %v34 = vadd.f32 %v32, %v33
  %v37 = vcombine.low %v28, %v34
  %v39 = vunpack.c.l.s4 1966171168
  %v40 = vunpack.c.0.s8 %v39
  %v41 = vlaneseq
  %v42 = vshrl.u32 %v41, 7
  %v43 = vsub.s32 %v40, %v42
  %v44 = vrot.slane %v37, %v43
  %v46 = vunpack.c.l.s4 1966171168
  %v47 = vunpack.c.0.s8 %v46
  %v48 = vlaneseq
  %v49 = vshrl.u32 %v48, 7
  %v50 = vsub.s32 %v47, %v49
  %v51 = vrot.slane %v44, %v50
  %v53 = vadd.f32 %v22, %v51
  %v54 = vlaneseq
  %vm55 = vcmp.ge.s32.totalorder %v54, 0
  %vm56 = vcmp.lt.s32.totalorder %v54, 256
  %vm57 = vmand %vm55, %vm56
  %58 = vst.msk [vmem:[%s1] sm:$0x3] %vm57, %v53
  %v59 = vld [vmem:[%s2] sm:$0x3]
  %v60 = vmul.f32 %v20, %v20
  %v61 = vmul.f32 %v21, %v21
  %v62 = vrot.slane %v60, 4
  %v63 = vadd.f32 %v60, %v62
  %v64 = vrot.slane %v63, 2
  %v65 = vadd.f32 %v63, %v64
  %v66 = vrot.slane %v65, 1
  %v67 = vadd.f32 %v65, %v66
  %v68 = vrot.slane %v61, 4
  %v69 = vadd.f32 %v61, %v68
  %v70 = vrot.slane %v69, 2
  %v71 = vadd.f32 %v69, %v70
  %v72 = vrot.slane %v71, 1
  %v73 = vadd.f32 %v71, %v72
  %v76 = vcombine.low %v67, %v73
  %v78 = vunpack.c.l.s4 1966171168
  %v79 = vunpack.c.0.s8 %v78
  %v80 = vlaneseq
  %v81 = vshrl.u32 %v80, 7
  %v82 = vsub.s32 %v79, %v81
  %v83 = vrot.slane %v76, %v82
  %v85 = vunpack.c.l.s4 1966171168
  %v86 = vunpack.c.0.s8 %v85
  %v87 = vlaneseq
  %v88 = vshrl.u32 %v87, 7
  %v89 = vsub.s32 %v86, %v88
  %v90 = vrot.slane %v83, %v89
  %v92 = vadd.f32 %v59, %v90
  %93 = vst.msk [vmem:[%s2] sm:$0x3] %vm57, %v92
  // Predicated region
  $region10: #{generator_forward.17} parent=0 // pred_check
    _
  $region11: #{generator_forward.17} parent=0 // pred_check_branch
    %95 = sbr.rel (0) target = $region13
  $region12: #{generator_forward.17} parent=0 // pred_region
    _
  $region13: #{generator_forward.17} parent=0 // pred_fallthru
    _
  // Predicated region
  $region14: #{generator_forward.17} parent=0 // pred_check
    _
  $region15: #{generator_forward.17} parent=0 // pred_check_branch
    %97 = sbr.rel (0) target = $region17
  $region16: #{generator_forward.17} parent=0 // pred_region
    _
  $region17: #{generator_forward.17} parent=0 // pred_fallthru
    _
  // Predicated region
  $region18: #{generator_forward.17} parent=0 // pred_check
    _
  $region19: #{generator_forward.17} parent=0 // pred_check_branch
    %99 = sbr.rel (0) target = $region21
  $region20: #{generator_forward.17} parent=0 // pred_region
    _
  $region21: #{generator_forward.17} parent=0 // pred_fallthru
    _
  // Predicated region
  $region22: #{generator_forward.17} parent=0 // pred_check
    _
  $region23: #{generator_forward.17} parent=0 // pred_check_branch
    %101 = sbr.rel (0) target = $region25
  $region24: #{generator_forward.17} parent=0 // pred_region
    _
  $region25: #{generator_forward.17} parent=0 // pred_fallthru
    _

// kernel: generator_forward.18
$region0: #{generator_forward.18}
  #allocation0 [shape = 'u32[]', space=smem, size = 0x4, offset = 0x4, fixed_abs, tag = 'smem constant byte address 0x4 - core index']
  #allocation1 [shape = 'u32[144,128]{1,0:T(1,128)}', space=vmem, size = 0x12000, scoped, tag = 'internal scratch']
  %s0 = inlined_call_operand.vmem [shape: f32[8,256], index: 0, kind: input, shape index: {}]
  %s1 = inlined_call_operand.vmem [shape: f32[1,256], index: 1, kind: input, shape index: {}]
  %s2 = inlined_call_operand.vmem [shape: f32[1,256], index: 2, kind: input, shape index: {}]
  %s3 = inlined_call_operand.vmem [shape: f32[8,256], index: 3, kind: output, shape index: {}]
  %s4 = sld [smem:[#allocation0]]
  $region22: #{generator_forward.18} parent=0
    _
  %s6 = ssub.s32 1, %s4
  %s7 = scalar_select 0, %s6, %s4
  // Predicated region
  $region2: #{generator_forward.18} parent=0 // pred_check
    _
  $region3: #{generator_forward.18} parent=0 // pred_check_branch
    %9 = sbr.rel (0) target = $region5
  $region4: #{generator_forward.18} parent=0 // pred_region
    _
  $region5: #{generator_forward.18} parent=0 // pred_fallthru
    _
  // Predicated region
  $region6: #{generator_forward.18} parent=0 // pred_check
    _
  $region7: #{generator_forward.18} parent=0 // pred_check_branch
    %11 = sbr.rel (0) target = $region9
  $region8: #{generator_forward.18} parent=0 // pred_region
    _
  $region9: #{generator_forward.18} parent=0 // pred_fallthru
    _
  // Predicated region
  $region10: #{generator_forward.18} parent=0 // pred_check
    _
  $region11: #{generator_forward.18} parent=0 // pred_check_branch
    %13 = sbr.rel (0) target = $region13
  $region12: #{generator_forward.18} parent=0 // pred_region
    _
  $region13: #{generator_forward.18} parent=0 // pred_fallthru
    _
  %v14 = vld [vmem:[%s0] sm:$0xff]
  %v15 = vld [vmem:[%s0 + $0x8] sm:$0xff]
  %v16 = vld [vmem:[%s1] sm:$0x3]
  %v18 = vlaneseq
  %v19 = vshrl.u32 %v18, 7
  %v20 = vsub.s32 0, %v19
  %v21 = vrot.slane %v16, %v20
  %v22 = vlaneseq
  %v23 = vshrl.u32 %v22, 7
  %v24 = vsub.s32 1, %v23
  %v25 = vrot.slane %v16, %v24
  %v28 = vmul.f32 %v14, %v21
  %v29 = vmul.f32 %v15, %v25
  %v30 = vld [vmem:[%s2] sm:$0x3]
  %v32 = vlaneseq
  %v33 = vshrl.u32 %v32, 7
  %v34 = vsub.s32 0, %v33
  %v35 = vrot.slane %v30, %v34
  %v36 = vlaneseq
  %v37 = vshrl.u32 %v36, 7
  %v38 = vsub.s32 1, %v37
  %v39 = vrot.slane %v30, %v38
  %v42 = vadd.f32 %v28, %v35
  %v43 = vadd.f32 %v29, %v39
  %v44 = vmax.f32 %v42, 0.0
  %v45 = vmax.f32 %v43, 0.0
  %46 = vst [vmem:[%s3] sm:$0xff] %v44
  %47 = vst [vmem:[%s3 + $0x8] sm:$0xff] %v45
  // Predicated region
  $region14: #{generator_forward.18} parent=0 // pred_check
    _
  $region15: #{generator_forward.18} parent=0 // pred_check_branch
    %49 = sbr.rel (0) target = $region17
  $region16: #{generator_forward.18} parent=0 // pred_region
    _
  $region17: #{generator_forward.18} parent=0 // pred_fallthru
    _
  // Predicated region
  $region18: #{generator_forward.18} parent=0 // pred_check
    _
  $region19: #{generator_forward.18} parent=0 // pred_check_branch
    %51 = sbr.rel (0) target = $region21
  $region20: #{generator_forward.18} parent=0 // pred_region
    _
  $region21: #{generator_forward.18} parent=0 // pred_fallthru
    _

// kernel: squeeze.88
$region0: #{squeeze.88}
  %s0 = inlined_call_operand.vmem [shape: f32[256], index: 0, kind: input, shape index: {}]
  %s1 = inlined_call_operand.vmem [shape: f32[8,32], index: 1, kind: output, shape index: {}]
  $region1: #{squeeze.88} parent=0
    #allocation0 [shape = 'u8[4096]{0}', space=vmem, size = 0x1000, scoped, tag = 'scoped mem for input reshape']
    %s3 = sshllo.u32 0, 2
    %v4 = vld [vmem:[%s0] sm:%s3]
    %5 = vst [vmem:[#allocation0] sm:%s3] %v4
    %v6 = vld [vmem:[#allocation0] sm:$0x3]
    %vm7 = vcmask 261120
    %8 = vst.msk [vmem:[%s1] ss:$4 sm:$0x3] %vm7, %v6
    %v9 = vld [vmem:[#allocation0] sm:$0x3]
    %10 = vrot.lane.b32.xlu0 %v9, 96
    %v11 = vpop.permute.xlu0 %10
    %vm12 = vcmask 261120
    %s13 = scalar_lea.vmem %s1, 1
    %14 = vst.msk [vmem:[%s13] ss:$4 sm:$0x3] %vm12, %v11
    %v15 = vld [vmem:[#allocation0] sm:$0x3]
    %16 = vrot.lane.b32.xlu0 %v15, 64
    %v17 = vpop.permute.xlu0 %16
    %vm18 = vcmask 261120
    %s19 = scalar_lea.vmem %s1, 2
    %20 = vst.msk [vmem:[%s19] ss:$4 sm:$0x3] %vm18, %v17
    %v21 = vld [vmem:[#allocation0] sm:$0x3]
    %22 = vrot.lane.b32.xlu0 %v21, 32
    %v23 = vpop.permute.xlu0 %22
    %vm24 = vcmask 261120
    %s25 = scalar_lea.vmem %s1, 3
    %26 = vst.msk [vmem:[%s25] ss:$4 sm:$0x3] %vm24, %v23

// kernel: generator_forward.19
$region0: #{generator_forward.19}
  #allocation0 [shape = 'u32[]', space=smem, size = 0x4, offset = 0x4, fixed_abs, tag = 'smem constant byte address 0x4 - core index']
  #allocation1 [shape = 'u32[144,128]{1,0:T(1,128)}', space=vmem, size = 0x12000, scoped, tag = 'internal scratch']
  %s0 = inlined_call_operand.vmem [shape: f32[128,128], index: 0, kind: input, shape index: {}]
  %s1 = inlined_call_operand.vmem [shape: f32[128,128], index: 1, kind: input, shape index: {}]
  %s2 = inlined_call_operand.vmem [shape: f32[128,128], index: 2, kind: output, shape index: {}]
  %s3 = sld [smem:[#allocation0]]
  $region18: #{generator_forward.19} parent=0
    _
  %s5 = ssub.s32 1, %s3
  %s6 = scalar_select 0, %s5, %s3
  // Predicated region
  $region2: #{generator_forward.19} parent=0 // pred_check
    _
  $region3: #{generator_forward.19} parent=0 // pred_check_branch
    %8 = sbr.rel (0) target = $region5
  $region4: #{generator_forward.19} parent=0 // pred_region
    _
  $region5: #{generator_forward.19} parent=0 // pred_fallthru
    _
  // Predicated region
  $region6: #{generator_forward.19} parent=0 // pred_check
    _
  $region7: #{generator_forward.19} parent=0 // pred_check_branch
    %10 = sbr.rel (0) target = $region9
  $region8: #{generator_forward.19} parent=0 // pred_region
    _
  $region9: #{generator_forward.19} parent=0 // pred_fallthru
    _
  %v11 = vld [vmem:[%s0] sm:$0xff]
  %v12 = vld [vmem:[%s0 + $0x8] sm:$0xff]
  %v13 = vld [vmem:[%s0 + $0x10] sm:$0xff]
  %v14 = vld [vmem:[%s0 + $0x18] sm:$0xff]
  %v15 = vld [vmem:[%s0 + $0x20] sm:$0xff]
  %v16 = vld [vmem:[%s0 + $0x28] sm:$0xff]
  %v17 = vld [vmem:[%s0 + $0x30] sm:$0xff]
  %v18 = vld [vmem:[%s0 + $0x38] sm:$0xff]
  %v19 = vld [vmem:[%s0 + $0x40] sm:$0xff]
  %v20 = vld [vmem:[%s0 + $0x48] sm:$0xff]
  %v21 = vld [vmem:[%s0 + $0x50] sm:$0xff]
  %v22 = vld [vmem:[%s0 + $0x58] sm:$0xff]
  %v23 = vld [vmem:[%s0 + $0x60] sm:$0xff]
  %v24 = vld [vmem:[%s0 + $0x68] sm:$0xff]
  %v25 = vld [vmem:[%s0 + $0x70] sm:$0xff]
  %v26 = vld [vmem:[%s0 + $0x78] sm:$0xff]
  %v27 = vld [vmem:[%s1] sm:$0xff]
  %v28 = vld [vmem:[%s1 + $0x8] sm:$0xff]
  %v29 = vld [vmem:[%s1 + $0x10] sm:$0xff]
  %v30 = vld [vmem:[%s1 + $0x18] sm:$0xff]
  %v31 = vld [vmem:[%s1 + $0x20] sm:$0xff]
  %v32 = vld [vmem:[%s1 + $0x28] sm:$0xff]
  %v33 = vld [vmem:[%s1 + $0x30] sm:$0xff]
  %v34 = vld [vmem:[%s1 + $0x38] sm:$0xff]
  %v35 = vld [vmem:[%s1 + $0x40] sm:$0xff]
  %v36 = vld [vmem:[%s1 + $0x48] sm:$0xff]
  %v37 = vld [vmem:[%s1 + $0x50] sm:$0xff]
  %v38 = vld [vmem:[%s1 + $0x58] sm:$0xff]
  %v39 = vld [vmem:[%s1 + $0x60] sm:$0xff]
  %v40 = vld [vmem:[%s1 + $0x68] sm:$0xff]
  %v41 = vld [vmem:[%s1 + $0x70] sm:$0xff]
  %v42 = vld [vmem:[%s1 + $0x78] sm:$0xff]
  %43 = vmatprep.subr.mxu0 0.0
  %44 = vmatpush1.msra.mxu0 %v27
  %45 = vmatprep.subr.mxu0 0.0
  %46 = vmatpush1.msra.mxu0 %v28
  %47 = vmatprep.subr.mxu0 0.0
  %48 = vmatpush1.msra.mxu0 %v29
  %49 = vmatprep.subr.mxu0 0.0
  %50 = vmatpush1.msra.mxu0 %v30
  %51 = vmatprep.subr.mxu0 0.0
  %52 = vmatpush1.msra.mxu0 %v31
  %53 = vmatprep.subr.mxu0 0.0
  %54 = vmatpush1.msra.mxu0 %v32
  %55 = vmatprep.subr.mxu0 0.0
  %56 = vmatpush1.msra.mxu0 %v33
  %57 = vmatprep.subr.mxu0 0.0
  %58 = vmatpush1.msra.mxu0 %v34
  %59 = vmatprep.subr.mxu0 0.0
  %60 = vmatpush1.msra.mxu0 %v35
  %61 = vmatprep.subr.mxu0 0.0
  %62 = vmatpush1.msra.mxu0 %v36
  %63 = vmatprep.subr.mxu0 0.0
  %64 = vmatpush1.msra.mxu0 %v37
  %65 = vmatprep.subr.mxu0 0.0
  %66 = vmatpush1.msra.mxu0 %v38
  %67 = vmatprep.subr.mxu0 0.0
  %68 = vmatpush1.msra.mxu0 %v39
  %69 = vmatprep.subr.mxu0 0.0
  %70 = vmatpush1.msra.mxu0 %v40
  %71 = vmatprep.subr.mxu0 0.0
  %72 = vmatpush1.msra.mxu0 %v41
  %73 = vmatprep.subr.mxu0 0.0
  %74 = vmatpush1.msra.mxu0 %v42
  %75 = vmatprep.subr.mxu0 0.0
  %76 = vmatpush1.msra.mxu0 0.0
  %77 = vmatprep.subr.mxu0 0.0
  %78 = vmatpush1.msra.mxu0 0.0
  %79 = vmatprep.subr.mxu0 0.0
  %80 = vmatpush1.msra.mxu0 0.0
  %81 = vmatprep.subr.mxu0 0.0
  %82 = vmatpush1.msra.mxu0 0.0
  %83 = vmatprep.subr.mxu0 0.0
  %84 = vmatpush1.msra.mxu0 0.0
  %85 = vmatprep.subr.mxu0 0.0
  %86 = vmatpush1.msra.mxu0 0.0
  %87 = vmatprep.subr.mxu0 0.0
  %88 = vmatpush1.msra.mxu0 0.0
  %89 = vmatprep.subr.mxu0 0.0
  %90 = vmatpush1.msra.mxu0 0.0
  %91 = vmatprep.subr.mxu0 0.0
  %92 = vmatpush1.msra.mxu0 0.0
  %93 = vmatprep.subr.mxu0 0.0
  %94 = vmatpush1.msra.mxu0 0.0
  %95 = vmatprep.subr.mxu0 0.0
  %96 = vmatpush1.msra.mxu0 0.0
  %97 = vmatprep.subr.mxu0 0.0
  %98 = vmatpush1.msra.mxu0 0.0
  %99 = vmatprep.subr.mxu0 0.0
  %100 = vmatpush1.msra.mxu0 0.0
  %101 = vmatprep.subr.mxu0 0.0
  %102 = vmatpush1.msra.mxu0 0.0
  %103 = vmatprep.subr.mxu0 0.0
  %104 = vmatpush1.msra.mxu0 0.0
  %105 = vmatprep.subr.mxu0 0.0
  %106 = vmatpush1.msra.mxu0 0.0
  %107 = vmatprep.mubr.f32.mxu0 0.0
  %108 = vmatmul.mubr.f32.gmra.mrb[0].mxu0 %v11
  %v109 = vpop.f32.mrb[0].mxu0
  %v110 = vadd.f32 0.0, %v109
  %v111 = vpop.f32.mrb[0].mxu0
  %112 = vmatprep.mubr.f32.mxu0 0.0
  %113 = vmatmul.mubr.f32.gmra.mrb[0].mxu0 %v12
  %v114 = vpop.f32.mrb[0].mxu0
  %v115 = vadd.f32 0.0, %v114
  %v116 = vpop.f32.mrb[0].mxu0
  %117 = vmatprep.mubr.f32.mxu0 0.0
  %118 = vmatmul.mubr.f32.gmra.mrb[0].mxu0 %v13
  %v119 = vpop.f32.mrb[0].mxu0
  %v120 = vadd.f32 0.0, %v119
  %v121 = vpop.f32.mrb[0].mxu0
  %122 = vmatprep.mubr.f32.mxu0 0.0
  %123 = vmatmul.mubr.f32.gmra.mrb[0].mxu0 %v14
  %v124 = vpop.f32.mrb[0].mxu0
  %v125 = vadd.f32 0.0, %v124
  %v126 = vpop.f32.mrb[0].mxu0
  %127 = vmatprep.mubr.f32.mxu0 0.0
  %128 = vmatmul.mubr.f32.gmra.mrb[0].mxu0 %v15
  %v129 = vpop.f32.mrb[0].mxu0
  %v130 = vadd.f32 0.0, %v129
  %v131 = vpop.f32.mrb[0].mxu0
  %132 = vmatprep.mubr.f32.mxu0 0.0
  %133 = vmatmul.mubr.f32.gmra.mrb[0].mxu0 %v16
  %v134 = vpop.f32.mrb[0].mxu0
  %v135 = vadd.f32 0.0, %v134
  %v136 = vpop.f32.mrb[0].mxu0
  %137 = vmatprep.mubr.f32.mxu0 0.0
  %138 = vmatmul.mubr.f32.gmra.mrb[0].mxu0 %v17
  %v139 = vpop.f32.mrb[0].mxu0
  %v140 = vadd.f32 0.0, %v139
  %v141 = vpop.f32.mrb[0].mxu0
  %142 = vmatprep.mubr.f32.mxu0 0.0
  %143 = vmatmul.mubr.f32.gmra.mrb[0].mxu0 %v18
  %v144 = vpop.f32.mrb[0].mxu0
  %v145 = vadd.f32 0.0, %v144
  %v146 = vpop.f32.mrb[0].mxu0
  %147 = vmatprep.mubr.f32.mxu0 0.0
  %148 = vmatmul.mubr.f32.gmra.mrb[0].mxu0 %v19
  %v149 = vpop.f32.mrb[0].mxu0
  %v150 = vadd.f32 0.0, %v149
  %v151 = vpop.f32.mrb[0].mxu0
  %152 = vmatprep.mubr.f32.mxu0 0.0
  %153 = vmatmul.mubr.f32.gmra.mrb[0].mxu0 %v20
  %v154 = vpop.f32.mrb[0].mxu0
  %v155 = vadd.f32 0.0, %v154
  %v156 = vpop.f32.mrb[0].mxu0
  %157 = vmatprep.mubr.f32.mxu0 0.0
  %158 = vmatmul.mubr.f32.gmra.mrb[0].mxu0 %v21
  %v159 = vpop.f32.mrb[0].mxu0
  %v160 = vadd.f32 0.0, %v159
  %v161 = vpop.f32.mrb[0].mxu0
  %162 = vmatprep.mubr.f32.mxu0 0.0
  %163 = vmatmul.mubr.f32.gmra.mrb[0].mxu0 %v22
  %v164 = vpop.f32.mrb[0].mxu0
  %v165 = vadd.f32 0.0, %v164
  %v166 = vpop.f32.mrb[0].mxu0
  %167 = vmatprep.mubr.f32.mxu0 0.0
  %168 = vmatmul.mubr.f32.gmra.mrb[0].mxu0 %v23
  %v169 = vpop.f32.mrb[0].mxu0
  %v170 = vadd.f32 0.0, %v169
  %v171 = vpop.f32.mrb[0].mxu0
  %172 = vmatprep.mubr.f32.mxu0 0.0
  %173 = vmatmul.mubr.f32.gmra.mrb[0].mxu0 %v24
  %v174 = vpop.f32.mrb[0].mxu0
  %v175 = vadd.f32 0.0, %v174
  %v176 = vpop.f32.mrb[0].mxu0
  %177 = vmatprep.mubr.f32.mxu0 0.0
  %178 = vmatmul.mubr.f32.gmra.mrb[0].mxu0 %v25
  %v179 = vpop.f32.mrb[0].mxu0
  %v180 = vadd.f32 0.0, %v179
  %v181 = vpop.f32.mrb[0].mxu0
  %182 = vmatprep.mubr.f32.mxu0 0.0
  %183 = vmatmul.mubr.f32.gmra.mrb[0].mxu0 %v26
  %v184 = vpop.f32.mrb[0].mxu0
  %v185 = vadd.f32 0.0, %v184
  %v186 = vpop.f32.mrb[0].mxu0
  %187 = vdwg.mxu0
  %188 = vst [vmem:[%s2] sm:$0xff] %v110
  %189 = vst [vmem:[%s2 + $0x8] sm:$0xff] %v115
  %190 = vst [vmem:[%s2 + $0x10] sm:$0xff] %v120
  %191 = vst [vmem:[%s2 + $0x18] sm:$0xff] %v125
  %192 = vst [vmem:[%s2 + $0x20] sm:$0xff] %v130
  %193 = vst [vmem:[%s2 + $0x28] sm:$0xff] %v135
  %194 = vst [vmem:[%s2 + $0x30] sm:$0xff] %v140
  %195 = vst [vmem:[%s2 + $0x38] sm:$0xff] %v145
  %196 = vst [vmem:[%s2 + $0x40] sm:$0xff] %v150
  %197 = vst [vmem:[%s2 + $0x48] sm:$0xff] %v155
  %198 = vst [vmem:[%s2 + $0x50] sm:$0xff] %v160
  %199 = vst [vmem:[%s2 + $0x58] sm:$0xff] %v165
  %200 = vst [vmem:[%s2 + $0x60] sm:$0xff] %v170
  %201 = vst [vmem:[%s2 + $0x68] sm:$0xff] %v175
  %202 = vst [vmem:[%s2 + $0x70] sm:$0xff] %v180
  %203 = vst [vmem:[%s2 + $0x78] sm:$0xff] %v185
  // Predicated region
  $region10: #{generator_forward.19} parent=0 // pred_check
    _
  $region11: #{generator_forward.19} parent=0 // pred_check_branch
    %205 = sbr.rel (0) target = $region13
  $region12: #{generator_forward.19} parent=0 // pred_region
    _
  $region13: #{generator_forward.19} parent=0 // pred_fallthru
    _
  // Predicated region
  $region14: #{generator_forward.19} parent=0 // pred_check
    _
  $region15: #{generator_forward.19} parent=0 // pred_check_branch
    %207 = sbr.rel (0) target = $region17
  $region16: #{generator_forward.19} parent=0 // pred_region
    _
  $region17: #{generator_forward.19} parent=0 // pred_fallthru
    _

// kernel: tile.47
$region0: #{tile.47}
  #allocation0 [shape = 's32[1]{0}', space=sflag, size = 0x4, scoped, tag = 'scoped memory for tile.47']
  %s0 = inlined_call_operand.vmem [shape: f32[32], index: 0, kind: input, shape index: {}]
  %s1 = inlined_call_operand.vmem [shape: f32[8,32], index: 1, kind: output, shape index: {}]
  // Predicated region
  $region2: #{tile.47} parent=0 // pred_check
    _
  $region3: #{tile.47} parent=0 // pred_check_branch
    %3 = sbr.rel (0) target = $region5
  $region4: #{tile.47} parent=0 // pred_region
    _
  $region5: #{tile.47} parent=0 // pred_fallthru
    _
  %v4 = vld [vmem:[%s0] ss:$0 sm:$0xff]
  %5 = vst [vmem:[%s1] sm:$0xff] %v4

// kernel: tile.52
$region0: #{tile.52}
  %s0 = inlined_call_operand.vmem [shape: f32[8,32], index: 0, kind: input, shape index: {}]
  %s1 = inlined_call_operand.vmem [shape: f32[1,256], index: 1, kind: output, shape index: {}]
  $region1: #{tile.52} parent=0
    #allocation0 [shape = 'u8[8192]{0}', space=vmem, size = 0x2000, scoped, tag = 'scoped mem for output reshape']
    %s2 = smov 3
    %v3 = vld [vmem:[%s0] ss:$4 sm:%s2]
    %vm4 = vcmask 261120
    %5 = vst.msk [vmem:[#allocation0] ss:$8 sm:$0x3] %vm4, %v3
    %s6 = scalar_lea.vmem %s0, 3
    %s7 = smov 3
    %v8 = vld [vmem:[%s6] ss:$4 sm:%s7]
    %9 = vrot.lane.b32.xlu0 %v8, 96
    %v10 = vpop.permute.xlu0 %9
    %vm11 = vcmask 1048320
    %12 = vst.msk [vmem:[#allocation0] ss:$8 sm:$0x3] %vm11, %v10
    %s13 = scalar_lea.vmem %s0, 2
    %s14 = smov 3
    %v15 = vld [vmem:[%s13] ss:$4 sm:%s14]
    %16 = vrot.lane.b32.xlu0 %v15, 64
    %v17 = vpop.permute.xlu0 %16
    %vm18 = vcmask 785920
    %19 = vst.msk [vmem:[#allocation0] ss:$8 sm:$0x3] %vm18, %v17
    %s20 = scalar_lea.vmem %s0, 1
    %s21 = smov 3
    %v22 = vld [vmem:[%s20] ss:$4 sm:%s21]
    %23 = vrot.lane.b32.xlu0 %v22, 32
    %v24 = vpop.permute.xlu0 %23
    %vm25 = vcmask 523520
    %26 = vst.msk [vmem:[#allocation0] ss:$8 sm:$0x3] %vm25, %v24
    %s28 = sshllo.u32 0, 1
    %v30 = vld [vmem:[#allocation0] sm:%s28]
    %s31 = sshllo.u32 0, 1
    %32 = vst [vmem:[%s1] sm:%s31] %v30
    %s33 = scalar_lea.vmem [#allocation0], 8
    %v34 = vld [vmem:[%s33] sm:%s28]
    %s35 = sshllo.u32 0, 1
    %s36 = scalar_lea.vmem %s1, 1
    %37 = vst [vmem:[%s36] sm:%s35] %v34

// kernel: generator_forward.20
$region0: #{generator_forward.20}
  #allocation0 [shape = 'u32[]', space=smem, size = 0x4, offset = 0x4, fixed_abs, tag = 'smem constant byte address 0x4 - core index']
  #allocation1 [shape = 'u32[144,128]{1,0:T(1,128)}', space=vmem, size = 0x12000, scoped, tag = 'internal scratch']
  %s0 = inlined_call_operand.vmem [shape: f32[16,256], index: 0, kind: input, shape index: {}]
  %s1 = inlined_call_operand.vmem [shape: f32[1,256], index: 1, kind: output, shape index: {0}]
  %s2 = inlined_call_operand.vmem [shape: f32[1,256], index: 2, kind: output, shape index: {1}]
  %3 = xla_tuple %s1, %s2
  %s4 = sld [smem:[#allocation0]]
  $region26: #{generator_forward.20} parent=0
    _
  %s6 = ssub.s32 1, %s4
  %s7 = scalar_select 0, %s6, %s4
  // Predicated region
  $region2: #{generator_forward.20} parent=0 // pred_check
    _
  $region3: #{generator_forward.20} parent=0 // pred_check_branch
    %9 = sbr.rel (0) target = $region5
  $region4: #{generator_forward.20} parent=0 // pred_region
    _
  $region5: #{generator_forward.20} parent=0 // pred_fallthru
    _
  %p10 = scmp.eq.s32.totalorder 0, 0
  // Predicated region
  $region6: #{generator_forward.20} parent=0 // pred_check
    %p11 = pneg %p10
  $region7: #{generator_forward.20} parent=0 // pred_check_branch
    %13 = sbr.rel (%p11) target = $region9
  $region8: #{generator_forward.20} parent=0 // pred_region
    %v14 = vlaneseq
    %vm15 = vcmp.ge.s32.totalorder %v14, 0
    %vm16 = vcmp.lt.s32.totalorder %v14, 256
    %vm17 = vmand %vm15, %vm16
    %18 = vst.msk [vmem:[%s1] sm:$0x3] %vm17, 0.0
    %19 = vst.msk [vmem:[%s2] sm:$0x3] %vm17, 0.0
  $region9: #{generator_forward.20} parent=0 // pred_fallthru
    _
  %v20 = vld [vmem:[%s0] sm:$0xff]
  %v21 = vld [vmem:[%s0 + $0x8] sm:$0xff]
  %v22 = vld [vmem:[%s0 + $0x10] sm:$0xff]
  %v23 = vld [vmem:[%s0 + $0x18] sm:$0xff]
  %v24 = vld [vmem:[%s1] sm:$0x3]
  %v25 = vadd.f32 %v20, %v22
  %v26 = vrot.slane %v25, 4
  %v27 = vadd.f32 %v25, %v26
  %v28 = vrot.slane %v27, 2
  %v29 = vadd.f32 %v27, %v28
  %v30 = vrot.slane %v29, 1
  %v31 = vadd.f32 %v29, %v30
  %v32 = vadd.f32 %v21, %v23
  %v33 = vrot.slane %v32, 4
  %v34 = vadd.f32 %v32, %v33
  %v35 = vrot.slane %v34, 2
  %v36 = vadd.f32 %v34, %v35
  %v37 = vrot.slane %v36, 1
  %v38 = vadd.f32 %v36, %v37
  %v41 = vcombine.low %v31, %v38
  %v43 = vunpack.c.l.s4 1966171168
  %v44 = vunpack.c.0.s8 %v43
  %v45 = vlaneseq
  %v46 = vshrl.u32 %v45, 7
  %v47 = vsub.s32 %v44, %v46
  %v48 = vrot.slane %v41, %v47
  %v50 = vunpack.c.l.s4 1966171168
  %v51 = vunpack.c.0.s8 %v50
  %v52 = vlaneseq
  %v53 = vshrl.u32 %v52, 7
  %v54 = vsub.s32 %v51, %v53
  %v55 = vrot.slane %v48, %v54
  %v57 = vadd.f32 %v24, %v55
  %v58 = vlaneseq
  %vm59 = vcmp.ge.s32.totalorder %v58, 0
  %vm60 = vcmp.lt.s32.totalorder %v58, 256
  %vm61 = vmand %vm59, %vm60
  %62 = vst.msk [vmem:[%s1] sm:$0x3] %vm61, %v57
  %v63 = vld [vmem:[%s2] sm:$0x3]
  %v64 = vmul.f32 %v20, %v20
  %v65 = vmul.f32 %v21, %v21
  %v66 = vmul.f32 %v22, %v22
  %v67 = vmul.f32 %v23, %v23
  %v68 = vadd.f32 %v64, %v66
  %v69 = vrot.slane %v68, 4
  %v70 = vadd.f32 %v68, %v69
  %v71 = vrot.slane %v70, 2
  %v72 = vadd.f32 %v70, %v71
  %v73 = vrot.slane %v72, 1
  %v74 = vadd.f32 %v72, %v73
  %v75 = vadd.f32 %v65, %v67
  %v76 = vrot.slane %v75, 4
  %v77 = vadd.f32 %v75, %v76
  %v78 = vrot.slane %v77, 2
  %v79 = vadd.f32 %v77, %v78
  %v80 = vrot.slane %v79, 1
  %v81 = vadd.f32 %v79, %v80
  %v84 = vcombine.low %v74, %v81
  %v86 = vunpack.c.l.s4 1966171168
  %v87 = vunpack.c.0.s8 %v86
  %v88 = vlaneseq
  %v89 = vshrl.u32 %v88, 7
  %v90 = vsub.s32 %v87, %v89
  %v91 = vrot.slane %v84, %v90
  %v93 = vunpack.c.l.s4 1966171168
  %v94 = vunpack.c.0.s8 %v93
  %v95 = vlaneseq
  %v96 = vshrl.u32 %v95, 7
  %v97 = vsub.s32 %v94, %v96
  %v98 = vrot.slane %v91, %v97
  %v100 = vadd.f32 %v63, %v98
  %101 = vst.msk [vmem:[%s2] sm:$0x3] %vm61, %v100
  // Predicated region
  $region10: #{generator_forward.20} parent=0 // pred_check
    _
  $region11: #{generator_forward.20} parent=0 // pred_check_branch
    %103 = sbr.rel (0) target = $region13
  $region12: #{generator_forward.20} parent=0 // pred_region
    _
  $region13: #{generator_forward.20} parent=0 // pred_fallthru
    _
  // Predicated region
  $region14: #{generator_forward.20} parent=0 // pred_check
    _
  $region15: #{generator_forward.20} parent=0 // pred_check_branch
    %105 = sbr.rel (0) target = $region17
  $region16: #{generator_forward.20} parent=0 // pred_region
    _
  $region17: #{generator_forward.20} parent=0 // pred_fallthru
    _
  // Predicated region
  $region18: #{generator_forward.20} parent=0 // pred_check
    _
  $region19: #{generator_forward.20} parent=0 // pred_check_branch
    %107 = sbr.rel (0) target = $region21
  $region20: #{generator_forward.20} parent=0 // pred_region
    _
  $region21: #{generator_forward.20} parent=0 // pred_fallthru
    _
  // Predicated region
  $region22: #{generator_forward.20} parent=0 // pred_check
    _
  $region23: #{generator_forward.20} parent=0 // pred_check_branch
    %109 = sbr.rel (0) target = $region25
  $region24: #{generator_forward.20} parent=0 // pred_region
    _
  $region25: #{generator_forward.20} parent=0 // pred_fallthru
    _

// kernel: generator_forward.21
$region0: #{generator_forward.21}
  #allocation0 [shape = 'u32[]', space=smem, size = 0x4, offset = 0x4, fixed_abs, tag = 'smem constant byte address 0x4 - core index']
  #allocation1 [shape = 'u32[144,128]{1,0:T(1,128)}', space=vmem, size = 0x12000, scoped, tag = 'internal scratch']
  %s0 = inlined_call_operand.vmem [shape: f32[16,256], index: 0, kind: input, shape index: {}]
  %s1 = inlined_call_operand.vmem [shape: f32[1,256], index: 1, kind: input, shape index: {}]
  %s2 = inlined_call_operand.vmem [shape: f32[1,256], index: 2, kind: input, shape index: {}]
  %s3 = inlined_call_operand.vmem [shape: f32[16,256], index: 3, kind: output, shape index: {}]
  %s4 = sld [smem:[#allocation0]]
  $region22: #{generator_forward.21} parent=0
    _
  %s6 = ssub.s32 1, %s4
  %s7 = scalar_select 0, %s6, %s4
  // Predicated region
  $region2: #{generator_forward.21} parent=0 // pred_check
    _
  $region3: #{generator_forward.21} parent=0 // pred_check_branch
    %9 = sbr.rel (0) target = $region5
  $region4: #{generator_forward.21} parent=0 // pred_region
    _
  $region5: #{generator_forward.21} parent=0 // pred_fallthru
    _
  // Predicated region
  $region6: #{generator_forward.21} parent=0 // pred_check
    _
  $region7: #{generator_forward.21} parent=0 // pred_check_branch
    %11 = sbr.rel (0) target = $region9
  $region8: #{generator_forward.21} parent=0 // pred_region
    _
  $region9: #{generator_forward.21} parent=0 // pred_fallthru
    _
  // Predicated region
  $region10: #{generator_forward.21} parent=0 // pred_check
    _
  $region11: #{generator_forward.21} parent=0 // pred_check_branch
    %13 = sbr.rel (0) target = $region13
  $region12: #{generator_forward.21} parent=0 // pred_region
    _
  $region13: #{generator_forward.21} parent=0 // pred_fallthru
    _
  %v14 = vld [vmem:[%s0] sm:$0xff]
  %v15 = vld [vmem:[%s0 + $0x8] sm:$0xff]
  %v16 = vld [vmem:[%s0 + $0x10] sm:$0xff]
  %v17 = vld [vmem:[%s0 + $0x18] sm:$0xff]
  %v18 = vld [vmem:[%s1] sm:$0x3]
  %v20 = vlaneseq
  %v21 = vshrl.u32 %v20, 7
  %v22 = vsub.s32 0, %v21
  %v23 = vrot.slane %v18, %v22
  %v24 = vlaneseq
  %v25 = vshrl.u32 %v24, 7
  %v26 = vsub.s32 1, %v25
  %v27 = vrot.slane %v18, %v26
  %v30 = vmul.f32 %v14, %v23
  %v31 = vmul.f32 %v15, %v27
  %v32 = vmul.f32 %v16, %v23
  %v33 = vmul.f32 %v17, %v27
  %v34 = vld [vmem:[%s2] sm:$0x3]
  %v36 = vlaneseq
  %v37 = vshrl.u32 %v36, 7
  %v38 = vsub.s32 0, %v37
  %v39 = vrot.slane %v34, %v38
  %v40 = vlaneseq
  %v41 = vshrl.u32 %v40, 7
  %v42 = vsub.s32 1, %v41
  %v43 = vrot.slane %v34, %v42
  %v46 = vadd.f32 %v30, %v39
  %v47 = vadd.f32 %v31, %v43
  %v48 = vadd.f32 %v32, %v39
  %v49 = vadd.f32 %v33, %v43
  %v50 = vmax.f32 %v46, 0.0
  %v51 = vmax.f32 %v47, 0.0
  %v52 = vmax.f32 %v48, 0.0
  %v53 = vmax.f32 %v49, 0.0
  %54 = vst [vmem:[%s3] sm:$0xff] %v50
  %55 = vst [vmem:[%s3 + $0x8] sm:$0xff] %v51
  %56 = vst [vmem:[%s3 + $0x10] sm:$0xff] %v52
  %57 = vst [vmem:[%s3 + $0x18] sm:$0xff] %v53
  // Predicated region
  $region14: #{generator_forward.21} parent=0 // pred_check
    _
  $region15: #{generator_forward.21} parent=0 // pred_check_branch
    %59 = sbr.rel (0) target = $region17
  $region16: #{generator_forward.21} parent=0 // pred_region
    _
  $region17: #{generator_forward.21} parent=0 // pred_fallthru
    _
  // Predicated region
  $region18: #{generator_forward.21} parent=0 // pred_check
    _
  $region19: #{generator_forward.21} parent=0 // pred_check_branch
    %61 = sbr.rel (0) target = $region21
  $region20: #{generator_forward.21} parent=0 // pred_region
    _
  $region21: #{generator_forward.21} parent=0 // pred_fallthru
    _

// kernel: generator_forward.22
$region0: #{generator_forward.22}
  #allocation0 [shape = 'u32[]', space=smem, size = 0x4, offset = 0x4, fixed_abs, tag = 'smem constant byte address 0x4 - core index']
  #allocation1 [shape = 'u32[144,128]{1,0:T(1,128)}', space=vmem, size = 0x12000, scoped, tag = 'internal scratch']
  %s0 = inlined_call_operand.vmem [shape: f32[168,128], index: 0, kind: input, shape index: {}]
  %s1 = inlined_call_operand.vmem [shape: f32[128,128], index: 1, kind: input, shape index: {}]
  %s2 = inlined_call_operand.vmem [shape: f32[168,128], index: 2, kind: output, shape index: {}]
  %s3 = sld [smem:[#allocation0]]
  $region18: #{generator_forward.22} parent=0
    _
  %s5 = ssub.s32 1, %s3
  %s6 = scalar_select 0, %s5, %s3
  // Predicated region
  $region2: #{generator_forward.22} parent=0 // pred_check
    _
  $region3: #{generator_forward.22} parent=0 // pred_check_branch
    %8 = sbr.rel (0) target = $region5
  $region4: #{generator_forward.22} parent=0 // pred_region
    _
  $region5: #{generator_forward.22} parent=0 // pred_fallthru
    _
  // Predicated region
  $region6: #{generator_forward.22} parent=0 // pred_check
    _
  $region7: #{generator_forward.22} parent=0 // pred_check_branch
    %10 = sbr.rel (0) target = $region9
  $region8: #{generator_forward.22} parent=0 // pred_region
    _
  $region9: #{generator_forward.22} parent=0 // pred_fallthru
    _
  %v11 = vld [vmem:[%s0] sm:$0xff]
  %v12 = vld [vmem:[%s0 + $0x8] sm:$0xff]
  %v13 = vld [vmem:[%s0 + $0x10] sm:$0xff]
  %v14 = vld [vmem:[%s0 + $0x18] sm:$0xff]
  %v15 = vld [vmem:[%s0 + $0x20] sm:$0xff]
  %v16 = vld [vmem:[%s0 + $0x28] sm:$0xff]
  %v17 = vld [vmem:[%s0 + $0x30] sm:$0xff]
  %v18 = vld [vmem:[%s0 + $0x38] sm:$0xff]
  %v19 = vld [vmem:[%s0 + $0x40] sm:$0xff]
  %v20 = vld [vmem:[%s0 + $0x48] sm:$0xff]
  %v21 = vld [vmem:[%s0 + $0x50] sm:$0xff]
  %v22 = vld [vmem:[%s0 + $0x58] sm:$0xff]
  %v23 = vld [vmem:[%s0 + $0x60] sm:$0xff]
  %v24 = vld [vmem:[%s0 + $0x68] sm:$0xff]
  %v25 = vld [vmem:[%s0 + $0x70] sm:$0xff]
  %v26 = vld [vmem:[%s0 + $0x78] sm:$0xff]
  %v27 = vld [vmem:[%s0 + $0x80] sm:$0xff]
  %v28 = vld [vmem:[%s0 + $0x88] sm:$0xff]
  %v29 = vld [vmem:[%s0 + $0x90] sm:$0xff]
  %v30 = vld [vmem:[%s0 + $0x98] sm:$0xff]
  %v31 = vld [vmem:[%s0 + $0xa0] sm:$0xff]
  %v32 = vld [vmem:[%s1] sm:$0xff]
  %v33 = vld [vmem:[%s1 + $0x8] sm:$0xff]
  %v34 = vld [vmem:[%s1 + $0x10] sm:$0xff]
  %v35 = vld [vmem:[%s1 + $0x18] sm:$0xff]
  %v36 = vld [vmem:[%s1 + $0x20] sm:$0xff]
  %v37 = vld [vmem:[%s1 + $0x28] sm:$0xff]
  %v38 = vld [vmem:[%s1 + $0x30] sm:$0xff]
  %v39 = vld [vmem:[%s1 + $0x38] sm:$0xff]
  %v40 = vld [vmem:[%s1 + $0x40] sm:$0xff]
  %v41 = vld [vmem:[%s1 + $0x48] sm:$0xff]
  %v42 = vld [vmem:[%s1 + $0x50] sm:$0xff]
  %v43 = vld [vmem:[%s1 + $0x58] sm:$0xff]
  %v44 = vld [vmem:[%s1 + $0x60] sm:$0xff]
  %v45 = vld [vmem:[%s1 + $0x68] sm:$0xff]
  %v46 = vld [vmem:[%s1 + $0x70] sm:$0xff]
  %v47 = vld [vmem:[%s1 + $0x78] sm:$0xff]
  %48 = vmatprep.subr.mxu0 0.0
  %49 = vmatpush1.msra.mxu0 %v32
  %50 = vmatprep.subr.mxu0 0.0
  %51 = vmatpush1.msra.mxu0 %v33
  %52 = vmatprep.subr.mxu0 0.0
  %53 = vmatpush1.msra.mxu0 %v34
  %54 = vmatprep.subr.mxu0 0.0
  %55 = vmatpush1.msra.mxu0 %v35
  %56 = vmatprep.subr.mxu0 0.0
  %57 = vmatpush1.msra.mxu0 %v36
  %58 = vmatprep.subr.mxu0 0.0
  %59 = vmatpush1.msra.mxu0 %v37
  %60 = vmatprep.subr.mxu0 0.0
  %61 = vmatpush1.msra.mxu0 %v38
  %62 = vmatprep.subr.mxu0 0.0
  %63 = vmatpush1.msra.mxu0 %v39
  %64 = vmatprep.subr.mxu0 0.0
  %65 = vmatpush1.msra.mxu0 %v40
  %66 = vmatprep.subr.mxu0 0.0
  %67 = vmatpush1.msra.mxu0 %v41
  %68 = vmatprep.subr.mxu0 0.0
  %69 = vmatpush1.msra.mxu0 %v42
  %70 = vmatprep.subr.mxu0 0.0
  %71 = vmatpush1.msra.mxu0 %v43
  %72 = vmatprep.subr.mxu0 0.0
  %73 = vmatpush1.msra.mxu0 %v44
  %74 = vmatprep.subr.mxu0 0.0
  %75 = vmatpush1.msra.mxu0 %v45
  %76 = vmatprep.subr.mxu0 0.0
  %77 = vmatpush1.msra.mxu0 %v46
  %78 = vmatprep.subr.mxu0 0.0
  %79 = vmatpush1.msra.mxu0 %v47
  %80 = vmatprep.subr.mxu0 0.0
  %81 = vmatpush1.msra.mxu0 0.0
  %82 = vmatprep.subr.mxu0 0.0
  %83 = vmatpush1.msra.mxu0 0.0
  %84 = vmatprep.subr.mxu0 0.0
  %85 = vmatpush1.msra.mxu0 0.0
  %86 = vmatprep.subr.mxu0 0.0
  %87 = vmatpush1.msra.mxu0 0.0
  %88 = vmatprep.subr.mxu0 0.0
  %89 = vmatpush1.msra.mxu0 0.0
  %90 = vmatprep.subr.mxu0 0.0
  %91 = vmatpush1.msra.mxu0 0.0
  %92 = vmatprep.subr.mxu0 0.0
  %93 = vmatpush1.msra.mxu0 0.0
  %94 = vmatprep.subr.mxu0 0.0
  %95 = vmatpush1.msra.mxu0 0.0
  %96 = vmatprep.subr.mxu0 0.0
  %97 = vmatpush1.msra.mxu0 0.0
  %98 = vmatprep.subr.mxu0 0.0
  %99 = vmatpush1.msra.mxu0 0.0
  %100 = vmatprep.subr.mxu0 0.0
  %101 = vmatpush1.msra.mxu0 0.0
  %102 = vmatprep.subr.mxu0 0.0
  %103 = vmatpush1.msra.mxu0 0.0
  %104 = vmatprep.subr.mxu0 0.0
  %105 = vmatpush1.msra.mxu0 0.0
  %106 = vmatprep.subr.mxu0 0.0
  %107 = vmatpush1.msra.mxu0 0.0
  %108 = vmatprep.subr.mxu0 0.0
  %109 = vmatpush1.msra.mxu0 0.0
  %110 = vmatprep.subr.mxu0 0.0
  %111 = vmatpush1.msra.mxu0 0.0
  %112 = vmatprep.mubr.f32.mxu0 0.0
  %113 = vmatmul.mubr.f32.gmra.mrb[0].mxu0 %v11
  %v114 = vpop.f32.mrb[0].mxu0
  %v115 = vadd.f32 0.0, %v114
  %v116 = vpop.f32.mrb[0].mxu0
  %117 = vmatprep.mubr.f32.mxu0 0.0
  %118 = vmatmul.mubr.f32.gmra.mrb[0].mxu0 %v12
  %v119 = vpop.f32.mrb[0].mxu0
  %v120 = vadd.f32 0.0, %v119
  %v121 = vpop.f32.mrb[0].mxu0
  %122 = vmatprep.mubr.f32.mxu0 0.0
  %123 = vmatmul.mubr.f32.gmra.mrb[0].mxu0 %v13
  %v124 = vpop.f32.mrb[0].mxu0
  %v125 = vadd.f32 0.0, %v124
  %v126 = vpop.f32.mrb[0].mxu0
  %127 = vmatprep.mubr.f32.mxu0 0.0
  %128 = vmatmul.mubr.f32.gmra.mrb[0].mxu0 %v14
  %v129 = vpop.f32.mrb[0].mxu0
  %v130 = vadd.f32 0.0, %v129
  %v131 = vpop.f32.mrb[0].mxu0
  %132 = vmatprep.mubr.f32.mxu0 0.0
  %133 = vmatmul.mubr.f32.gmra.mrb[0].mxu0 %v15
  %v134 = vpop.f32.mrb[0].mxu0
  %v135 = vadd.f32 0.0, %v134
  %v136 = vpop.f32.mrb[0].mxu0
  %137 = vmatprep.mubr.f32.mxu0 0.0
  %138 = vmatmul.mubr.f32.gmra.mrb[0].mxu0 %v16
  %v139 = vpop.f32.mrb[0].mxu0
  %v140 = vadd.f32 0.0, %v139
  %v141 = vpop.f32.mrb[0].mxu0
  %142 = vmatprep.mubr.f32.mxu0 0.0
  %143 = vmatmul.mubr.f32.gmra.mrb[0].mxu0 %v17
  %v144 = vpop.f32.mrb[0].mxu0
  %v145 = vadd.f32 0.0, %v144
  %v146 = vpop.f32.mrb[0].mxu0
  %147 = vmatprep.mubr.f32.mxu0 0.0
  %148 = vmatmul.mubr.f32.gmra.mrb[0].mxu0 %v18
  %v149 = vpop.f32.mrb[0].mxu0
  %v150 = vadd.f32 0.0, %v149
  %v151 = vpop.f32.mrb[0].mxu0
  %152 = vmatprep.mubr.f32.mxu0 0.0
  %153 = vmatmul.mubr.f32.gmra.mrb[0].mxu0 %v19
  %v154 = vpop.f32.mrb[0].mxu0
  %v155 = vadd.f32 0.0, %v154
  %v156 = vpop.f32.mrb[0].mxu0
  %157 = vmatprep.mubr.f32.mxu0 0.0
  %158 = vmatmul.mubr.f32.gmra.mrb[0].mxu0 %v20
  %v159 = vpop.f32.mrb[0].mxu0
  %v160 = vadd.f32 0.0, %v159
  %v161 = vpop.f32.mrb[0].mxu0
  %162 = vmatprep.mubr.f32.mxu0 0.0
  %163 = vmatmul.mubr.f32.gmra.mrb[0].mxu0 %v21
  %v164 = vpop.f32.mrb[0].mxu0
  %v165 = vadd.f32 0.0, %v164
  %v166 = vpop.f32.mrb[0].mxu0
  %167 = vmatprep.mubr.f32.mxu0 0.0
  %168 = vmatmul.mubr.f32.gmra.mrb[0].mxu0 %v22
  %v169 = vpop.f32.mrb[0].mxu0
  %v170 = vadd.f32 0.0, %v169
  %v171 = vpop.f32.mrb[0].mxu0
  %172 = vmatprep.mubr.f32.mxu0 0.0
  %173 = vmatmul.mubr.f32.gmra.mrb[0].mxu0 %v23
  %v174 = vpop.f32.mrb[0].mxu0
  %v175 = vadd.f32 0.0, %v174
  %v176 = vpop.f32.mrb[0].mxu0
  %177 = vmatprep.mubr.f32.mxu0 0.0
  %178 = vmatmul.mubr.f32.gmra.mrb[0].mxu0 %v24
  %v179 = vpop.f32.mrb[0].mxu0
  %v180 = vadd.f32 0.0, %v179
  %v181 = vpop.f32.mrb[0].mxu0
  %182 = vmatprep.mubr.f32.mxu0 0.0
  %183 = vmatmul.mubr.f32.gmra.mrb[0].mxu0 %v25
  %v184 = vpop.f32.mrb[0].mxu0
  %v185 = vadd.f32 0.0, %v184
  %v186 = vpop.f32.mrb[0].mxu0
  %187 = vmatprep.mubr.f32.mxu0 0.0
  %188 = vmatmul.mubr.f32.gmra.mrb[0].mxu0 %v26
  %v189 = vpop.f32.mrb[0].mxu0
  %v190 = vadd.f32 0.0, %v189
  %v191 = vpop.f32.mrb[0].mxu0
  %192 = vmatprep.mubr.f32.mxu0 0.0
  %193 = vmatmul.mubr.f32.gmra.mrb[0].mxu0 %v27
  %v194 = vpop.f32.mrb[0].mxu0
  %v195 = vadd.f32 0.0, %v194
  %v196 = vpop.f32.mrb[0].mxu0
  %197 = vmatprep.mubr.f32.mxu0 0.0
  %198 = vmatmul.mubr.f32.gmra.mrb[0].mxu0 %v28
  %v199 = vpop.f32.mrb[0].mxu0
  %v200 = vadd.f32 0.0, %v199
  %v201 = vpop.f32.mrb[0].mxu0
  %202 = vmatprep.mubr.f32.mxu0 0.0
  %203 = vmatmul.mubr.f32.gmra.mrb[0].mxu0 %v29
  %v204 = vpop.f32.mrb[0].mxu0
  %v205 = vadd.f32 0.0, %v204
  %v206 = vpop.f32.mrb[0].mxu0
  %207 = vmatprep.mubr.f32.mxu0 0.0
  %208 = vmatmul.mubr.f32.gmra.mrb[0].mxu0 %v30
  %v209 = vpop.f32.mrb[0].mxu0
  %v210 = vadd.f32 0.0, %v209
  %v211 = vpop.f32.mrb[0].mxu0
  %212 = vmatprep.mubr.f32.mxu0 0.0
  %213 = vmatmul.mubr.f32.gmra.mrb[0].mxu0 %v31
  %v214 = vpop.f32.mrb[0].mxu0
  %v215 = vadd.f32 0.0, %v214
  %v216 = vpop.f32.mrb[0].mxu0
  %217 = vdwg.mxu0
  %218 = vst [vmem:[%s2] sm:$0xff] %v115
  %219 = vst [vmem:[%s2 + $0x8] sm:$0xff] %v120
  %220 = vst [vmem:[%s2 + $0x10] sm:$0xff] %v125
  %221 = vst [vmem:[%s2 + $0x18] sm:$0xff] %v130
  %222 = vst [vmem:[%s2 + $0x20] sm:$0xff] %v135
  %223 = vst [vmem:[%s2 + $0x28] sm:$0xff] %v140
  %224 = vst [vmem:[%s2 + $0x30] sm:$0xff] %v145
  %225 = vst [vmem:[%s2 + $0x38] sm:$0xff] %v150
  %226 = vst [vmem:[%s2 + $0x40] sm:$0xff] %v155
  %227 = vst [vmem:[%s2 + $0x48] sm:$0xff] %v160
  %228 = vst [vmem:[%s2 + $0x50] sm:$0xff] %v165
  %229 = vst [vmem:[%s2 + $0x58] sm:$0xff] %v170
  %230 = vst [vmem:[%s2 + $0x60] sm:$0xff] %v175
  %231 = vst [vmem:[%s2 + $0x68] sm:$0xff] %v180
  %232 = vst [vmem:[%s2 + $0x70] sm:$0xff] %v185
  %233 = vst [vmem:[%s2 + $0x78] sm:$0xff] %v190
  %234 = vst [vmem:[%s2 + $0x80] sm:$0xff] %v195
  %235 = vst [vmem:[%s2 + $0x88] sm:$0xff] %v200
  %236 = vst [vmem:[%s2 + $0x90] sm:$0xff] %v205
  %237 = vst [vmem:[%s2 + $0x98] sm:$0xff] %v210
  %238 = vst [vmem:[%s2 + $0xa0] sm:$0xff] %v215
  // Predicated region
  $region10: #{generator_forward.22} parent=0 // pred_check
    _
  $region11: #{generator_forward.22} parent=0 // pred_check_branch
    %240 = sbr.rel (0) target = $region13
  $region12: #{generator_forward.22} parent=0 // pred_region
    _
  $region13: #{generator_forward.22} parent=0 // pred_fallthru
    _
  // Predicated region
  $region14: #{generator_forward.22} parent=0 // pred_check
    _
  $region15: #{generator_forward.22} parent=0 // pred_check_branch
    %242 = sbr.rel (0) target = $region17
  $region16: #{generator_forward.22} parent=0 // pred_region
    _
  $region17: #{generator_forward.22} parent=0 // pred_fallthru
    _

// kernel: squeeze.111
$region0: #{squeeze.111}
  %s0 = inlined_call_operand.vmem [shape: f32[256], index: 0, kind: input, shape index: {}]
  %s1 = inlined_call_operand.vmem [shape: f32[16,16], index: 1, kind: output, shape index: {}]
  $region1: #{squeeze.111} parent=0
    #allocation0 [shape = 'u8[4096]{0}', space=vmem, size = 0x1000, scoped, tag = 'scoped mem for input reshape']
    %s3 = sshllo.u32 0, 2
    %v4 = vld [vmem:[%s0] sm:%s3]
    %5 = vst [vmem:[#allocation0] sm:%s3] %v4
    %v6 = vld [vmem:[#allocation0] sm:$0x3]
    %vm7 = vcmask 130048
    %8 = vst.msk [vmem:[%s1] ss:$8 sm:$0x3] %vm7, %v6
    %v9 = vld [vmem:[#allocation0] sm:$0x3]
    %10 = vrot.lane.b32.xlu0 %v9, 112
    %v11 = vpop.permute.xlu0 %10
    %vm12 = vcmask 130048
    %s13 = scalar_lea.vmem %s1, 1
    %14 = vst.msk [vmem:[%s13] ss:$8 sm:$0x3] %vm12, %v11
    %v15 = vld [vmem:[#allocation0] sm:$0x3]
    %16 = vrot.lane.b32.xlu0 %v15, 96
    %v17 = vpop.permute.xlu0 %16
    %vm18 = vcmask 130048
    %s19 = scalar_lea.vmem %s1, 2
    %20 = vst.msk [vmem:[%s19] ss:$8 sm:$0x3] %vm18, %v17
    %v21 = vld [vmem:[#allocation0] sm:$0x3]
    %22 = vrot.lane.b32.xlu0 %v21, 80
    %v23 = vpop.permute.xlu0 %22
    %vm24 = vcmask 130048
    %s25 = scalar_lea.vmem %s1, 3
    %26 = vst.msk [vmem:[%s25] ss:$8 sm:$0x3] %vm24, %v23
    %v27 = vld [vmem:[#allocation0] sm:$0x3]
    %28 = vrot.lane.b32.xlu0 %v27, 64
    %v29 = vpop.permute.xlu0 %28
    %vm30 = vcmask 130048
    %s31 = scalar_lea.vmem %s1, 4
    %32 = vst.msk [vmem:[%s31] ss:$8 sm:$0x3] %vm30, %v29
    %v33 = vld [vmem:[#allocation0] sm:$0x3]
    %34 = vrot.lane.b32.xlu0 %v33, 48
    %v35 = vpop.permute.xlu0 %34
    %vm36 = vcmask 130048
    %s37 = scalar_lea.vmem %s1, 5
    %38 = vst.msk [vmem:[%s37] ss:$8 sm:$0x3] %vm36, %v35
    %v39 = vld [vmem:[#allocation0] sm:$0x3]
    %40 = vrot.lane.b32.xlu0 %v39, 32
    %v41 = vpop.permute.xlu0 %40
    %vm42 = vcmask 130048
    %s43 = scalar_lea.vmem %s1, 6
    %44 = vst.msk [vmem:[%s43] ss:$8 sm:$0x3] %vm42, %v41
    %v45 = vld [vmem:[#allocation0] sm:$0x3]
    %46 = vrot.lane.b32.xlu0 %v45, 16
    %v47 = vpop.permute.xlu0 %46
    %vm48 = vcmask 130048
    %s49 = scalar_lea.vmem %s1, 7
    %50 = vst.msk [vmem:[%s49] ss:$8 sm:$0x3] %vm48, %v47

// kernel: tile.57
$region0: #{tile.57}
  #allocation0 [shape = 's32[1]{0}', space=sflag, size = 0x4, scoped, tag = 'scoped memory for tile.57']
  %s0 = inlined_call_operand.vmem [shape: f32[16], index: 0, kind: input, shape index: {}]
  %s1 = inlined_call_operand.vmem [shape: f32[16,16], index: 1, kind: output, shape index: {}]
  // Predicated region
  $region2: #{tile.57} parent=0 // pred_check
    _
  $region3: #{tile.57} parent=0 // pred_check_branch
    %3 = sbr.rel (0) target = $region5
  $region4: #{tile.57} parent=0 // pred_region
    _
  $region5: #{tile.57} parent=0 // pred_fallthru
    _
  %v4 = vld [vmem:[%s0] ss:$0 sm:$0xff]
  %5 = vst [vmem:[%s1] sm:$0xff] %v4
  %s6 = scalar_lea.vmem %s1, 8
  %7 = vst [vmem:[%s6] sm:$0xff] %v4

// kernel: generator_forward.23
$region0: #{generator_forward.23}
  #allocation0 [shape = 'u32[]', space=smem, size = 0x4, offset = 0x4, fixed_abs, tag = 'smem constant byte address 0x4 - core index']
  #allocation1 [shape = 'u32[144,128]{1,0:T(1,128)}', space=vmem, size = 0x12000, scoped, tag = 'internal scratch']
  %s0 = inlined_call_operand.vmem [shape: f32[32,256], index: 0, kind: input, shape index: {}]
  %s1 = inlined_call_operand.vmem [shape: f32[1,256], index: 1, kind: output, shape index: {0}]
  %s2 = inlined_call_operand.vmem [shape: f32[1,256], index: 2, kind: output, shape index: {1}]
  %3 = xla_tuple %s1, %s2
  %s4 = sld [smem:[#allocation0]]
  $region26: #{generator_forward.23} parent=0
    _
  %s6 = ssub.s32 1, %s4
  %s7 = scalar_select 0, %s6, %s4
  // Predicated region
  $region2: #{generator_forward.23} parent=0 // pred_check
    _
  $region3: #{generator_forward.23} parent=0 // pred_check_branch
    %9 = sbr.rel (0) target = $region5
  $region4: #{generator_forward.23} parent=0 // pred_region
    _
  $region5: #{generator_forward.23} parent=0 // pred_fallthru
    _
  %p10 = scmp.eq.s32.totalorder 0, 0
  // Predicated region
  $region6: #{generator_forward.23} parent=0 // pred_check
    %p11 = pneg %p10
  $region7: #{generator_forward.23} parent=0 // pred_check_branch
    %13 = sbr.rel (%p11) target = $region9
  $region8: #{generator_forward.23} parent=0 // pred_region
    %v14 = vlaneseq
    %vm15 = vcmp.ge.s32.totalorder %v14, 0
    %vm16 = vcmp.lt.s32.totalorder %v14, 256
    %vm17 = vmand %vm15, %vm16
    %18 = vst.msk [vmem:[%s1] sm:$0x3] %vm17, 0.0
    %19 = vst.msk [vmem:[%s2] sm:$0x3] %vm17, 0.0
  $region9: #{generator_forward.23} parent=0 // pred_fallthru
    _
  %v20 = vld [vmem:[%s0] sm:$0xff]
  %v21 = vld [vmem:[%s0 + $0x8] sm:$0xff]
  %v22 = vld [vmem:[%s0 + $0x10] sm:$0xff]
  %v23 = vld [vmem:[%s0 + $0x18] sm:$0xff]
  %v24 = vld [vmem:[%s0 + $0x20] sm:$0xff]
  %v25 = vld [vmem:[%s0 + $0x28] sm:$0xff]
  %v26 = vld [vmem:[%s0 + $0x30] sm:$0xff]
  %v27 = vld [vmem:[%s0 + $0x38] sm:$0xff]
  %v28 = vld [vmem:[%s1] sm:$0x3]
  %v29 = vadd.f32 %v20, %v22
  %v30 = vadd.f32 %v29, %v24
  %v31 = vadd.f32 %v30, %v26
  %v32 = vrot.slane %v31, 4
  %v33 = vadd.f32 %v31, %v32
  %v34 = vrot.slane %v33, 2
  %v35 = vadd.f32 %v33, %v34
  %v36 = vrot.slane %v35, 1
  %v37 = vadd.f32 %v35, %v36
  %v38 = vadd.f32 %v21, %v23
  %v39 = vadd.f32 %v38, %v25
  %v40 = vadd.f32 %v39, %v27
  %v41 = vrot.slane %v40, 4
  %v42 = vadd.f32 %v40, %v41
  %v43 = vrot.slane %v42, 2
  %v44 = vadd.f32 %v42, %v43
  %v45 = vrot.slane %v44, 1
  %v46 = vadd.f32 %v44, %v45
  %v49 = vcombine.low %v37, %v46
  %v51 = vunpack.c.l.s4 1966171168
  %v52 = vunpack.c.0.s8 %v51
  %v53 = vlaneseq
  %v54 = vshrl.u32 %v53, 7
  %v55 = vsub.s32 %v52, %v54
  %v56 = vrot.slane %v49, %v55
  %v58 = vunpack.c.l.s4 1966171168
  %v59 = vunpack.c.0.s8 %v58
  %v60 = vlaneseq
  %v61 = vshrl.u32 %v60, 7
  %v62 = vsub.s32 %v59, %v61
  %v63 = vrot.slane %v56, %v62
  %v65 = vadd.f32 %v28, %v63
  %v66 = vlaneseq
  %vm67 = vcmp.ge.s32.totalorder %v66, 0
  %vm68 = vcmp.lt.s32.totalorder %v66, 256
  %vm69 = vmand %vm67, %vm68
  %70 = vst.msk [vmem:[%s1] sm:$0x3] %vm69, %v65
  %v71 = vld [vmem:[%s2] sm:$0x3]
  %v72 = vmul.f32 %v20, %v20
  %v73 = vmul.f32 %v21, %v21
  %v74 = vmul.f32 %v22, %v22
  %v75 = vmul.f32 %v23, %v23
  %v76 = vmul.f32 %v24, %v24
  %v77 = vmul.f32 %v25, %v25
  %v78 = vmul.f32 %v26, %v26
  %v79 = vmul.f32 %v27, %v27
  %v80 = vadd.f32 %v72, %v74
  %v81 = vadd.f32 %v80, %v76
  %v82 = vadd.f32 %v81, %v78
  %v83 = vrot.slane %v82, 4
  %v84 = vadd.f32 %v82, %v83
  %v85 = vrot.slane %v84, 2
  %v86 = vadd.f32 %v84, %v85
  %v87 = vrot.slane %v86, 1
  %v88 = vadd.f32 %v86, %v87
  %v89 = vadd.f32 %v73, %v75
  %v90 = vadd.f32 %v89, %v77
  %v91 = vadd.f32 %v90, %v79
  %v92 = vrot.slane %v91, 4
  %v93 = vadd.f32 %v91, %v92
  %v94 = vrot.slane %v93, 2
  %v95 = vadd.f32 %v93, %v94
  %v96 = vrot.slane %v95, 1
  %v97 = vadd.f32 %v95, %v96
  %v100 = vcombine.low %v88, %v97
  %v102 = vunpack.c.l.s4 1966171168
  %v103 = vunpack.c.0.s8 %v102
  %v104 = vlaneseq
  %v105 = vshrl.u32 %v104, 7
  %v106 = vsub.s32 %v103, %v105
  %v107 = vrot.slane %v100, %v106
  %v109 = vunpack.c.l.s4 1966171168
  %v110 = vunpack.c.0.s8 %v109
  %v111 = vlaneseq
  %v112 = vshrl.u32 %v111, 7
  %v113 = vsub.s32 %v110, %v112
  %v114 = vrot.slane %v107, %v113
  %v116 = vadd.f32 %v71, %v114
  %117 = vst.msk [vmem:[%s2] sm:$0x3] %vm69, %v116
  // Predicated region
  $region10: #{generator_forward.23} parent=0 // pred_check
    _
  $region11: #{generator_forward.23} parent=0 // pred_check_branch
    %119 = sbr.rel (0) target = $region13
  $region12: #{generator_forward.23} parent=0 // pred_region
    _
  $region13: #{generator_forward.23} parent=0 // pred_fallthru
    _
  // Predicated region
  $region14: #{generator_forward.23} parent=0 // pred_check
    _
  $region15: #{generator_forward.23} parent=0 // pred_check_branch
    %121 = sbr.rel (0) target = $region17
  $region16: #{generator_forward.23} parent=0 // pred_region
    _
  $region17: #{generator_forward.23} parent=0 // pred_fallthru
    _
  // Predicated region
  $region18: #{generator_forward.23} parent=0 // pred_check
    _
  $region19: #{generator_forward.23} parent=0 // pred_check_branch
    %123 = sbr.rel (0) target = $region21
  $region20: #{generator_forward.23} parent=0 // pred_region
    _
  $region21: #{generator_forward.23} parent=0 // pred_fallthru
    _
  // Predicated region
  $region22: #{generator_forward.23} parent=0 // pred_check
    _
  $region23: #{generator_forward.23} parent=0 // pred_check_branch
    %125 = sbr.rel (0) target = $region25
  $region24: #{generator_forward.23} parent=0 // pred_region
    _
  $region25: #{generator_forward.23} parent=0 // pred_fallthru
    _

// kernel: tile.62
$region0: #{tile.62}
  %s0 = inlined_call_operand.vmem [shape: f32[16,16], index: 0, kind: input, shape index: {}]
  %s1 = inlined_call_operand.vmem [shape: f32[1,256], index: 1, kind: output, shape index: {}]
  $region1: #{tile.62} parent=0
    #allocation0 [shape = 'u8[8192]{0}', space=vmem, size = 0x2000, scoped, tag = 'scoped mem for output reshape']
    %s2 = smov 3
    %v3 = vld [vmem:[%s0] ss:$8 sm:%s2]
    %vm4 = vcmask 130048
    %5 = vst.msk [vmem:[#allocation0] ss:$8 sm:$0x3] %vm4, %v3
    %s6 = scalar_lea.vmem %s0, 7
    %s7 = smov 3
    %v8 = vld [vmem:[%s6] ss:$8 sm:%s7]
    %9 = vrot.lane.b32.xlu0 %v8, 112
    %v10 = vpop.permute.xlu0 %9
    %vm11 = vcmask 1048448
    %12 = vst.msk [vmem:[#allocation0] ss:$8 sm:$0x3] %vm11, %v10
    %s13 = scalar_lea.vmem %s0, 6
    %s14 = smov 3
    %v15 = vld [vmem:[%s13] ss:$8 sm:%s14]
    %16 = vrot.lane.b32.xlu0 %v15, 96
    %v17 = vpop.permute.xlu0 %16
    %vm18 = vcmask 917248
    %19 = vst.msk [vmem:[#allocation0] ss:$8 sm:$0x3] %vm18, %v17
    %s20 = scalar_lea.vmem %s0, 5
    %s21 = smov 3
    %v22 = vld [vmem:[%s20] ss:$8 sm:%s21]
    %23 = vrot.lane.b32.xlu0 %v22, 80
    %v24 = vpop.permute.xlu0 %23
    %vm25 = vcmask 786048
    %26 = vst.msk [vmem:[#allocation0] ss:$8 sm:$0x3] %vm25, %v24
    %s27 = scalar_lea.vmem %s0, 4
    %s28 = smov 3
    %v29 = vld [vmem:[%s27] ss:$8 sm:%s28]
    %30 = vrot.lane.b32.xlu0 %v29, 64
    %v31 = vpop.permute.xlu0 %30
    %vm32 = vcmask 654848
    %33 = vst.msk [vmem:[#allocation0] ss:$8 sm:$0x3] %vm32, %v31
    %s34 = scalar_lea.vmem %s0, 3
    %s35 = smov 3
    %v36 = vld [vmem:[%s34] ss:$8 sm:%s35]
    %37 = vrot.lane.b32.xlu0 %v36, 48
    %v38 = vpop.permute.xlu0 %37
    %vm39 = vcmask 523648
    %40 = vst.msk [vmem:[#allocation0] ss:$8 sm:$0x3] %vm39, %v38
    %s41 = scalar_lea.vmem %s0, 2
    %s42 = smov 3
    %v43 = vld [vmem:[%s41] ss:$8 sm:%s42]
    %44 = vrot.lane.b32.xlu0 %v43, 32
    %v45 = vpop.permute.xlu0 %44
    %vm46 = vcmask 392448
    %47 = vst.msk [vmem:[#allocation0] ss:$8 sm:$0x3] %vm46, %v45
    %s48 = scalar_lea.vmem %s0, 1
    %s49 = smov 3
    %v50 = vld [vmem:[%s48] ss:$8 sm:%s49]
    %51 = vrot.lane.b32.xlu0 %v50, 16
    %v52 = vpop.permute.xlu0 %51
    %vm53 = vcmask 261248
    %54 = vst.msk [vmem:[#allocation0] ss:$8 sm:$0x3] %vm53, %v52
    %s56 = sshllo.u32 0, 1
    %v58 = vld [vmem:[#allocation0] sm:%s56]
    %s59 = sshllo.u32 0, 1
    %60 = vst [vmem:[%s1] sm:%s59] %v58
    %s61 = scalar_lea.vmem [#allocation0], 8
    %v62 = vld [vmem:[%s61] sm:%s56]
    %s63 = sshllo.u32 0, 1
    %s64 = scalar_lea.vmem %s1, 1
    %65 = vst [vmem:[%s64] sm:%s63] %v62

// kernel: generator_forward.24
$region0: #{generator_forward.24}
  #allocation0 [shape = 'u32[]', space=smem, size = 0x4, offset = 0x4, fixed_abs, tag = 'smem constant byte address 0x4 - core index']
  #allocation1 [shape = 'u32[144,128]{1,0:T(1,128)}', space=vmem, size = 0x12000, scoped, tag = 'internal scratch']
  %s0 = inlined_call_operand.vmem [shape: f32[32,256], index: 0, kind: input, shape index: {}]
  %s1 = inlined_call_operand.vmem [shape: f32[1,256], index: 1, kind: input, shape index: {}]
  %s2 = inlined_call_operand.vmem [shape: f32[1,256], index: 2, kind: input, shape index: {}]
  %s3 = inlined_call_operand.vmem [shape: f32[32,256], index: 3, kind: output, shape index: {}]
  %s4 = sld [smem:[#allocation0]]
  $region22: #{generator_forward.24} parent=0
    _
  %s6 = ssub.s32 1, %s4
  %s7 = scalar_select 0, %s6, %s4
  // Predicated region
  $region2: #{generator_forward.24} parent=0 // pred_check
    _
  $region3: #{generator_forward.24} parent=0 // pred_check_branch
    %9 = sbr.rel (0) target = $region5
  $region4: #{generator_forward.24} parent=0 // pred_region
    _
  $region5: #{generator_forward.24} parent=0 // pred_fallthru
    _
  // Predicated region
  $region6: #{generator_forward.24} parent=0 // pred_check
    _
  $region7: #{generator_forward.24} parent=0 // pred_check_branch
    %11 = sbr.rel (0) target = $region9
  $region8: #{generator_forward.24} parent=0 // pred_region
    _
  $region9: #{generator_forward.24} parent=0 // pred_fallthru
    _
  // Predicated region
  $region10: #{generator_forward.24} parent=0 // pred_check
    _
  $region11: #{generator_forward.24} parent=0 // pred_check_branch
    %13 = sbr.rel (0) target = $region13
  $region12: #{generator_forward.24} parent=0 // pred_region
    _
  $region13: #{generator_forward.24} parent=0 // pred_fallthru
    _
  %v14 = vld [vmem:[%s0] sm:$0xff]
  %v15 = vld [vmem:[%s0 + $0x8] sm:$0xff]
  %v16 = vld [vmem:[%s0 + $0x10] sm:$0xff]
  %v17 = vld [vmem:[%s0 + $0x18] sm:$0xff]
  %v18 = vld [vmem:[%s0 + $0x20] sm:$0xff]
  %v19 = vld [vmem:[%s0 + $0x28] sm:$0xff]
  %v20 = vld [vmem:[%s0 + $0x30] sm:$0xff]
  %v21 = vld [vmem:[%s0 + $0x38] sm:$0xff]
  %v22 = vld [vmem:[%s1] sm:$0x3]
  %v24 = vlaneseq
  %v25 = vshrl.u32 %v24, 7
  %v26 = vsub.s32 0, %v25
  %v27 = vrot.slane %v22, %v26
  %v28 = vlaneseq
  %v29 = vshrl.u32 %v28, 7
  %v30 = vsub.s32 1, %v29
  %v31 = vrot.slane %v22, %v30
  %v34 = vmul.f32 %v14, %v27
  %v35 = vmul.f32 %v15, %v31
  %v36 = vmul.f32 %v16, %v27
  %v37 = vmul.f32 %v17, %v31
  %v38 = vmul.f32 %v18, %v27
  %v39 = vmul.f32 %v19, %v31
  %v40 = vmul.f32 %v20, %v27
  %v41 = vmul.f32 %v21, %v31
  %v42 = vld [vmem:[%s2] sm:$0x3]
  %v44 = vlaneseq
  %v45 = vshrl.u32 %v44, 7
  %v46 = vsub.s32 0, %v45
  %v47 = vrot.slane %v42, %v46
  %v48 = vlaneseq
  %v49 = vshrl.u32 %v48, 7
  %v50 = vsub.s32 1, %v49
  %v51 = vrot.slane %v42, %v50
  %v54 = vadd.f32 %v34, %v47
  %v55 = vadd.f32 %v35, %v51
  %v56 = vadd.f32 %v36, %v47
  %v57 = vadd.f32 %v37, %v51
  %v58 = vadd.f32 %v38, %v47
  %v59 = vadd.f32 %v39, %v51
  %v60 = vadd.f32 %v40, %v47
  %v61 = vadd.f32 %v41, %v51
  %v62 = vmax.f32 %v54, 0.0
  %v63 = vmax.f32 %v55, 0.0
  %v64 = vmax.f32 %v56, 0.0
  %v65 = vmax.f32 %v57, 0.0
  %v66 = vmax.f32 %v58, 0.0
  %v67 = vmax.f32 %v59, 0.0
  %v68 = vmax.f32 %v60, 0.0
  %v69 = vmax.f32 %v61, 0.0
  %70 = vst [vmem:[%s3] sm:$0xff] %v62
  %71 = vst [vmem:[%s3 + $0x8] sm:$0xff] %v63
  %72 = vst [vmem:[%s3 + $0x10] sm:$0xff] %v64
  %73 = vst [vmem:[%s3 + $0x18] sm:$0xff] %v65
  %74 = vst [vmem:[%s3 + $0x20] sm:$0xff] %v66
  %75 = vst [vmem:[%s3 + $0x28] sm:$0xff] %v67
  %76 = vst [vmem:[%s3 + $0x30] sm:$0xff] %v68
  %77 = vst [vmem:[%s3 + $0x38] sm:$0xff] %v69
  // Predicated region
  $region14: #{generator_forward.24} parent=0 // pred_check
    _
  $region15: #{generator_forward.24} parent=0 // pred_check_branch
    %79 = sbr.rel (0) target = $region17
  $region16: #{generator_forward.24} parent=0 // pred_region
    _
  $region17: #{generator_forward.24} parent=0 // pred_fallthru
    _
  // Predicated region
  $region18: #{generator_forward.24} parent=0 // pred_check
    _
  $region19: #{generator_forward.24} parent=0 // pred_check_branch
    %81 = sbr.rel (0) target = $region21
  $region20: #{generator_forward.24} parent=0 // pred_region
    _
  $region21: #{generator_forward.24} parent=0 // pred_fallthru
    _

// kernel: generator_forward.25
$region0: #{generator_forward.25}
  #allocation0 [shape = 'u32[]', space=smem, size = 0x4, offset = 0x4, fixed_abs, tag = 'smem constant byte address 0x4 - core index']
  #allocation1 [shape = 'u32[144,128]{1,0:T(1,128)}', space=vmem, size = 0x12000, scoped, tag = 'internal scratch']
  %s0 = inlined_call_operand.vmem [shape: f32[592,128], index: 0, kind: input, shape index: {}]
  %s1 = inlined_call_operand.vmem [shape: f32[128,128], index: 1, kind: input, shape index: {}]
  %s2 = inlined_call_operand.vmem [shape: f32[592,128], index: 2, kind: output, shape index: {}]
  %s3 = sld [smem:[#allocation0]]
  $region41: #{generator_forward.25} parent=0
    _
  %s5 = ssub.s32 1, %s3
  %s6 = scalar_select 0, %s5, %s3
  loop: start=0, step=1, limit=4
  $region2: #{generator_forward.25} parent=0 // loop_pre_header
    _
  $region3: #{generator_forward.25} parent=0 // loop_header
    %s8 = sphi 0, %s12
    %p9 = scmp.ge.s32.totalorder %s8, 4
    %s15 = sphi 0, %s27
    %s16 = sphi 0, %s23
    %s17 = sphi 0, %s15
    %s18 = sphi 0, %s16
    %s19 = sphi 0, %s17
    %s20 = sphi 0, %s18
    %s30 = sphi 0, %s32
    %s33 = sphi 0, %s30
    %s34 = sphi 0, %s33
    %s50 = sphi 0, %s34
    %s56 = sphi 0, %s58
    %s59 = sphi 0, %s56
    %s60 = sphi 0, %s59
    %s76 = sphi 0, %s60
    %s84 = sphi 0, %s86
    %s87 = sphi 0, %s84
    %s88 = sphi 0, %s87
    %s104 = sphi 0, %s88
  $region4: #{generator_forward.25} parent=0 // loop_header_branch
    %11 = sbr.rel (%p9) target = $region8
  $region5: #{generator_forward.25} parent=0 // loop_body
    %s13 = ssub.s32 %s8, 1
    %s14 = ssub.s32 %s8, 2
    %s21 = sadd.s32 1, %s16
    %p22 = scmp.ge.s32.totalorder %s21, 1
    %s23 = scalar_select %p22, 0, %s21
    %s24 = sadd.s32 1, %s15
    %s25 = scalar_select %p22, %s24, %s15
    %p26 = scmp.ge.s32.totalorder %s25, 2
    %s27 = scalar_select %p26, 0, %s25
    %s28 = ssub.s32 %s15, %s27
    %p29 = scmp.eq.s32.totalorder %s28, 0
    %s31 = sadd.s32 %s30, 1
    %s32 = scalar_select %p29, %s30, %s31
    %p35 = pneg %p29
    %p36 = scmp.eq.s32.totalorder %s8, 1
    %p37 = por %p35, %p36
    %p38 = scmp.ne.s32.totalorder %s30, %s33
    %p39 = scmp.eq.s32.totalorder %s8, 0
    %p40 = por %p38, %p39
    %p41 = scmp.ne.s32.totalorder %s30, %s33
    %p42 = scmp.eq.s32.totalorder %s13, 1
    %p43 = por %p41, %p42
    %p44 = scmp.ne.s32.totalorder %s33, %s34
    %p45 = scmp.eq.s32.totalorder %s13, 0
    %p46 = por %p44, %p45
    %p47 = scmp.ne.s32.totalorder %s33, %s34
    %p48 = scmp.eq.s32.totalorder %s14, 1
    %p49 = por %p47, %p48
    %p51 = scmp.ne.s32.totalorder %s34, %s50
    %p52 = scmp.eq.s32.totalorder %s14, 0
    %p53 = por %p51, %p52
    %s54 = ssub.s32 %s16, %s23
    %p55 = scmp.eq.s32.totalorder %s54, 0
    %s57 = sadd.s32 %s56, 1
    %s58 = scalar_select %p55, %s56, %s57
    %p61 = pneg %p55
    %p62 = scmp.eq.s32.totalorder %s8, 1
    %p63 = por %p61, %p62
    %p64 = scmp.ne.s32.totalorder %s56, %s59
    %p65 = scmp.eq.s32.totalorder %s8, 0
    %p66 = por %p64, %p65
    %p67 = scmp.ne.s32.totalorder %s56, %s59
    %p68 = scmp.eq.s32.totalorder %s13, 1
    %p69 = por %p67, %p68
    %p70 = scmp.ne.s32.totalorder %s59, %s60
    %p71 = scmp.eq.s32.totalorder %s13, 0
    %p72 = por %p70, %p71
    %p73 = scmp.ne.s32.totalorder %s59, %s60
    %p74 = scmp.eq.s32.totalorder %s14, 1
    %p75 = por %p73, %p74
    %p77 = scmp.ne.s32.totalorder %s60, %s76
    %p78 = scmp.eq.s32.totalorder %s14, 0
    %p79 = por %p77, %p78
    %s80 = ssub.s32 %s15, %s27
    %s81 = ssub.s32 %s16, %s23
    %s82 = sor.u32 %s80, %s81
    %p83 = scmp.eq.s32.totalorder %s82, 0
    %s85 = sadd.s32 %s84, 1
    %s86 = scalar_select %p83, %s84, %s85
    %p89 = pneg %p83
    %p90 = scmp.eq.s32.totalorder %s8, 1
    %p91 = por %p89, %p90
    %p92 = scmp.ne.s32.totalorder %s84, %s87
    %p93 = scmp.eq.s32.totalorder %s8, 0
    %p94 = por %p92, %p93
    %p95 = scmp.ne.s32.totalorder %s84, %s87
    %p96 = scmp.eq.s32.totalorder %s13, 1
    %p97 = por %p95, %p96
    %p98 = scmp.ne.s32.totalorder %s87, %s88
    %p99 = scmp.eq.s32.totalorder %s13, 0
    %p100 = por %p98, %p99
    %p101 = scmp.ne.s32.totalorder %s87, %s88
    %p102 = scmp.eq.s32.totalorder %s14, 1
    %p103 = por %p101, %p102
    %p105 = scmp.ne.s32.totalorder %s88, %s104
    %p106 = scmp.eq.s32.totalorder %s14, 0
    %p107 = por %p105, %p106
    %p108 = scmp.le.s32.totalorder 1, %s8
    %p109 = scmp.lt.s32.totalorder %s8, 3
    %p110 = pnand %p108, %p109
    %p111 = pneg %p110
    // Predicated region
    $region9: #{generator_forward.25} parent=5 // pred_check
      _
    $region10: #{generator_forward.25} parent=5 // pred_check_branch
      %113 = sbr.rel (%p110) target = $region12
    $region11: #{generator_forward.25} parent=5 // pred_region
      %s114 = ssub.s32 %s8, 1
      // Predicated region
      $region13: #{generator_forward.25} parent=11 // pred_check
        %p115 = pneg %p72
      $region14: #{generator_forward.25} parent=11 // pred_check_branch
        %117 = sbr.rel (%p115) target = $region16
      $region15: #{generator_forward.25} parent=11 // pred_region
        %p118 = scmp.lt.s32.totalorder %s18, 0
        %s119 = scalar_select %p118, %s18, 0
        %s120 = smul.addr %s119, 8
        %s121 = scalar_lea.vmem %s1, %s120
      $region16: #{generator_forward.25} parent=11 // pred_fallthru
        _
    $region12: #{generator_forward.25} parent=5 // pred_fallthru
      _
    %p122 = scmp.lt.s32.totalorder %s8, 2
    // Predicated region
    $region17: #{generator_forward.25} parent=5 // pred_check
      %p123 = pneg %p122
    $region18: #{generator_forward.25} parent=5 // pred_check_branch
      %125 = sbr.rel (%p123) target = $region20
    $region19: #{generator_forward.25} parent=5 // pred_region
      // Predicated region
      $region21: #{generator_forward.25} parent=19 // pred_check
        %p126 = pneg %p40
      $region22: #{generator_forward.25} parent=19 // pred_check_branch
        %128 = sbr.rel (%p126) target = $region24
      $region23: #{generator_forward.25} parent=19 // pred_region
        %s129 = smul.u32 37, %s15
        %p130 = scmp.lt.s32.totalorder %s129, 73
        %s131 = scalar_select %p130, %s129, 73
        %s132 = smul.addr %s131, 8
        %s133 = scalar_lea.vmem %s0, %s132
        %s134 = smul.u32 37, %s15
      $region24: #{generator_forward.25} parent=19 // pred_fallthru
        _
    $region20: #{generator_forward.25} parent=5 // pred_fallthru
      _
    %p135 = scmp.le.s32.totalorder 1, %s8
    %p136 = scmp.lt.s32.totalorder %s8, 3
    %p137 = pnand %p135, %p136
    %p138 = pneg %p137
    // Predicated region
    $region25: #{generator_forward.25} parent=5 // pred_check
      _
    $region26: #{generator_forward.25} parent=5 // pred_check_branch
      %140 = sbr.rel (%p137) target = $region28
    $region27: #{generator_forward.25} parent=5 // pred_region
      %s141 = ssub.s32 %s8, 1
      %s142 = smul.u32 37, %s17
      %p143 = scmp.lt.s32.totalorder %s142, 73
      %s144 = scalar_select %p143, %s142, 73
      %s145 = smul.addr %s144, 8
      %s146 = scalar_lea.vmem %s0, %s145
      %p147 = pneg %p46
      %p148 = pneg %p43
      %p149 = scmp.lt.s32.totalorder %s18, 0
      %s150 = scalar_select %p149, %s18, 0
      %s151 = smul.addr %s150, 8
      %s152 = scalar_lea.vmem %s1, %s151
      %p153 = pneg %p72
      %p154 = pneg %p69
      %p155 = pneg %p100
      %p156 = pneg %p97
      %s157 = smul.u32 37, %s17
      %p158 = scmp.lt.s32.totalorder %s157, 73
      %s159 = scalar_select %p158, %s157, 73
      %p160 = scmp.lt.s32.totalorder %s18, 0
      %s161 = scalar_select %p160, %s18, 0
      %s162 = sadd.s32 %s161, %s159
      %s163 = smul.addr %s162, 8
      %s164 = scalar_lea.vmem %s2, %s163
      %s165 = smul.u32 37, %s17
      %p166 = scmp.lt.s32.totalorder %s165, 73
      %s167 = scalar_select %p166, %s165, 73
      %s168 = smul.addr %s167, 8
      %s169 = scalar_lea.vmem %s0, %s168
      %s170 = smul.u32 37, %s17
      %p171 = scmp.lt.s32.totalorder %s18, 0
      %s172 = scalar_select %p171, %s18, 0
      %s173 = smul.addr %s172, 8
      %s174 = scalar_lea.vmem %s1, %s173
      %s175 = smul.u32 37, %s17
      %p176 = scmp.lt.s32.totalorder %s175, 73
      %s177 = scalar_select %p176, %s175, 73
      %p178 = scmp.lt.s32.totalorder %s18, 0
      %s179 = scalar_select %p178, %s18, 0
      %s180 = sadd.s32 %s179, %s177
      %s181 = smul.addr %s180, 8
      %s182 = scalar_lea.vmem %s2, %s181
      %s183 = smul.u32 37, %s17
      %v184 = vld [vmem:[%s169] sm:$0xff]
      %v185 = vld [vmem:[%s169 + $0x8] sm:$0xff]
      %v186 = vld [vmem:[%s169 + $0x10] sm:$0xff]
      %v187 = vld [vmem:[%s169 + $0x18] sm:$0xff]
      %v188 = vld [vmem:[%s169 + $0x20] sm:$0xff]
      %v189 = vld [vmem:[%s169 + $0x28] sm:$0xff]
      %v190 = vld [vmem:[%s169 + $0x30] sm:$0xff]
      %v191 = vld [vmem:[%s169 + $0x38] sm:$0xff]
      %v192 = vld [vmem:[%s169 + $0x40] sm:$0xff]
      %v193 = vld [vmem:[%s169 + $0x48] sm:$0xff]
      %v194 = vld [vmem:[%s169 + $0x50] sm:$0xff]
      %v195 = vld [vmem:[%s169 + $0x58] sm:$0xff]
      %v196 = vld [vmem:[%s169 + $0x60] sm:$0xff]
      %v197 = vld [vmem:[%s169 + $0x68] sm:$0xff]
      %v198 = vld [vmem:[%s169 + $0x70] sm:$0xff]
      %v199 = vld [vmem:[%s169 + $0x78] sm:$0xff]
      %v200 = vld [vmem:[%s169 + $0x80] sm:$0xff]
      %v201 = vld [vmem:[%s169 + $0x88] sm:$0xff]
      %v202 = vld [vmem:[%s169 + $0x90] sm:$0xff]
      %v203 = vld [vmem:[%s169 + $0x98] sm:$0xff]
      %v204 = vld [vmem:[%s169 + $0xa0] sm:$0xff]
      %v205 = vld [vmem:[%s169 + $0xa8] sm:$0xff]
      %v206 = vld [vmem:[%s169 + $0xb0] sm:$0xff]
      %v207 = vld [vmem:[%s169 + $0xb8] sm:$0xff]
      %v208 = vld [vmem:[%s169 + $0xc0] sm:$0xff]
      %v209 = vld [vmem:[%s169 + $0xc8] sm:$0xff]
      %v210 = vld [vmem:[%s169 + $0xd0] sm:$0xff]
      %v211 = vld [vmem:[%s169 + $0xd8] sm:$0xff]
      %v212 = vld [vmem:[%s169 + $0xe0] sm:$0xff]
      %v213 = vld [vmem:[%s169 + $0xe8] sm:$0xff]
      %v214 = vld [vmem:[%s169 + $0xf0] sm:$0xff]
      %v215 = vld [vmem:[%s169 + $0xf8] sm:$0xff]
      %v216 = vld [vmem:[%s169 + $0x100] sm:$0xff]
      %v217 = vld [vmem:[%s169 + $0x108] sm:$0xff]
      %v218 = vld [vmem:[%s169 + $0x110] sm:$0xff]
      %v219 = vld [vmem:[%s169 + $0x118] sm:$0xff]
      %v220 = vld [vmem:[%s169 + $0x120] sm:$0xff]
      %v221 = vld [vmem:[%s174] sm:$0xff]
      %v222 = vld [vmem:[%s174 + $0x8] sm:$0xff]
      %v223 = vld [vmem:[%s174 + $0x10] sm:$0xff]
      %v224 = vld [vmem:[%s174 + $0x18] sm:$0xff]
      %v225 = vld [vmem:[%s174 + $0x20] sm:$0xff]
      %v226 = vld [vmem:[%s174 + $0x28] sm:$0xff]
      %v227 = vld [vmem:[%s174 + $0x30] sm:$0xff]
      %v228 = vld [vmem:[%s174 + $0x38] sm:$0xff]
      %v229 = vld [vmem:[%s174 + $0x40] sm:$0xff]
      %v230 = vld [vmem:[%s174 + $0x48] sm:$0xff]
      %v231 = vld [vmem:[%s174 + $0x50] sm:$0xff]
      %v232 = vld [vmem:[%s174 + $0x58] sm:$0xff]
      %v233 = vld [vmem:[%s174 + $0x60] sm:$0xff]
      %v234 = vld [vmem:[%s174 + $0x68] sm:$0xff]
      %v235 = vld [vmem:[%s174 + $0x70] sm:$0xff]
      %v236 = vld [vmem:[%s174 + $0x78] sm:$0xff]
      %237 = vmatprep.subr.mxu0 0.0
      %238 = vmatpush1.msra.mxu0 %v221
      %239 = vmatprep.subr.mxu0 0.0
      %240 = vmatpush1.msra.mxu0 %v222
      %241 = vmatprep.subr.mxu0 0.0
      %242 = vmatpush1.msra.mxu0 %v223
      %243 = vmatprep.subr.mxu0 0.0
      %244 = vmatpush1.msra.mxu0 %v224
      %245 = vmatprep.subr.mxu0 0.0
      %246 = vmatpush1.msra.mxu0 %v225
      %247 = vmatprep.subr.mxu0 0.0
      %248 = vmatpush1.msra.mxu0 %v226
      %249 = vmatprep.subr.mxu0 0.0
      %250 = vmatpush1.msra.mxu0 %v227
      %251 = vmatprep.subr.mxu0 0.0
      %252 = vmatpush1.msra.mxu0 %v228
      %253 = vmatprep.subr.mxu0 0.0
      %254 = vmatpush1.msra.mxu0 %v229
      %255 = vmatprep.subr.mxu0 0.0
      %256 = vmatpush1.msra.mxu0 %v230
      %257 = vmatprep.subr.mxu0 0.0
      %258 = vmatpush1.msra.mxu0 %v231
      %259 = vmatprep.subr.mxu0 0.0
      %260 = vmatpush1.msra.mxu0 %v232
      %261 = vmatprep.subr.mxu0 0.0
      %262 = vmatpush1.msra.mxu0 %v233
      %263 = vmatprep.subr.mxu0 0.0
      %264 = vmatpush1.msra.mxu0 %v234
      %265 = vmatprep.subr.mxu0 0.0
      %266 = vmatpush1.msra.mxu0 %v235
      %267 = vmatprep.subr.mxu0 0.0
      %268 = vmatpush1.msra.mxu0 %v236
      %269 = vmatprep.subr.mxu0 0.0
      %270 = vmatpush1.msra.mxu0 0.0
      %271 = vmatprep.subr.mxu0 0.0
      %272 = vmatpush1.msra.mxu0 0.0
      %273 = vmatprep.subr.mxu0 0.0
      %274 = vmatpush1.msra.mxu0 0.0
      %275 = vmatprep.subr.mxu0 0.0
      %276 = vmatpush1.msra.mxu0 0.0
      %277 = vmatprep.subr.mxu0 0.0
      %278 = vmatpush1.msra.mxu0 0.0
      %279 = vmatprep.subr.mxu0 0.0
      %280 = vmatpush1.msra.mxu0 0.0
      %281 = vmatprep.subr.mxu0 0.0
      %282 = vmatpush1.msra.mxu0 0.0
      %283 = vmatprep.subr.mxu0 0.0
      %284 = vmatpush1.msra.mxu0 0.0
      %285 = vmatprep.subr.mxu0 0.0
      %286 = vmatpush1.msra.mxu0 0.0
      %287 = vmatprep.subr.mxu0 0.0
      %288 = vmatpush1.msra.mxu0 0.0
      %289 = vmatprep.subr.mxu0 0.0
      %290 = vmatpush1.msra.mxu0 0.0
      %291 = vmatprep.subr.mxu0 0.0
      %292 = vmatpush1.msra.mxu0 0.0
      %293 = vmatprep.subr.mxu0 0.0
      %294 = vmatpush1.msra.mxu0 0.0
      %295 = vmatprep.subr.mxu0 0.0
      %296 = vmatpush1.msra.mxu0 0.0
      %297 = vmatprep.subr.mxu0 0.0
      %298 = vmatpush1.msra.mxu0 0.0
      %299 = vmatprep.subr.mxu0 0.0
      %300 = vmatpush1.msra.mxu0 0.0
      %301 = vmatprep.mubr.f32.mxu0 0.0
      %302 = vmatmul.mubr.f32.gmra.mrb[0].mxu0 %v184
      %v303 = vpop.f32.mrb[0].mxu0
      %v304 = vadd.f32 0.0, %v303
      %v305 = vpop.f32.mrb[0].mxu0
      %306 = vmatprep.mubr.f32.mxu0 0.0
      %307 = vmatmul.mubr.f32.gmra.mrb[0].mxu0 %v185
      %v308 = vpop.f32.mrb[0].mxu0
      %v309 = vadd.f32 0.0, %v308
      %v310 = vpop.f32.mrb[0].mxu0
      %311 = vmatprep.mubr.f32.mxu0 0.0
      %312 = vmatmul.mubr.f32.gmra.mrb[0].mxu0 %v186
      %v313 = vpop.f32.mrb[0].mxu0
      %v314 = vadd.f32 0.0, %v313
      %v315 = vpop.f32.mrb[0].mxu0
      %316 = vmatprep.mubr.f32.mxu0 0.0
      %317 = vmatmul.mubr.f32.gmra.mrb[0].mxu0 %v187
      %v318 = vpop.f32.mrb[0].mxu0
      %v319 = vadd.f32 0.0, %v318
      %v320 = vpop.f32.mrb[0].mxu0
      %321 = vmatprep.mubr.f32.mxu0 0.0
      %322 = vmatmul.mubr.f32.gmra.mrb[0].mxu0 %v188
      %v323 = vpop.f32.mrb[0].mxu0
      %v324 = vadd.f32 0.0, %v323
      %v325 = vpop.f32.mrb[0].mxu0
      %326 = vmatprep.mubr.f32.mxu0 0.0
      %327 = vmatmul.mubr.f32.gmra.mrb[0].mxu0 %v189
      %v328 = vpop.f32.mrb[0].mxu0
      %v329 = vadd.f32 0.0, %v328
      %v330 = vpop.f32.mrb[0].mxu0
      %331 = vmatprep.mubr.f32.mxu0 0.0
      %332 = vmatmul.mubr.f32.gmra.mrb[0].mxu0 %v190
      %v333 = vpop.f32.mrb[0].mxu0
      %v334 = vadd.f32 0.0, %v333
      %v335 = vpop.f32.mrb[0].mxu0
      %336 = vmatprep.mubr.f32.mxu0 0.0
      %337 = vmatmul.mubr.f32.gmra.mrb[0].mxu0 %v191
      %v338 = vpop.f32.mrb[0].mxu0
      %v339 = vadd.f32 0.0, %v338
      %v340 = vpop.f32.mrb[0].mxu0
      %341 = vmatprep.mubr.f32.mxu0 0.0
      %342 = vmatmul.mubr.f32.gmra.mrb[0].mxu0 %v192
      %v343 = vpop.f32.mrb[0].mxu0
      %v344 = vadd.f32 0.0, %v343
      %v345 = vpop.f32.mrb[0].mxu0
      %346 = vmatprep.mubr.f32.mxu0 0.0
      %347 = vmatmul.mubr.f32.gmra.mrb[0].mxu0 %v193
      %v348 = vpop.f32.mrb[0].mxu0
      %v349 = vadd.f32 0.0, %v348
      %v350 = vpop.f32.mrb[0].mxu0
      %351 = vmatprep.mubr.f32.mxu0 0.0
      %352 = vmatmul.mubr.f32.gmra.mrb[0].mxu0 %v194
      %v353 = vpop.f32.mrb[0].mxu0
      %v354 = vadd.f32 0.0, %v353
      %v355 = vpop.f32.mrb[0].mxu0
      %356 = vmatprep.mubr.f32.mxu0 0.0
      %357 = vmatmul.mubr.f32.gmra.mrb[0].mxu0 %v195
      %v358 = vpop.f32.mrb[0].mxu0
      %v359 = vadd.f32 0.0, %v358
      %v360 = vpop.f32.mrb[0].mxu0
      %361 = vmatprep.mubr.f32.mxu0 0.0
      %362 = vmatmul.mubr.f32.gmra.mrb[0].mxu0 %v196
      %v363 = vpop.f32.mrb[0].mxu0
      %v364 = vadd.f32 0.0, %v363
      %v365 = vpop.f32.mrb[0].mxu0
      %366 = vmatprep.mubr.f32.mxu0 0.0
      %367 = vmatmul.mubr.f32.gmra.mrb[0].mxu0 %v197
      %v368 = vpop.f32.mrb[0].mxu0
      %v369 = vadd.f32 0.0, %v368
      %v370 = vpop.f32.mrb[0].mxu0
      %371 = vmatprep.mubr.f32.mxu0 0.0
      %372 = vmatmul.mubr.f32.gmra.mrb[0].mxu0 %v198
      %v373 = vpop.f32.mrb[0].mxu0
      %v374 = vadd.f32 0.0, %v373
      %v375 = vpop.f32.mrb[0].mxu0
      %376 = vmatprep.mubr.f32.mxu0 0.0
      %377 = vmatmul.mubr.f32.gmra.mrb[0].mxu0 %v199
      %v378 = vpop.f32.mrb[0].mxu0
      %v379 = vadd.f32 0.0, %v378
      %v380 = vpop.f32.mrb[0].mxu0
      %381 = vmatprep.mubr.f32.mxu0 0.0
      %382 = vmatmul.mubr.f32.gmra.mrb[0].mxu0 %v200
      %v383 = vpop.f32.mrb[0].mxu0
      %v384 = vadd.f32 0.0, %v383
      %v385 = vpop.f32.mrb[0].mxu0
      %386 = vmatprep.mubr.f32.mxu0 0.0
      %387 = vmatmul.mubr.f32.gmra.mrb[0].mxu0 %v201
      %v388 = vpop.f32.mrb[0].mxu0
      %v389 = vadd.f32 0.0, %v388
      %v390 = vpop.f32.mrb[0].mxu0
      %391 = vmatprep.mubr.f32.mxu0 0.0
      %392 = vmatmul.mubr.f32.gmra.mrb[0].mxu0 %v202
      %v393 = vpop.f32.mrb[0].mxu0
      %v394 = vadd.f32 0.0, %v393
      %v395 = vpop.f32.mrb[0].mxu0
      %396 = vmatprep.mubr.f32.mxu0 0.0
      %397 = vmatmul.mubr.f32.gmra.mrb[0].mxu0 %v203
      %v398 = vpop.f32.mrb[0].mxu0
      %v399 = vadd.f32 0.0, %v398
      %v400 = vpop.f32.mrb[0].mxu0
      %401 = vmatprep.mubr.f32.mxu0 0.0
      %402 = vmatmul.mubr.f32.gmra.mrb[0].mxu0 %v204
      %v403 = vpop.f32.mrb[0].mxu0
      %v404 = vadd.f32 0.0, %v403
      %v405 = vpop.f32.mrb[0].mxu0
      %406 = vmatprep.mubr.f32.mxu0 0.0
      %407 = vmatmul.mubr.f32.gmra.mrb[0].mxu0 %v205
      %v408 = vpop.f32.mrb[0].mxu0
      %v409 = vadd.f32 0.0, %v408
      %v410 = vpop.f32.mrb[0].mxu0
      %411 = vmatprep.mubr.f32.mxu0 0.0
      %412 = vmatmul.mubr.f32.gmra.mrb[0].mxu0 %v206
      %v413 = vpop.f32.mrb[0].mxu0
      %v414 = vadd.f32 0.0, %v413
      %v415 = vpop.f32.mrb[0].mxu0
      %416 = vmatprep.mubr.f32.mxu0 0.0
      %417 = vmatmul.mubr.f32.gmra.mrb[0].mxu0 %v207
      %v418 = vpop.f32.mrb[0].mxu0
      %v419 = vadd.f32 0.0, %v418
      %v420 = vpop.f32.mrb[0].mxu0
      %421 = vmatprep.mubr.f32.mxu0 0.0
      %422 = vmatmul.mubr.f32.gmra.mrb[0].mxu0 %v208
      %v423 = vpop.f32.mrb[0].mxu0
      %v424 = vadd.f32 0.0, %v423
      %v425 = vpop.f32.mrb[0].mxu0
      %426 = vmatprep.mubr.f32.mxu0 0.0
      %427 = vmatmul.mubr.f32.gmra.mrb[0].mxu0 %v209
      %v428 = vpop.f32.mrb[0].mxu0
      %v429 = vadd.f32 0.0, %v428
      %v430 = vpop.f32.mrb[0].mxu0
      %431 = vmatprep.mubr.f32.mxu0 0.0
      %432 = vmatmul.mubr.f32.gmra.mrb[0].mxu0 %v210
      %v433 = vpop.f32.mrb[0].mxu0
      %v434 = vadd.f32 0.0, %v433
      %v435 = vpop.f32.mrb[0].mxu0
      %436 = vmatprep.mubr.f32.mxu0 0.0
      %437 = vmatmul.mubr.f32.gmra.mrb[0].mxu0 %v211
      %v438 = vpop.f32.mrb[0].mxu0
      %v439 = vadd.f32 0.0, %v438
      %v440 = vpop.f32.mrb[0].mxu0
      %441 = vmatprep.mubr.f32.mxu0 0.0
      %442 = vmatmul.mubr.f32.gmra.mrb[0].mxu0 %v212
      %v443 = vpop.f32.mrb[0].mxu0
      %v444 = vadd.f32 0.0, %v443
      %v445 = vpop.f32.mrb[0].mxu0
      %446 = vmatprep.mubr.f32.mxu0 0.0
      %447 = vmatmul.mubr.f32.gmra.mrb[0].mxu0 %v213
      %v448 = vpop.f32.mrb[0].mxu0
      %v449 = vadd.f32 0.0, %v448
      %v450 = vpop.f32.mrb[0].mxu0
      %451 = vmatprep.mubr.f32.mxu0 0.0
      %452 = vmatmul.mubr.f32.gmra.mrb[0].mxu0 %v214
      %v453 = vpop.f32.mrb[0].mxu0
      %v454 = vadd.f32 0.0, %v453
      %v455 = vpop.f32.mrb[0].mxu0
      %456 = vmatprep.mubr.f32.mxu0 0.0
      %457 = vmatmul.mubr.f32.gmra.mrb[0].mxu0 %v215
      %v458 = vpop.f32.mrb[0].mxu0
      %v459 = vadd.f32 0.0, %v458
      %v460 = vpop.f32.mrb[0].mxu0
      %461 = vmatprep.mubr.f32.mxu0 0.0
      %462 = vmatmul.mubr.f32.gmra.mrb[0].mxu0 %v216
      %v463 = vpop.f32.mrb[0].mxu0
      %v464 = vadd.f32 0.0, %v463
      %v465 = vpop.f32.mrb[0].mxu0
      %466 = vmatprep.mubr.f32.mxu0 0.0
      %467 = vmatmul.mubr.f32.gmra.mrb[0].mxu0 %v217
      %v468 = vpop.f32.mrb[0].mxu0
      %v469 = vadd.f32 0.0, %v468
      %v470 = vpop.f32.mrb[0].mxu0
      %471 = vmatprep.mubr.f32.mxu0 0.0
      %472 = vmatmul.mubr.f32.gmra.mrb[0].mxu0 %v218
      %v473 = vpop.f32.mrb[0].mxu0
      %v474 = vadd.f32 0.0, %v473
      %v475 = vpop.f32.mrb[0].mxu0
      %476 = vmatprep.mubr.f32.mxu0 0.0
      %477 = vmatmul.mubr.f32.gmra.mrb[0].mxu0 %v219
      %v478 = vpop.f32.mrb[0].mxu0
      %v479 = vadd.f32 0.0, %v478
      %v480 = vpop.f32.mrb[0].mxu0
      %481 = vmatprep.mubr.f32.mxu0 0.0
      %482 = vmatmul.mubr.f32.gmra.mrb[0].mxu0 %v220
      %v483 = vpop.f32.mrb[0].mxu0
      %v484 = vadd.f32 0.0, %v483
      %v485 = vpop.f32.mrb[0].mxu0
      %486 = vdwg.mxu0
      %487 = vst [vmem:[%s182] sm:$0xff] %v304
      %488 = vst [vmem:[%s182 + $0x8] sm:$0xff] %v309
      %489 = vst [vmem:[%s182 + $0x10] sm:$0xff] %v314
      %490 = vst [vmem:[%s182 + $0x18] sm:$0xff] %v319
      %491 = vst [vmem:[%s182 + $0x20] sm:$0xff] %v324
      %492 = vst [vmem:[%s182 + $0x28] sm:$0xff] %v329
      %493 = vst [vmem:[%s182 + $0x30] sm:$0xff] %v334
      %494 = vst [vmem:[%s182 + $0x38] sm:$0xff] %v339
      %495 = vst [vmem:[%s182 + $0x40] sm:$0xff] %v344
      %496 = vst [vmem:[%s182 + $0x48] sm:$0xff] %v349
      %497 = vst [vmem:[%s182 + $0x50] sm:$0xff] %v354
      %498 = vst [vmem:[%s182 + $0x58] sm:$0xff] %v359
      %499 = vst [vmem:[%s182 + $0x60] sm:$0xff] %v364
      %500 = vst [vmem:[%s182 + $0x68] sm:$0xff] %v369
      %501 = vst [vmem:[%s182 + $0x70] sm:$0xff] %v374
      %502 = vst [vmem:[%s182 + $0x78] sm:$0xff] %v379
      %503 = vst [vmem:[%s182 + $0x80] sm:$0xff] %v384
      %504 = vst [vmem:[%s182 + $0x88] sm:$0xff] %v389
      %505 = vst [vmem:[%s182 + $0x90] sm:$0xff] %v394
      %506 = vst [vmem:[%s182 + $0x98] sm:$0xff] %v399
      %507 = vst [vmem:[%s182 + $0xa0] sm:$0xff] %v404
      %508 = vst [vmem:[%s182 + $0xa8] sm:$0xff] %v409
      %509 = vst [vmem:[%s182 + $0xb0] sm:$0xff] %v414
      %510 = vst [vmem:[%s182 + $0xb8] sm:$0xff] %v419
      %511 = vst [vmem:[%s182 + $0xc0] sm:$0xff] %v424
      %512 = vst [vmem:[%s182 + $0xc8] sm:$0xff] %v429
      %513 = vst [vmem:[%s182 + $0xd0] sm:$0xff] %v434
      %514 = vst [vmem:[%s182 + $0xd8] sm:$0xff] %v439
      %515 = vst [vmem:[%s182 + $0xe0] sm:$0xff] %v444
      %516 = vst [vmem:[%s182 + $0xe8] sm:$0xff] %v449
      %517 = vst [vmem:[%s182 + $0xf0] sm:$0xff] %v454
      %518 = vst [vmem:[%s182 + $0xf8] sm:$0xff] %v459
      %519 = vst [vmem:[%s182 + $0x100] sm:$0xff] %v464
      %520 = vst [vmem:[%s182 + $0x108] sm:$0xff] %v469
      %521 = vst [vmem:[%s182 + $0x110] sm:$0xff] %v474
      %522 = vst [vmem:[%s182 + $0x118] sm:$0xff] %v479
      %523 = vst [vmem:[%s182 + $0x120] sm:$0xff] %v484
      %s524 = smul.u32 37, %s17
      %p525 = scmp.lt.s32.totalorder %s524, 73
      %s526 = scalar_select %p525, %s524, 73
      %p527 = scmp.lt.s32.totalorder %s18, 0
      %s528 = scalar_select %p527, %s18, 0
      %s529 = sadd.s32 %s528, %s526
      %s530 = smul.addr %s529, 8
      %s531 = scalar_lea.vmem %s2, %s530
      // Predicated region
      $region29: #{generator_forward.25} parent=27 // pred_check
        %p532 = pneg %p97
      $region30: #{generator_forward.25} parent=27 // pred_check_branch
        %534 = sbr.rel (%p532) target = $region32
      $region31: #{generator_forward.25} parent=27 // pred_region
        %s535 = smul.u32 37, %s17
      $region32: #{generator_forward.25} parent=27 // pred_fallthru
        _
    $region28: #{generator_forward.25} parent=5 // pred_fallthru
      _
    %p536 = scmp.le.s32.totalorder 2, %s8
    // Predicated region
    $region33: #{generator_forward.25} parent=5 // pred_check
      %p537 = pneg %p536
    $region34: #{generator_forward.25} parent=5 // pred_check_branch
      %539 = sbr.rel (%p537) target = $region36
    $region35: #{generator_forward.25} parent=5 // pred_region
      %s540 = ssub.s32 %s8, 2
      // Predicated region
      $region37: #{generator_forward.25} parent=35 // pred_check
        %p541 = pneg %p103
      $region38: #{generator_forward.25} parent=35 // pred_check_branch
        %543 = sbr.rel (%p541) target = $region40
      $region39: #{generator_forward.25} parent=35 // pred_region
        %s544 = smul.u32 37, %s19
        %p545 = scmp.lt.s32.totalorder %s544, 73
        %s546 = scalar_select %p545, %s544, 73
        %p547 = scmp.lt.s32.totalorder %s20, 0
        %s548 = scalar_select %p547, %s20, 0
        %s549 = sadd.s32 %s548, %s546
        %s550 = smul.addr %s549, 8
        %s551 = scalar_lea.vmem %s2, %s550
      $region40: #{generator_forward.25} parent=35 // pred_fallthru
        _
    $region36: #{generator_forward.25} parent=5 // pred_fallthru
      _
  $region6: #{generator_forward.25} parent=0 // loop_footer
    %s12 = sadd.s32 1, %s8
  $region7: #{generator_forward.25} parent=0 // loop_footer_branch
    %7 = sbr.rel target = $region3
  $region8: #{generator_forward.25} parent=0 // loop_exit
    _

// kernel: squeeze.133
$region0: #{squeeze.133}
  %s0 = inlined_call_operand.vmem [shape: f32[256], index: 0, kind: input, shape index: {}]
  %s1 = inlined_call_operand.vmem [shape: f32[32,8], index: 1, kind: output, shape index: {}]
  $region1: #{squeeze.133} parent=0
    #allocation0 [shape = 'u8[4096]{0}', space=vmem, size = 0x1000, scoped, tag = 'scoped mem for input reshape']
    %s3 = sshllo.u32 0, 2
    %v4 = vld [vmem:[%s0] sm:%s3]
    %5 = vst [vmem:[#allocation0] sm:%s3] %v4
    %v6 = vld [vmem:[#allocation0] sm:$0x3]
    %vm7 = vcmask 64512
    %8 = vst.msk [vmem:[%s1] ss:$16 sm:$0x3] %vm7, %v6
    %v9 = vld [vmem:[#allocation0] sm:$0x3]
    %10 = vrot.lane.b32.xlu0 %v9, 120
    %v11 = vpop.permute.xlu0 %10
    %vm12 = vcmask 64512
    %s13 = scalar_lea.vmem %s1, 1
    %14 = vst.msk [vmem:[%s13] ss:$16 sm:$0x3] %vm12, %v11
    %v15 = vld [vmem:[#allocation0] sm:$0x3]
    %16 = vrot.lane.b32.xlu0 %v15, 112
    %v17 = vpop.permute.xlu0 %16
    %vm18 = vcmask 64512
    %s19 = scalar_lea.vmem %s1, 2
    %20 = vst.msk [vmem:[%s19] ss:$16 sm:$0x3] %vm18, %v17
    %v21 = vld [vmem:[#allocation0] sm:$0x3]
    %22 = vrot.lane.b32.xlu0 %v21, 104
    %v23 = vpop.permute.xlu0 %22
    %vm24 = vcmask 64512
    %s25 = scalar_lea.vmem %s1, 3
    %26 = vst.msk [vmem:[%s25] ss:$16 sm:$0x3] %vm24, %v23
    %v27 = vld [vmem:[#allocation0] sm:$0x3]
    %28 = vrot.lane.b32.xlu0 %v27, 96
    %v29 = vpop.permute.xlu0 %28
    %vm30 = vcmask 64512
    %s31 = scalar_lea.vmem %s1, 4
    %32 = vst.msk [vmem:[%s31] ss:$16 sm:$0x3] %vm30, %v29
    %v33 = vld [vmem:[#allocation0] sm:$0x3]
    %34 = vrot.lane.b32.xlu0 %v33, 88
    %v35 = vpop.permute.xlu0 %34
    %vm36 = vcmask 64512
    %s37 = scalar_lea.vmem %s1, 5
    %38 = vst.msk [vmem:[%s37] ss:$16 sm:$0x3] %vm36, %v35
    %v39 = vld [vmem:[#allocation0] sm:$0x3]
    %40 = vrot.lane.b32.xlu0 %v39, 80
    %v41 = vpop.permute.xlu0 %40
    %vm42 = vcmask 64512
    %s43 = scalar_lea.vmem %s1, 6
    %44 = vst.msk [vmem:[%s43] ss:$16 sm:$0x3] %vm42, %v41
    %v45 = vld [vmem:[#allocation0] sm:$0x3]
    %46 = vrot.lane.b32.xlu0 %v45, 72
    %v47 = vpop.permute.xlu0 %46
    %vm48 = vcmask 64512
    %s49 = scalar_lea.vmem %s1, 7
    %50 = vst.msk [vmem:[%s49] ss:$16 sm:$0x3] %vm48, %v47
    %v51 = vld [vmem:[#allocation0] sm:$0x3]
    %52 = vrot.lane.b32.xlu0 %v51, 64
    %v53 = vpop.permute.xlu0 %52
    %vm54 = vcmask 64512
    %s55 = scalar_lea.vmem %s1, 8
    %56 = vst.msk [vmem:[%s55] ss:$16 sm:$0x3] %vm54, %v53
    %v57 = vld [vmem:[#allocation0] sm:$0x3]
    %58 = vrot.lane.b32.xlu0 %v57, 56
    %v59 = vpop.permute.xlu0 %58
    %vm60 = vcmask 64512
    %s61 = scalar_lea.vmem %s1, 9
    %62 = vst.msk [vmem:[%s61] ss:$16 sm:$0x3] %vm60, %v59
    %v63 = vld [vmem:[#allocation0] sm:$0x3]
    %64 = vrot.lane.b32.xlu0 %v63, 48
    %v65 = vpop.permute.xlu0 %64
    %vm66 = vcmask 64512
    %s67 = scalar_lea.vmem %s1, 10
    %68 = vst.msk [vmem:[%s67] ss:$16 sm:$0x3] %vm66, %v65
    %v69 = vld [vmem:[#allocation0] sm:$0x3]
    %70 = vrot.lane.b32.xlu0 %v69, 40
    %v71 = vpop.permute.xlu0 %70
    %vm72 = vcmask 64512
    %s73 = scalar_lea.vmem %s1, 11
    %74 = vst.msk [vmem:[%s73] ss:$16 sm:$0x3] %vm72, %v71
    %v75 = vld [vmem:[#allocation0] sm:$0x3]
    %76 = vrot.lane.b32.xlu0 %v75, 32
    %v77 = vpop.permute.xlu0 %76
    %vm78 = vcmask 64512
    %s79 = scalar_lea.vmem %s1, 12
    %80 = vst.msk [vmem:[%s79] ss:$16 sm:$0x3] %vm78, %v77
    %v81 = vld [vmem:[#allocation0] sm:$0x3]
    %82 = vrot.lane.b32.xlu0 %v81, 24
    %v83 = vpop.permute.xlu0 %82
    %vm84 = vcmask 64512
    %s85 = scalar_lea.vmem %s1, 13
    %86 = vst.msk [vmem:[%s85] ss:$16 sm:$0x3] %vm84, %v83
    %v87 = vld [vmem:[#allocation0] sm:$0x3]
    %88 = vrot.lane.b32.xlu0 %v87, 16
    %v89 = vpop.permute.xlu0 %88
    %vm90 = vcmask 64512
    %s91 = scalar_lea.vmem %s1, 14
    %92 = vst.msk [vmem:[%s91] ss:$16 sm:$0x3] %vm90, %v89
    %v93 = vld [vmem:[#allocation0] sm:$0x3]
    %94 = vrot.lane.b32.xlu0 %v93, 8
    %v95 = vpop.permute.xlu0 %94
    %vm96 = vcmask 64512
    %s97 = scalar_lea.vmem %s1, 15
    %98 = vst.msk [vmem:[%s97] ss:$16 sm:$0x3] %vm96, %v95

// kernel: tile.67
$region0: #{tile.67}
  #allocation0 [shape = 's32[1]{0}', space=sflag, size = 0x4, scoped, tag = 'scoped memory for tile.67']
  %s0 = inlined_call_operand.vmem [shape: f32[8], index: 0, kind: input, shape index: {}]
  %s1 = inlined_call_operand.vmem [shape: f32[32,8], index: 1, kind: output, shape index: {}]
  // Predicated region
  $region2: #{tile.67} parent=0 // pred_check
    _
  $region3: #{tile.67} parent=0 // pred_check_branch
    %3 = sbr.rel (0) target = $region5
  $region4: #{tile.67} parent=0 // pred_region
    _
  $region5: #{tile.67} parent=0 // pred_fallthru
    _
  %v4 = vld [vmem:[%s0] ss:$0 sm:$0xff]
  %5 = vst [vmem:[%s1] sm:$0xff] %v4
  %s6 = scalar_lea.vmem %s1, 8
  %7 = vst [vmem:[%s6] sm:$0xff] %v4
  %s8 = scalar_lea.vmem %s1, 16
  %9 = vst [vmem:[%s8] sm:$0xff] %v4
  %s10 = scalar_lea.vmem %s1, 24
  %11 = vst [vmem:[%s10] sm:$0xff] %v4

// kernel: tile.72
$region0: #{tile.72}
  %s0 = inlined_call_operand.vmem [shape: f32[32,8], index: 0, kind: input, shape index: {}]
  %s1 = inlined_call_operand.vmem [shape: f32[1,256], index: 1, kind: output, shape index: {}]
  $region1: #{tile.72} parent=0
    #allocation0 [shape = 'u8[8192]{0}', space=vmem, size = 0x2000, scoped, tag = 'scoped mem for output reshape']
    %s2 = smov 3
    %v3 = vld [vmem:[%s0] ss:$16 sm:%s2]
    %vm4 = vcmask 64512
    %5 = vst.msk [vmem:[#allocation0] ss:$8 sm:$0x3] %vm4, %v3
    %s6 = scalar_lea.vmem %s0, 15
    %s7 = smov 3
    %v8 = vld [vmem:[%s6] ss:$16 sm:%s7]
    %9 = vrot.lane.b32.xlu0 %v8, 120
    %v10 = vpop.permute.xlu0 %9
    %vm11 = vcmask 1048512
    %12 = vst.msk [vmem:[#allocation0] ss:$8 sm:$0x3] %vm11, %v10
    %s13 = scalar_lea.vmem %s0, 14
    %s14 = smov 3
    %v15 = vld [vmem:[%s13] ss:$16 sm:%s14]
    %16 = vrot.lane.b32.xlu0 %v15, 112
    %v17 = vpop.permute.xlu0 %16
    %vm18 = vcmask 982912
    %19 = vst.msk [vmem:[#allocation0] ss:$8 sm:$0x3] %vm18, %v17
    %s20 = scalar_lea.vmem %s0, 13
    %s21 = smov 3
    %v22 = vld [vmem:[%s20] ss:$16 sm:%s21]
    %23 = vrot.lane.b32.xlu0 %v22, 104
    %v24 = vpop.permute.xlu0 %23
    %vm25 = vcmask 917312
    %26 = vst.msk [vmem:[#allocation0] ss:$8 sm:$0x3] %vm25, %v24
    %s27 = scalar_lea.vmem %s0, 12
    %s28 = smov 3
    %v29 = vld [vmem:[%s27] ss:$16 sm:%s28]
    %30 = vrot.lane.b32.xlu0 %v29, 96
    %v31 = vpop.permute.xlu0 %30
    %vm32 = vcmask 851712
    %33 = vst.msk [vmem:[#allocation0] ss:$8 sm:$0x3] %vm32, %v31
    %s34 = scalar_lea.vmem %s0, 11
    %s35 = smov 3
    %v36 = vld [vmem:[%s34] ss:$16 sm:%s35]
    %37 = vrot.lane.b32.xlu0 %v36, 88
    %v38 = vpop.permute.xlu0 %37
    %vm39 = vcmask 786112
    %40 = vst.msk [vmem:[#allocation0] ss:$8 sm:$0x3] %vm39, %v38
    %s41 = scalar_lea.vmem %s0, 10
    %s42 = smov 3
    %v43 = vld [vmem:[%s41] ss:$16 sm:%s42]
    %44 = vrot.lane.b32.xlu0 %v43, 80
    %v45 = vpop.permute.xlu0 %44
    %vm46 = vcmask 720512
    %47 = vst.msk [vmem:[#allocation0] ss:$8 sm:$0x3] %vm46, %v45
    %s48 = scalar_lea.vmem %s0, 9
    %s49 = smov 3
    %v50 = vld [vmem:[%s48] ss:$16 sm:%s49]
    %51 = vrot.lane.b32.xlu0 %v50, 72
    %v52 = vpop.permute.xlu0 %51
    %vm53 = vcmask 654912
    %54 = vst.msk [vmem:[#allocation0] ss:$8 sm:$0x3] %vm53, %v52
    %s55 = scalar_lea.vmem %s0, 8
    %s56 = smov 3
    %v57 = vld [vmem:[%s55] ss:$16 sm:%s56]
    %58 = vrot.lane.b32.xlu0 %v57, 64
    %v59 = vpop.permute.xlu0 %58
    %vm60 = vcmask 589312
    %61 = vst.msk [vmem:[#allocation0] ss:$8 sm:$0x3] %vm60, %v59
    %s62 = scalar_lea.vmem %s0, 7
    %s63 = smov 3
    %v64 = vld [vmem:[%s62] ss:$16 sm:%s63]
    %65 = vrot.lane.b32.xlu0 %v64, 56
    %v66 = vpop.permute.xlu0 %65
    %vm67 = vcmask 523712
    %68 = vst.msk [vmem:[#allocation0] ss:$8 sm:$0x3] %vm67, %v66
    %s69 = scalar_lea.vmem %s0, 6
    %s70 = smov 3
    %v71 = vld [vmem:[%s69] ss:$16 sm:%s70]
    %72 = vrot.lane.b32.xlu0 %v71, 48
    %v73 = vpop.permute.xlu0 %72
    %vm74 = vcmask 458112
    %75 = vst.msk [vmem:[#allocation0] ss:$8 sm:$0x3] %vm74, %v73
    %s76 = scalar_lea.vmem %s0, 5
    %s77 = smov 3
    %v78 = vld [vmem:[%s76] ss:$16 sm:%s77]
    %79 = vrot.lane.b32.xlu0 %v78, 40
    %v80 = vpop.permute.xlu0 %79
    %vm81 = vcmask 392512
    %82 = vst.msk [vmem:[#allocation0] ss:$8 sm:$0x3] %vm81, %v80
    %s83 = scalar_lea.vmem %s0, 4
    %s84 = smov 3
    %v85 = vld [vmem:[%s83] ss:$16 sm:%s84]
    %86 = vrot.lane.b32.xlu0 %v85, 32
    %v87 = vpop.permute.xlu0 %86
    %vm88 = vcmask 326912
    %89 = vst.msk [vmem:[#allocation0] ss:$8 sm:$0x3] %vm88, %v87
    %s90 = scalar_lea.vmem %s0, 3
    %s91 = smov 3
    %v92 = vld [vmem:[%s90] ss:$16 sm:%s91]
    %93 = vrot.lane.b32.xlu0 %v92, 24
    %v94 = vpop.permute.xlu0 %93
    %vm95 = vcmask 261312
    %96 = vst.msk [vmem:[#allocation0] ss:$8 sm:$0x3] %vm95, %v94
    %s97 = scalar_lea.vmem %s0, 2
    %s98 = smov 3
    %v99 = vld [vmem:[%s97] ss:$16 sm:%s98]
    %100 = vrot.lane.b32.xlu0 %v99, 16
    %v101 = vpop.permute.xlu0 %100
    %vm102 = vcmask 195712
    %103 = vst.msk [vmem:[#allocation0] ss:$8 sm:$0x3] %vm102, %v101
    %s104 = scalar_lea.vmem %s0, 1
    %s105 = smov 3
    %v106 = vld [vmem:[%s104] ss:$16 sm:%s105]
    %107 = vrot.lane.b32.xlu0 %v106, 8
    %v108 = vpop.permute.xlu0 %107
    %vm109 = vcmask 130112
    %110 = vst.msk [vmem:[#allocation0] ss:$8 sm:$0x3] %vm109, %v108
    %s112 = sshllo.u32 0, 1
    %v114 = vld [vmem:[#allocation0] sm:%s112]
    %s115 = sshllo.u32 0, 1
    %116 = vst [vmem:[%s1] sm:%s115] %v114
    %s117 = scalar_lea.vmem [#allocation0], 8
    %v118 = vld [vmem:[%s117] sm:%s112]
    %s119 = sshllo.u32 0, 1
    %s120 = scalar_lea.vmem %s1, 1
    %121 = vst [vmem:[%s120] sm:%s119] %v118

// kernel: generator_forward.26
$region0: #{generator_forward.26}
  #allocation0 [shape = 'u32[]', space=smem, size = 0x4, offset = 0x4, fixed_abs, tag = 'smem constant byte address 0x4 - core index']
  #allocation1 [shape = 'u32[144,128]{1,0:T(1,128)}', space=vmem, size = 0x12000, scoped, tag = 'internal scratch']
  %s0 = inlined_call_operand.vmem [shape: f32[64,256], index: 0, kind: input, shape index: {}]
  %s1 = inlined_call_operand.vmem [shape: f32[1,256], index: 1, kind: output, shape index: {0}]
  %s2 = inlined_call_operand.vmem [shape: f32[1,256], index: 2, kind: output, shape index: {1}]
  %3 = xla_tuple %s1, %s2
  %s4 = sld [smem:[#allocation0]]
  $region26: #{generator_forward.26} parent=0
    _
  %s6 = ssub.s32 1, %s4
  %s7 = scalar_select 0, %s6, %s4
  // Predicated region
  $region2: #{generator_forward.26} parent=0 // pred_check
    _
  $region3: #{generator_forward.26} parent=0 // pred_check_branch
    %9 = sbr.rel (0) target = $region5
  $region4: #{generator_forward.26} parent=0 // pred_region
    _
  $region5: #{generator_forward.26} parent=0 // pred_fallthru
    _
  %p10 = scmp.eq.s32.totalorder 0, 0
  // Predicated region
  $region6: #{generator_forward.26} parent=0 // pred_check
    %p11 = pneg %p10
  $region7: #{generator_forward.26} parent=0 // pred_check_branch
    %13 = sbr.rel (%p11) target = $region9
  $region8: #{generator_forward.26} parent=0 // pred_region
    %v14 = vlaneseq
    %vm15 = vcmp.ge.s32.totalorder %v14, 0
    %vm16 = vcmp.lt.s32.totalorder %v14, 256
    %vm17 = vmand %vm15, %vm16
    %18 = vst.msk [vmem:[%s1] sm:$0x3] %vm17, 0.0
    %19 = vst.msk [vmem:[%s2] sm:$0x3] %vm17, 0.0
  $region9: #{generator_forward.26} parent=0 // pred_fallthru
    _
  %v20 = vld [vmem:[%s0] sm:$0xff]
  %v21 = vld [vmem:[%s0 + $0x8] sm:$0xff]
  %v22 = vld [vmem:[%s0 + $0x10] sm:$0xff]
  %v23 = vld [vmem:[%s0 + $0x18] sm:$0xff]
  %v24 = vld [vmem:[%s0 + $0x20] sm:$0xff]
  %v25 = vld [vmem:[%s0 + $0x28] sm:$0xff]
  %v26 = vld [vmem:[%s0 + $0x30] sm:$0xff]
  %v27 = vld [vmem:[%s0 + $0x38] sm:$0xff]
  %v28 = vld [vmem:[%s0 + $0x40] sm:$0xff]
  %v29 = vld [vmem:[%s0 + $0x48] sm:$0xff]
  %v30 = vld [vmem:[%s0 + $0x50] sm:$0xff]
  %v31 = vld [vmem:[%s0 + $0x58] sm:$0xff]
  %v32 = vld [vmem:[%s0 + $0x60] sm:$0xff]
  %v33 = vld [vmem:[%s0 + $0x68] sm:$0xff]
  %v34 = vld [vmem:[%s0 + $0x70] sm:$0xff]
  %v35 = vld [vmem:[%s0 + $0x78] sm:$0xff]
  %v36 = vld [vmem:[%s1] sm:$0x3]
  %v37 = vadd.f32 %v20, %v22
  %v38 = vadd.f32 %v37, %v24
  %v39 = vadd.f32 %v38, %v26
  %v40 = vadd.f32 %v39, %v28
  %v41 = vadd.f32 %v40, %v30
  %v42 = vadd.f32 %v41, %v32
  %v43 = vadd.f32 %v42, %v34
  %v44 = vrot.slane %v43, 4
  %v45 = vadd.f32 %v43, %v44
  %v46 = vrot.slane %v45, 2
  %v47 = vadd.f32 %v45, %v46
  %v48 = vrot.slane %v47, 1
  %v49 = vadd.f32 %v47, %v48
  %v50 = vadd.f32 %v21, %v23
  %v51 = vadd.f32 %v50, %v25
  %v52 = vadd.f32 %v51, %v27
  %v53 = vadd.f32 %v52, %v29
  %v54 = vadd.f32 %v53, %v31
  %v55 = vadd.f32 %v54, %v33
  %v56 = vadd.f32 %v55, %v35
  %v57 = vrot.slane %v56, 4
  %v58 = vadd.f32 %v56, %v57
  %v59 = vrot.slane %v58, 2
  %v60 = vadd.f32 %v58, %v59
  %v61 = vrot.slane %v60, 1
  %v62 = vadd.f32 %v60, %v61
  %v65 = vcombine.low %v49, %v62
  %v67 = vunpack.c.l.s4 1966171168
  %v68 = vunpack.c.0.s8 %v67
  %v69 = vlaneseq
  %v70 = vshrl.u32 %v69, 7
  %v71 = vsub.s32 %v68, %v70
  %v72 = vrot.slane %v65, %v71
  %v74 = vunpack.c.l.s4 1966171168
  %v75 = vunpack.c.0.s8 %v74
  %v76 = vlaneseq
  %v77 = vshrl.u32 %v76, 7
  %v78 = vsub.s32 %v75, %v77
  %v79 = vrot.slane %v72, %v78
  %v81 = vadd.f32 %v36, %v79
  %v82 = vlaneseq
  %vm83 = vcmp.ge.s32.totalorder %v82, 0
  %vm84 = vcmp.lt.s32.totalorder %v82, 256
  %vm85 = vmand %vm83, %vm84
  %86 = vst.msk [vmem:[%s1] sm:$0x3] %vm85, %v81
  %v87 = vld [vmem:[%s2] sm:$0x3]
  %v88 = vmul.f32 %v20, %v20
  %v89 = vmul.f32 %v21, %v21
  %v90 = vmul.f32 %v22, %v22
  %v91 = vmul.f32 %v23, %v23
  %v92 = vmul.f32 %v24, %v24
  %v93 = vmul.f32 %v25, %v25
  %v94 = vmul.f32 %v26, %v26
  %v95 = vmul.f32 %v27, %v27
  %v96 = vmul.f32 %v28, %v28
  %v97 = vmul.f32 %v29, %v29
  %v98 = vmul.f32 %v30, %v30
  %v99 = vmul.f32 %v31, %v31
  %v100 = vmul.f32 %v32, %v32
  %v101 = vmul.f32 %v33, %v33
  %v102 = vmul.f32 %v34, %v34
  %v103 = vmul.f32 %v35, %v35
  %v104 = vadd.f32 %v88, %v90
  %v105 = vadd.f32 %v104, %v92
  %v106 = vadd.f32 %v105, %v94
  %v107 = vadd.f32 %v106, %v96
  %v108 = vadd.f32 %v107, %v98
  %v109 = vadd.f32 %v108, %v100
  %v110 = vadd.f32 %v109, %v102
  %v111 = vrot.slane %v110, 4
  %v112 = vadd.f32 %v110, %v111
  %v113 = vrot.slane %v112, 2
  %v114 = vadd.f32 %v112, %v113
  %v115 = vrot.slane %v114, 1
  %v116 = vadd.f32 %v114, %v115
  %v117 = vadd.f32 %v89, %v91
  %v118 = vadd.f32 %v117, %v93
  %v119 = vadd.f32 %v118, %v95
  %v120 = vadd.f32 %v119, %v97
  %v121 = vadd.f32 %v120, %v99
  %v122 = vadd.f32 %v121, %v101
  %v123 = vadd.f32 %v122, %v103
  %v124 = vrot.slane %v123, 4
  %v125 = vadd.f32 %v123, %v124
  %v126 = vrot.slane %v125, 2
  %v127 = vadd.f32 %v125, %v126
  %v128 = vrot.slane %v127, 1
  %v129 = vadd.f32 %v127, %v128
  %v132 = vcombine.low %v116, %v129
  %v134 = vunpack.c.l.s4 1966171168
  %v135 = vunpack.c.0.s8 %v134
  %v136 = vlaneseq
  %v137 = vshrl.u32 %v136, 7
  %v138 = vsub.s32 %v135, %v137
  %v139 = vrot.slane %v132, %v138
  %v141 = vunpack.c.l.s4 1966171168
  %v142 = vunpack.c.0.s8 %v141
  %v143 = vlaneseq
  %v144 = vshrl.u32 %v143, 7
  %v145 = vsub.s32 %v142, %v144
  %v146 = vrot.slane %v139, %v145
  %v148 = vadd.f32 %v87, %v146
  %149 = vst.msk [vmem:[%s2] sm:$0x3] %vm85, %v148
  // Predicated region
  $region10: #{generator_forward.26} parent=0 // pred_check
    _
  $region11: #{generator_forward.26} parent=0 // pred_check_branch
    %151 = sbr.rel (0) target = $region13
  $region12: #{generator_forward.26} parent=0 // pred_region
    _
  $region13: #{generator_forward.26} parent=0 // pred_fallthru
    _
  // Predicated region
  $region14: #{generator_forward.26} parent=0 // pred_check
    _
  $region15: #{generator_forward.26} parent=0 // pred_check_branch
    %153 = sbr.rel (0) target = $region17
  $region16: #{generator_forward.26} parent=0 // pred_region
    _
  $region17: #{generator_forward.26} parent=0 // pred_fallthru
    _
  // Predicated region
  $region18: #{generator_forward.26} parent=0 // pred_check
    _
  $region19: #{generator_forward.26} parent=0 // pred_check_branch
    %155 = sbr.rel (0) target = $region21
  $region20: #{generator_forward.26} parent=0 // pred_region
    _
  $region21: #{generator_forward.26} parent=0 // pred_fallthru
    _
  // Predicated region
  $region22: #{generator_forward.26} parent=0 // pred_check
    _
  $region23: #{generator_forward.26} parent=0 // pred_check_branch
    %157 = sbr.rel (0) target = $region25
  $region24: #{generator_forward.26} parent=0 // pred_region
    _
  $region25: #{generator_forward.26} parent=0 // pred_fallthru
    _

// kernel: generator_forward.27
$region0: #{generator_forward.27}
  #allocation0 [shape = 'u32[]', space=smem, size = 0x4, offset = 0x4, fixed_abs, tag = 'smem constant byte address 0x4 - core index']
  #allocation1 [shape = 'u32[144,128]{1,0:T(1,128)}', space=vmem, size = 0x12000, scoped, tag = 'internal scratch']
  %s0 = inlined_call_operand.vmem [shape: f32[64,256], index: 0, kind: input, shape index: {}]
  %s1 = inlined_call_operand.vmem [shape: f32[1,256], index: 1, kind: input, shape index: {}]
  %s2 = inlined_call_operand.vmem [shape: f32[1,256], index: 2, kind: input, shape index: {}]
  %s3 = inlined_call_operand.vmem [shape: f32[64,256], index: 3, kind: output, shape index: {}]
  %s4 = sld [smem:[#allocation0]]
  $region22: #{generator_forward.27} parent=0
    _
  %s6 = ssub.s32 1, %s4
  %s7 = scalar_select 0, %s6, %s4
  // Predicated region
  $region2: #{generator_forward.27} parent=0 // pred_check
    _
  $region3: #{generator_forward.27} parent=0 // pred_check_branch
    %9 = sbr.rel (0) target = $region5
  $region4: #{generator_forward.27} parent=0 // pred_region
    _
  $region5: #{generator_forward.27} parent=0 // pred_fallthru
    _
  // Predicated region
  $region6: #{generator_forward.27} parent=0 // pred_check
    _
  $region7: #{generator_forward.27} parent=0 // pred_check_branch
    %11 = sbr.rel (0) target = $region9
  $region8: #{generator_forward.27} parent=0 // pred_region
    _
  $region9: #{generator_forward.27} parent=0 // pred_fallthru
    _
  // Predicated region
  $region10: #{generator_forward.27} parent=0 // pred_check
    _
  $region11: #{generator_forward.27} parent=0 // pred_check_branch
    %13 = sbr.rel (0) target = $region13
  $region12: #{generator_forward.27} parent=0 // pred_region
    _
  $region13: #{generator_forward.27} parent=0 // pred_fallthru
    _
  %v14 = vld [vmem:[%s0] sm:$0xff]
  %v15 = vld [vmem:[%s0 + $0x8] sm:$0xff]
  %v16 = vld [vmem:[%s0 + $0x10] sm:$0xff]
  %v17 = vld [vmem:[%s0 + $0x18] sm:$0xff]
  %v18 = vld [vmem:[%s0 + $0x20] sm:$0xff]
  %v19 = vld [vmem:[%s0 + $0x28] sm:$0xff]
  %v20 = vld [vmem:[%s0 + $0x30] sm:$0xff]
  %v21 = vld [vmem:[%s0 + $0x38] sm:$0xff]
  %v22 = vld [vmem:[%s0 + $0x40] sm:$0xff]
  %v23 = vld [vmem:[%s0 + $0x48] sm:$0xff]
  %v24 = vld [vmem:[%s0 + $0x50] sm:$0xff]
  %v25 = vld [vmem:[%s0 + $0x58] sm:$0xff]
  %v26 = vld [vmem:[%s0 + $0x60] sm:$0xff]
  %v27 = vld [vmem:[%s0 + $0x68] sm:$0xff]
  %v28 = vld [vmem:[%s0 + $0x70] sm:$0xff]
  %v29 = vld [vmem:[%s0 + $0x78] sm:$0xff]
  %v30 = vld [vmem:[%s1] sm:$0x3]
  %v32 = vlaneseq
  %v33 = vshrl.u32 %v32, 7
  %v34 = vsub.s32 0, %v33
  %v35 = vrot.slane %v30, %v34
  %v36 = vlaneseq
  %v37 = vshrl.u32 %v36, 7
  %v38 = vsub.s32 1, %v37
  %v39 = vrot.slane %v30, %v38
  %v42 = vmul.f32 %v14, %v35
  %v43 = vmul.f32 %v15, %v39
  %v44 = vmul.f32 %v16, %v35
  %v45 = vmul.f32 %v17, %v39
  %v46 = vmul.f32 %v18, %v35
  %v47 = vmul.f32 %v19, %v39
  %v48 = vmul.f32 %v20, %v35
  %v49 = vmul.f32 %v21, %v39
  %v50 = vmul.f32 %v22, %v35
  %v51 = vmul.f32 %v23, %v39
  %v52 = vmul.f32 %v24, %v35
  %v53 = vmul.f32 %v25, %v39
  %v54 = vmul.f32 %v26, %v35
  %v55 = vmul.f32 %v27, %v39
  %v56 = vmul.f32 %v28, %v35
  %v57 = vmul.f32 %v29, %v39
  %v58 = vld [vmem:[%s2] sm:$0x3]
  %v60 = vlaneseq
  %v61 = vshrl.u32 %v60, 7
  %v62 = vsub.s32 0, %v61
  %v63 = vrot.slane %v58, %v62
  %v64 = vlaneseq
  %v65 = vshrl.u32 %v64, 7
  %v66 = vsub.s32 1, %v65
  %v67 = vrot.slane %v58, %v66
  %v70 = vadd.f32 %v42, %v63
  %v71 = vadd.f32 %v43, %v67
  %v72 = vadd.f32 %v44, %v63
  %v73 = vadd.f32 %v45, %v67
  %v74 = vadd.f32 %v46, %v63
  %v75 = vadd.f32 %v47, %v67
  %v76 = vadd.f32 %v48, %v63
  %v77 = vadd.f32 %v49, %v67
  %v78 = vadd.f32 %v50, %v63
  %v79 = vadd.f32 %v51, %v67
  %v80 = vadd.f32 %v52, %v63
  %v81 = vadd.f32 %v53, %v67
  %v82 = vadd.f32 %v54, %v63
  %v83 = vadd.f32 %v55, %v67
  %v84 = vadd.f32 %v56, %v63
  %v85 = vadd.f32 %v57, %v67
  %v86 = vmax.f32 %v70, 0.0
  %v87 = vmax.f32 %v71, 0.0
  %v88 = vmax.f32 %v72, 0.0
  %v89 = vmax.f32 %v73, 0.0
  %v90 = vmax.f32 %v74, 0.0
  %v91 = vmax.f32 %v75, 0.0
  %v92 = vmax.f32 %v76, 0.0
  %v93 = vmax.f32 %v77, 0.0
  %v94 = vmax.f32 %v78, 0.0
  %v95 = vmax.f32 %v79, 0.0
  %v96 = vmax.f32 %v80, 0.0
  %v97 = vmax.f32 %v81, 0.0
  %v98 = vmax.f32 %v82, 0.0
  %v99 = vmax.f32 %v83, 0.0
  %v100 = vmax.f32 %v84, 0.0
  %v101 = vmax.f32 %v85, 0.0
  %102 = vst [vmem:[%s3] sm:$0xff] %v86
  %103 = vst [vmem:[%s3 + $0x8] sm:$0xff] %v87
  %104 = vst [vmem:[%s3 + $0x10] sm:$0xff] %v88
  %105 = vst [vmem:[%s3 + $0x18] sm:$0xff] %v89
  %106 = vst [vmem:[%s3 + $0x20] sm:$0xff] %v90
  %107 = vst [vmem:[%s3 + $0x28] sm:$0xff] %v91
  %108 = vst [vmem:[%s3 + $0x30] sm:$0xff] %v92
  %109 = vst [vmem:[%s3 + $0x38] sm:$0xff] %v93
  %110 = vst [vmem:[%s3 + $0x40] sm:$0xff] %v94
  %111 = vst [vmem:[%s3 + $0x48] sm:$0xff] %v95
  %112 = vst [vmem:[%s3 + $0x50] sm:$0xff] %v96
  %113 = vst [vmem:[%s3 + $0x58] sm:$0xff] %v97
  %114 = vst [vmem:[%s3 + $0x60] sm:$0xff] %v98
  %115 = vst [vmem:[%s3 + $0x68] sm:$0xff] %v99
  %116 = vst [vmem:[%s3 + $0x70] sm:$0xff] %v100
  %117 = vst [vmem:[%s3 + $0x78] sm:$0xff] %v101
  // Predicated region
  $region14: #{generator_forward.27} parent=0 // pred_check
    _
  $region15: #{generator_forward.27} parent=0 // pred_check_branch
    %119 = sbr.rel (0) target = $region17
  $region16: #{generator_forward.27} parent=0 // pred_region
    _
  $region17: #{generator_forward.27} parent=0 // pred_fallthru
    _
  // Predicated region
  $region18: #{generator_forward.27} parent=0 // pred_check
    _
  $region19: #{generator_forward.27} parent=0 // pred_check_branch
    %121 = sbr.rel (0) target = $region21
  $region20: #{generator_forward.27} parent=0 // pred_region
    _
  $region21: #{generator_forward.27} parent=0 // pred_fallthru
    _

// kernel: generator_forward.28
$region0: #{generator_forward.28}
  #allocation0 [shape = 'u32[]', space=smem, size = 0x4, offset = 0x4, fixed_abs, tag = 'smem constant byte address 0x4 - core index']
  #allocation1 [shape = 'u32[144,128]{1,0:T(1,128)}', space=vmem, size = 0x12000, scoped, tag = 'internal scratch']
  %s0 = inlined_call_operand.vmem [shape: f32[2200,128], index: 0, kind: input, shape index: {}]
  %s1 = inlined_call_operand.vmem [shape: f32[128,128], index: 1, kind: input, shape index: {}]
  %s2 = inlined_call_operand.vmem [shape: f32[2200,128], index: 2, kind: output, shape index: {}]
  %s3 = sld [smem:[#allocation0]]
  $region41: #{generator_forward.28} parent=0
    _
  %s5 = ssub.s32 1, %s3
  %s6 = scalar_select 0, %s5, %s3
  loop: start=0, step=1, limit=7
  $region2: #{generator_forward.28} parent=0 // loop_pre_header
    _
  $region3: #{generator_forward.28} parent=0 // loop_header
    %s8 = sphi 0, %s12
    %p9 = scmp.ge.s32.totalorder %s8, 7
    %s15 = sphi 0, %s27
    %s16 = sphi 0, %s23
    %s17 = sphi 0, %s15
    %s18 = sphi 0, %s16
    %s19 = sphi 0, %s17
    %s20 = sphi 0, %s18
    %s30 = sphi 0, %s32
    %s33 = sphi 0, %s30
    %s34 = sphi 0, %s33
    %s50 = sphi 0, %s34
    %s56 = sphi 0, %s58
    %s59 = sphi 0, %s56
    %s60 = sphi 0, %s59
    %s76 = sphi 0, %s60
    %s84 = sphi 0, %s86
    %s87 = sphi 0, %s84
    %s88 = sphi 0, %s87
    %s104 = sphi 0, %s88
  $region4: #{generator_forward.28} parent=0 // loop_header_branch
    %11 = sbr.rel (%p9) target = $region8
  $region5: #{generator_forward.28} parent=0 // loop_body
    %s13 = ssub.s32 %s8, 1
    %s14 = ssub.s32 %s8, 2
    %s21 = sadd.s32 1, %s16
    %p22 = scmp.ge.s32.totalorder %s21, 1
    %s23 = scalar_select %p22, 0, %s21
    %s24 = sadd.s32 1, %s15
    %s25 = scalar_select %p22, %s24, %s15
    %p26 = scmp.ge.s32.totalorder %s25, 5
    %s27 = scalar_select %p26, 0, %s25
    %s28 = ssub.s32 %s15, %s27
    %p29 = scmp.eq.s32.totalorder %s28, 0
    %s31 = sadd.s32 %s30, 1
    %s32 = scalar_select %p29, %s30, %s31
    %p35 = pneg %p29
    %p36 = scmp.eq.s32.totalorder %s8, 4
    %p37 = por %p35, %p36
    %p38 = scmp.ne.s32.totalorder %s30, %s33
    %p39 = scmp.eq.s32.totalorder %s8, 0
    %p40 = por %p38, %p39
    %p41 = scmp.ne.s32.totalorder %s30, %s33
    %p42 = scmp.eq.s32.totalorder %s13, 4
    %p43 = por %p41, %p42
    %p44 = scmp.ne.s32.totalorder %s33, %s34
    %p45 = scmp.eq.s32.totalorder %s13, 0
    %p46 = por %p44, %p45
    %p47 = scmp.ne.s32.totalorder %s33, %s34
    %p48 = scmp.eq.s32.totalorder %s14, 4
    %p49 = por %p47, %p48
    %p51 = scmp.ne.s32.totalorder %s34, %s50
    %p52 = scmp.eq.s32.totalorder %s14, 0
    %p53 = por %p51, %p52
    %s54 = ssub.s32 %s16, %s23
    %p55 = scmp.eq.s32.totalorder %s54, 0
    %s57 = sadd.s32 %s56, 1
    %s58 = scalar_select %p55, %s56, %s57
    %p61 = pneg %p55
    %p62 = scmp.eq.s32.totalorder %s8, 4
    %p63 = por %p61, %p62
    %p64 = scmp.ne.s32.totalorder %s56, %s59
    %p65 = scmp.eq.s32.totalorder %s8, 0
    %p66 = por %p64, %p65
    %p67 = scmp.ne.s32.totalorder %s56, %s59
    %p68 = scmp.eq.s32.totalorder %s13, 4
    %p69 = por %p67, %p68
    %p70 = scmp.ne.s32.totalorder %s59, %s60
    %p71 = scmp.eq.s32.totalorder %s13, 0
    %p72 = por %p70, %p71
    %p73 = scmp.ne.s32.totalorder %s59, %s60
    %p74 = scmp.eq.s32.totalorder %s14, 4
    %p75 = por %p73, %p74
    %p77 = scmp.ne.s32.totalorder %s60, %s76
    %p78 = scmp.eq.s32.totalorder %s14, 0
    %p79 = por %p77, %p78
    %s80 = ssub.s32 %s15, %s27
    %s81 = ssub.s32 %s16, %s23
    %s82 = sor.u32 %s80, %s81
    %p83 = scmp.eq.s32.totalorder %s82, 0
    %s85 = sadd.s32 %s84, 1
    %s86 = scalar_select %p83, %s84, %s85
    %p89 = pneg %p83
    %p90 = scmp.eq.s32.totalorder %s8, 4
    %p91 = por %p89, %p90
    %p92 = scmp.ne.s32.totalorder %s84, %s87
    %p93 = scmp.eq.s32.totalorder %s8, 0
    %p94 = por %p92, %p93
    %p95 = scmp.ne.s32.totalorder %s84, %s87
    %p96 = scmp.eq.s32.totalorder %s13, 4
    %p97 = por %p95, %p96
    %p98 = scmp.ne.s32.totalorder %s87, %s88
    %p99 = scmp.eq.s32.totalorder %s13, 0
    %p100 = por %p98, %p99
    %p101 = scmp.ne.s32.totalorder %s87, %s88
    %p102 = scmp.eq.s32.totalorder %s14, 4
    %p103 = por %p101, %p102
    %p105 = scmp.ne.s32.totalorder %s88, %s104
    %p106 = scmp.eq.s32.totalorder %s14, 0
    %p107 = por %p105, %p106
    %p108 = scmp.le.s32.totalorder 1, %s8
    %p109 = scmp.lt.s32.totalorder %s8, 6
    %p110 = pnand %p108, %p109
    %p111 = pneg %p110
    // Predicated region
    $region9: #{generator_forward.28} parent=5 // pred_check
      _
    $region10: #{generator_forward.28} parent=5 // pred_check_branch
      %113 = sbr.rel (%p110) target = $region12
    $region11: #{generator_forward.28} parent=5 // pred_region
      %s114 = ssub.s32 %s8, 1
      // Predicated region
      $region13: #{generator_forward.28} parent=11 // pred_check
        %p115 = pneg %p72
      $region14: #{generator_forward.28} parent=11 // pred_check_branch
        %117 = sbr.rel (%p115) target = $region16
      $region15: #{generator_forward.28} parent=11 // pred_region
        %p118 = scmp.lt.s32.totalorder %s18, 0
        %s119 = scalar_select %p118, %s18, 0
        %s120 = smul.addr %s119, 8
        %s121 = scalar_lea.vmem %s1, %s120
      $region16: #{generator_forward.28} parent=11 // pred_fallthru
        _
    $region12: #{generator_forward.28} parent=5 // pred_fallthru
      _
    %p122 = scmp.lt.s32.totalorder %s8, 5
    // Predicated region
    $region17: #{generator_forward.28} parent=5 // pred_check
      %p123 = pneg %p122
    $region18: #{generator_forward.28} parent=5 // pred_check_branch
      %125 = sbr.rel (%p123) target = $region20
    $region19: #{generator_forward.28} parent=5 // pred_region
      // Predicated region
      $region21: #{generator_forward.28} parent=19 // pred_check
        %p126 = pneg %p40
      $region22: #{generator_forward.28} parent=19 // pred_check_branch
        %128 = sbr.rel (%p126) target = $region24
      $region23: #{generator_forward.28} parent=19 // pred_region
        %s129 = smul.u32 55, %s15
        %p130 = scmp.lt.s32.totalorder %s129, 274
        %s131 = scalar_select %p130, %s129, 274
        %s132 = smul.addr %s131, 8
        %s133 = scalar_lea.vmem %s0, %s132
        %s134 = smul.u32 55, %s15
      $region24: #{generator_forward.28} parent=19 // pred_fallthru
        _
    $region20: #{generator_forward.28} parent=5 // pred_fallthru
      _
    %p135 = scmp.le.s32.totalorder 1, %s8
    %p136 = scmp.lt.s32.totalorder %s8, 6
    %p137 = pnand %p135, %p136
    %p138 = pneg %p137
    // Predicated region
    $region25: #{generator_forward.28} parent=5 // pred_check
      _
    $region26: #{generator_forward.28} parent=5 // pred_check_branch
      %140 = sbr.rel (%p137) target = $region28
    $region27: #{generator_forward.28} parent=5 // pred_region
      %s141 = ssub.s32 %s8, 1
      %s142 = smul.u32 55, %s17
      %p143 = scmp.lt.s32.totalorder %s142, 274
      %s144 = scalar_select %p143, %s142, 274
      %s145 = smul.addr %s144, 8
      %s146 = scalar_lea.vmem %s0, %s145
      %p147 = pneg %p46
      %p148 = pneg %p43
      %p149 = scmp.lt.s32.totalorder %s18, 0
      %s150 = scalar_select %p149, %s18, 0
      %s151 = smul.addr %s150, 8
      %s152 = scalar_lea.vmem %s1, %s151
      %p153 = pneg %p72
      %p154 = pneg %p69
      %p155 = pneg %p100
      %p156 = pneg %p97
      %s157 = smul.u32 55, %s17
      %p158 = scmp.lt.s32.totalorder %s157, 274
      %s159 = scalar_select %p158, %s157, 274
      %p160 = scmp.lt.s32.totalorder %s18, 0
      %s161 = scalar_select %p160, %s18, 0
      %s162 = sadd.s32 %s161, %s159
      %s163 = smul.addr %s162, 8
      %s164 = scalar_lea.vmem %s2, %s163
      %s165 = smul.u32 55, %s17
      %p166 = scmp.lt.s32.totalorder %s165, 274
      %s167 = scalar_select %p166, %s165, 274
      %s168 = smul.addr %s167, 8
      %s169 = scalar_lea.vmem %s0, %s168
      %s170 = smul.u32 55, %s17
      %p171 = scmp.lt.s32.totalorder %s18, 0
      %s172 = scalar_select %p171, %s18, 0
      %s173 = smul.addr %s172, 8
      %s174 = scalar_lea.vmem %s1, %s173
      %s175 = smul.u32 55, %s17
      %p176 = scmp.lt.s32.totalorder %s175, 274
      %s177 = scalar_select %p176, %s175, 274
      %p178 = scmp.lt.s32.totalorder %s18, 0
      %s179 = scalar_select %p178, %s18, 0
      %s180 = sadd.s32 %s179, %s177
      %s181 = smul.addr %s180, 8
      %s182 = scalar_lea.vmem %s2, %s181
      %s183 = smul.u32 55, %s17
      %v184 = vld [vmem:[%s169] sm:$0xff]
      %v185 = vld [vmem:[%s169 + $0x8] sm:$0xff]
      %v186 = vld [vmem:[%s169 + $0x10] sm:$0xff]
      %v187 = vld [vmem:[%s169 + $0x18] sm:$0xff]
      %v188 = vld [vmem:[%s169 + $0x20] sm:$0xff]
      %v189 = vld [vmem:[%s169 + $0x28] sm:$0xff]
      %v190 = vld [vmem:[%s169 + $0x30] sm:$0xff]
      %v191 = vld [vmem:[%s169 + $0x38] sm:$0xff]
      %v192 = vld [vmem:[%s169 + $0x40] sm:$0xff]
      %v193 = vld [vmem:[%s169 + $0x48] sm:$0xff]
      %v194 = vld [vmem:[%s169 + $0x50] sm:$0xff]
      %v195 = vld [vmem:[%s169 + $0x58] sm:$0xff]
      %v196 = vld [vmem:[%s169 + $0x60] sm:$0xff]
      %v197 = vld [vmem:[%s169 + $0x68] sm:$0xff]
      %v198 = vld [vmem:[%s169 + $0x70] sm:$0xff]
      %v199 = vld [vmem:[%s169 + $0x78] sm:$0xff]
      %v200 = vld [vmem:[%s169 + $0x80] sm:$0xff]
      %v201 = vld [vmem:[%s169 + $0x88] sm:$0xff]
      %v202 = vld [vmem:[%s169 + $0x90] sm:$0xff]
      %v203 = vld [vmem:[%s169 + $0x98] sm:$0xff]
      %v204 = vld [vmem:[%s169 + $0xa0] sm:$0xff]
      %v205 = vld [vmem:[%s169 + $0xa8] sm:$0xff]
      %v206 = vld [vmem:[%s169 + $0xb0] sm:$0xff]
      %v207 = vld [vmem:[%s169 + $0xb8] sm:$0xff]
      %v208 = vld [vmem:[%s169 + $0xc0] sm:$0xff]
      %v209 = vld [vmem:[%s169 + $0xc8] sm:$0xff]
      %v210 = vld [vmem:[%s169 + $0xd0] sm:$0xff]
      %v211 = vld [vmem:[%s169 + $0xd8] sm:$0xff]
      %v212 = vld [vmem:[%s169 + $0xe0] sm:$0xff]
      %v213 = vld [vmem:[%s169 + $0xe8] sm:$0xff]
      %v214 = vld [vmem:[%s169 + $0xf0] sm:$0xff]
      %v215 = vld [vmem:[%s169 + $0xf8] sm:$0xff]
      %v216 = vld [vmem:[%s169 + $0x100] sm:$0xff]
      %v217 = vld [vmem:[%s169 + $0x108] sm:$0xff]
      %v218 = vld [vmem:[%s169 + $0x110] sm:$0xff]
      %v219 = vld [vmem:[%s169 + $0x118] sm:$0xff]
      %v220 = vld [vmem:[%s169 + $0x120] sm:$0xff]
      %v221 = vld [vmem:[%s169 + $0x128] sm:$0xff]
      %v222 = vld [vmem:[%s169 + $0x130] sm:$0xff]
      %v223 = vld [vmem:[%s169 + $0x138] sm:$0xff]
      %v224 = vld [vmem:[%s169 + $0x140] sm:$0xff]
      %v225 = vld [vmem:[%s169 + $0x148] sm:$0xff]
      %v226 = vld [vmem:[%s169 + $0x150] sm:$0xff]
      %v227 = vld [vmem:[%s169 + $0x158] sm:$0xff]
      %v228 = vld [vmem:[%s169 + $0x160] sm:$0xff]
      %v229 = vld [vmem:[%s169 + $0x168] sm:$0xff]
      %v230 = vld [vmem:[%s169 + $0x170] sm:$0xff]
      %v231 = vld [vmem:[%s169 + $0x178] sm:$0xff]
      %v232 = vld [vmem:[%s169 + $0x180] sm:$0xff]
      %v233 = vld [vmem:[%s169 + $0x188] sm:$0xff]
      %v234 = vld [vmem:[%s169 + $0x190] sm:$0xff]
      %v235 = vld [vmem:[%s169 + $0x198] sm:$0xff]
      %v236 = vld [vmem:[%s169 + $0x1a0] sm:$0xff]
      %v237 = vld [vmem:[%s169 + $0x1a8] sm:$0xff]
      %v238 = vld [vmem:[%s169 + $0x1b0] sm:$0xff]
      %v239 = vld [vmem:[%s174] sm:$0xff]
      %v240 = vld [vmem:[%s174 + $0x8] sm:$0xff]
      %v241 = vld [vmem:[%s174 + $0x10] sm:$0xff]
      %v242 = vld [vmem:[%s174 + $0x18] sm:$0xff]
      %v243 = vld [vmem:[%s174 + $0x20] sm:$0xff]
      %v244 = vld [vmem:[%s174 + $0x28] sm:$0xff]
      %v245 = vld [vmem:[%s174 + $0x30] sm:$0xff]
      %v246 = vld [vmem:[%s174 + $0x38] sm:$0xff]
      %v247 = vld [vmem:[%s174 + $0x40] sm:$0xff]
      %v248 = vld [vmem:[%s174 + $0x48] sm:$0xff]
      %v249 = vld [vmem:[%s174 + $0x50] sm:$0xff]
      %v250 = vld [vmem:[%s174 + $0x58] sm:$0xff]
      %v251 = vld [vmem:[%s174 + $0x60] sm:$0xff]
      %v252 = vld [vmem:[%s174 + $0x68] sm:$0xff]
      %v253 = vld [vmem:[%s174 + $0x70] sm:$0xff]
      %v254 = vld [vmem:[%s174 + $0x78] sm:$0xff]
      %255 = vmatprep.subr.mxu0 0.0
      %256 = vmatpush1.msra.mxu0 %v239
      %257 = vmatprep.subr.mxu0 0.0
      %258 = vmatpush1.msra.mxu0 %v240
      %259 = vmatprep.subr.mxu0 0.0
      %260 = vmatpush1.msra.mxu0 %v241
      %261 = vmatprep.subr.mxu0 0.0
      %262 = vmatpush1.msra.mxu0 %v242
      %263 = vmatprep.subr.mxu0 0.0
      %264 = vmatpush1.msra.mxu0 %v243
      %265 = vmatprep.subr.mxu0 0.0
      %266 = vmatpush1.msra.mxu0 %v244
      %267 = vmatprep.subr.mxu0 0.0
      %268 = vmatpush1.msra.mxu0 %v245
      %269 = vmatprep.subr.mxu0 0.0
      %270 = vmatpush1.msra.mxu0 %v246
      %271 = vmatprep.subr.mxu0 0.0
      %272 = vmatpush1.msra.mxu0 %v247
      %273 = vmatprep.subr.mxu0 0.0
      %274 = vmatpush1.msra.mxu0 %v248
      %275 = vmatprep.subr.mxu0 0.0
      %276 = vmatpush1.msra.mxu0 %v249
      %277 = vmatprep.subr.mxu0 0.0
      %278 = vmatpush1.msra.mxu0 %v250
      %279 = vmatprep.subr.mxu0 0.0
      %280 = vmatpush1.msra.mxu0 %v251
      %281 = vmatprep.subr.mxu0 0.0
      %282 = vmatpush1.msra.mxu0 %v252
      %283 = vmatprep.subr.mxu0 0.0
      %284 = vmatpush1.msra.mxu0 %v253
      %285 = vmatprep.subr.mxu0 0.0
      %286 = vmatpush1.msra.mxu0 %v254
      %287 = vmatprep.subr.mxu0 0.0
      %288 = vmatpush1.msra.mxu0 0.0
      %289 = vmatprep.subr.mxu0 0.0
      %290 = vmatpush1.msra.mxu0 0.0
      %291 = vmatprep.subr.mxu0 0.0
      %292 = vmatpush1.msra.mxu0 0.0
      %293 = vmatprep.subr.mxu0 0.0
      %294 = vmatpush1.msra.mxu0 0.0
      %295 = vmatprep.subr.mxu0 0.0
      %296 = vmatpush1.msra.mxu0 0.0
      %297 = vmatprep.subr.mxu0 0.0
      %298 = vmatpush1.msra.mxu0 0.0
      %299 = vmatprep.subr.mxu0 0.0
      %300 = vmatpush1.msra.mxu0 0.0
      %301 = vmatprep.subr.mxu0 0.0
      %302 = vmatpush1.msra.mxu0 0.0
      %303 = vmatprep.subr.mxu0 0.0
      %304 = vmatpush1.msra.mxu0 0.0
      %305 = vmatprep.subr.mxu0 0.0
      %306 = vmatpush1.msra.mxu0 0.0
      %307 = vmatprep.subr.mxu0 0.0
      %308 = vmatpush1.msra.mxu0 0.0
      %309 = vmatprep.subr.mxu0 0.0
      %310 = vmatpush1.msra.mxu0 0.0
      %311 = vmatprep.subr.mxu0 0.0
      %312 = vmatpush1.msra.mxu0 0.0
      %313 = vmatprep.subr.mxu0 0.0
      %314 = vmatpush1.msra.mxu0 0.0
      %315 = vmatprep.subr.mxu0 0.0
      %316 = vmatpush1.msra.mxu0 0.0
      %317 = vmatprep.subr.mxu0 0.0
      %318 = vmatpush1.msra.mxu0 0.0
      %319 = vmatprep.mubr.f32.mxu0 0.0
      %320 = vmatmul.mubr.f32.gmra.mrb[0].mxu0 %v184
      %v321 = vpop.f32.mrb[0].mxu0
      %v322 = vadd.f32 0.0, %v321
      %v323 = vpop.f32.mrb[0].mxu0
      %324 = vmatprep.mubr.f32.mxu0 0.0
      %325 = vmatmul.mubr.f32.gmra.mrb[0].mxu0 %v185
      %v326 = vpop.f32.mrb[0].mxu0
      %v327 = vadd.f32 0.0, %v326
      %v328 = vpop.f32.mrb[0].mxu0
      %329 = vmatprep.mubr.f32.mxu0 0.0
      %330 = vmatmul.mubr.f32.gmra.mrb[0].mxu0 %v186
      %v331 = vpop.f32.mrb[0].mxu0
      %v332 = vadd.f32 0.0, %v331
      %v333 = vpop.f32.mrb[0].mxu0
      %334 = vmatprep.mubr.f32.mxu0 0.0
      %335 = vmatmul.mubr.f32.gmra.mrb[0].mxu0 %v187
      %v336 = vpop.f32.mrb[0].mxu0
      %v337 = vadd.f32 0.0, %v336
      %v338 = vpop.f32.mrb[0].mxu0
      %339 = vmatprep.mubr.f32.mxu0 0.0
      %340 = vmatmul.mubr.f32.gmra.mrb[0].mxu0 %v188
      %v341 = vpop.f32.mrb[0].mxu0
      %v342 = vadd.f32 0.0, %v341
      %v343 = vpop.f32.mrb[0].mxu0
      %344 = vmatprep.mubr.f32.mxu0 0.0
      %345 = vmatmul.mubr.f32.gmra.mrb[0].mxu0 %v189
      %v346 = vpop.f32.mrb[0].mxu0
      %v347 = vadd.f32 0.0, %v346
      %v348 = vpop.f32.mrb[0].mxu0
      %349 = vmatprep.mubr.f32.mxu0 0.0
      %350 = vmatmul.mubr.f32.gmra.mrb[0].mxu0 %v190
      %v351 = vpop.f32.mrb[0].mxu0
      %v352 = vadd.f32 0.0, %v351
      %v353 = vpop.f32.mrb[0].mxu0
      %354 = vmatprep.mubr.f32.mxu0 0.0
      %355 = vmatmul.mubr.f32.gmra.mrb[0].mxu0 %v191
      %v356 = vpop.f32.mrb[0].mxu0
      %v357 = vadd.f32 0.0, %v356
      %v358 = vpop.f32.mrb[0].mxu0
      %359 = vmatprep.mubr.f32.mxu0 0.0
      %360 = vmatmul.mubr.f32.gmra.mrb[0].mxu0 %v192
      %v361 = vpop.f32.mrb[0].mxu0
      %v362 = vadd.f32 0.0, %v361
      %v363 = vpop.f32.mrb[0].mxu0
      %364 = vmatprep.mubr.f32.mxu0 0.0
      %365 = vmatmul.mubr.f32.gmra.mrb[0].mxu0 %v193
      %v366 = vpop.f32.mrb[0].mxu0
      %v367 = vadd.f32 0.0, %v366
      %v368 = vpop.f32.mrb[0].mxu0
      %369 = vmatprep.mubr.f32.mxu0 0.0
      %370 = vmatmul.mubr.f32.gmra.mrb[0].mxu0 %v194
      %v371 = vpop.f32.mrb[0].mxu0
      %v372 = vadd.f32 0.0, %v371
      %v373 = vpop.f32.mrb[0].mxu0
      %374 = vmatprep.mubr.f32.mxu0 0.0
      %375 = vmatmul.mubr.f32.gmra.mrb[0].mxu0 %v195
      %v376 = vpop.f32.mrb[0].mxu0
      %v377 = vadd.f32 0.0, %v376
      %v378 = vpop.f32.mrb[0].mxu0
      %379 = vmatprep.mubr.f32.mxu0 0.0
      %380 = vmatmul.mubr.f32.gmra.mrb[0].mxu0 %v196
      %v381 = vpop.f32.mrb[0].mxu0
      %v382 = vadd.f32 0.0, %v381
      %v383 = vpop.f32.mrb[0].mxu0
      %384 = vmatprep.mubr.f32.mxu0 0.0
      %385 = vmatmul.mubr.f32.gmra.mrb[0].mxu0 %v197
      %v386 = vpop.f32.mrb[0].mxu0
      %v387 = vadd.f32 0.0, %v386
      %v388 = vpop.f32.mrb[0].mxu0
      %389 = vmatprep.mubr.f32.mxu0 0.0
      %390 = vmatmul.mubr.f32.gmra.mrb[0].mxu0 %v198
      %v391 = vpop.f32.mrb[0].mxu0
      %v392 = vadd.f32 0.0, %v391
      %v393 = vpop.f32.mrb[0].mxu0
      %394 = vmatprep.mubr.f32.mxu0 0.0
      %395 = vmatmul.mubr.f32.gmra.mrb[0].mxu0 %v199
      %v396 = vpop.f32.mrb[0].mxu0
      %v397 = vadd.f32 0.0, %v396
      %v398 = vpop.f32.mrb[0].mxu0
      %399 = vmatprep.mubr.f32.mxu0 0.0
      %400 = vmatmul.mubr.f32.gmra.mrb[0].mxu0 %v200
      %v401 = vpop.f32.mrb[0].mxu0
      %v402 = vadd.f32 0.0, %v401
      %v403 = vpop.f32.mrb[0].mxu0
      %404 = vmatprep.mubr.f32.mxu0 0.0
      %405 = vmatmul.mubr.f32.gmra.mrb[0].mxu0 %v201
      %v406 = vpop.f32.mrb[0].mxu0
      %v407 = vadd.f32 0.0, %v406
      %v408 = vpop.f32.mrb[0].mxu0
      %409 = vmatprep.mubr.f32.mxu0 0.0
      %410 = vmatmul.mubr.f32.gmra.mrb[0].mxu0 %v202
      %v411 = vpop.f32.mrb[0].mxu0
      %v412 = vadd.f32 0.0, %v411
      %v413 = vpop.f32.mrb[0].mxu0
      %414 = vmatprep.mubr.f32.mxu0 0.0
      %415 = vmatmul.mubr.f32.gmra.mrb[0].mxu0 %v203
      %v416 = vpop.f32.mrb[0].mxu0
      %v417 = vadd.f32 0.0, %v416
      %v418 = vpop.f32.mrb[0].mxu0
      %419 = vmatprep.mubr.f32.mxu0 0.0
      %420 = vmatmul.mubr.f32.gmra.mrb[0].mxu0 %v204
      %v421 = vpop.f32.mrb[0].mxu0
      %v422 = vadd.f32 0.0, %v421
      %v423 = vpop.f32.mrb[0].mxu0
      %424 = vmatprep.mubr.f32.mxu0 0.0
      %425 = vmatmul.mubr.f32.gmra.mrb[0].mxu0 %v205
      %v426 = vpop.f32.mrb[0].mxu0
      %v427 = vadd.f32 0.0, %v426
      %v428 = vpop.f32.mrb[0].mxu0
      %429 = vmatprep.mubr.f32.mxu0 0.0
      %430 = vmatmul.mubr.f32.gmra.mrb[0].mxu0 %v206
      %v431 = vpop.f32.mrb[0].mxu0
      %v432 = vadd.f32 0.0, %v431
      %v433 = vpop.f32.mrb[0].mxu0
      %434 = vmatprep.mubr.f32.mxu0 0.0
      %435 = vmatmul.mubr.f32.gmra.mrb[0].mxu0 %v207
      %v436 = vpop.f32.mrb[0].mxu0
      %v437 = vadd.f32 0.0, %v436
      %v438 = vpop.f32.mrb[0].mxu0
      %439 = vmatprep.mubr.f32.mxu0 0.0
      %440 = vmatmul.mubr.f32.gmra.mrb[0].mxu0 %v208
      %v441 = vpop.f32.mrb[0].mxu0
      %v442 = vadd.f32 0.0, %v441
      %v443 = vpop.f32.mrb[0].mxu0
      %444 = vmatprep.mubr.f32.mxu0 0.0
      %445 = vmatmul.mubr.f32.gmra.mrb[0].mxu0 %v209
      %v446 = vpop.f32.mrb[0].mxu0
      %v447 = vadd.f32 0.0, %v446
      %v448 = vpop.f32.mrb[0].mxu0
      %449 = vmatprep.mubr.f32.mxu0 0.0
      %450 = vmatmul.mubr.f32.gmra.mrb[0].mxu0 %v210
      %v451 = vpop.f32.mrb[0].mxu0
      %v452 = vadd.f32 0.0, %v451
      %v453 = vpop.f32.mrb[0].mxu0
      %454 = vmatprep.mubr.f32.mxu0 0.0
      %455 = vmatmul.mubr.f32.gmra.mrb[0].mxu0 %v211
      %v456 = vpop.f32.mrb[0].mxu0
      %v457 = vadd.f32 0.0, %v456
      %v458 = vpop.f32.mrb[0].mxu0
      %459 = vmatprep.mubr.f32.mxu0 0.0
      %460 = vmatmul.mubr.f32.gmra.mrb[0].mxu0 %v212
      %v461 = vpop.f32.mrb[0].mxu0
      %v462 = vadd.f32 0.0, %v461
      %v463 = vpop.f32.mrb[0].mxu0
      %464 = vmatprep.mubr.f32.mxu0 0.0
      %465 = vmatmul.mubr.f32.gmra.mrb[0].mxu0 %v213
      %v466 = vpop.f32.mrb[0].mxu0
      %v467 = vadd.f32 0.0, %v466
      %v468 = vpop.f32.mrb[0].mxu0
      %469 = vmatprep.mubr.f32.mxu0 0.0
      %470 = vmatmul.mubr.f32.gmra.mrb[0].mxu0 %v214
      %v471 = vpop.f32.mrb[0].mxu0
      %v472 = vadd.f32 0.0, %v471
      %v473 = vpop.f32.mrb[0].mxu0
      %474 = vmatprep.mubr.f32.mxu0 0.0
      %475 = vmatmul.mubr.f32.gmra.mrb[0].mxu0 %v215
      %v476 = vpop.f32.mrb[0].mxu0
      %v477 = vadd.f32 0.0, %v476
      %v478 = vpop.f32.mrb[0].mxu0
      %479 = vmatprep.mubr.f32.mxu0 0.0
      %480 = vmatmul.mubr.f32.gmra.mrb[0].mxu0 %v216
      %v481 = vpop.f32.mrb[0].mxu0
      %v482 = vadd.f32 0.0, %v481
      %v483 = vpop.f32.mrb[0].mxu0
      %484 = vmatprep.mubr.f32.mxu0 0.0
      %485 = vmatmul.mubr.f32.gmra.mrb[0].mxu0 %v217
      %v486 = vpop.f32.mrb[0].mxu0
      %v487 = vadd.f32 0.0, %v486
      %v488 = vpop.f32.mrb[0].mxu0
      %489 = vmatprep.mubr.f32.mxu0 0.0
      %490 = vmatmul.mubr.f32.gmra.mrb[0].mxu0 %v218
      %v491 = vpop.f32.mrb[0].mxu0
      %v492 = vadd.f32 0.0, %v491
      %v493 = vpop.f32.mrb[0].mxu0
      %494 = vmatprep.mubr.f32.mxu0 0.0
      %495 = vmatmul.mubr.f32.gmra.mrb[0].mxu0 %v219
      %v496 = vpop.f32.mrb[0].mxu0
      %v497 = vadd.f32 0.0, %v496
      %v498 = vpop.f32.mrb[0].mxu0
      %499 = vmatprep.mubr.f32.mxu0 0.0
      %500 = vmatmul.mubr.f32.gmra.mrb[0].mxu0 %v220
      %v501 = vpop.f32.mrb[0].mxu0
      %v502 = vadd.f32 0.0, %v501
      %v503 = vpop.f32.mrb[0].mxu0
      %504 = vmatprep.mubr.f32.mxu0 0.0
      %505 = vmatmul.mubr.f32.gmra.mrb[0].mxu0 %v221
      %v506 = vpop.f32.mrb[0].mxu0
      %v507 = vadd.f32 0.0, %v506
      %v508 = vpop.f32.mrb[0].mxu0
      %509 = vmatprep.mubr.f32.mxu0 0.0
      %510 = vmatmul.mubr.f32.gmra.mrb[0].mxu0 %v222
      %v511 = vpop.f32.mrb[0].mxu0
      %v512 = vadd.f32 0.0, %v511
      %v513 = vpop.f32.mrb[0].mxu0
      %514 = vmatprep.mubr.f32.mxu0 0.0
      %515 = vmatmul.mubr.f32.gmra.mrb[0].mxu0 %v223
      %v516 = vpop.f32.mrb[0].mxu0
      %v517 = vadd.f32 0.0, %v516
      %v518 = vpop.f32.mrb[0].mxu0
      %519 = vmatprep.mubr.f32.mxu0 0.0
      %520 = vmatmul.mubr.f32.gmra.mrb[0].mxu0 %v224
      %v521 = vpop.f32.mrb[0].mxu0
      %v522 = vadd.f32 0.0, %v521
      %v523 = vpop.f32.mrb[0].mxu0
      %524 = vmatprep.mubr.f32.mxu0 0.0
      %525 = vmatmul.mubr.f32.gmra.mrb[0].mxu0 %v225
      %v526 = vpop.f32.mrb[0].mxu0
      %v527 = vadd.f32 0.0, %v526
      %v528 = vpop.f32.mrb[0].mxu0
      %529 = vmatprep.mubr.f32.mxu0 0.0
      %530 = vmatmul.mubr.f32.gmra.mrb[0].mxu0 %v226
      %v531 = vpop.f32.mrb[0].mxu0
      %v532 = vadd.f32 0.0, %v531
      %v533 = vpop.f32.mrb[0].mxu0
      %534 = vmatprep.mubr.f32.mxu0 0.0
      %535 = vmatmul.mubr.f32.gmra.mrb[0].mxu0 %v227
      %v536 = vpop.f32.mrb[0].mxu0
      %v537 = vadd.f32 0.0, %v536
      %v538 = vpop.f32.mrb[0].mxu0
      %539 = vmatprep.mubr.f32.mxu0 0.0
      %540 = vmatmul.mubr.f32.gmra.mrb[0].mxu0 %v228
      %v541 = vpop.f32.mrb[0].mxu0
      %v542 = vadd.f32 0.0, %v541
      %v543 = vpop.f32.mrb[0].mxu0
      %544 = vmatprep.mubr.f32.mxu0 0.0
      %545 = vmatmul.mubr.f32.gmra.mrb[0].mxu0 %v229
      %v546 = vpop.f32.mrb[0].mxu0
      %v547 = vadd.f32 0.0, %v546
      %v548 = vpop.f32.mrb[0].mxu0
      %549 = vmatprep.mubr.f32.mxu0 0.0
      %550 = vmatmul.mubr.f32.gmra.mrb[0].mxu0 %v230
      %v551 = vpop.f32.mrb[0].mxu0
      %v552 = vadd.f32 0.0, %v551
      %v553 = vpop.f32.mrb[0].mxu0
      %554 = vmatprep.mubr.f32.mxu0 0.0
      %555 = vmatmul.mubr.f32.gmra.mrb[0].mxu0 %v231
      %v556 = vpop.f32.mrb[0].mxu0
      %v557 = vadd.f32 0.0, %v556
      %v558 = vpop.f32.mrb[0].mxu0
      %559 = vmatprep.mubr.f32.mxu0 0.0
      %560 = vmatmul.mubr.f32.gmra.mrb[0].mxu0 %v232
      %v561 = vpop.f32.mrb[0].mxu0
      %v562 = vadd.f32 0.0, %v561
      %v563 = vpop.f32.mrb[0].mxu0
      %564 = vmatprep.mubr.f32.mxu0 0.0
      %565 = vmatmul.mubr.f32.gmra.mrb[0].mxu0 %v233
      %v566 = vpop.f32.mrb[0].mxu0
      %v567 = vadd.f32 0.0, %v566
      %v568 = vpop.f32.mrb[0].mxu0
      %569 = vmatprep.mubr.f32.mxu0 0.0
      %570 = vmatmul.mubr.f32.gmra.mrb[0].mxu0 %v234
      %v571 = vpop.f32.mrb[0].mxu0
      %v572 = vadd.f32 0.0, %v571
      %v573 = vpop.f32.mrb[0].mxu0
      %574 = vmatprep.mubr.f32.mxu0 0.0
      %575 = vmatmul.mubr.f32.gmra.mrb[0].mxu0 %v235
      %v576 = vpop.f32.mrb[0].mxu0
      %v577 = vadd.f32 0.0, %v576
      %v578 = vpop.f32.mrb[0].mxu0
      %579 = vmatprep.mubr.f32.mxu0 0.0
      %580 = vmatmul.mubr.f32.gmra.mrb[0].mxu0 %v236
      %v581 = vpop.f32.mrb[0].mxu0
      %v582 = vadd.f32 0.0, %v581
      %v583 = vpop.f32.mrb[0].mxu0
      %584 = vmatprep.mubr.f32.mxu0 0.0
      %585 = vmatmul.mubr.f32.gmra.mrb[0].mxu0 %v237
      %v586 = vpop.f32.mrb[0].mxu0
      %v587 = vadd.f32 0.0, %v586
      %v588 = vpop.f32.mrb[0].mxu0
      %589 = vmatprep.mubr.f32.mxu0 0.0
      %590 = vmatmul.mubr.f32.gmra.mrb[0].mxu0 %v238
      %v591 = vpop.f32.mrb[0].mxu0
      %v592 = vadd.f32 0.0, %v591
      %v593 = vpop.f32.mrb[0].mxu0
      %594 = vdwg.mxu0
      %595 = vst [vmem:[%s182] sm:$0xff] %v322
      %596 = vst [vmem:[%s182 + $0x8] sm:$0xff] %v327
      %597 = vst [vmem:[%s182 + $0x10] sm:$0xff] %v332
      %598 = vst [vmem:[%s182 + $0x18] sm:$0xff] %v337
      %599 = vst [vmem:[%s182 + $0x20] sm:$0xff] %v342
      %600 = vst [vmem:[%s182 + $0x28] sm:$0xff] %v347
      %601 = vst [vmem:[%s182 + $0x30] sm:$0xff] %v352
      %602 = vst [vmem:[%s182 + $0x38] sm:$0xff] %v357
      %603 = vst [vmem:[%s182 + $0x40] sm:$0xff] %v362
      %604 = vst [vmem:[%s182 + $0x48] sm:$0xff] %v367
      %605 = vst [vmem:[%s182 + $0x50] sm:$0xff] %v372
      %606 = vst [vmem:[%s182 + $0x58] sm:$0xff] %v377
      %607 = vst [vmem:[%s182 + $0x60] sm:$0xff] %v382
      %608 = vst [vmem:[%s182 + $0x68] sm:$0xff] %v387
      %609 = vst [vmem:[%s182 + $0x70] sm:$0xff] %v392
      %610 = vst [vmem:[%s182 + $0x78] sm:$0xff] %v397
      %611 = vst [vmem:[%s182 + $0x80] sm:$0xff] %v402
      %612 = vst [vmem:[%s182 + $0x88] sm:$0xff] %v407
      %613 = vst [vmem:[%s182 + $0x90] sm:$0xff] %v412
      %614 = vst [vmem:[%s182 + $0x98] sm:$0xff] %v417
      %615 = vst [vmem:[%s182 + $0xa0] sm:$0xff] %v422
      %616 = vst [vmem:[%s182 + $0xa8] sm:$0xff] %v427
      %617 = vst [vmem:[%s182 + $0xb0] sm:$0xff] %v432
      %618 = vst [vmem:[%s182 + $0xb8] sm:$0xff] %v437
      %619 = vst [vmem:[%s182 + $0xc0] sm:$0xff] %v442
      %620 = vst [vmem:[%s182 + $0xc8] sm:$0xff] %v447
      %621 = vst [vmem:[%s182 + $0xd0] sm:$0xff] %v452
      %622 = vst [vmem:[%s182 + $0xd8] sm:$0xff] %v457
      %623 = vst [vmem:[%s182 + $0xe0] sm:$0xff] %v462
      %624 = vst [vmem:[%s182 + $0xe8] sm:$0xff] %v467
      %625 = vst [vmem:[%s182 + $0xf0] sm:$0xff] %v472
      %626 = vst [vmem:[%s182 + $0xf8] sm:$0xff] %v477
      %627 = vst [vmem:[%s182 + $0x100] sm:$0xff] %v482
      %628 = vst [vmem:[%s182 + $0x108] sm:$0xff] %v487
      %629 = vst [vmem:[%s182 + $0x110] sm:$0xff] %v492
      %630 = vst [vmem:[%s182 + $0x118] sm:$0xff] %v497
      %631 = vst [vmem:[%s182 + $0x120] sm:$0xff] %v502
      %632 = vst [vmem:[%s182 + $0x128] sm:$0xff] %v507
      %633 = vst [vmem:[%s182 + $0x130] sm:$0xff] %v512
      %634 = vst [vmem:[%s182 + $0x138] sm:$0xff] %v517
      %635 = vst [vmem:[%s182 + $0x140] sm:$0xff] %v522
      %636 = vst [vmem:[%s182 + $0x148] sm:$0xff] %v527
      %637 = vst [vmem:[%s182 + $0x150] sm:$0xff] %v532
      %638 = vst [vmem:[%s182 + $0x158] sm:$0xff] %v537
      %639 = vst [vmem:[%s182 + $0x160] sm:$0xff] %v542
      %640 = vst [vmem:[%s182 + $0x168] sm:$0xff] %v547
      %641 = vst [vmem:[%s182 + $0x170] sm:$0xff] %v552
      %642 = vst [vmem:[%s182 + $0x178] sm:$0xff] %v557
      %643 = vst [vmem:[%s182 + $0x180] sm:$0xff] %v562
      %644 = vst [vmem:[%s182 + $0x188] sm:$0xff] %v567
      %645 = vst [vmem:[%s182 + $0x190] sm:$0xff] %v572
      %646 = vst [vmem:[%s182 + $0x198] sm:$0xff] %v577
      %647 = vst [vmem:[%s182 + $0x1a0] sm:$0xff] %v582
      %648 = vst [vmem:[%s182 + $0x1a8] sm:$0xff] %v587
      %649 = vst [vmem:[%s182 + $0x1b0] sm:$0xff] %v592
      %s650 = smul.u32 55, %s17
      %p651 = scmp.lt.s32.totalorder %s650, 274
      %s652 = scalar_select %p651, %s650, 274
      %p653 = scmp.lt.s32.totalorder %s18, 0
      %s654 = scalar_select %p653, %s18, 0
      %s655 = sadd.s32 %s654, %s652
      %s656 = smul.addr %s655, 8
      %s657 = scalar_lea.vmem %s2, %s656
      // Predicated region
      $region29: #{generator_forward.28} parent=27 // pred_check
        %p658 = pneg %p97
      $region30: #{generator_forward.28} parent=27 // pred_check_branch
        %660 = sbr.rel (%p658) target = $region32
      $region31: #{generator_forward.28} parent=27 // pred_region
        %s661 = smul.u32 55, %s17
      $region32: #{generator_forward.28} parent=27 // pred_fallthru
        _
    $region28: #{generator_forward.28} parent=5 // pred_fallthru
      _
    %p662 = scmp.le.s32.totalorder 2, %s8
    // Predicated region
    $region33: #{generator_forward.28} parent=5 // pred_check
      %p663 = pneg %p662
    $region34: #{generator_forward.28} parent=5 // pred_check_branch
      %665 = sbr.rel (%p663) target = $region36
    $region35: #{generator_forward.28} parent=5 // pred_region
      %s666 = ssub.s32 %s8, 2
      // Predicated region
      $region37: #{generator_forward.28} parent=35 // pred_check
        %p667 = pneg %p103
      $region38: #{generator_forward.28} parent=35 // pred_check_branch
        %669 = sbr.rel (%p667) target = $region40
      $region39: #{generator_forward.28} parent=35 // pred_region
        %s670 = smul.u32 55, %s19
        %p671 = scmp.lt.s32.totalorder %s670, 274
        %s672 = scalar_select %p671, %s670, 274
        %p673 = scmp.lt.s32.totalorder %s20, 0
        %s674 = scalar_select %p673, %s20, 0
        %s675 = sadd.s32 %s674, %s672
        %s676 = smul.addr %s675, 8
        %s677 = scalar_lea.vmem %s2, %s676
      $region40: #{generator_forward.28} parent=35 // pred_fallthru
        _
    $region36: #{generator_forward.28} parent=5 // pred_fallthru
      _
  $region6: #{generator_forward.28} parent=0 // loop_footer
    %s12 = sadd.s32 1, %s8
  $region7: #{generator_forward.28} parent=0 // loop_footer_branch
    %7 = sbr.rel target = $region3
  $region8: #{generator_forward.28} parent=0 // loop_exit
    _

// kernel: squeeze.155
$region0: #{squeeze.155}
  %s0 = inlined_call_operand.vmem [shape: f32[256], index: 0, kind: input, shape index: {}]
  %s1 = inlined_call_operand.vmem [shape: f32[64,4], index: 1, kind: output, shape index: {}]
  $region1: #{squeeze.155} parent=0
    #allocation0 [shape = 'u8[4096]{0}', space=vmem, size = 0x1000, scoped, tag = 'scoped mem for input reshape']
    %s3 = sshllo.u32 0, 2
    %v4 = vld [vmem:[%s0] sm:%s3]
    %5 = vst [vmem:[#allocation0] sm:%s3] %v4
    %v6 = vld [vmem:[#allocation0] sm:$0x3]
    %vm7 = vcmask 31744
    %8 = vst.msk [vmem:[%s1] sm:$0x1] %vm7, %v6
    %s9 = scalar_lea.vmem %s1, 31
    %10 = vst.msk [vmem:[%s9] sm:$0x2] %vm7, %v6
    %v11 = vld [vmem:[#allocation0] sm:$0x3]
    %12 = vrot.lane.b32.xlu0 %v11, 124
    %v13 = vpop.permute.xlu0 %12
    %vm14 = vcmask 31744
    %s15 = scalar_lea.vmem %s1, 1
    %16 = vst.msk [vmem:[%s15] sm:$0x1] %vm14, %v13
    %s17 = scalar_lea.vmem %s1, 32
    %18 = vst.msk [vmem:[%s17] sm:$0x2] %vm14, %v13
    %v19 = vld [vmem:[#allocation0] sm:$0x3]
    %20 = vrot.lane.b32.xlu0 %v19, 120
    %v21 = vpop.permute.xlu0 %20
    %vm22 = vcmask 31744
    %s23 = scalar_lea.vmem %s1, 2
    %24 = vst.msk [vmem:[%s23] sm:$0x1] %vm22, %v21
    %s25 = scalar_lea.vmem %s1, 33
    %26 = vst.msk [vmem:[%s25] sm:$0x2] %vm22, %v21
    %v27 = vld [vmem:[#allocation0] sm:$0x3]
    %28 = vrot.lane.b32.xlu0 %v27, 116
    %v29 = vpop.permute.xlu0 %28
    %vm30 = vcmask 31744
    %s31 = scalar_lea.vmem %s1, 3
    %32 = vst.msk [vmem:[%s31] sm:$0x1] %vm30, %v29
    %s33 = scalar_lea.vmem %s1, 34
    %34 = vst.msk [vmem:[%s33] sm:$0x2] %vm30, %v29
    %v35 = vld [vmem:[#allocation0] sm:$0x3]
    %36 = vrot.lane.b32.xlu0 %v35, 112
    %v37 = vpop.permute.xlu0 %36
    %vm38 = vcmask 31744
    %s39 = scalar_lea.vmem %s1, 4
    %40 = vst.msk [vmem:[%s39] sm:$0x1] %vm38, %v37
    %s41 = scalar_lea.vmem %s1, 35
    %42 = vst.msk [vmem:[%s41] sm:$0x2] %vm38, %v37
    %v43 = vld [vmem:[#allocation0] sm:$0x3]
    %44 = vrot.lane.b32.xlu0 %v43, 108
    %v45 = vpop.permute.xlu0 %44
    %vm46 = vcmask 31744
    %s47 = scalar_lea.vmem %s1, 5
    %48 = vst.msk [vmem:[%s47] sm:$0x1] %vm46, %v45
    %s49 = scalar_lea.vmem %s1, 36
    %50 = vst.msk [vmem:[%s49] sm:$0x2] %vm46, %v45
    %v51 = vld [vmem:[#allocation0] sm:$0x3]
    %52 = vrot.lane.b32.xlu0 %v51, 104
    %v53 = vpop.permute.xlu0 %52
    %vm54 = vcmask 31744
    %s55 = scalar_lea.vmem %s1, 6
    %56 = vst.msk [vmem:[%s55] sm:$0x1] %vm54, %v53
    %s57 = scalar_lea.vmem %s1, 37
    %58 = vst.msk [vmem:[%s57] sm:$0x2] %vm54, %v53
    %v59 = vld [vmem:[#allocation0] sm:$0x3]
    %60 = vrot.lane.b32.xlu0 %v59, 100
    %v61 = vpop.permute.xlu0 %60
    %vm62 = vcmask 31744
    %s63 = scalar_lea.vmem %s1, 7
    %64 = vst.msk [vmem:[%s63] sm:$0x1] %vm62, %v61
    %s65 = scalar_lea.vmem %s1, 38
    %66 = vst.msk [vmem:[%s65] sm:$0x2] %vm62, %v61
    %v67 = vld [vmem:[#allocation0] sm:$0x3]
    %68 = vrot.lane.b32.xlu0 %v67, 96
    %v69 = vpop.permute.xlu0 %68
    %vm70 = vcmask 31744
    %s71 = scalar_lea.vmem %s1, 8
    %72 = vst.msk [vmem:[%s71] sm:$0x1] %vm70, %v69
    %s73 = scalar_lea.vmem %s1, 39
    %74 = vst.msk [vmem:[%s73] sm:$0x2] %vm70, %v69
    %v75 = vld [vmem:[#allocation0] sm:$0x3]
    %76 = vrot.lane.b32.xlu0 %v75, 92
    %v77 = vpop.permute.xlu0 %76
    %vm78 = vcmask 31744
    %s79 = scalar_lea.vmem %s1, 9
    %80 = vst.msk [vmem:[%s79] sm:$0x1] %vm78, %v77
    %s81 = scalar_lea.vmem %s1, 40
    %82 = vst.msk [vmem:[%s81] sm:$0x2] %vm78, %v77
    %v83 = vld [vmem:[#allocation0] sm:$0x3]
    %84 = vrot.lane.b32.xlu0 %v83, 88
    %v85 = vpop.permute.xlu0 %84
    %vm86 = vcmask 31744
    %s87 = scalar_lea.vmem %s1, 10
    %88 = vst.msk [vmem:[%s87] sm:$0x1] %vm86, %v85
    %s89 = scalar_lea.vmem %s1, 41
    %90 = vst.msk [vmem:[%s89] sm:$0x2] %vm86, %v85
    %v91 = vld [vmem:[#allocation0] sm:$0x3]
    %92 = vrot.lane.b32.xlu0 %v91, 84
    %v93 = vpop.permute.xlu0 %92
    %vm94 = vcmask 31744
    %s95 = scalar_lea.vmem %s1, 11
    %96 = vst.msk [vmem:[%s95] sm:$0x1] %vm94, %v93
    %s97 = scalar_lea.vmem %s1, 42
    %98 = vst.msk [vmem:[%s97] sm:$0x2] %vm94, %v93
    %v99 = vld [vmem:[#allocation0] sm:$0x3]
    %100 = vrot.lane.b32.xlu0 %v99, 80
    %v101 = vpop.permute.xlu0 %100
    %vm102 = vcmask 31744
    %s103 = scalar_lea.vmem %s1, 12
    %104 = vst.msk [vmem:[%s103] sm:$0x1] %vm102, %v101
    %s105 = scalar_lea.vmem %s1, 43
    %106 = vst.msk [vmem:[%s105] sm:$0x2] %vm102, %v101
    %v107 = vld [vmem:[#allocation0] sm:$0x3]
    %108 = vrot.lane.b32.xlu0 %v107, 76
    %v109 = vpop.permute.xlu0 %108
    %vm110 = vcmask 31744
    %s111 = scalar_lea.vmem %s1, 13
    %112 = vst.msk [vmem:[%s111] sm:$0x1] %vm110, %v109
    %s113 = scalar_lea.vmem %s1, 44
    %114 = vst.msk [vmem:[%s113] sm:$0x2] %vm110, %v109
    %v115 = vld [vmem:[#allocation0] sm:$0x3]
    %116 = vrot.lane.b32.xlu0 %v115, 72
    %v117 = vpop.permute.xlu0 %116
    %vm118 = vcmask 31744
    %s119 = scalar_lea.vmem %s1, 14
    %120 = vst.msk [vmem:[%s119] sm:$0x1] %vm118, %v117
    %s121 = scalar_lea.vmem %s1, 45
    %122 = vst.msk [vmem:[%s121] sm:$0x2] %vm118, %v117
    %v123 = vld [vmem:[#allocation0] sm:$0x3]
    %124 = vrot.lane.b32.xlu0 %v123, 68
    %v125 = vpop.permute.xlu0 %124
    %vm126 = vcmask 31744
    %s127 = scalar_lea.vmem %s1, 15
    %128 = vst.msk [vmem:[%s127] sm:$0x1] %vm126, %v125
    %s129 = scalar_lea.vmem %s1, 46
    %130 = vst.msk [vmem:[%s129] sm:$0x2] %vm126, %v125
    %v131 = vld [vmem:[#allocation0] sm:$0x3]
    %132 = vrot.lane.b32.xlu0 %v131, 64
    %v133 = vpop.permute.xlu0 %132
    %vm134 = vcmask 31744
    %s135 = scalar_lea.vmem %s1, 16
    %136 = vst.msk [vmem:[%s135] sm:$0x1] %vm134, %v133
    %s137 = scalar_lea.vmem %s1, 47
    %138 = vst.msk [vmem:[%s137] sm:$0x2] %vm134, %v133
    %v139 = vld [vmem:[#allocation0] sm:$0x3]
    %140 = vrot.lane.b32.xlu0 %v139, 60
    %v141 = vpop.permute.xlu0 %140
    %vm142 = vcmask 31744
    %s143 = scalar_lea.vmem %s1, 17
    %144 = vst.msk [vmem:[%s143] sm:$0x1] %vm142, %v141
    %s145 = scalar_lea.vmem %s1, 48
    %146 = vst.msk [vmem:[%s145] sm:$0x2] %vm142, %v141
    %v147 = vld [vmem:[#allocation0] sm:$0x3]
    %148 = vrot.lane.b32.xlu0 %v147, 56
    %v149 = vpop.permute.xlu0 %148
    %vm150 = vcmask 31744
    %s151 = scalar_lea.vmem %s1, 18
    %152 = vst.msk [vmem:[%s151] sm:$0x1] %vm150, %v149
    %s153 = scalar_lea.vmem %s1, 49
    %154 = vst.msk [vmem:[%s153] sm:$0x2] %vm150, %v149
    %v155 = vld [vmem:[#allocation0] sm:$0x3]
    %156 = vrot.lane.b32.xlu0 %v155, 52
    %v157 = vpop.permute.xlu0 %156
    %vm158 = vcmask 31744
    %s159 = scalar_lea.vmem %s1, 19
    %160 = vst.msk [vmem:[%s159] sm:$0x1] %vm158, %v157
    %s161 = scalar_lea.vmem %s1, 50
    %162 = vst.msk [vmem:[%s161] sm:$0x2] %vm158, %v157
    %v163 = vld [vmem:[#allocation0] sm:$0x3]
    %164 = vrot.lane.b32.xlu0 %v163, 48
    %v165 = vpop.permute.xlu0 %164
    %vm166 = vcmask 31744
    %s167 = scalar_lea.vmem %s1, 20
    %168 = vst.msk [vmem:[%s167] sm:$0x1] %vm166, %v165
    %s169 = scalar_lea.vmem %s1, 51
    %170 = vst.msk [vmem:[%s169] sm:$0x2] %vm166, %v165
    %v171 = vld [vmem:[#allocation0] sm:$0x3]
    %172 = vrot.lane.b32.xlu0 %v171, 44
    %v173 = vpop.permute.xlu0 %172
    %vm174 = vcmask 31744
    %s175 = scalar_lea.vmem %s1, 21
    %176 = vst.msk [vmem:[%s175] sm:$0x1] %vm174, %v173
    %s177 = scalar_lea.vmem %s1, 52
    %178 = vst.msk [vmem:[%s177] sm:$0x2] %vm174, %v173
    %v179 = vld [vmem:[#allocation0] sm:$0x3]
    %180 = vrot.lane.b32.xlu0 %v179, 40
    %v181 = vpop.permute.xlu0 %180
    %vm182 = vcmask 31744
    %s183 = scalar_lea.vmem %s1, 22
    %184 = vst.msk [vmem:[%s183] sm:$0x1] %vm182, %v181
    %s185 = scalar_lea.vmem %s1, 53
    %186 = vst.msk [vmem:[%s185] sm:$0x2] %vm182, %v181
    %v187 = vld [vmem:[#allocation0] sm:$0x3]
    %188 = vrot.lane.b32.xlu0 %v187, 36
    %v189 = vpop.permute.xlu0 %188
    %vm190 = vcmask 31744
    %s191 = scalar_lea.vmem %s1, 23
    %192 = vst.msk [vmem:[%s191] sm:$0x1] %vm190, %v189
    %s193 = scalar_lea.vmem %s1, 54
    %194 = vst.msk [vmem:[%s193] sm:$0x2] %vm190, %v189
    %v195 = vld [vmem:[#allocation0] sm:$0x3]
    %196 = vrot.lane.b32.xlu0 %v195, 32
    %v197 = vpop.permute.xlu0 %196
    %vm198 = vcmask 31744
    %s199 = scalar_lea.vmem %s1, 24
    %200 = vst.msk [vmem:[%s199] sm:$0x1] %vm198, %v197
    %s201 = scalar_lea.vmem %s1, 55
    %202 = vst.msk [vmem:[%s201] sm:$0x2] %vm198, %v197
    %v203 = vld [vmem:[#allocation0] sm:$0x3]
    %204 = vrot.lane.b32.xlu0 %v203, 28
    %v205 = vpop.permute.xlu0 %204
    %vm206 = vcmask 31744
    %s207 = scalar_lea.vmem %s1, 25
    %208 = vst.msk [vmem:[%s207] sm:$0x1] %vm206, %v205
    %s209 = scalar_lea.vmem %s1, 56
    %210 = vst.msk [vmem:[%s209] sm:$0x2] %vm206, %v205
    %v211 = vld [vmem:[#allocation0] sm:$0x3]
    %212 = vrot.lane.b32.xlu0 %v211, 24
    %v213 = vpop.permute.xlu0 %212
    %vm214 = vcmask 31744
    %s215 = scalar_lea.vmem %s1, 26
    %216 = vst.msk [vmem:[%s215] sm:$0x1] %vm214, %v213
    %s217 = scalar_lea.vmem %s1, 57
    %218 = vst.msk [vmem:[%s217] sm:$0x2] %vm214, %v213
    %v219 = vld [vmem:[#allocation0] sm:$0x3]
    %220 = vrot.lane.b32.xlu0 %v219, 20
    %v221 = vpop.permute.xlu0 %220
    %vm222 = vcmask 31744
    %s223 = scalar_lea.vmem %s1, 27
    %224 = vst.msk [vmem:[%s223] sm:$0x1] %vm222, %v221
    %s225 = scalar_lea.vmem %s1, 58
    %226 = vst.msk [vmem:[%s225] sm:$0x2] %vm222, %v221
    %v227 = vld [vmem:[#allocation0] sm:$0x3]
    %228 = vrot.lane.b32.xlu0 %v227, 16
    %v229 = vpop.permute.xlu0 %228
    %vm230 = vcmask 31744
    %s231 = scalar_lea.vmem %s1, 28
    %232 = vst.msk [vmem:[%s231] sm:$0x1] %vm230, %v229
    %s233 = scalar_lea.vmem %s1, 59
    %234 = vst.msk [vmem:[%s233] sm:$0x2] %vm230, %v229
    %v235 = vld [vmem:[#allocation0] sm:$0x3]
    %236 = vrot.lane.b32.xlu0 %v235, 12
    %v237 = vpop.permute.xlu0 %236
    %vm238 = vcmask 31744
    %s239 = scalar_lea.vmem %s1, 29
    %240 = vst.msk [vmem:[%s239] sm:$0x1] %vm238, %v237
    %s241 = scalar_lea.vmem %s1, 60
    %242 = vst.msk [vmem:[%s241] sm:$0x2] %vm238, %v237
    %v243 = vld [vmem:[#allocation0] sm:$0x3]
    %244 = vrot.lane.b32.xlu0 %v243, 8
    %v245 = vpop.permute.xlu0 %244
    %vm246 = vcmask 31744
    %s247 = scalar_lea.vmem %s1, 30
    %248 = vst.msk [vmem:[%s247] sm:$0x1] %vm246, %v245
    %s249 = scalar_lea.vmem %s1, 61
    %250 = vst.msk [vmem:[%s249] sm:$0x2] %vm246, %v245
    %v251 = vld [vmem:[#allocation0] sm:$0x3]
    %252 = vrot.lane.b32.xlu0 %v251, 4
    %v253 = vpop.permute.xlu0 %252
    %vm254 = vcmask 31744
    %s255 = scalar_lea.vmem %s1, 31
    %256 = vst.msk [vmem:[%s255] sm:$0x1] %vm254, %v253
    %s257 = scalar_lea.vmem %s1, 62
    %258 = vst.msk [vmem:[%s257] sm:$0x2] %vm254, %v253

// kernel: tile.77
$region0: #{tile.77}
  #allocation0 [shape = 's32[1]{0}', space=sflag, size = 0x4, scoped, tag = 'scoped memory for tile.77']
  %s0 = inlined_call_operand.vmem [shape: f32[4], index: 0, kind: input, shape index: {}]
  %s1 = inlined_call_operand.vmem [shape: f32[64,4], index: 1, kind: output, shape index: {}]
  // Predicated region
  $region2: #{tile.77} parent=0 // pred_check
    _
  $region3: #{tile.77} parent=0 // pred_check_branch
    %3 = sbr.rel (0) target = $region5
  $region4: #{tile.77} parent=0 // pred_region
    _
  $region5: #{tile.77} parent=0 // pred_fallthru
    _
  %v4 = vld [vmem:[%s0] ss:$0 sm:$0xff]
  %5 = vst [vmem:[%s1] sm:$0xff] %v4
  %s6 = scalar_lea.vmem %s1, 8
  %7 = vst [vmem:[%s6] sm:$0xff] %v4
  %s8 = scalar_lea.vmem %s1, 16
  %9 = vst [vmem:[%s8] sm:$0xff] %v4
  %s10 = scalar_lea.vmem %s1, 24
  %11 = vst [vmem:[%s10] sm:$0xff] %v4
  %s12 = scalar_lea.vmem %s1, 32
  %13 = vst [vmem:[%s12] sm:$0xff] %v4
  %s14 = scalar_lea.vmem %s1, 40
  %15 = vst [vmem:[%s14] sm:$0xff] %v4
  %s16 = scalar_lea.vmem %s1, 48
  %17 = vst [vmem:[%s16] sm:$0xff] %v4
  %s18 = scalar_lea.vmem %s1, 56
  %19 = vst [vmem:[%s18] sm:$0xff] %v4

// kernel: tile.82
$region0: #{tile.82}
  %s0 = inlined_call_operand.vmem [shape: f32[64,4], index: 0, kind: input, shape index: {}]
  %s1 = inlined_call_operand.vmem [shape: f32[1,256], index: 1, kind: output, shape index: {}]
  $region1: #{tile.82} parent=0
    #allocation0 [shape = 'u8[8192]{0}', space=vmem, size = 0x2000, scoped, tag = 'scoped mem for output reshape']
    %v2 = vld [vmem:[%s0] sm:$0x1]
    %s3 = scalar_lea.vmem %s0, 31
    %v4 = vld [vmem:[%s3] sm:$0x2]
    %vm5 = vcmask 1041409
    %v6 = vsel %vm5, %v4, %v2
    %vm7 = vcmask 31744
    %8 = vst.msk [vmem:[#allocation0] ss:$8 sm:$0x3] %vm7, %v6
    %s9 = scalar_lea.vmem %s0, 31
    %v10 = vld [vmem:[%s9] sm:$0x1]
    %s11 = scalar_lea.vmem %s0, 62
    %v12 = vld [vmem:[%s11] sm:$0x2]
    %vm13 = vcmask 1041409
    %v14 = vsel %vm13, %v12, %v10
    %15 = vrot.lane.b32.xlu0 %v14, 124
    %v16 = vpop.permute.xlu0 %15
    %vm17 = vcmask 1048544
    %18 = vst.msk [vmem:[#allocation0] ss:$8 sm:$0x3] %vm17, %v16
    %s19 = scalar_lea.vmem %s0, 30
    %v20 = vld [vmem:[%s19] sm:$0x1]
    %s21 = scalar_lea.vmem %s0, 61
    %v22 = vld [vmem:[%s21] sm:$0x2]
    %vm23 = vcmask 1041409
    %v24 = vsel %vm23, %v22, %v20
    %25 = vrot.lane.b32.xlu0 %v24, 120
    %v26 = vpop.permute.xlu0 %25
    %vm27 = vcmask 1015744
    %28 = vst.msk [vmem:[#allocation0] ss:$8 sm:$0x3] %vm27, %v26
    %s29 = scalar_lea.vmem %s0, 29
    %v30 = vld [vmem:[%s29] sm:$0x1]
    %s31 = scalar_lea.vmem %s0, 60
    %v32 = vld [vmem:[%s31] sm:$0x2]
    %vm33 = vcmask 1041409
    %v34 = vsel %vm33, %v32, %v30
    %35 = vrot.lane.b32.xlu0 %v34, 116
    %v36 = vpop.permute.xlu0 %35
    %vm37 = vcmask 982944
    %38 = vst.msk [vmem:[#allocation0] ss:$8 sm:$0x3] %vm37, %v36
    %s39 = scalar_lea.vmem %s0, 28
    %v40 = vld [vmem:[%s39] sm:$0x1]
    %s41 = scalar_lea.vmem %s0, 59
    %v42 = vld [vmem:[%s41] sm:$0x2]
    %vm43 = vcmask 1041409
    %v44 = vsel %vm43, %v42, %v40
    %45 = vrot.lane.b32.xlu0 %v44, 112
    %v46 = vpop.permute.xlu0 %45
    %vm47 = vcmask 950144
    %48 = vst.msk [vmem:[#allocation0] ss:$8 sm:$0x3] %vm47, %v46
    %s49 = scalar_lea.vmem %s0, 27
    %v50 = vld [vmem:[%s49] sm:$0x1]
    %s51 = scalar_lea.vmem %s0, 58
    %v52 = vld [vmem:[%s51] sm:$0x2]
    %vm53 = vcmask 1041409
    %v54 = vsel %vm53, %v52, %v50
    %55 = vrot.lane.b32.xlu0 %v54, 108
    %v56 = vpop.permute.xlu0 %55
    %vm57 = vcmask 917344
    %58 = vst.msk [vmem:[#allocation0] ss:$8 sm:$0x3] %vm57, %v56
    %s59 = scalar_lea.vmem %s0, 26
    %v60 = vld [vmem:[%s59] sm:$0x1]
    %s61 = scalar_lea.vmem %s0, 57
    %v62 = vld [vmem:[%s61] sm:$0x2]
    %vm63 = vcmask 1041409
    %v64 = vsel %vm63, %v62, %v60
    %65 = vrot.lane.b32.xlu0 %v64, 104
    %v66 = vpop.permute.xlu0 %65
    %vm67 = vcmask 884544
    %68 = vst.msk [vmem:[#allocation0] ss:$8 sm:$0x3] %vm67, %v66
    %s69 = scalar_lea.vmem %s0, 25
    %v70 = vld [vmem:[%s69] sm:$0x1]
    %s71 = scalar_lea.vmem %s0, 56
    %v72 = vld [vmem:[%s71] sm:$0x2]
    %vm73 = vcmask 1041409
    %v74 = vsel %vm73, %v72, %v70
    %75 = vrot.lane.b32.xlu0 %v74, 100
    %v76 = vpop.permute.xlu0 %75
    %vm77 = vcmask 851744
    %78 = vst.msk [vmem:[#allocation0] ss:$8 sm:$0x3] %vm77, %v76
    %s79 = scalar_lea.vmem %s0, 24
    %v80 = vld [vmem:[%s79] sm:$0x1]
    %s81 = scalar_lea.vmem %s0, 55
    %v82 = vld [vmem:[%s81] sm:$0x2]
    %vm83 = vcmask 1041409
    %v84 = vsel %vm83, %v82, %v80
    %85 = vrot.lane.b32.xlu0 %v84, 96
    %v86 = vpop.permute.xlu0 %85
    %vm87 = vcmask 818944
    %88 = vst.msk [vmem:[#allocation0] ss:$8 sm:$0x3] %vm87, %v86
    %s89 = scalar_lea.vmem %s0, 23
    %v90 = vld [vmem:[%s89] sm:$0x1]
    %s91 = scalar_lea.vmem %s0, 54
    %v92 = vld [vmem:[%s91] sm:$0x2]
    %vm93 = vcmask 1041409
    %v94 = vsel %vm93, %v92, %v90
    %95 = vrot.lane.b32.xlu0 %v94, 92
    %v96 = vpop.permute.xlu0 %95
    %vm97 = vcmask 786144
    %98 = vst.msk [vmem:[#allocation0] ss:$8 sm:$0x3] %vm97, %v96
    %s99 = scalar_lea.vmem %s0, 22
    %v100 = vld [vmem:[%s99] sm:$0x1]
    %s101 = scalar_lea.vmem %s0, 53
    %v102 = vld [vmem:[%s101] sm:$0x2]
    %vm103 = vcmask 1041409
    %v104 = vsel %vm103, %v102, %v100
    %105 = vrot.lane.b32.xlu0 %v104, 88
    %v106 = vpop.permute.xlu0 %105
    %vm107 = vcmask 753344
    %108 = vst.msk [vmem:[#allocation0] ss:$8 sm:$0x3] %vm107, %v106
    %s109 = scalar_lea.vmem %s0, 21
    %v110 = vld [vmem:[%s109] sm:$0x1]
    %s111 = scalar_lea.vmem %s0, 52
    %v112 = vld [vmem:[%s111] sm:$0x2]
    %vm113 = vcmask 1041409
    %v114 = vsel %vm113, %v112, %v110
    %115 = vrot.lane.b32.xlu0 %v114, 84
    %v116 = vpop.permute.xlu0 %115
    %vm117 = vcmask 720544
    %118 = vst.msk [vmem:[#allocation0] ss:$8 sm:$0x3] %vm117, %v116
    %s119 = scalar_lea.vmem %s0, 20
    %v120 = vld [vmem:[%s119] sm:$0x1]
    %s121 = scalar_lea.vmem %s0, 51
    %v122 = vld [vmem:[%s121] sm:$0x2]
    %vm123 = vcmask 1041409
    %v124 = vsel %vm123, %v122, %v120
    %125 = vrot.lane.b32.xlu0 %v124, 80
    %v126 = vpop.permute.xlu0 %125
    %vm127 = vcmask 687744
    %128 = vst.msk [vmem:[#allocation0] ss:$8 sm:$0x3] %vm127, %v126
    %s129 = scalar_lea.vmem %s0, 19
    %v130 = vld [vmem:[%s129] sm:$0x1]
    %s131 = scalar_lea.vmem %s0, 50
    %v132 = vld [vmem:[%s131] sm:$0x2]
    %vm133 = vcmask 1041409
    %v134 = vsel %vm133, %v132, %v130
    %135 = vrot.lane.b32.xlu0 %v134, 76
    %v136 = vpop.permute.xlu0 %135
    %vm137 = vcmask 654944
    %138 = vst.msk [vmem:[#allocation0] ss:$8 sm:$0x3] %vm137, %v136
    %s139 = scalar_lea.vmem %s0, 18
    %v140 = vld [vmem:[%s139] sm:$0x1]
    %s141 = scalar_lea.vmem %s0, 49
    %v142 = vld [vmem:[%s141] sm:$0x2]
    %vm143 = vcmask 1041409
    %v144 = vsel %vm143, %v142, %v140
    %145 = vrot.lane.b32.xlu0 %v144, 72
    %v146 = vpop.permute.xlu0 %145
    %vm147 = vcmask 622144
    %148 = vst.msk [vmem:[#allocation0] ss:$8 sm:$0x3] %vm147, %v146
    %s149 = scalar_lea.vmem %s0, 17
    %v150 = vld [vmem:[%s149] sm:$0x1]
    %s151 = scalar_lea.vmem %s0, 48
    %v152 = vld [vmem:[%s151] sm:$0x2]
    %vm153 = vcmask 1041409
    %v154 = vsel %vm153, %v152, %v150
    %155 = vrot.lane.b32.xlu0 %v154, 68
    %v156 = vpop.permute.xlu0 %155
    %vm157 = vcmask 589344
    %158 = vst.msk [vmem:[#allocation0] ss:$8 sm:$0x3] %vm157, %v156
    %s159 = scalar_lea.vmem %s0, 16
    %v160 = vld [vmem:[%s159] sm:$0x1]
    %s161 = scalar_lea.vmem %s0, 47
    %v162 = vld [vmem:[%s161] sm:$0x2]
    %vm163 = vcmask 1041409
    %v164 = vsel %vm163, %v162, %v160
    %165 = vrot.lane.b32.xlu0 %v164, 64
    %v166 = vpop.permute.xlu0 %165
    %vm167 = vcmask 556544
    %168 = vst.msk [vmem:[#allocation0] ss:$8 sm:$0x3] %vm167, %v166
    %s169 = scalar_lea.vmem %s0, 15
    %v170 = vld [vmem:[%s169] sm:$0x1]
    %s171 = scalar_lea.vmem %s0, 46
    %v172 = vld [vmem:[%s171] sm:$0x2]
    %vm173 = vcmask 1041409
    %v174 = vsel %vm173, %v172, %v170
    %175 = vrot.lane.b32.xlu0 %v174, 60
    %v176 = vpop.permute.xlu0 %175
    %vm177 = vcmask 523744
    %178 = vst.msk [vmem:[#allocation0] ss:$8 sm:$0x3] %vm177, %v176
    %s179 = scalar_lea.vmem %s0, 14
    %v180 = vld [vmem:[%s179] sm:$0x1]
    %s181 = scalar_lea.vmem %s0, 45
    %v182 = vld [vmem:[%s181] sm:$0x2]
    %vm183 = vcmask 1041409
    %v184 = vsel %vm183, %v182, %v180
    %185 = vrot.lane.b32.xlu0 %v184, 56
    %v186 = vpop.permute.xlu0 %185
    %vm187 = vcmask 490944
    %188 = vst.msk [vmem:[#allocation0] ss:$8 sm:$0x3] %vm187, %v186
    %s189 = scalar_lea.vmem %s0, 13
    %v190 = vld [vmem:[%s189] sm:$0x1]
    %s191 = scalar_lea.vmem %s0, 44
    %v192 = vld [vmem:[%s191] sm:$0x2]
    %vm193 = vcmask 1041409
    %v194 = vsel %vm193, %v192, %v190
    %195 = vrot.lane.b32.xlu0 %v194, 52
    %v196 = vpop.permute.xlu0 %195
    %vm197 = vcmask 458144
    %198 = vst.msk [vmem:[#allocation0] ss:$8 sm:$0x3] %vm197, %v196
    %s199 = scalar_lea.vmem %s0, 12
    %v200 = vld [vmem:[%s199] sm:$0x1]
    %s201 = scalar_lea.vmem %s0, 43
    %v202 = vld [vmem:[%s201] sm:$0x2]
    %vm203 = vcmask 1041409
    %v204 = vsel %vm203, %v202, %v200
    %205 = vrot.lane.b32.xlu0 %v204, 48
    %v206 = vpop.permute.xlu0 %205
    %vm207 = vcmask 425344
    %208 = vst.msk [vmem:[#allocation0] ss:$8 sm:$0x3] %vm207, %v206
    %s209 = scalar_lea.vmem %s0, 11
    %v210 = vld [vmem:[%s209] sm:$0x1]
    %s211 = scalar_lea.vmem %s0, 42
    %v212 = vld [vmem:[%s211] sm:$0x2]
    %vm213 = vcmask 1041409
    %v214 = vsel %vm213, %v212, %v210
    %215 = vrot.lane.b32.xlu0 %v214, 44
    %v216 = vpop.permute.xlu0 %215
    %vm217 = vcmask 392544
    %218 = vst.msk [vmem:[#allocation0] ss:$8 sm:$0x3] %vm217, %v216
    %s219 = scalar_lea.vmem %s0, 10
    %v220 = vld [vmem:[%s219] sm:$0x1]
    %s221 = scalar_lea.vmem %s0, 41
    %v222 = vld [vmem:[%s221] sm:$0x2]
    %vm223 = vcmask 1041409
    %v224 = vsel %vm223, %v222, %v220
    %225 = vrot.lane.b32.xlu0 %v224, 40
    %v226 = vpop.permute.xlu0 %225
    %vm227 = vcmask 359744
    %228 = vst.msk [vmem:[#allocation0] ss:$8 sm:$0x3] %vm227, %v226
    %s229 = scalar_lea.vmem %s0, 9
    %v230 = vld [vmem:[%s229] sm:$0x1]
    %s231 = scalar_lea.vmem %s0, 40
    %v232 = vld [vmem:[%s231] sm:$0x2]
    %vm233 = vcmask 1041409
    %v234 = vsel %vm233, %v232, %v230
    %235 = vrot.lane.b32.xlu0 %v234, 36
    %v236 = vpop.permute.xlu0 %235
    %vm237 = vcmask 326944
    %238 = vst.msk [vmem:[#allocation0] ss:$8 sm:$0x3] %vm237, %v236
    %s239 = scalar_lea.vmem %s0, 8
    %v240 = vld [vmem:[%s239] sm:$0x1]
    %s241 = scalar_lea.vmem %s0, 39
    %v242 = vld [vmem:[%s241] sm:$0x2]
    %vm243 = vcmask 1041409
    %v244 = vsel %vm243, %v242, %v240
    %245 = vrot.lane.b32.xlu0 %v244, 32
    %v246 = vpop.permute.xlu0 %245
    %vm247 = vcmask 294144
    %248 = vst.msk [vmem:[#allocation0] ss:$8 sm:$0x3] %vm247, %v246
    %s249 = scalar_lea.vmem %s0, 7
    %v250 = vld [vmem:[%s249] sm:$0x1]
    %s251 = scalar_lea.vmem %s0, 38
    %v252 = vld [vmem:[%s251] sm:$0x2]
    %vm253 = vcmask 1041409
    %v254 = vsel %vm253, %v252, %v250
    %255 = vrot.lane.b32.xlu0 %v254, 28
    %v256 = vpop.permute.xlu0 %255
    %vm257 = vcmask 261344
    %258 = vst.msk [vmem:[#allocation0] ss:$8 sm:$0x3] %vm257, %v256
    %s259 = scalar_lea.vmem %s0, 6
    %v260 = vld [vmem:[%s259] sm:$0x1]
    %s261 = scalar_lea.vmem %s0, 37
    %v262 = vld [vmem:[%s261] sm:$0x2]
    %vm263 = vcmask 1041409
    %v264 = vsel %vm263, %v262, %v260
    %265 = vrot.lane.b32.xlu0 %v264, 24
    %v266 = vpop.permute.xlu0 %265
    %vm267 = vcmask 228544
    %268 = vst.msk [vmem:[#allocation0] ss:$8 sm:$0x3] %vm267, %v266
    %s269 = scalar_lea.vmem %s0, 5
    %v270 = vld [vmem:[%s269] sm:$0x1]
    %s271 = scalar_lea.vmem %s0, 36
    %v272 = vld [vmem:[%s271] sm:$0x2]
    %vm273 = vcmask 1041409
    %v274 = vsel %vm273, %v272, %v270
    %275 = vrot.lane.b32.xlu0 %v274, 20
    %v276 = vpop.permute.xlu0 %275
    %vm277 = vcmask 195744
    %278 = vst.msk [vmem:[#allocation0] ss:$8 sm:$0x3] %vm277, %v276
    %s279 = scalar_lea.vmem %s0, 4
    %v280 = vld [vmem:[%s279] sm:$0x1]
    %s281 = scalar_lea.vmem %s0, 35
    %v282 = vld [vmem:[%s281] sm:$0x2]
    %vm283 = vcmask 1041409
    %v284 = vsel %vm283, %v282, %v280
    %285 = vrot.lane.b32.xlu0 %v284, 16
    %v286 = vpop.permute.xlu0 %285
    %vm287 = vcmask 162944
    %288 = vst.msk [vmem:[#allocation0] ss:$8 sm:$0x3] %vm287, %v286
    %s289 = scalar_lea.vmem %s0, 3
    %v290 = vld [vmem:[%s289] sm:$0x1]
    %s291 = scalar_lea.vmem %s0, 34
    %v292 = vld [vmem:[%s291] sm:$0x2]
    %vm293 = vcmask 1041409
    %v294 = vsel %vm293, %v292, %v290
    %295 = vrot.lane.b32.xlu0 %v294, 12
    %v296 = vpop.permute.xlu0 %295
    %vm297 = vcmask 130144
    %298 = vst.msk [vmem:[#allocation0] ss:$8 sm:$0x3] %vm297, %v296
    %s299 = scalar_lea.vmem %s0, 2
    %v300 = vld [vmem:[%s299] sm:$0x1]
    %s301 = scalar_lea.vmem %s0, 33
    %v302 = vld [vmem:[%s301] sm:$0x2]
    %vm303 = vcmask 1041409
    %v304 = vsel %vm303, %v302, %v300
    %305 = vrot.lane.b32.xlu0 %v304, 8
    %v306 = vpop.permute.xlu0 %305
    %vm307 = vcmask 97344
    %308 = vst.msk [vmem:[#allocation0] ss:$8 sm:$0x3] %vm307, %v306
    %s309 = scalar_lea.vmem %s0, 1
    %v310 = vld [vmem:[%s309] sm:$0x1]
    %s311 = scalar_lea.vmem %s0, 32
    %v312 = vld [vmem:[%s311] sm:$0x2]
    %vm313 = vcmask 1041409
    %v314 = vsel %vm313, %v312, %v310
    %315 = vrot.lane.b32.xlu0 %v314, 4
    %v316 = vpop.permute.xlu0 %315
    %vm317 = vcmask 64544
    %318 = vst.msk [vmem:[#allocation0] ss:$8 sm:$0x3] %vm317, %v316
    %s320 = sshllo.u32 0, 1
    %v322 = vld [vmem:[#allocation0] sm:%s320]
    %s323 = sshllo.u32 0, 1
    %324 = vst [vmem:[%s1] sm:%s323] %v322
    %s325 = scalar_lea.vmem [#allocation0], 8
    %v326 = vld [vmem:[%s325] sm:%s320]
    %s327 = sshllo.u32 0, 1
    %s328 = scalar_lea.vmem %s1, 1
    %329 = vst [vmem:[%s328] sm:%s327] %v326

// kernel: generator_forward.29
$region0: #{generator_forward.29}
  #allocation0 [shape = 'u32[]', space=smem, size = 0x4, offset = 0x4, fixed_abs, tag = 'smem constant byte address 0x4 - core index']
  #allocation1 [shape = 'u32[144,128]{1,0:T(1,128)}', space=vmem, size = 0x12000, scoped, tag = 'internal scratch']
  %s0 = inlined_call_operand.vmem [shape: f32[128,256], index: 0, kind: input, shape index: {}]
  %s1 = inlined_call_operand.vmem [shape: f32[1,256], index: 1, kind: output, shape index: {0}]
  %s2 = inlined_call_operand.vmem [shape: f32[1,256], index: 2, kind: output, shape index: {1}]
  %3 = xla_tuple %s1, %s2
  %s4 = sld [smem:[#allocation0]]
  $region26: #{generator_forward.29} parent=0
    _
  %s6 = ssub.s32 1, %s4
  %s7 = scalar_select 0, %s6, %s4
  // Predicated region
  $region2: #{generator_forward.29} parent=0 // pred_check
    _
  $region3: #{generator_forward.29} parent=0 // pred_check_branch
    %9 = sbr.rel (0) target = $region5
  $region4: #{generator_forward.29} parent=0 // pred_region
    _
  $region5: #{generator_forward.29} parent=0 // pred_fallthru
    _
  %p10 = scmp.eq.s32.totalorder 0, 0
  // Predicated region
  $region6: #{generator_forward.29} parent=0 // pred_check
    %p11 = pneg %p10
  $region7: #{generator_forward.29} parent=0 // pred_check_branch
    %13 = sbr.rel (%p11) target = $region9
  $region8: #{generator_forward.29} parent=0 // pred_region
    %v14 = vlaneseq
    %vm15 = vcmp.ge.s32.totalorder %v14, 0
    %vm16 = vcmp.lt.s32.totalorder %v14, 256
    %vm17 = vmand %vm15, %vm16
    %18 = vst.msk [vmem:[%s1] sm:$0x3] %vm17, 0.0
    %19 = vst.msk [vmem:[%s2] sm:$0x3] %vm17, 0.0
  $region9: #{generator_forward.29} parent=0 // pred_fallthru
    _
  %v20 = vld [vmem:[%s0] sm:$0xff]
  %v21 = vld [vmem:[%s0 + $0x8] sm:$0xff]
  %v22 = vld [vmem:[%s0 + $0x10] sm:$0xff]
  %v23 = vld [vmem:[%s0 + $0x18] sm:$0xff]
  %v24 = vld [vmem:[%s0 + $0x20] sm:$0xff]
  %v25 = vld [vmem:[%s0 + $0x28] sm:$0xff]
  %v26 = vld [vmem:[%s0 + $0x30] sm:$0xff]
  %v27 = vld [vmem:[%s0 + $0x38] sm:$0xff]
  %v28 = vld [vmem:[%s0 + $0x40] sm:$0xff]
  %v29 = vld [vmem:[%s0 + $0x48] sm:$0xff]
  %v30 = vld [vmem:[%s0 + $0x50] sm:$0xff]
  %v31 = vld [vmem:[%s0 + $0x58] sm:$0xff]
  %v32 = vld [vmem:[%s0 + $0x60] sm:$0xff]
  %v33 = vld [vmem:[%s0 + $0x68] sm:$0xff]
  %v34 = vld [vmem:[%s0 + $0x70] sm:$0xff]
  %v35 = vld [vmem:[%s0 + $0x78] sm:$0xff]
  %v36 = vld [vmem:[%s0 + $0x80] sm:$0xff]
  %v37 = vld [vmem:[%s0 + $0x88] sm:$0xff]
  %v38 = vld [vmem:[%s0 + $0x90] sm:$0xff]
  %v39 = vld [vmem:[%s0 + $0x98] sm:$0xff]
  %v40 = vld [vmem:[%s0 + $0xa0] sm:$0xff]
  %v41 = vld [vmem:[%s0 + $0xa8] sm:$0xff]
  %v42 = vld [vmem:[%s0 + $0xb0] sm:$0xff]
  %v43 = vld [vmem:[%s0 + $0xb8] sm:$0xff]
  %v44 = vld [vmem:[%s0 + $0xc0] sm:$0xff]
  %v45 = vld [vmem:[%s0 + $0xc8] sm:$0xff]
  %v46 = vld [vmem:[%s0 + $0xd0] sm:$0xff]
  %v47 = vld [vmem:[%s0 + $0xd8] sm:$0xff]
  %v48 = vld [vmem:[%s0 + $0xe0] sm:$0xff]
  %v49 = vld [vmem:[%s0 + $0xe8] sm:$0xff]
  %v50 = vld [vmem:[%s0 + $0xf0] sm:$0xff]
  %v51 = vld [vmem:[%s0 + $0xf8] sm:$0xff]
  %v52 = vld [vmem:[%s1] sm:$0x3]
  %v53 = vadd.f32 %v20, %v22
  %v54 = vadd.f32 %v53, %v24
  %v55 = vadd.f32 %v54, %v26
  %v56 = vadd.f32 %v55, %v28
  %v57 = vadd.f32 %v56, %v30
  %v58 = vadd.f32 %v57, %v32
  %v59 = vadd.f32 %v58, %v34
  %v60 = vadd.f32 %v59, %v36
  %v61 = vadd.f32 %v60, %v38
  %v62 = vadd.f32 %v61, %v40
  %v63 = vadd.f32 %v62, %v42
  %v64 = vadd.f32 %v63, %v44
  %v65 = vadd.f32 %v64, %v46
  %v66 = vadd.f32 %v65, %v48
  %v67 = vadd.f32 %v66, %v50
  %v68 = vrot.slane %v67, 4
  %v69 = vadd.f32 %v67, %v68
  %v70 = vrot.slane %v69, 2
  %v71 = vadd.f32 %v69, %v70
  %v72 = vrot.slane %v71, 1
  %v73 = vadd.f32 %v71, %v72
  %v74 = vadd.f32 %v21, %v23
  %v75 = vadd.f32 %v74, %v25
  %v76 = vadd.f32 %v75, %v27
  %v77 = vadd.f32 %v76, %v29
  %v78 = vadd.f32 %v77, %v31
  %v79 = vadd.f32 %v78, %v33
  %v80 = vadd.f32 %v79, %v35
  %v81 = vadd.f32 %v80, %v37
  %v82 = vadd.f32 %v81, %v39
  %v83 = vadd.f32 %v82, %v41
  %v84 = vadd.f32 %v83, %v43
  %v85 = vadd.f32 %v84, %v45
  %v86 = vadd.f32 %v85, %v47
  %v87 = vadd.f32 %v86, %v49
  %v88 = vadd.f32 %v87, %v51
  %v89 = vrot.slane %v88, 4
  %v90 = vadd.f32 %v88, %v89
  %v91 = vrot.slane %v90, 2
  %v92 = vadd.f32 %v90, %v91
  %v93 = vrot.slane %v92, 1
  %v94 = vadd.f32 %v92, %v93
  %v97 = vcombine.low %v73, %v94
  %v99 = vunpack.c.l.s4 1966171168
  %v100 = vunpack.c.0.s8 %v99
  %v101 = vlaneseq
  %v102 = vshrl.u32 %v101, 7
  %v103 = vsub.s32 %v100, %v102
  %v104 = vrot.slane %v97, %v103
  %v106 = vunpack.c.l.s4 1966171168
  %v107 = vunpack.c.0.s8 %v106
  %v108 = vlaneseq
  %v109 = vshrl.u32 %v108, 7
  %v110 = vsub.s32 %v107, %v109
  %v111 = vrot.slane %v104, %v110
  %v113 = vadd.f32 %v52, %v111
  %v114 = vlaneseq
  %vm115 = vcmp.ge.s32.totalorder %v114, 0
  %vm116 = vcmp.lt.s32.totalorder %v114, 256
  %vm117 = vmand %vm115, %vm116
  %118 = vst.msk [vmem:[%s1] sm:$0x3] %vm117, %v113
  %v119 = vld [vmem:[%s2] sm:$0x3]
  %v120 = vmul.f32 %v20, %v20
  %v121 = vmul.f32 %v21, %v21
  %v122 = vmul.f32 %v22, %v22
  %v123 = vmul.f32 %v23, %v23
  %v124 = vmul.f32 %v24, %v24
  %v125 = vmul.f32 %v25, %v25
  %v126 = vmul.f32 %v26, %v26
  %v127 = vmul.f32 %v27, %v27
  %v128 = vmul.f32 %v28, %v28
  %v129 = vmul.f32 %v29, %v29
  %v130 = vmul.f32 %v30, %v30
  %v131 = vmul.f32 %v31, %v31
  %v132 = vmul.f32 %v32, %v32
  %v133 = vmul.f32 %v33, %v33
  %v134 = vmul.f32 %v34, %v34
  %v135 = vmul.f32 %v35, %v35
  %v136 = vmul.f32 %v36, %v36
  %v137 = vmul.f32 %v37, %v37
  %v138 = vmul.f32 %v38, %v38
  %v139 = vmul.f32 %v39, %v39
  %v140 = vmul.f32 %v40, %v40
  %v141 = vmul.f32 %v41, %v41
  %v142 = vmul.f32 %v42, %v42
  %v143 = vmul.f32 %v43, %v43
  %v144 = vmul.f32 %v44, %v44
  %v145 = vmul.f32 %v45, %v45
  %v146 = vmul.f32 %v46, %v46
  %v147 = vmul.f32 %v47, %v47
  %v148 = vmul.f32 %v48, %v48
  %v149 = vmul.f32 %v49, %v49
  %v150 = vmul.f32 %v50, %v50
  %v151 = vmul.f32 %v51, %v51
  %v152 = vadd.f32 %v120, %v122
  %v153 = vadd.f32 %v152, %v124
  %v154 = vadd.f32 %v153, %v126
  %v155 = vadd.f32 %v154, %v128
  %v156 = vadd.f32 %v155, %v130
  %v157 = vadd.f32 %v156, %v132
  %v158 = vadd.f32 %v157, %v134
  %v159 = vadd.f32 %v158, %v136
  %v160 = vadd.f32 %v159, %v138
  %v161 = vadd.f32 %v160, %v140
  %v162 = vadd.f32 %v161, %v142
  %v163 = vadd.f32 %v162, %v144
  %v164 = vadd.f32 %v163, %v146
  %v165 = vadd.f32 %v164, %v148
  %v166 = vadd.f32 %v165, %v150
  %v167 = vrot.slane %v166, 4
  %v168 = vadd.f32 %v166, %v167
  %v169 = vrot.slane %v168, 2
  %v170 = vadd.f32 %v168, %v169
  %v171 = vrot.slane %v170, 1
  %v172 = vadd.f32 %v170, %v171
  %v173 = vadd.f32 %v121, %v123
  %v174 = vadd.f32 %v173, %v125
  %v175 = vadd.f32 %v174, %v127
  %v176 = vadd.f32 %v175, %v129
  %v177 = vadd.f32 %v176, %v131
  %v178 = vadd.f32 %v177, %v133
  %v179 = vadd.f32 %v178, %v135
  %v180 = vadd.f32 %v179, %v137
  %v181 = vadd.f32 %v180, %v139
  %v182 = vadd.f32 %v181, %v141
  %v183 = vadd.f32 %v182, %v143
  %v184 = vadd.f32 %v183, %v145
  %v185 = vadd.f32 %v184, %v147
  %v186 = vadd.f32 %v185, %v149
  %v187 = vadd.f32 %v186, %v151
  %v188 = vrot.slane %v187, 4
  %v189 = vadd.f32 %v187, %v188
  %v190 = vrot.slane %v189, 2
  %v191 = vadd.f32 %v189, %v190
  %v192 = vrot.slane %v191, 1
  %v193 = vadd.f32 %v191, %v192
  %v196 = vcombine.low %v172, %v193
  %v198 = vunpack.c.l.s4 1966171168
  %v199 = vunpack.c.0.s8 %v198
  %v200 = vlaneseq
  %v201 = vshrl.u32 %v200, 7
  %v202 = vsub.s32 %v199, %v201
  %v203 = vrot.slane %v196, %v202
  %v205 = vunpack.c.l.s4 1966171168
  %v206 = vunpack.c.0.s8 %v205
  %v207 = vlaneseq
  %v208 = vshrl.u32 %v207, 7
  %v209 = vsub.s32 %v206, %v208
  %v210 = vrot.slane %v203, %v209
  %v212 = vadd.f32 %v119, %v210
  %213 = vst.msk [vmem:[%s2] sm:$0x3] %vm117, %v212
  // Predicated region
  $region10: #{generator_forward.29} parent=0 // pred_check
    _
  $region11: #{generator_forward.29} parent=0 // pred_check_branch
    %215 = sbr.rel (0) target = $region13
  $region12: #{generator_forward.29} parent=0 // pred_region
    _
  $region13: #{generator_forward.29} parent=0 // pred_fallthru
    _
  // Predicated region
  $region14: #{generator_forward.29} parent=0 // pred_check
    _
  $region15: #{generator_forward.29} parent=0 // pred_check_branch
    %217 = sbr.rel (0) target = $region17
  $region16: #{generator_forward.29} parent=0 // pred_region
    _
  $region17: #{generator_forward.29} parent=0 // pred_fallthru
    _
  // Predicated region
  $region18: #{generator_forward.29} parent=0 // pred_check
    _
  $region19: #{generator_forward.29} parent=0 // pred_check_branch
    %219 = sbr.rel (0) target = $region21
  $region20: #{generator_forward.29} parent=0 // pred_region
    _
  $region21: #{generator_forward.29} parent=0 // pred_fallthru
    _
  // Predicated region
  $region22: #{generator_forward.29} parent=0 // pred_check
    _
  $region23: #{generator_forward.29} parent=0 // pred_check_branch
    %221 = sbr.rel (0) target = $region25
  $region24: #{generator_forward.29} parent=0 // pred_region
    _
  $region25: #{generator_forward.29} parent=0 // pred_fallthru
    _

// kernel: generator_forward.30
$region0: #{generator_forward.30}
  #allocation0 [shape = 'u32[]', space=smem, size = 0x4, offset = 0x4, fixed_abs, tag = 'smem constant byte address 0x4 - core index']
  #allocation1 [shape = 'u32[144,128]{1,0:T(1,128)}', space=vmem, size = 0x12000, scoped, tag = 'internal scratch']
  %s0 = inlined_call_operand.vmem [shape: f32[128,256], index: 0, kind: input, shape index: {}]
  %s1 = inlined_call_operand.vmem [shape: f32[1,256], index: 1, kind: input, shape index: {}]
  %s2 = inlined_call_operand.vmem [shape: f32[1,256], index: 2, kind: input, shape index: {}]
  %s3 = inlined_call_operand.vmem [shape: f32[128,256], index: 3, kind: output, shape index: {}]
  %s4 = sld [smem:[#allocation0]]
  $region22: #{generator_forward.30} parent=0
    _
  %s6 = ssub.s32 1, %s4
  %s7 = scalar_select 0, %s6, %s4
  // Predicated region
  $region2: #{generator_forward.30} parent=0 // pred_check
    _
  $region3: #{generator_forward.30} parent=0 // pred_check_branch
    %9 = sbr.rel (0) target = $region5
  $region4: #{generator_forward.30} parent=0 // pred_region
    _
  $region5: #{generator_forward.30} parent=0 // pred_fallthru
    _
  // Predicated region
  $region6: #{generator_forward.30} parent=0 // pred_check
    _
  $region7: #{generator_forward.30} parent=0 // pred_check_branch
    %11 = sbr.rel (0) target = $region9
  $region8: #{generator_forward.30} parent=0 // pred_region
    _
  $region9: #{generator_forward.30} parent=0 // pred_fallthru
    _
  // Predicated region
  $region10: #{generator_forward.30} parent=0 // pred_check
    _
  $region11: #{generator_forward.30} parent=0 // pred_check_branch
    %13 = sbr.rel (0) target = $region13
  $region12: #{generator_forward.30} parent=0 // pred_region
    _
  $region13: #{generator_forward.30} parent=0 // pred_fallthru
    _
  %v14 = vld [vmem:[%s0] sm:$0xff]
  %v15 = vld [vmem:[%s0 + $0x8] sm:$0xff]
  %v16 = vld [vmem:[%s0 + $0x10] sm:$0xff]
  %v17 = vld [vmem:[%s0 + $0x18] sm:$0xff]
  %v18 = vld [vmem:[%s0 + $0x20] sm:$0xff]
  %v19 = vld [vmem:[%s0 + $0x28] sm:$0xff]
  %v20 = vld [vmem:[%s0 + $0x30] sm:$0xff]
  %v21 = vld [vmem:[%s0 + $0x38] sm:$0xff]
  %v22 = vld [vmem:[%s0 + $0x40] sm:$0xff]
  %v23 = vld [vmem:[%s0 + $0x48] sm:$0xff]
  %v24 = vld [vmem:[%s0 + $0x50] sm:$0xff]
  %v25 = vld [vmem:[%s0 + $0x58] sm:$0xff]
  %v26 = vld [vmem:[%s0 + $0x60] sm:$0xff]
  %v27 = vld [vmem:[%s0 + $0x68] sm:$0xff]
  %v28 = vld [vmem:[%s0 + $0x70] sm:$0xff]
  %v29 = vld [vmem:[%s0 + $0x78] sm:$0xff]
  %v30 = vld [vmem:[%s0 + $0x80] sm:$0xff]
  %v31 = vld [vmem:[%s0 + $0x88] sm:$0xff]
  %v32 = vld [vmem:[%s0 + $0x90] sm:$0xff]
  %v33 = vld [vmem:[%s0 + $0x98] sm:$0xff]
  %v34 = vld [vmem:[%s0 + $0xa0] sm:$0xff]
  %v35 = vld [vmem:[%s0 + $0xa8] sm:$0xff]
  %v36 = vld [vmem:[%s0 + $0xb0] sm:$0xff]
  %v37 = vld [vmem:[%s0 + $0xb8] sm:$0xff]
  %v38 = vld [vmem:[%s0 + $0xc0] sm:$0xff]
  %v39 = vld [vmem:[%s0 + $0xc8] sm:$0xff]
  %v40 = vld [vmem:[%s0 + $0xd0] sm:$0xff]
  %v41 = vld [vmem:[%s0 + $0xd8] sm:$0xff]
  %v42 = vld [vmem:[%s0 + $0xe0] sm:$0xff]
  %v43 = vld [vmem:[%s0 + $0xe8] sm:$0xff]
  %v44 = vld [vmem:[%s0 + $0xf0] sm:$0xff]
  %v45 = vld [vmem:[%s0 + $0xf8] sm:$0xff]
  %v46 = vld [vmem:[%s1] sm:$0x3]
  %v48 = vlaneseq
  %v49 = vshrl.u32 %v48, 7
  %v50 = vsub.s32 0, %v49
  %v51 = vrot.slane %v46, %v50
  %v52 = vlaneseq
  %v53 = vshrl.u32 %v52, 7
  %v54 = vsub.s32 1, %v53
  %v55 = vrot.slane %v46, %v54
  %v58 = vmul.f32 %v14, %v51
  %v59 = vmul.f32 %v15, %v55
  %v60 = vmul.f32 %v16, %v51
  %v61 = vmul.f32 %v17, %v55
  %v62 = vmul.f32 %v18, %v51
  %v63 = vmul.f32 %v19, %v55
  %v64 = vmul.f32 %v20, %v51
  %v65 = vmul.f32 %v21, %v55
  %v66 = vmul.f32 %v22, %v51
  %v67 = vmul.f32 %v23, %v55
  %v68 = vmul.f32 %v24, %v51
  %v69 = vmul.f32 %v25, %v55
  %v70 = vmul.f32 %v26, %v51
  %v71 = vmul.f32 %v27, %v55
  %v72 = vmul.f32 %v28, %v51
  %v73 = vmul.f32 %v29, %v55
  %v74 = vmul.f32 %v30, %v51
  %v75 = vmul.f32 %v31, %v55
  %v76 = vmul.f32 %v32, %v51
  %v77 = vmul.f32 %v33, %v55
  %v78 = vmul.f32 %v34, %v51
  %v79 = vmul.f32 %v35, %v55
  %v80 = vmul.f32 %v36, %v51
  %v81 = vmul.f32 %v37, %v55
  %v82 = vmul.f32 %v38, %v51
  %v83 = vmul.f32 %v39, %v55
  %v84 = vmul.f32 %v40, %v51
  %v85 = vmul.f32 %v41, %v55
  %v86 = vmul.f32 %v42, %v51
  %v87 = vmul.f32 %v43, %v55
  %v88 = vmul.f32 %v44, %v51
  %v89 = vmul.f32 %v45, %v55
  %v90 = vld [vmem:[%s2] sm:$0x3]
  %v92 = vlaneseq
  %v93 = vshrl.u32 %v92, 7
  %v94 = vsub.s32 0, %v93
  %v95 = vrot.slane %v90, %v94
  %v96 = vlaneseq
  %v97 = vshrl.u32 %v96, 7
  %v98 = vsub.s32 1, %v97
  %v99 = vrot.slane %v90, %v98
  %v102 = vadd.f32 %v58, %v95
  %v103 = vadd.f32 %v59, %v99
  %v104 = vadd.f32 %v60, %v95
  %v105 = vadd.f32 %v61, %v99
  %v106 = vadd.f32 %v62, %v95
  %v107 = vadd.f32 %v63, %v99
  %v108 = vadd.f32 %v64, %v95
  %v109 = vadd.f32 %v65, %v99
  %v110 = vadd.f32 %v66, %v95
  %v111 = vadd.f32 %v67, %v99
  %v112 = vadd.f32 %v68, %v95
  %v113 = vadd.f32 %v69, %v99
  %v114 = vadd.f32 %v70, %v95
  %v115 = vadd.f32 %v71, %v99
  %v116 = vadd.f32 %v72, %v95
  %v117 = vadd.f32 %v73, %v99
  %v118 = vadd.f32 %v74, %v95
  %v119 = vadd.f32 %v75, %v99
  %v120 = vadd.f32 %v76, %v95
  %v121 = vadd.f32 %v77, %v99
  %v122 = vadd.f32 %v78, %v95
  %v123 = vadd.f32 %v79, %v99
  %v124 = vadd.f32 %v80, %v95
  %v125 = vadd.f32 %v81, %v99
  %v126 = vadd.f32 %v82, %v95
  %v127 = vadd.f32 %v83, %v99
  %v128 = vadd.f32 %v84, %v95
  %v129 = vadd.f32 %v85, %v99
  %v130 = vadd.f32 %v86, %v95
  %v131 = vadd.f32 %v87, %v99
  %v132 = vadd.f32 %v88, %v95
  %v133 = vadd.f32 %v89, %v99
  %v134 = vmax.f32 %v102, 0.0
  %v135 = vmax.f32 %v103, 0.0
  %v136 = vmax.f32 %v104, 0.0
  %v137 = vmax.f32 %v105, 0.0
  %v138 = vmax.f32 %v106, 0.0
  %v139 = vmax.f32 %v107, 0.0
  %v140 = vmax.f32 %v108, 0.0
  %v141 = vmax.f32 %v109, 0.0
  %v142 = vmax.f32 %v110, 0.0
  %v143 = vmax.f32 %v111, 0.0
  %v144 = vmax.f32 %v112, 0.0
  %v145 = vmax.f32 %v113, 0.0
  %v146 = vmax.f32 %v114, 0.0
  %v147 = vmax.f32 %v115, 0.0
  %v148 = vmax.f32 %v116, 0.0
  %v149 = vmax.f32 %v117, 0.0
  %v150 = vmax.f32 %v118, 0.0
  %v151 = vmax.f32 %v119, 0.0
  %v152 = vmax.f32 %v120, 0.0
  %v153 = vmax.f32 %v121, 0.0
  %v154 = vmax.f32 %v122, 0.0
  %v155 = vmax.f32 %v123, 0.0
  %v156 = vmax.f32 %v124, 0.0
  %v157 = vmax.f32 %v125, 0.0
  %v158 = vmax.f32 %v126, 0.0
  %v159 = vmax.f32 %v127, 0.0
  %v160 = vmax.f32 %v128, 0.0
  %v161 = vmax.f32 %v129, 0.0
  %v162 = vmax.f32 %v130, 0.0
  %v163 = vmax.f32 %v131, 0.0
  %v164 = vmax.f32 %v132, 0.0
  %v165 = vmax.f32 %v133, 0.0
  %166 = vst [vmem:[%s3] sm:$0xff] %v134
  %167 = vst [vmem:[%s3 + $0x8] sm:$0xff] %v135
  %168 = vst [vmem:[%s3 + $0x10] sm:$0xff] %v136
  %169 = vst [vmem:[%s3 + $0x18] sm:$0xff] %v137
  %170 = vst [vmem:[%s3 + $0x20] sm:$0xff] %v138
  %171 = vst [vmem:[%s3 + $0x28] sm:$0xff] %v139
  %172 = vst [vmem:[%s3 + $0x30] sm:$0xff] %v140
  %173 = vst [vmem:[%s3 + $0x38] sm:$0xff] %v141
  %174 = vst [vmem:[%s3 + $0x40] sm:$0xff] %v142
  %175 = vst [vmem:[%s3 + $0x48] sm:$0xff] %v143
  %176 = vst [vmem:[%s3 + $0x50] sm:$0xff] %v144
  %177 = vst [vmem:[%s3 + $0x58] sm:$0xff] %v145
  %178 = vst [vmem:[%s3 + $0x60] sm:$0xff] %v146
  %179 = vst [vmem:[%s3 + $0x68] sm:$0xff] %v147
  %180 = vst [vmem:[%s3 + $0x70] sm:$0xff] %v148
  %181 = vst [vmem:[%s3 + $0x78] sm:$0xff] %v149
  %182 = vst [vmem:[%s3 + $0x80] sm:$0xff] %v150
  %183 = vst [vmem:[%s3 + $0x88] sm:$0xff] %v151
  %184 = vst [vmem:[%s3 + $0x90] sm:$0xff] %v152
  %185 = vst [vmem:[%s3 + $0x98] sm:$0xff] %v153
  %186 = vst [vmem:[%s3 + $0xa0] sm:$0xff] %v154
  %187 = vst [vmem:[%s3 + $0xa8] sm:$0xff] %v155
  %188 = vst [vmem:[%s3 + $0xb0] sm:$0xff] %v156
  %189 = vst [vmem:[%s3 + $0xb8] sm:$0xff] %v157
  %190 = vst [vmem:[%s3 + $0xc0] sm:$0xff] %v158
  %191 = vst [vmem:[%s3 + $0xc8] sm:$0xff] %v159
  %192 = vst [vmem:[%s3 + $0xd0] sm:$0xff] %v160
  %193 = vst [vmem:[%s3 + $0xd8] sm:$0xff] %v161
  %194 = vst [vmem:[%s3 + $0xe0] sm:$0xff] %v162
  %195 = vst [vmem:[%s3 + $0xe8] sm:$0xff] %v163
  %196 = vst [vmem:[%s3 + $0xf0] sm:$0xff] %v164
  %197 = vst [vmem:[%s3 + $0xf8] sm:$0xff] %v165
  // Predicated region
  $region14: #{generator_forward.30} parent=0 // pred_check
    _
  $region15: #{generator_forward.30} parent=0 // pred_check_branch
    %199 = sbr.rel (0) target = $region17
  $region16: #{generator_forward.30} parent=0 // pred_region
    _
  $region17: #{generator_forward.30} parent=0 // pred_fallthru
    _
  // Predicated region
  $region18: #{generator_forward.30} parent=0 // pred_check
    _
  $region19: #{generator_forward.30} parent=0 // pred_check_branch
    %201 = sbr.rel (0) target = $region21
  $region20: #{generator_forward.30} parent=0 // pred_region
    _
  $region21: #{generator_forward.30} parent=0 // pred_fallthru
    _

// kernel: generator_forward.31
$region0: #{generator_forward.31}
  #allocation0 [shape = 'u32[]', space=smem, size = 0x4, offset = 0x4, fixed_abs, tag = 'smem constant byte address 0x4 - core index']
  #allocation1 [shape = 'u32[144,128]{1,0:T(1,128)}', space=vmem, size = 0x12000, scoped, tag = 'internal scratch']
  %s0 = inlined_call_operand.vmem [shape: f32[8568,128], index: 0, kind: input, shape index: {}]
  %s1 = inlined_call_operand.vmem [shape: f32[128,128], index: 1, kind: input, shape index: {}]
  %s2 = inlined_call_operand.vmem [shape: f32[8568,128], index: 2, kind: output, shape index: {}]
  %s3 = sld [smem:[#allocation0]]
  $region41: #{generator_forward.31} parent=0
    _
  %s5 = ssub.s32 1, %s3
  %s6 = scalar_select 0, %s5, %s3
  loop: start=0, step=1, limit=19
  $region2: #{generator_forward.31} parent=0 // loop_pre_header
    _
  $region3: #{generator_forward.31} parent=0 // loop_header
    %s8 = sphi 0, %s12
    %p9 = scmp.ge.s32.totalorder %s8, 19
    %s15 = sphi 0, %s27
    %s16 = sphi 0, %s23
    %s17 = sphi 0, %s15
    %s18 = sphi 0, %s16
    %s19 = sphi 0, %s17
    %s20 = sphi 0, %s18
    %s30 = sphi 0, %s32
    %s33 = sphi 0, %s30
    %s34 = sphi 0, %s33
    %s50 = sphi 0, %s34
    %s56 = sphi 0, %s58
    %s59 = sphi 0, %s56
    %s60 = sphi 0, %s59
    %s76 = sphi 0, %s60
    %s84 = sphi 0, %s86
    %s87 = sphi 0, %s84
    %s88 = sphi 0, %s87
    %s104 = sphi 0, %s88
  $region4: #{generator_forward.31} parent=0 // loop_header_branch
    %11 = sbr.rel (%p9) target = $region8
  $region5: #{generator_forward.31} parent=0 // loop_body
    %s13 = ssub.s32 %s8, 1
    %s14 = ssub.s32 %s8, 2
    %s21 = sadd.s32 1, %s16
    %p22 = scmp.ge.s32.totalorder %s21, 1
    %s23 = scalar_select %p22, 0, %s21
    %s24 = sadd.s32 1, %s15
    %s25 = scalar_select %p22, %s24, %s15
    %p26 = scmp.ge.s32.totalorder %s25, 17
    %s27 = scalar_select %p26, 0, %s25
    %s28 = ssub.s32 %s15, %s27
    %p29 = scmp.eq.s32.totalorder %s28, 0
    %s31 = sadd.s32 %s30, 1
    %s32 = scalar_select %p29, %s30, %s31
    %p35 = pneg %p29
    %p36 = scmp.eq.s32.totalorder %s8, 16
    %p37 = por %p35, %p36
    %p38 = scmp.ne.s32.totalorder %s30, %s33
    %p39 = scmp.eq.s32.totalorder %s8, 0
    %p40 = por %p38, %p39
    %p41 = scmp.ne.s32.totalorder %s30, %s33
    %p42 = scmp.eq.s32.totalorder %s13, 16
    %p43 = por %p41, %p42
    %p44 = scmp.ne.s32.totalorder %s33, %s34
    %p45 = scmp.eq.s32.totalorder %s13, 0
    %p46 = por %p44, %p45
    %p47 = scmp.ne.s32.totalorder %s33, %s34
    %p48 = scmp.eq.s32.totalorder %s14, 16
    %p49 = por %p47, %p48
    %p51 = scmp.ne.s32.totalorder %s34, %s50
    %p52 = scmp.eq.s32.totalorder %s14, 0
    %p53 = por %p51, %p52
    %s54 = ssub.s32 %s16, %s23
    %p55 = scmp.eq.s32.totalorder %s54, 0
    %s57 = sadd.s32 %s56, 1
    %s58 = scalar_select %p55, %s56, %s57
    %p61 = pneg %p55
    %p62 = scmp.eq.s32.totalorder %s8, 16
    %p63 = por %p61, %p62
    %p64 = scmp.ne.s32.totalorder %s56, %s59
    %p65 = scmp.eq.s32.totalorder %s8, 0
    %p66 = por %p64, %p65
    %p67 = scmp.ne.s32.totalorder %s56, %s59
    %p68 = scmp.eq.s32.totalorder %s13, 16
    %p69 = por %p67, %p68
    %p70 = scmp.ne.s32.totalorder %s59, %s60
    %p71 = scmp.eq.s32.totalorder %s13, 0
    %p72 = por %p70, %p71
    %p73 = scmp.ne.s32.totalorder %s59, %s60
    %p74 = scmp.eq.s32.totalorder %s14, 16
    %p75 = por %p73, %p74
    %p77 = scmp.ne.s32.totalorder %s60, %s76
    %p78 = scmp.eq.s32.totalorder %s14, 0
    %p79 = por %p77, %p78
    %s80 = ssub.s32 %s15, %s27
    %s81 = ssub.s32 %s16, %s23
    %s82 = sor.u32 %s80, %s81
    %p83 = scmp.eq.s32.totalorder %s82, 0
    %s85 = sadd.s32 %s84, 1
    %s86 = scalar_select %p83, %s84, %s85
    %p89 = pneg %p83
    %p90 = scmp.eq.s32.totalorder %s8, 16
    %p91 = por %p89, %p90
    %p92 = scmp.ne.s32.totalorder %s84, %s87
    %p93 = scmp.eq.s32.totalorder %s8, 0
    %p94 = por %p92, %p93
    %p95 = scmp.ne.s32.totalorder %s84, %s87
    %p96 = scmp.eq.s32.totalorder %s13, 16
    %p97 = por %p95, %p96
    %p98 = scmp.ne.s32.totalorder %s87, %s88
    %p99 = scmp.eq.s32.totalorder %s13, 0
    %p100 = por %p98, %p99
    %p101 = scmp.ne.s32.totalorder %s87, %s88
    %p102 = scmp.eq.s32.totalorder %s14, 16
    %p103 = por %p101, %p102
    %p105 = scmp.ne.s32.totalorder %s88, %s104
    %p106 = scmp.eq.s32.totalorder %s14, 0
    %p107 = por %p105, %p106
    %p108 = scmp.le.s32.totalorder 1, %s8
    %p109 = scmp.lt.s32.totalorder %s8, 18
    %p110 = pnand %p108, %p109
    %p111 = pneg %p110
    // Predicated region
    $region9: #{generator_forward.31} parent=5 // pred_check
      _
    $region10: #{generator_forward.31} parent=5 // pred_check_branch
      %113 = sbr.rel (%p110) target = $region12
    $region11: #{generator_forward.31} parent=5 // pred_region
      %s114 = ssub.s32 %s8, 1
      // Predicated region
      $region13: #{generator_forward.31} parent=11 // pred_check
        %p115 = pneg %p72
      $region14: #{generator_forward.31} parent=11 // pred_check_branch
        %117 = sbr.rel (%p115) target = $region16
      $region15: #{generator_forward.31} parent=11 // pred_region
        %p118 = scmp.lt.s32.totalorder %s18, 0
        %s119 = scalar_select %p118, %s18, 0
        %s120 = smul.addr %s119, 8
        %s121 = scalar_lea.vmem %s1, %s120
      $region16: #{generator_forward.31} parent=11 // pred_fallthru
        _
    $region12: #{generator_forward.31} parent=5 // pred_fallthru
      _
    %p122 = scmp.lt.s32.totalorder %s8, 17
    // Predicated region
    $region17: #{generator_forward.31} parent=5 // pred_check
      %p123 = pneg %p122
    $region18: #{generator_forward.31} parent=5 // pred_check_branch
      %125 = sbr.rel (%p123) target = $region20
    $region19: #{generator_forward.31} parent=5 // pred_region
      // Predicated region
      $region21: #{generator_forward.31} parent=19 // pred_check
        %p126 = pneg %p40
      $region22: #{generator_forward.31} parent=19 // pred_check_branch
        %128 = sbr.rel (%p126) target = $region24
      $region23: #{generator_forward.31} parent=19 // pred_region
        %s129 = smul.u32 63, %s15
        %p130 = scmp.lt.s32.totalorder %s129, 1070
        %s131 = scalar_select %p130, %s129, 1070
        %s132 = smul.addr %s131, 8
        %s133 = scalar_lea.vmem %s0, %s132
        %s134 = smul.u32 63, %s15
      $region24: #{generator_forward.31} parent=19 // pred_fallthru
        _
    $region20: #{generator_forward.31} parent=5 // pred_fallthru
      _
    %p135 = scmp.le.s32.totalorder 1, %s8
    %p136 = scmp.lt.s32.totalorder %s8, 18
    %p137 = pnand %p135, %p136
    %p138 = pneg %p137
    // Predicated region
    $region25: #{generator_forward.31} parent=5 // pred_check
      _
    $region26: #{generator_forward.31} parent=5 // pred_check_branch
      %140 = sbr.rel (%p137) target = $region28
    $region27: #{generator_forward.31} parent=5 // pred_region
      %s141 = ssub.s32 %s8, 1
      %s142 = smul.u32 63, %s17
      %p143 = scmp.lt.s32.totalorder %s142, 1070
      %s144 = scalar_select %p143, %s142, 1070
      %s145 = smul.addr %s144, 8
      %s146 = scalar_lea.vmem %s0, %s145
      %p147 = pneg %p46
      %p148 = pneg %p43
      %p149 = scmp.lt.s32.totalorder %s18, 0
      %s150 = scalar_select %p149, %s18, 0
      %s151 = smul.addr %s150, 8
      %s152 = scalar_lea.vmem %s1, %s151
      %p153 = pneg %p72
      %p154 = pneg %p69
      %p155 = pneg %p100
      %p156 = pneg %p97
      %s157 = smul.u32 63, %s17
      %p158 = scmp.lt.s32.totalorder %s157, 1070
      %s159 = scalar_select %p158, %s157, 1070
      %p160 = scmp.lt.s32.totalorder %s18, 0
      %s161 = scalar_select %p160, %s18, 0
      %s162 = sadd.s32 %s161, %s159
      %s163 = smul.addr %s162, 8
      %s164 = scalar_lea.vmem %s2, %s163
      %s165 = smul.u32 63, %s17
      %p166 = scmp.lt.s32.totalorder %s165, 1070
      %s167 = scalar_select %p166, %s165, 1070
      %s168 = smul.addr %s167, 8
      %s169 = scalar_lea.vmem %s0, %s168
      %s170 = smul.u32 63, %s17
      %p171 = scmp.lt.s32.totalorder %s18, 0
      %s172 = scalar_select %p171, %s18, 0
      %s173 = smul.addr %s172, 8
      %s174 = scalar_lea.vmem %s1, %s173
      %s175 = smul.u32 63, %s17
      %p176 = scmp.lt.s32.totalorder %s175, 1070
      %s177 = scalar_select %p176, %s175, 1070
      %p178 = scmp.lt.s32.totalorder %s18, 0
      %s179 = scalar_select %p178, %s18, 0
      %s180 = sadd.s32 %s179, %s177
      %s181 = smul.addr %s180, 8
      %s182 = scalar_lea.vmem %s2, %s181
      %s183 = smul.u32 63, %s17
      %v184 = vld [vmem:[%s169] sm:$0xff]
      %v185 = vld [vmem:[%s169 + $0x8] sm:$0xff]
      %v186 = vld [vmem:[%s169 + $0x10] sm:$0xff]
      %v187 = vld [vmem:[%s169 + $0x18] sm:$0xff]
      %v188 = vld [vmem:[%s169 + $0x20] sm:$0xff]
      %v189 = vld [vmem:[%s169 + $0x28] sm:$0xff]
      %v190 = vld [vmem:[%s169 + $0x30] sm:$0xff]
      %v191 = vld [vmem:[%s169 + $0x38] sm:$0xff]
      %v192 = vld [vmem:[%s169 + $0x40] sm:$0xff]
      %v193 = vld [vmem:[%s169 + $0x48] sm:$0xff]
      %v194 = vld [vmem:[%s169 + $0x50] sm:$0xff]
      %v195 = vld [vmem:[%s169 + $0x58] sm:$0xff]
      %v196 = vld [vmem:[%s169 + $0x60] sm:$0xff]
      %v197 = vld [vmem:[%s169 + $0x68] sm:$0xff]
      %v198 = vld [vmem:[%s169 + $0x70] sm:$0xff]
      %v199 = vld [vmem:[%s169 + $0x78] sm:$0xff]
      %v200 = vld [vmem:[%s169 + $0x80] sm:$0xff]
      %v201 = vld [vmem:[%s169 + $0x88] sm:$0xff]
      %v202 = vld [vmem:[%s169 + $0x90] sm:$0xff]
      %v203 = vld [vmem:[%s169 + $0x98] sm:$0xff]
      %v204 = vld [vmem:[%s169 + $0xa0] sm:$0xff]
      %v205 = vld [vmem:[%s169 + $0xa8] sm:$0xff]
      %v206 = vld [vmem:[%s169 + $0xb0] sm:$0xff]
      %v207 = vld [vmem:[%s169 + $0xb8] sm:$0xff]
      %v208 = vld [vmem:[%s169 + $0xc0] sm:$0xff]
      %v209 = vld [vmem:[%s169 + $0xc8] sm:$0xff]
      %v210 = vld [vmem:[%s169 + $0xd0] sm:$0xff]
      %v211 = vld [vmem:[%s169 + $0xd8] sm:$0xff]
      %v212 = vld [vmem:[%s169 + $0xe0] sm:$0xff]
      %v213 = vld [vmem:[%s169 + $0xe8] sm:$0xff]
      %v214 = vld [vmem:[%s169 + $0xf0] sm:$0xff]
      %v215 = vld [vmem:[%s169 + $0xf8] sm:$0xff]
      %v216 = vld [vmem:[%s169 + $0x100] sm:$0xff]
      %v217 = vld [vmem:[%s169 + $0x108] sm:$0xff]
      %v218 = vld [vmem:[%s169 + $0x110] sm:$0xff]
      %v219 = vld [vmem:[%s169 + $0x118] sm:$0xff]
      %v220 = vld [vmem:[%s169 + $0x120] sm:$0xff]
      %v221 = vld [vmem:[%s169 + $0x128] sm:$0xff]
      %v222 = vld [vmem:[%s169 + $0x130] sm:$0xff]
      %v223 = vld [vmem:[%s169 + $0x138] sm:$0xff]
      %v224 = vld [vmem:[%s169 + $0x140] sm:$0xff]
      %v225 = vld [vmem:[%s169 + $0x148] sm:$0xff]
      %v226 = vld [vmem:[%s169 + $0x150] sm:$0xff]
      %v227 = vld [vmem:[%s169 + $0x158] sm:$0xff]
      %v228 = vld [vmem:[%s169 + $0x160] sm:$0xff]
      %v229 = vld [vmem:[%s169 + $0x168] sm:$0xff]
      %v230 = vld [vmem:[%s169 + $0x170] sm:$0xff]
      %v231 = vld [vmem:[%s169 + $0x178] sm:$0xff]
      %v232 = vld [vmem:[%s169 + $0x180] sm:$0xff]
      %v233 = vld [vmem:[%s169 + $0x188] sm:$0xff]
      %v234 = vld [vmem:[%s169 + $0x190] sm:$0xff]
      %v235 = vld [vmem:[%s169 + $0x198] sm:$0xff]
      %v236 = vld [vmem:[%s169 + $0x1a0] sm:$0xff]
      %v237 = vld [vmem:[%s169 + $0x1a8] sm:$0xff]
      %v238 = vld [vmem:[%s169 + $0x1b0] sm:$0xff]
      %v239 = vld [vmem:[%s169 + $0x1b8] sm:$0xff]
      %v240 = vld [vmem:[%s169 + $0x1c0] sm:$0xff]
      %v241 = vld [vmem:[%s169 + $0x1c8] sm:$0xff]
      %v242 = vld [vmem:[%s169 + $0x1d0] sm:$0xff]
      %v243 = vld [vmem:[%s169 + $0x1d8] sm:$0xff]
      %v244 = vld [vmem:[%s169 + $0x1e0] sm:$0xff]
      %v245 = vld [vmem:[%s169 + $0x1e8] sm:$0xff]
      %v246 = vld [vmem:[%s169 + $0x1f0] sm:$0xff]
      %v247 = vld [vmem:[%s174] sm:$0xff]
      %v248 = vld [vmem:[%s174 + $0x8] sm:$0xff]
      %v249 = vld [vmem:[%s174 + $0x10] sm:$0xff]
      %v250 = vld [vmem:[%s174 + $0x18] sm:$0xff]
      %v251 = vld [vmem:[%s174 + $0x20] sm:$0xff]
      %v252 = vld [vmem:[%s174 + $0x28] sm:$0xff]
      %v253 = vld [vmem:[%s174 + $0x30] sm:$0xff]
      %v254 = vld [vmem:[%s174 + $0x38] sm:$0xff]
      %v255 = vld [vmem:[%s174 + $0x40] sm:$0xff]
      %v256 = vld [vmem:[%s174 + $0x48] sm:$0xff]
      %v257 = vld [vmem:[%s174 + $0x50] sm:$0xff]
      %v258 = vld [vmem:[%s174 + $0x58] sm:$0xff]
      %v259 = vld [vmem:[%s174 + $0x60] sm:$0xff]
      %v260 = vld [vmem:[%s174 + $0x68] sm:$0xff]
      %v261 = vld [vmem:[%s174 + $0x70] sm:$0xff]
      %v262 = vld [vmem:[%s174 + $0x78] sm:$0xff]
      %263 = vmatprep.subr.mxu0 0.0
      %264 = vmatpush1.msra.mxu0 %v247
      %265 = vmatprep.subr.mxu0 0.0
      %266 = vmatpush1.msra.mxu0 %v248
      %267 = vmatprep.subr.mxu0 0.0
      %268 = vmatpush1.msra.mxu0 %v249
      %269 = vmatprep.subr.mxu0 0.0
      %270 = vmatpush1.msra.mxu0 %v250
      %271 = vmatprep.subr.mxu0 0.0
      %272 = vmatpush1.msra.mxu0 %v251
      %273 = vmatprep.subr.mxu0 0.0
      %274 = vmatpush1.msra.mxu0 %v252
      %275 = vmatprep.subr.mxu0 0.0
      %276 = vmatpush1.msra.mxu0 %v253
      %277 = vmatprep.subr.mxu0 0.0
      %278 = vmatpush1.msra.mxu0 %v254
      %279 = vmatprep.subr.mxu0 0.0
      %280 = vmatpush1.msra.mxu0 %v255
      %281 = vmatprep.subr.mxu0 0.0
      %282 = vmatpush1.msra.mxu0 %v256
      %283 = vmatprep.subr.mxu0 0.0
      %284 = vmatpush1.msra.mxu0 %v257
      %285 = vmatprep.subr.mxu0 0.0
      %286 = vmatpush1.msra.mxu0 %v258
      %287 = vmatprep.subr.mxu0 0.0
      %288 = vmatpush1.msra.mxu0 %v259
      %289 = vmatprep.subr.mxu0 0.0
      %290 = vmatpush1.msra.mxu0 %v260
      %291 = vmatprep.subr.mxu0 0.0
      %292 = vmatpush1.msra.mxu0 %v261
      %293 = vmatprep.subr.mxu0 0.0
      %294 = vmatpush1.msra.mxu0 %v262
      %295 = vmatprep.subr.mxu0 0.0
      %296 = vmatpush1.msra.mxu0 0.0
      %297 = vmatprep.subr.mxu0 0.0
      %298 = vmatpush1.msra.mxu0 0.0
      %299 = vmatprep.subr.mxu0 0.0
      %300 = vmatpush1.msra.mxu0 0.0
      %301 = vmatprep.subr.mxu0 0.0
      %302 = vmatpush1.msra.mxu0 0.0
      %303 = vmatprep.subr.mxu0 0.0
      %304 = vmatpush1.msra.mxu0 0.0
      %305 = vmatprep.subr.mxu0 0.0
      %306 = vmatpush1.msra.mxu0 0.0
      %307 = vmatprep.subr.mxu0 0.0
      %308 = vmatpush1.msra.mxu0 0.0
      %309 = vmatprep.subr.mxu0 0.0
      %310 = vmatpush1.msra.mxu0 0.0
      %311 = vmatprep.subr.mxu0 0.0
      %312 = vmatpush1.msra.mxu0 0.0
      %313 = vmatprep.subr.mxu0 0.0
      %314 = vmatpush1.msra.mxu0 0.0
      %315 = vmatprep.subr.mxu0 0.0
      %316 = vmatpush1.msra.mxu0 0.0
      %317 = vmatprep.subr.mxu0 0.0
      %318 = vmatpush1.msra.mxu0 0.0
      %319 = vmatprep.subr.mxu0 0.0
      %320 = vmatpush1.msra.mxu0 0.0
      %321 = vmatprep.subr.mxu0 0.0
      %322 = vmatpush1.msra.mxu0 0.0
      %323 = vmatprep.subr.mxu0 0.0
      %324 = vmatpush1.msra.mxu0 0.0
      %325 = vmatprep.subr.mxu0 0.0
      %326 = vmatpush1.msra.mxu0 0.0
      %327 = vmatprep.mubr.f32.mxu0 0.0
      %328 = vmatmul.mubr.f32.gmra.mrb[0].mxu0 %v184
      %v329 = vpop.f32.mrb[0].mxu0
      %v330 = vadd.f32 0.0, %v329
      %v331 = vpop.f32.mrb[0].mxu0
      %332 = vmatprep.mubr.f32.mxu0 0.0
      %333 = vmatmul.mubr.f32.gmra.mrb[0].mxu0 %v185
      %v334 = vpop.f32.mrb[0].mxu0
      %v335 = vadd.f32 0.0, %v334
      %v336 = vpop.f32.mrb[0].mxu0
      %337 = vmatprep.mubr.f32.mxu0 0.0
      %338 = vmatmul.mubr.f32.gmra.mrb[0].mxu0 %v186
      %v339 = vpop.f32.mrb[0].mxu0
      %v340 = vadd.f32 0.0, %v339
      %v341 = vpop.f32.mrb[0].mxu0
      %342 = vmatprep.mubr.f32.mxu0 0.0
      %343 = vmatmul.mubr.f32.gmra.mrb[0].mxu0 %v187
      %v344 = vpop.f32.mrb[0].mxu0
      %v345 = vadd.f32 0.0, %v344
      %v346 = vpop.f32.mrb[0].mxu0
      %347 = vmatprep.mubr.f32.mxu0 0.0
      %348 = vmatmul.mubr.f32.gmra.mrb[0].mxu0 %v188
      %v349 = vpop.f32.mrb[0].mxu0
      %v350 = vadd.f32 0.0, %v349
      %v351 = vpop.f32.mrb[0].mxu0
      %352 = vmatprep.mubr.f32.mxu0 0.0
      %353 = vmatmul.mubr.f32.gmra.mrb[0].mxu0 %v189
      %v354 = vpop.f32.mrb[0].mxu0
      %v355 = vadd.f32 0.0, %v354
      %v356 = vpop.f32.mrb[0].mxu0
      %357 = vmatprep.mubr.f32.mxu0 0.0
      %358 = vmatmul.mubr.f32.gmra.mrb[0].mxu0 %v190
      %v359 = vpop.f32.mrb[0].mxu0
      %v360 = vadd.f32 0.0, %v359
      %v361 = vpop.f32.mrb[0].mxu0
      %362 = vmatprep.mubr.f32.mxu0 0.0
      %363 = vmatmul.mubr.f32.gmra.mrb[0].mxu0 %v191
      %v364 = vpop.f32.mrb[0].mxu0
      %v365 = vadd.f32 0.0, %v364
      %v366 = vpop.f32.mrb[0].mxu0
      %367 = vmatprep.mubr.f32.mxu0 0.0
      %368 = vmatmul.mubr.f32.gmra.mrb[0].mxu0 %v192
      %v369 = vpop.f32.mrb[0].mxu0
      %v370 = vadd.f32 0.0, %v369
      %v371 = vpop.f32.mrb[0].mxu0
      %372 = vmatprep.mubr.f32.mxu0 0.0
      %373 = vmatmul.mubr.f32.gmra.mrb[0].mxu0 %v193
      %v374 = vpop.f32.mrb[0].mxu0
      %v375 = vadd.f32 0.0, %v374
      %v376 = vpop.f32.mrb[0].mxu0
      %377 = vmatprep.mubr.f32.mxu0 0.0
      %378 = vmatmul.mubr.f32.gmra.mrb[0].mxu0 %v194
      %v379 = vpop.f32.mrb[0].mxu0
      %v380 = vadd.f32 0.0, %v379
      %v381 = vpop.f32.mrb[0].mxu0
      %382 = vmatprep.mubr.f32.mxu0 0.0
      %383 = vmatmul.mubr.f32.gmra.mrb[0].mxu0 %v195
      %v384 = vpop.f32.mrb[0].mxu0
      %v385 = vadd.f32 0.0, %v384
      %v386 = vpop.f32.mrb[0].mxu0
      %387 = vmatprep.mubr.f32.mxu0 0.0
      %388 = vmatmul.mubr.f32.gmra.mrb[0].mxu0 %v196
      %v389 = vpop.f32.mrb[0].mxu0
      %v390 = vadd.f32 0.0, %v389
      %v391 = vpop.f32.mrb[0].mxu0
      %392 = vmatprep.mubr.f32.mxu0 0.0
      %393 = vmatmul.mubr.f32.gmra.mrb[0].mxu0 %v197
      %v394 = vpop.f32.mrb[0].mxu0
      %v395 = vadd.f32 0.0, %v394
      %v396 = vpop.f32.mrb[0].mxu0
      %397 = vmatprep.mubr.f32.mxu0 0.0
      %398 = vmatmul.mubr.f32.gmra.mrb[0].mxu0 %v198
      %v399 = vpop.f32.mrb[0].mxu0
      %v400 = vadd.f32 0.0, %v399
      %v401 = vpop.f32.mrb[0].mxu0
      %402 = vmatprep.mubr.f32.mxu0 0.0
      %403 = vmatmul.mubr.f32.gmra.mrb[0].mxu0 %v199
      %v404 = vpop.f32.mrb[0].mxu0
      %v405 = vadd.f32 0.0, %v404
      %v406 = vpop.f32.mrb[0].mxu0
      %407 = vmatprep.mubr.f32.mxu0 0.0
      %408 = vmatmul.mubr.f32.gmra.mrb[0].mxu0 %v200
      %v409 = vpop.f32.mrb[0].mxu0
      %v410 = vadd.f32 0.0, %v409
      %v411 = vpop.f32.mrb[0].mxu0
      %412 = vmatprep.mubr.f32.mxu0 0.0
      %413 = vmatmul.mubr.f32.gmra.mrb[0].mxu0 %v201
      %v414 = vpop.f32.mrb[0].mxu0
      %v415 = vadd.f32 0.0, %v414
      %v416 = vpop.f32.mrb[0].mxu0
      %417 = vmatprep.mubr.f32.mxu0 0.0
      %418 = vmatmul.mubr.f32.gmra.mrb[0].mxu0 %v202
      %v419 = vpop.f32.mrb[0].mxu0
      %v420 = vadd.f32 0.0, %v419
      %v421 = vpop.f32.mrb[0].mxu0
      %422 = vmatprep.mubr.f32.mxu0 0.0
      %423 = vmatmul.mubr.f32.gmra.mrb[0].mxu0 %v203
      %v424 = vpop.f32.mrb[0].mxu0
      %v425 = vadd.f32 0.0, %v424
      %v426 = vpop.f32.mrb[0].mxu0
      %427 = vmatprep.mubr.f32.mxu0 0.0
      %428 = vmatmul.mubr.f32.gmra.mrb[0].mxu0 %v204
      %v429 = vpop.f32.mrb[0].mxu0
      %v430 = vadd.f32 0.0, %v429
      %v431 = vpop.f32.mrb[0].mxu0
      %432 = vmatprep.mubr.f32.mxu0 0.0
      %433 = vmatmul.mubr.f32.gmra.mrb[0].mxu0 %v205
      %v434 = vpop.f32.mrb[0].mxu0
      %v435 = vadd.f32 0.0, %v434
      %v436 = vpop.f32.mrb[0].mxu0
      %437 = vmatprep.mubr.f32.mxu0 0.0
      %438 = vmatmul.mubr.f32.gmra.mrb[0].mxu0 %v206
      %v439 = vpop.f32.mrb[0].mxu0
      %v440 = vadd.f32 0.0, %v439
      %v441 = vpop.f32.mrb[0].mxu0
      %442 = vmatprep.mubr.f32.mxu0 0.0
      %443 = vmatmul.mubr.f32.gmra.mrb[0].mxu0 %v207
      %v444 = vpop.f32.mrb[0].mxu0
      %v445 = vadd.f32 0.0, %v444
      %v446 = vpop.f32.mrb[0].mxu0
      %447 = vmatprep.mubr.f32.mxu0 0.0
      %448 = vmatmul.mubr.f32.gmra.mrb[0].mxu0 %v208
      %v449 = vpop.f32.mrb[0].mxu0
      %v450 = vadd.f32 0.0, %v449
      %v451 = vpop.f32.mrb[0].mxu0
      %452 = vmatprep.mubr.f32.mxu0 0.0
      %453 = vmatmul.mubr.f32.gmra.mrb[0].mxu0 %v209
      %v454 = vpop.f32.mrb[0].mxu0
      %v455 = vadd.f32 0.0, %v454
      %v456 = vpop.f32.mrb[0].mxu0
      %457 = vmatprep.mubr.f32.mxu0 0.0
      %458 = vmatmul.mubr.f32.gmra.mrb[0].mxu0 %v210
      %v459 = vpop.f32.mrb[0].mxu0
      %v460 = vadd.f32 0.0, %v459
      %v461 = vpop.f32.mrb[0].mxu0
      %462 = vmatprep.mubr.f32.mxu0 0.0
      %463 = vmatmul.mubr.f32.gmra.mrb[0].mxu0 %v211
      %v464 = vpop.f32.mrb[0].mxu0
      %v465 = vadd.f32 0.0, %v464
      %v466 = vpop.f32.mrb[0].mxu0
      %467 = vmatprep.mubr.f32.mxu0 0.0
      %468 = vmatmul.mubr.f32.gmra.mrb[0].mxu0 %v212
      %v469 = vpop.f32.mrb[0].mxu0
      %v470 = vadd.f32 0.0, %v469
      %v471 = vpop.f32.mrb[0].mxu0
      %472 = vmatprep.mubr.f32.mxu0 0.0
      %473 = vmatmul.mubr.f32.gmra.mrb[0].mxu0 %v213
      %v474 = vpop.f32.mrb[0].mxu0
      %v475 = vadd.f32 0.0, %v474
      %v476 = vpop.f32.mrb[0].mxu0
      %477 = vmatprep.mubr.f32.mxu0 0.0
      %478 = vmatmul.mubr.f32.gmra.mrb[0].mxu0 %v214
      %v479 = vpop.f32.mrb[0].mxu0
      %v480 = vadd.f32 0.0, %v479
      %v481 = vpop.f32.mrb[0].mxu0
      %482 = vmatprep.mubr.f32.mxu0 0.0
      %483 = vmatmul.mubr.f32.gmra.mrb[0].mxu0 %v215
      %v484 = vpop.f32.mrb[0].mxu0
      %v485 = vadd.f32 0.0, %v484
      %v486 = vpop.f32.mrb[0].mxu0
      %487 = vmatprep.mubr.f32.mxu0 0.0
      %488 = vmatmul.mubr.f32.gmra.mrb[0].mxu0 %v216
      %v489 = vpop.f32.mrb[0].mxu0
      %v490 = vadd.f32 0.0, %v489
      %v491 = vpop.f32.mrb[0].mxu0
      %492 = vmatprep.mubr.f32.mxu0 0.0
      %493 = vmatmul.mubr.f32.gmra.mrb[0].mxu0 %v217
      %v494 = vpop.f32.mrb[0].mxu0
      %v495 = vadd.f32 0.0, %v494
      %v496 = vpop.f32.mrb[0].mxu0
      %497 = vmatprep.mubr.f32.mxu0 0.0
      %498 = vmatmul.mubr.f32.gmra.mrb[0].mxu0 %v218
      %v499 = vpop.f32.mrb[0].mxu0
      %v500 = vadd.f32 0.0, %v499
      %v501 = vpop.f32.mrb[0].mxu0
      %502 = vmatprep.mubr.f32.mxu0 0.0
      %503 = vmatmul.mubr.f32.gmra.mrb[0].mxu0 %v219
      %v504 = vpop.f32.mrb[0].mxu0
      %v505 = vadd.f32 0.0, %v504
      %v506 = vpop.f32.mrb[0].mxu0
      %507 = vmatprep.mubr.f32.mxu0 0.0
      %508 = vmatmul.mubr.f32.gmra.mrb[0].mxu0 %v220
      %v509 = vpop.f32.mrb[0].mxu0
      %v510 = vadd.f32 0.0, %v509
      %v511 = vpop.f32.mrb[0].mxu0
      %512 = vmatprep.mubr.f32.mxu0 0.0
      %513 = vmatmul.mubr.f32.gmra.mrb[0].mxu0 %v221
      %v514 = vpop.f32.mrb[0].mxu0
      %v515 = vadd.f32 0.0, %v514
      %v516 = vpop.f32.mrb[0].mxu0
      %517 = vmatprep.mubr.f32.mxu0 0.0
      %518 = vmatmul.mubr.f32.gmra.mrb[0].mxu0 %v222
      %v519 = vpop.f32.mrb[0].mxu0
      %v520 = vadd.f32 0.0, %v519
      %v521 = vpop.f32.mrb[0].mxu0
      %522 = vmatprep.mubr.f32.mxu0 0.0
      %523 = vmatmul.mubr.f32.gmra.mrb[0].mxu0 %v223
      %v524 = vpop.f32.mrb[0].mxu0
      %v525 = vadd.f32 0.0, %v524
      %v526 = vpop.f32.mrb[0].mxu0
      %527 = vmatprep.mubr.f32.mxu0 0.0
      %528 = vmatmul.mubr.f32.gmra.mrb[0].mxu0 %v224
      %v529 = vpop.f32.mrb[0].mxu0
      %v530 = vadd.f32 0.0, %v529
      %v531 = vpop.f32.mrb[0].mxu0
      %532 = vmatprep.mubr.f32.mxu0 0.0
      %533 = vmatmul.mubr.f32.gmra.mrb[0].mxu0 %v225
      %v534 = vpop.f32.mrb[0].mxu0
      %v535 = vadd.f32 0.0, %v534
      %v536 = vpop.f32.mrb[0].mxu0
      %537 = vmatprep.mubr.f32.mxu0 0.0
      %538 = vmatmul.mubr.f32.gmra.mrb[0].mxu0 %v226
      %v539 = vpop.f32.mrb[0].mxu0
      %v540 = vadd.f32 0.0, %v539
      %v541 = vpop.f32.mrb[0].mxu0
      %542 = vmatprep.mubr.f32.mxu0 0.0
      %543 = vmatmul.mubr.f32.gmra.mrb[0].mxu0 %v227
      %v544 = vpop.f32.mrb[0].mxu0
      %v545 = vadd.f32 0.0, %v544
      %v546 = vpop.f32.mrb[0].mxu0
      %547 = vmatprep.mubr.f32.mxu0 0.0
      %548 = vmatmul.mubr.f32.gmra.mrb[0].mxu0 %v228
      %v549 = vpop.f32.mrb[0].mxu0
      %v550 = vadd.f32 0.0, %v549
      %v551 = vpop.f32.mrb[0].mxu0
      %552 = vmatprep.mubr.f32.mxu0 0.0
      %553 = vmatmul.mubr.f32.gmra.mrb[0].mxu0 %v229
      %v554 = vpop.f32.mrb[0].mxu0
      %v555 = vadd.f32 0.0, %v554
      %v556 = vpop.f32.mrb[0].mxu0
      %557 = vmatprep.mubr.f32.mxu0 0.0
      %558 = vmatmul.mubr.f32.gmra.mrb[0].mxu0 %v230
      %v559 = vpop.f32.mrb[0].mxu0
      %v560 = vadd.f32 0.0, %v559
      %v561 = vpop.f32.mrb[0].mxu0
      %562 = vmatprep.mubr.f32.mxu0 0.0
      %563 = vmatmul.mubr.f32.gmra.mrb[0].mxu0 %v231
      %v564 = vpop.f32.mrb[0].mxu0
      %v565 = vadd.f32 0.0, %v564
      %v566 = vpop.f32.mrb[0].mxu0
      %567 = vmatprep.mubr.f32.mxu0 0.0
      %568 = vmatmul.mubr.f32.gmra.mrb[0].mxu0 %v232
      %v569 = vpop.f32.mrb[0].mxu0
      %v570 = vadd.f32 0.0, %v569
      %v571 = vpop.f32.mrb[0].mxu0
      %572 = vmatprep.mubr.f32.mxu0 0.0
      %573 = vmatmul.mubr.f32.gmra.mrb[0].mxu0 %v233
      %v574 = vpop.f32.mrb[0].mxu0
      %v575 = vadd.f32 0.0, %v574
      %v576 = vpop.f32.mrb[0].mxu0
      %577 = vmatprep.mubr.f32.mxu0 0.0
      %578 = vmatmul.mubr.f32.gmra.mrb[0].mxu0 %v234
      %v579 = vpop.f32.mrb[0].mxu0
      %v580 = vadd.f32 0.0, %v579
      %v581 = vpop.f32.mrb[0].mxu0
      %582 = vmatprep.mubr.f32.mxu0 0.0
      %583 = vmatmul.mubr.f32.gmra.mrb[0].mxu0 %v235
      %v584 = vpop.f32.mrb[0].mxu0
      %v585 = vadd.f32 0.0, %v584
      %v586 = vpop.f32.mrb[0].mxu0
      %587 = vmatprep.mubr.f32.mxu0 0.0
      %588 = vmatmul.mubr.f32.gmra.mrb[0].mxu0 %v236
      %v589 = vpop.f32.mrb[0].mxu0
      %v590 = vadd.f32 0.0, %v589
      %v591 = vpop.f32.mrb[0].mxu0
      %592 = vmatprep.mubr.f32.mxu0 0.0
      %593 = vmatmul.mubr.f32.gmra.mrb[0].mxu0 %v237
      %v594 = vpop.f32.mrb[0].mxu0
      %v595 = vadd.f32 0.0, %v594
      %v596 = vpop.f32.mrb[0].mxu0
      %597 = vmatprep.mubr.f32.mxu0 0.0
      %598 = vmatmul.mubr.f32.gmra.mrb[0].mxu0 %v238
      %v599 = vpop.f32.mrb[0].mxu0
      %v600 = vadd.f32 0.0, %v599
      %v601 = vpop.f32.mrb[0].mxu0
      %602 = vmatprep.mubr.f32.mxu0 0.0
      %603 = vmatmul.mubr.f32.gmra.mrb[0].mxu0 %v239
      %v604 = vpop.f32.mrb[0].mxu0
      %v605 = vadd.f32 0.0, %v604
      %v606 = vpop.f32.mrb[0].mxu0
      %607 = vmatprep.mubr.f32.mxu0 0.0
      %608 = vmatmul.mubr.f32.gmra.mrb[0].mxu0 %v240
      %v609 = vpop.f32.mrb[0].mxu0
      %v610 = vadd.f32 0.0, %v609
      %v611 = vpop.f32.mrb[0].mxu0
      %612 = vmatprep.mubr.f32.mxu0 0.0
      %613 = vmatmul.mubr.f32.gmra.mrb[0].mxu0 %v241
      %v614 = vpop.f32.mrb[0].mxu0
      %v615 = vadd.f32 0.0, %v614
      %v616 = vpop.f32.mrb[0].mxu0
      %617 = vmatprep.mubr.f32.mxu0 0.0
      %618 = vmatmul.mubr.f32.gmra.mrb[0].mxu0 %v242
      %v619 = vpop.f32.mrb[0].mxu0
      %v620 = vadd.f32 0.0, %v619
      %v621 = vpop.f32.mrb[0].mxu0
      %622 = vmatprep.mubr.f32.mxu0 0.0
      %623 = vmatmul.mubr.f32.gmra.mrb[0].mxu0 %v243
      %v624 = vpop.f32.mrb[0].mxu0
      %v625 = vadd.f32 0.0, %v624
      %v626 = vpop.f32.mrb[0].mxu0
      %627 = vmatprep.mubr.f32.mxu0 0.0
      %628 = vmatmul.mubr.f32.gmra.mrb[0].mxu0 %v244
      %v629 = vpop.f32.mrb[0].mxu0
      %v630 = vadd.f32 0.0, %v629
      %v631 = vpop.f32.mrb[0].mxu0
      %632 = vmatprep.mubr.f32.mxu0 0.0
      %633 = vmatmul.mubr.f32.gmra.mrb[0].mxu0 %v245
      %v634 = vpop.f32.mrb[0].mxu0
      %v635 = vadd.f32 0.0, %v634
      %v636 = vpop.f32.mrb[0].mxu0
      %637 = vmatprep.mubr.f32.mxu0 0.0
      %638 = vmatmul.mubr.f32.gmra.mrb[0].mxu0 %v246
      %v639 = vpop.f32.mrb[0].mxu0
      %v640 = vadd.f32 0.0, %v639
      %v641 = vpop.f32.mrb[0].mxu0
      %642 = vdwg.mxu0
      %v643 = vtanh.pop %v330
      %v644 = vtanh.pop %v335
      %v645 = vtanh.pop %v340
      %v646 = vtanh.pop %v345
      %v647 = vtanh.pop %v350
      %v648 = vtanh.pop %v355
      %v649 = vtanh.pop %v360
      %v650 = vtanh.pop %v365
      %v651 = vtanh.pop %v370
      %v652 = vtanh.pop %v375
      %v653 = vtanh.pop %v380
      %v654 = vtanh.pop %v385
      %v655 = vtanh.pop %v390
      %v656 = vtanh.pop %v395
      %v657 = vtanh.pop %v400
      %v658 = vtanh.pop %v405
      %v659 = vtanh.pop %v410
      %v660 = vtanh.pop %v415
      %v661 = vtanh.pop %v420
      %v662 = vtanh.pop %v425
      %v663 = vtanh.pop %v430
      %v664 = vtanh.pop %v435
      %v665 = vtanh.pop %v440
      %v666 = vtanh.pop %v445
      %v667 = vtanh.pop %v450
      %v668 = vtanh.pop %v455
      %v669 = vtanh.pop %v460
      %v670 = vtanh.pop %v465
      %v671 = vtanh.pop %v470
      %v672 = vtanh.pop %v475
      %v673 = vtanh.pop %v480
      %v674 = vtanh.pop %v485
      %v675 = vtanh.pop %v490
      %v676 = vtanh.pop %v495
      %v677 = vtanh.pop %v500
      %v678 = vtanh.pop %v505
      %v679 = vtanh.pop %v510
      %v680 = vtanh.pop %v515
      %v681 = vtanh.pop %v520
      %v682 = vtanh.pop %v525
      %v683 = vtanh.pop %v530
      %v684 = vtanh.pop %v535
      %v685 = vtanh.pop %v540
      %v686 = vtanh.pop %v545
      %v687 = vtanh.pop %v550
      %v688 = vtanh.pop %v555
      %v689 = vtanh.pop %v560
      %v690 = vtanh.pop %v565
      %v691 = vtanh.pop %v570
      %v692 = vtanh.pop %v575
      %v693 = vtanh.pop %v580
      %v694 = vtanh.pop %v585
      %v695 = vtanh.pop %v590
      %v696 = vtanh.pop %v595
      %v697 = vtanh.pop %v600
      %v698 = vtanh.pop %v605
      %v699 = vtanh.pop %v610
      %v700 = vtanh.pop %v615
      %v701 = vtanh.pop %v620
      %v702 = vtanh.pop %v625
      %v703 = vtanh.pop %v630
      %v704 = vtanh.pop %v635
      %v705 = vtanh.pop %v640
      %706 = vst [vmem:[%s182] sm:$0xff] %v643
      %707 = vst [vmem:[%s182 + $0x8] sm:$0xff] %v644
      %708 = vst [vmem:[%s182 + $0x10] sm:$0xff] %v645
      %709 = vst [vmem:[%s182 + $0x18] sm:$0xff] %v646
      %710 = vst [vmem:[%s182 + $0x20] sm:$0xff] %v647
      %711 = vst [vmem:[%s182 + $0x28] sm:$0xff] %v648
      %712 = vst [vmem:[%s182 + $0x30] sm:$0xff] %v649
      %713 = vst [vmem:[%s182 + $0x38] sm:$0xff] %v650
      %714 = vst [vmem:[%s182 + $0x40] sm:$0xff] %v651
      %715 = vst [vmem:[%s182 + $0x48] sm:$0xff] %v652
      %716 = vst [vmem:[%s182 + $0x50] sm:$0xff] %v653
      %717 = vst [vmem:[%s182 + $0x58] sm:$0xff] %v654
      %718 = vst [vmem:[%s182 + $0x60] sm:$0xff] %v655
      %719 = vst [vmem:[%s182 + $0x68] sm:$0xff] %v656
      %720 = vst [vmem:[%s182 + $0x70] sm:$0xff] %v657
      %721 = vst [vmem:[%s182 + $0x78] sm:$0xff] %v658
      %722 = vst [vmem:[%s182 + $0x80] sm:$0xff] %v659
      %723 = vst [vmem:[%s182 + $0x88] sm:$0xff] %v660
      %724 = vst [vmem:[%s182 + $0x90] sm:$0xff] %v661
      %725 = vst [vmem:[%s182 + $0x98] sm:$0xff] %v662
      %726 = vst [vmem:[%s182 + $0xa0] sm:$0xff] %v663
      %727 = vst [vmem:[%s182 + $0xa8] sm:$0xff] %v664
      %728 = vst [vmem:[%s182 + $0xb0] sm:$0xff] %v665
      %729 = vst [vmem:[%s182 + $0xb8] sm:$0xff] %v666
      %730 = vst [vmem:[%s182 + $0xc0] sm:$0xff] %v667
      %731 = vst [vmem:[%s182 + $0xc8] sm:$0xff] %v668
      %732 = vst [vmem:[%s182 + $0xd0] sm:$0xff] %v669
      %733 = vst [vmem:[%s182 + $0xd8] sm:$0xff] %v670
      %734 = vst [vmem:[%s182 + $0xe0] sm:$0xff] %v671
      %735 = vst [vmem:[%s182 + $0xe8] sm:$0xff] %v672
      %736 = vst [vmem:[%s182 + $0xf0] sm:$0xff] %v673
      %737 = vst [vmem:[%s182 + $0xf8] sm:$0xff] %v674
      %738 = vst [vmem:[%s182 + $0x100] sm:$0xff] %v675
      %739 = vst [vmem:[%s182 + $0x108] sm:$0xff] %v676
      %740 = vst [vmem:[%s182 + $0x110] sm:$0xff] %v677
      %741 = vst [vmem:[%s182 + $0x118] sm:$0xff] %v678
      %742 = vst [vmem:[%s182 + $0x120] sm:$0xff] %v679
      %743 = vst [vmem:[%s182 + $0x128] sm:$0xff] %v680
      %744 = vst [vmem:[%s182 + $0x130] sm:$0xff] %v681
      %745 = vst [vmem:[%s182 + $0x138] sm:$0xff] %v682
      %746 = vst [vmem:[%s182 + $0x140] sm:$0xff] %v683
      %747 = vst [vmem:[%s182 + $0x148] sm:$0xff] %v684
      %748 = vst [vmem:[%s182 + $0x150] sm:$0xff] %v685
      %749 = vst [vmem:[%s182 + $0x158] sm:$0xff] %v686
      %750 = vst [vmem:[%s182 + $0x160] sm:$0xff] %v687
      %751 = vst [vmem:[%s182 + $0x168] sm:$0xff] %v688
      %752 = vst [vmem:[%s182 + $0x170] sm:$0xff] %v689
      %753 = vst [vmem:[%s182 + $0x178] sm:$0xff] %v690
      %754 = vst [vmem:[%s182 + $0x180] sm:$0xff] %v691
      %755 = vst [vmem:[%s182 + $0x188] sm:$0xff] %v692
      %756 = vst [vmem:[%s182 + $0x190] sm:$0xff] %v693
      %757 = vst [vmem:[%s182 + $0x198] sm:$0xff] %v694
      %758 = vst [vmem:[%s182 + $0x1a0] sm:$0xff] %v695
      %759 = vst [vmem:[%s182 + $0x1a8] sm:$0xff] %v696
      %760 = vst [vmem:[%s182 + $0x1b0] sm:$0xff] %v697
      %761 = vst [vmem:[%s182 + $0x1b8] sm:$0xff] %v698
      %762 = vst [vmem:[%s182 + $0x1c0] sm:$0xff] %v699
      %763 = vst [vmem:[%s182 + $0x1c8] sm:$0xff] %v700
      %764 = vst [vmem:[%s182 + $0x1d0] sm:$0xff] %v701
      %765 = vst [vmem:[%s182 + $0x1d8] sm:$0xff] %v702
      %766 = vst [vmem:[%s182 + $0x1e0] sm:$0xff] %v703
      %767 = vst [vmem:[%s182 + $0x1e8] sm:$0xff] %v704
      %768 = vst [vmem:[%s182 + $0x1f0] sm:$0xff] %v705
      %s769 = smul.u32 63, %s17
      %p770 = scmp.lt.s32.totalorder %s769, 1070
      %s771 = scalar_select %p770, %s769, 1070
      %p772 = scmp.lt.s32.totalorder %s18, 0
      %s773 = scalar_select %p772, %s18, 0
      %s774 = sadd.s32 %s773, %s771
      %s775 = smul.addr %s774, 8
      %s776 = scalar_lea.vmem %s2, %s775
      // Predicated region
      $region29: #{generator_forward.31} parent=27 // pred_check
        %p777 = pneg %p97
      $region30: #{generator_forward.31} parent=27 // pred_check_branch
        %779 = sbr.rel (%p777) target = $region32
      $region31: #{generator_forward.31} parent=27 // pred_region
        %s780 = smul.u32 63, %s17
      $region32: #{generator_forward.31} parent=27 // pred_fallthru
        _
    $region28: #{generator_forward.31} parent=5 // pred_fallthru
      _
    %p781 = scmp.le.s32.totalorder 2, %s8
    // Predicated region
    $region33: #{generator_forward.31} parent=5 // pred_check
      %p782 = pneg %p781
    $region34: #{generator_forward.31} parent=5 // pred_check_branch
      %784 = sbr.rel (%p782) target = $region36
    $region35: #{generator_forward.31} parent=5 // pred_region
      %s785 = ssub.s32 %s8, 2
      // Predicated region
      $region37: #{generator_forward.31} parent=35 // pred_check
        %p786 = pneg %p103
      $region38: #{generator_forward.31} parent=35 // pred_check_branch
        %788 = sbr.rel (%p786) target = $region40
      $region39: #{generator_forward.31} parent=35 // pred_region
        %s789 = smul.u32 63, %s19
        %p790 = scmp.lt.s32.totalorder %s789, 1070
        %s791 = scalar_select %p790, %s789, 1070
        %p792 = scmp.lt.s32.totalorder %s20, 0
        %s793 = scalar_select %p792, %s20, 0
        %s794 = sadd.s32 %s793, %s791
        %s795 = smul.addr %s794, 8
        %s796 = scalar_lea.vmem %s2, %s795
      $region40: #{generator_forward.31} parent=35 // pred_fallthru
        _
    $region36: #{generator_forward.31} parent=5 // pred_fallthru
      _
  $region6: #{generator_forward.31} parent=0 // loop_footer
    %s12 = sadd.s32 1, %s8
  $region7: #{generator_forward.31} parent=0 // loop_footer_branch
    %7 = sbr.rel target = $region3
  $region8: #{generator_forward.31} parent=0 // loop_exit
    _

</llo_original>
